<compile_context>
chip_gen: v5e
topology: v5e:2x2
jax: 0.10.0
libtpu: 0.0.40
codegen_flags: <defaults>
</compile_context>

<pallas_src>
import functools
import math

import numpy as np
import jax
import jax.numpy as jnp
from jax import lax
from jax.experimental import pallas as pl
from jax.experimental.pallas import tpu as pltpu


# ----------------------------------------------------------------------------
# Pallas kernel: one grid step == one chunk of `box_block` boxes that all live
# on the same image of one pyramid level (one channel tile of it).
# ----------------------------------------------------------------------------
def _roi_align_level_kernel(
    img_ref,      # SMEM (n_chunks,) int32  image index of this chunk's group
    cnt_ref,      # SMEM (n_chunks,) int32  number of real boxes in this chunk
    par_ref,      # VMEM (B*P, 4)   f32     [a0_start, a0_bin, a1_start, a1_bin]
    feat_ref,     # VMEM (1, 1, A0, A1*Cb)  one image's feature slab (channel tile)
    out_ref,      # VMEM (B*P*P, Cb)
    *,
    pooled,
    box_block,
    channels,
    sampling_ratio,
    size0,
    size1,
    stage2_dtype,
):
    P = pooled
    B = box_block
    Cb = channels
    sr = sampling_ratio            # static, > 0
    rows = B * P
    c = pl.program_id(0)

    # Fully-dummy chunks (group padding) skip all compute; their stale output
    # block is never gathered by the wrapper.
    @pl.when(cnt_ref[c] > 0)
    def _():
        a0f = float(size0)
        a1f = float(size1)
        g0 = lax.broadcasted_iota(jnp.int32, (rows, size0), 1).astype(jnp.float32)
        g1 = lax.broadcasted_iota(jnp.int32, (rows, size1), 1).astype(jnp.float32)
        s0 = par_ref[:, 0:1]        # (rows, 1): sample-grid start along axis0
        b0 = par_ref[:, 1:2]        # bin size along axis0
        s1 = par_ref[:, 2:3]
        b1 = par_ref[:, 3:4]

        # Separable bilinear weights, vectorized over the whole chunk.
        w0 = jnp.zeros((rows, size0), jnp.float32)
        w1 = jnp.zeros((rows, size1), jnp.float32)
        for k in range(sr):         # static unroll over the sampling grid
            t = (k + 0.5) / sr
            a = s0 + t * b0
            v = (a >= -1.0) & (a <= a0f)
            ac = jnp.clip(a, 0.0, a0f - 1.0)
            w0 = w0 + jnp.where(v, jnp.maximum(0.0, 1.0 - jnp.abs(ac - g0)), 0.0)
            a = s1 + t * b1
            v = (a >= -1.0) & (a <= a1f)
            ac = jnp.clip(a, 0.0, a1f - 1.0)
            w1 = w1 + jnp.where(v, jnp.maximum(0.0, 1.0 - jnp.abs(ac - g1)), 0.0)
        inv_sr = 1.0 / float(sr)    # 1/sr on each factor => 1/sr^2 total
        w0 = w0 * inv_sr
        w1 = w1 * inv_sr

        feat = feat_ref[0, 0]                                    # (A0, A1*Cb)

        # Stage 1 (one big MXU matmul, M = B*P rows): contract the longer axis.
        tmp = jnp.dot(w0.astype(feat.dtype), feat,
                      preferred_element_type=jnp.float32)        # (B*P, A1*Cb) f32
        tmp = tmp.reshape(rows, size1, Cb)                       # lane groups == channels

        # Stage 2 (batched over (box, bin0) rows): contract the shorter axis.
        # TODO(synk): on v5e/v6e this could become a single MXU matmul via a
        #             block-diagonal w1 when (B*P*P, B*P*A1) fits VMEM.
        w1b = w1.reshape(B, P, size1)
        w1r = jnp.broadcast_to(w1b[:, None, :, :],
                               (B, P, P, size1)).reshape(rows, P, size1)
        out = jnp.einsum(
            "mqw,mwc->mqc",
            w1r.astype(stage2_dtype), tmp.astype(stage2_dtype),
            preferred_element_type=jnp.float32)                  # (B*P, P, Cb)
        out_ref[...] = out.reshape(rows * P, Cb).astype(out_ref.dtype)


# ----------------------------------------------------------------------------
# ROIPooler wrapper (grouping / padding glue in plain JAX, hot path in Pallas).
# ----------------------------------------------------------------------------
class ROIPoolerPallas:
    def __init__(self, output_size, scales, sampling_ratio, pooler_type,
                 canonical_box_size=224, canonical_level=4, box_block=32):
        if isinstance(output_size, int):
            output_size = (output_size, output_size)
        assert len(output_size) == 2
        assert output_size[0] == output_size[1], "pooler assumes square output"
        self.output_size = output_size

        assert sampling_ratio > 0
        self.sampling_ratio = int(sampling_ratio)

        if pooler_type == "ROIAlign":
            self.aligned = False
        elif pooler_type == "ROIAlignV2":
            self.aligned = True
        elif pooler_type in ("ROIPool", "ROIAlignRotated"):
            raise NotImplementedError(
                "Pooler type {} not implemented in the Pallas port".format(pooler_type))
        else:
            raise ValueError("Unknown pooler type: {}".format(pooler_type))

        min_level = -math.log2(scales[0])
        max_level = -math.log2(scales[-1])
        assert math.isclose(min_level, int(min_level)) and math.isclose(max_level, int(max_level))
        self.min_level = int(min_level)
        self.max_level = int(max_level)
        assert len(scales) == self.max_level - self.min_level + 1
        assert 0 <= self.min_level <= self.max_level
        self.scales = [float(s) for s in scales]
        self.canonical_level = canonical_level
        assert canonical_box_size > 0
        self.canonical_box_size = canonical_box_size
        self.box_block = int(box_block)
        assert self.box_block % 8 == 0, "box_block must be a multiple of 8"

    @staticmethod
    def _pick_channel_block(C, A0, A1, itemsize, budget=12 << 20):
        # Largest channel tile (multiple of 128, or full C) whose feature slab
        # stays within the per-buffer budget -> double-buffering fits v7x VMEM.
        cands = [d for d in range(1, C + 1) if C % d == 0 and (d % 128 == 0 or d == C)]
        fit = [d for d in cands if A0 * A1 * d * itemsize <= budget]
        return max(fit) if fit else min(cands)

    def __call__(self, x, box_lists):
        L = len(self.scales)
        assert isinstance(x, list) and isinstance(box_lists, list)
        assert len(x) == L
        N, C = int(x[0].shape[0]), int(x[0].shape[1])
        assert len(box_lists) == N
        P = self.output_size[0]
        B = self.box_block
        dtype = x[0].dtype

        num_boxes = sum(int(b.shape[0]) for b in box_lists)
        if num_boxes == 0:
            return jnp.zeros((0, C) + self.output_size, dtype=dtype)

        # ---- convert_boxes_to_pooler_format (batch index + box coords) ------
        boxes = jnp.concatenate([jnp.asarray(b, jnp.float32) for b in box_lists], axis=0)
        bidx = jnp.concatenate(
            [jnp.full((int(b.shape[0]),), i, jnp.int32) for i, b in enumerate(box_lists)],
            axis=0)
        M = int(boxes.shape[0])

        # ---- assign_boxes_to_levels ------------------------------------------
        if L == 1:
            lvl = jnp.zeros((M,), jnp.int32)
        else:
            sizes = jnp.sqrt((boxes[:, 2] - boxes[:, 0]) * (boxes[:, 3] - boxes[:, 1]))
            lvl = jnp.floor(self.canonical_level +
                            jnp.log2(sizes / self.canonical_box_size + 1e-8))
            lvl = (jnp.clip(lvl, self.min_level, self.max_level).astype(jnp.int32)
                   - self.min_level)

        # ---- per-box ROIAlign sample parameters (scale / offset folded in) ----
        scales_arr = jnp.asarray(self.scales, jnp.float32)
        scale_pb = scales_arr[lvl]                                  # (M,)
        offset = 0.5 if self.aligned else 0.0
        x0 = boxes[:, 0] * scale_pb - offset
        y0 = boxes[:, 1] * scale_pb - offset
        x1 = boxes[:, 2] * scale_pb - offset
        y1 = boxes[:, 3] * scale_pb - offset
        roi_w = x1 - x0
        roi_h = y1 - y0
        if not self.aligned:                        # legacy ROIAlign clamps degenerate rois
            roi_w = jnp.maximum(roi_w, 1.0)
            roi_h = jnp.maximum(roi_h, 1.0)
        bin_w = roi_w / P
        bin_h = roi_h / P
        pbin = jnp.arange(P, dtype=jnp.float32)
        ystart = y0[:, None] + pbin[None, :] * bin_h[:, None]       # (M, P)
        xstart = x0[:, None] + pbin[None, :] * bin_w[:, None]       # (M, P)
        bw_rows = jnp.broadcast_to(bin_w[:, None], (M, P))
        bh_rows = jnp.broadcast_to(bin_h[:, None], (M, P))

        m_pad = (M + N * (B - 1) + B - 1) // B * B                  # static per-level bound
        n_chunks = m_pad // B
        itemsize = np.dtype(dtype).itemsize
        st2_dt = (jnp.bfloat16 if np.dtype(dtype) == np.dtype(jnp.bfloat16)
                  else jnp.float32)

        result = jnp.zeros((M, C, P, P), dtype)
        for l in range(L):
            feat = x[l]
            H, W = int(feat.shape[2]), int(feat.shape[3])
            on = (lvl == l)

            # ---- group this level's boxes by image, pad each group to B ------
            key = jnp.where(on, bidx, N).astype(jnp.int32)          # off-level -> sentinel N
            order = jnp.argsort(key)
            key_s = key[order]
            counts = jnp.zeros((N,), jnp.int32).at[key].add(1, mode="drop")
            padded = (counts + B - 1) // B * B
            cum_pad = jnp.cumsum(padded)
            pad_start = cum_pad - padded
            raw_start = jnp.cumsum(counts) - counts
            key_sc = jnp.clip(key_s, 0, N - 1)
            rank = jnp.arange(M, dtype=jnp.int32) - raw_start[key_sc]
            dest_s = jnp.where(key_s < N, pad_start[key_sc] + rank, m_pad).astype(jnp.int32)
            dest = jnp.zeros((M,), jnp.int32).at[order].set(dest_s)  # box -> padded slot

            # ---- stage-1 contracts the longer spatial axis --------------------
            swap = W > H
            if swap:
                A0, A1 = W, H
                fcl = jnp.transpose(feat, (0, 3, 2, 1))              # (N, W, H, C)
                par = jnp.stack([xstart, bw_rows, ystart, bh_rows], axis=-1)   # (M, P, 4)
            else:
                A0, A1 = H, W
                fcl = jnp.transpose(feat, (0, 2, 3, 1))              # (N, H, W, C)
                par = jnp.stack([ystart, bh_rows, xstart, bw_rows], axis=-1)

            row_dest = dest[:, None] * P + jnp.arange(P, dtype=jnp.int32)[None, :]
            par_pad = jnp.zeros((m_pad * P, 4), jnp.float32).at[
                row_dest.reshape(-1)].set(par.reshape(M * P, 4), mode="drop")

            # ---- per-chunk metadata (scalar-prefetched) ------------------------
            chunk_start = jnp.arange(n_chunks, dtype=jnp.int32) * B
            g = jnp.clip(jnp.searchsorted(cum_pad, chunk_start, side="right"),
                         0, N - 1).astype(jnp.int32)
            chunk_cnt = jnp.clip(counts[g] - (chunk_start - pad_start[g]),
                                 0, B).astype(jnp.int32)
            total_pad = cum_pad[-1]
            last_real = jnp.maximum(total_pad // B - 1, 0)
            chunk_img = jnp.where(chunk_start < total_pad, g, g[last_real]).astype(jnp.int32)

            # ---- channel tiling so the feature block stays VMEM-friendly ------
            Cb = self._pick_channel_block(C, A0, A1, itemsize)
            nC = C // Cb
            feat_in = fcl.reshape(N, A0, A1, nC, Cb)
            feat_in = jnp.transpose(feat_in, (0, 3, 1, 2, 4)).reshape(N, nC, A0, A1 * Cb)

            kernel = functools.partial(
                _roi_align_level_kernel, pooled=P, box_block=B, channels=Cb,
                sampling_ratio=self.sampling_ratio, size0=A0, size1=A1,
                stage2_dtype=st2_dt)

            fblk = A0 * A1 * Cb * itemsize
            oblk = B * P * P * Cb * itemsize
            interm = 4 * (B * P * (A0 + A1 + P * A1) + B * P * A1 * Cb + B * P * P * Cb)
            vmem_limit = int(min(48 * 2 ** 20,
                                 max(16 * 2 ** 20,
                                     2 * fblk + 2 * oblk + interm + 4 * 2 ** 20)))

            grid_spec = pltpu.PrefetchScalarGridSpec(
                num_scalar_prefetch=2,
                grid=(n_chunks, nC),
                in_specs=[
                    pl.BlockSpec((B * P, 4), lambda c, cc, *prefetch: (c, 0)),
                    pl.BlockSpec((1, 1, A0, A1 * Cb),
                                 lambda c, cc, img_r, cnt_r: (img_r[c], cc, 0, 0)),
                ],
                out_specs=pl.BlockSpec((B * P * P, Cb), lambda c, cc, *prefetch: (c, cc)),
            )

            out_l = pl.pallas_call(
                kernel,
                out_shape=jax.ShapeDtypeStruct((n_chunks * B * P * P, C), dtype),
                grid_spec=grid_spec,
                compiler_params=pltpu.CompilerParams(
                    dimension_semantics=("parallel", "parallel"),
                    vmem_limit_bytes=vmem_limit),
            )(chunk_img, chunk_cnt, par_pad, feat_in)

            pooled_l = out_l.reshape(m_pad, P, P, C)[jnp.clip(dest, 0, m_pad - 1)]
            perm = (0, 3, 2, 1) if swap else (0, 3, 1, 2)            # -> (M, C, Ph, Pw)
            pooled_l = jnp.transpose(pooled_l, perm)
            result = jnp.where(on[:, None, None, None], pooled_l, result)

        return result


# ----------------------------------------------------------------------------
# Pure numpy reference (gather-based ROIAlign) for correctness checking.
# ----------------------------------------------------------------------------
def _roi_align_single_ref(feat, box, scale, P, sr, aligned):
    C, H, W = feat.shape
    off = 0.5 if aligned else 0.0
    x0 = box[0] * scale - off
    y0 = box[1] * scale - off
    x1 = box[2] * scale - off
    y1 = box[3] * scale - off
    rw, rh = x1 - x0, y1 - y0
    if not aligned:
        rw, rh = max(rw, 1.0), max(rh, 1.0)
    bw, bh = rw / P, rh / P
    out = np.zeros((C, P, P), np.float64)
    for ph in range(P):
        for pw in range(P):
            acc = np.zeros(C, np.float64)
            for iy in range(sr):
                y = y0 + ph * bh + (iy + 0.5) * bh / sr
                for ix in range(sr):
                    x = x0 + pw * bw + (ix + 0.5) * bw / sr
                    if y < -1.0 or y > H or x < -1.0 or x > W:
                        continue
                    yc = min(max(y, 0.0), H - 1.0)
                    xc = min(max(x, 0.0), W - 1.0)
                    yl, xl = int(np.floor(yc)), int(np.floor(xc))
                    yh, xh = min(yl + 1, H - 1), min(xl + 1, W - 1)
                    ly, lx = yc - yl, xc - xl
                    acc += (feat[:, yl, xl] * (1 - ly) * (1 - lx)
                            + feat[:, yl, xh] * (1 - ly) * lx
                            + feat[:, yh, xl] * ly * (1 - lx)
                            + feat[:, yh, xh] * ly * lx)
            out[:, ph, pw] = acc / (sr * sr)
    return out


def _roi_pooler_ref(x_list, box_lists, scales, P, sr, aligned,
                    canonical_box_size, canonical_level, min_level, max_level):
    boxes = np.concatenate([np.asarray(b, np.float64) for b in box_lists], 0)
    bidx = np.concatenate(
        [np.full((len(b),), i, np.int64) for i, b in enumerate(box_lists)], 0)
    M, C = boxes.shape[0], x_list[0].shape[1]
    if len(x_list) == 1:
        lvl = np.zeros((M,), np.int64)
    else:
        sizes = np.sqrt((boxes[:, 2] - boxes[:, 0]) * (boxes[:, 3] - boxes[:, 1]))
        lvl = np.floor(canonical_level + np.log2(sizes / canonical_box_size + 1e-8))
        lvl = np.clip(lvl, min_level, max_level).astype(np.int64) - min_level
    out = np.zeros((M, C, P, P), np.float64)
    for m in range(M):
        feat = np.asarray(x_list[int(lvl[m])], np.float64)[int(bidx[m])]
        out[m] = _roi_align_single_ref(feat, boxes[m], scales[int(lvl[m])], P, sr, aligned)
    return out


# ----------------------------------------------------------------------------
if __name__ == "__main__":
    key = jax.random.PRNGKey(0)
    N, C, P, sr = 2, 128, 4, 2                 # C >= 128 keeps the output store lane-dense
    scales = [1.0 / 4.0, 1.0 / 8.0]            # two-level feature pyramid

    # Level 0 is wider than tall (exercises the swapped stage-1 axis), level 1
    # is taller than wide (exercises the non-swapped path).
    x_lvl0 = jax.random.normal(jax.random.fold_in(key, 0), (N, C, 16, 24), jnp.float32)
    x_lvl1 = jax.random.normal(jax.random.fold_in(key, 1), (N, C, 12, 8), jnp.float32)
    x = [x_lvl0, x_lvl1]

    # boxes in original-image coordinates (x0, y0, x1, y1)
    boxes_img0 = jnp.array([[4.0, 6.0, 20.0, 28.0],
                            [2.0, 2.0, 90.0, 60.0],
                            [10.0, 12.0, 30.0, 26.0],
                            [60.0, 30.0, 92.0, 62.0]], jnp.float32)
    boxes_img1 = jnp.array([[0.0, 0.0, 40.0, 40.0],
                            [50.0, 8.0, 80.0, 56.0],
                            [5.0, 5.0, 25.0, 20.0]], jnp.float32)
    box_lists = [boxes_img0, boxes_img1]

    pooler = ROIPoolerPallas(output_size=P, scales=scales, sampling_ratio=sr,
                             pooler_type="ROIAlignV2",
                             canonical_box_size=32, canonical_level=3)

    out = pooler(x, box_lists)
    out = jax.block_until_ready(out)

    ref = _roi_pooler_ref([np.asarray(t) for t in x],
                          [np.asarray(b) for b in box_lists],
                          scales, P, sr, True, 32, 3,
                          pooler.min_level, pooler.max_level)
    np.testing.assert_allclose(np.asarray(out, np.float64), ref, rtol=1e-4, atol=1e-4)
    print("KERNEL_OK")
</pallas_src>

<mosaic_0001>
module attributes {stable_mosaic.version = 11 : i64} {
  func.func @_roi_align_level_kernel(%arg0: i32, %arg1: i32, %arg2: memref<3xi32, #tpu.memory_space<smem>>, %arg3: memref<3xi32, #tpu.memory_space<smem>>, %arg4: memref<128x4xf32, #tpu.memory_space<vmem>>, %arg5: memref<1x1x24x2048xf32, #tpu.memory_space<vmem>>, %arg6: memref<512x128xf32, #tpu.memory_space<vmem>>) attributes {dimension_semantics = [#tpu.dimension_semantics<parallel>, #tpu.dimension_semantics<parallel>], iteration_bounds = array<i64: 3, 1>, scalar_prefetch = 2 : i64, scratch_operands = 0 : i64, tpu.core_type = #tpu.core_type<tc>, window_params = [{transform_indices = @transform_0, window_bounds = array<i64: 128, 4>}, {transform_indices = @transform_1, window_bounds = array<i64: 1, 1, 24, 2048>}, {transform_indices = @transform_2, window_bounds = array<i64: 512, 128>}]} {
    %0 = arith.index_cast %arg0 : i32 to index
    %1 = memref.load %arg3[%0] : memref<3xi32, #tpu.memory_space<smem>>
    %c0_i32 = arith.constant 0 : i32
    %2 = arith.cmpi sgt, %1, %c0_i32 : i32
    %3 = arith.extui %2 : i1 to i32
    %c0_i32_0 = arith.constant 0 : i32
    %4 = arith.cmpi ne, %3, %c0_i32_0 : i32
    scf.if %4 {
      %5 = tpu.iota {dimensions = array<i32: 1>} : vector<128x24xi32>
      %6 = arith.sitofp %5 : vector<128x24xi32> to vector<128x24xf32>
      %7 = tpu.iota {dimensions = array<i32: 1>} : vector<128x16xi32>
      %8 = arith.sitofp %7 : vector<128x16xi32> to vector<128x16xf32>
      %c0 = arith.constant 0 : index
      %c0_1 = arith.constant 0 : index
      %9 = vector.load %arg4[%c0, %c0_1] : memref<128x4xf32, #tpu.memory_space<vmem>>, vector<128x1xf32>
      %c0_2 = arith.constant 0 : index
      %c1 = arith.constant 1 : index
      %10 = vector.load %arg4[%c0_2, %c1] : memref<128x4xf32, #tpu.memory_space<vmem>>, vector<128x1xf32>
      %c0_3 = arith.constant 0 : index
      %c2 = arith.constant 2 : index
      %11 = vector.load %arg4[%c0_3, %c2] : memref<128x4xf32, #tpu.memory_space<vmem>>, vector<128x1xf32>
      %c0_4 = arith.constant 0 : index
      %c3 = arith.constant 3 : index
      %12 = vector.load %arg4[%c0_4, %c3] : memref<128x4xf32, #tpu.memory_space<vmem>>, vector<128x1xf32>
      %cst = arith.constant 0.000000e+00 : f32
      %13 = vector.broadcast %cst : f32 to vector<128x24xf32>
      %cst_5 = arith.constant 0.000000e+00 : f32
      %14 = vector.broadcast %cst_5 : f32 to vector<128x16xf32>
      %cst_6 = arith.constant 2.500000e-01 : f32
      %15 = vector.broadcast %cst_6 : f32 to vector<128x1xf32>
      %16 = arith.mulf %15, %10 : vector<128x1xf32>
      %17 = arith.addf %9, %16 : vector<128x1xf32>
      %cst_7 = arith.constant -1.000000e+00 : f32
      %18 = vector.broadcast %cst_7 : f32 to vector<128x1xf32>
      %19 = arith.cmpf oge, %17, %18 : vector<128x1xf32>
      %cst_8 = arith.constant 2.400000e+01 : f32
      %20 = vector.broadcast %cst_8 : f32 to vector<128x1xf32>
      %21 = arith.cmpf ole, %17, %20 : vector<128x1xf32>
      %22 = arith.andi %19, %21 : vector<128x1xi1>
      %cst_9 = arith.constant 0.000000e+00 : f32
      %cst_10 = arith.constant 2.300000e+01 : f32
      %23 = vector.broadcast %cst_9 : f32 to vector<128x1xf32>
      %24 = arith.maximumf %23, %17 : vector<128x1xf32>
      %25 = vector.broadcast %cst_10 : f32 to vector<128x1xf32>
      %26 = arith.minimumf %25, %24 : vector<128x1xf32>
      %27 = vector.broadcast %26 : vector<128x1xf32> to vector<128x24xf32>
      %28 = arith.subf %27, %6 : vector<128x24xf32>
      %29 = math.absf %28 : vector<128x24xf32>
      %cst_11 = arith.constant 1.000000e+00 : f32
      %30 = vector.broadcast %cst_11 : f32 to vector<128x24xf32>
      %31 = arith.subf %30, %29 : vector<128x24xf32>
      %cst_12 = arith.constant 0.000000e+00 : f32
      %32 = vector.broadcast %cst_12 : f32 to vector<128x24xf32>
      %33 = arith.maximumf %32, %31 : vector<128x24xf32>
      %cst_13 = arith.constant 0.000000e+00 : f32
      %34 = vector.shape_cast %22 : vector<128x1xi1> to vector<128x1xi1>
      %35 = vector.broadcast %34 : vector<128x1xi1> to vector<128x24xi1>
      %36 = vector.broadcast %cst_13 : f32 to vector<128x24xf32>
      %37 = arith.select %35, %33, %36 : vector<128x24xi1>, vector<128x24xf32>
      %38 = arith.addf %13, %37 : vector<128x24xf32>
      %cst_14 = arith.constant 2.500000e-01 : f32
      %39 = vector.broadcast %cst_14 : f32 to vector<128x1xf32>
      %40 = arith.mulf %39, %12 : vector<128x1xf32>
      %41 = arith.addf %11, %40 : vector<128x1xf32>
      %cst_15 = arith.constant -1.000000e+00 : f32
      %42 = vector.broadcast %cst_15 : f32 to vector<128x1xf32>
      %43 = arith.cmpf oge, %41, %42 : vector<128x1xf32>
      %cst_16 = arith.constant 1.600000e+01 : f32
      %44 = vector.broadcast %cst_16 : f32 to vector<128x1xf32>
      %45 = arith.cmpf ole, %41, %44 : vector<128x1xf32>
      %46 = arith.andi %43, %45 : vector<128x1xi1>
      %cst_17 = arith.constant 0.000000e+00 : f32
      %cst_18 = arith.constant 1.500000e+01 : f32
      %47 = vector.broadcast %cst_17 : f32 to vector<128x1xf32>
      %48 = arith.maximumf %47, %41 : vector<128x1xf32>
      %49 = vector.broadcast %cst_18 : f32 to vector<128x1xf32>
      %50 = arith.minimumf %49, %48 : vector<128x1xf32>
      %51 = vector.broadcast %50 : vector<128x1xf32> to vector<128x16xf32>
      %52 = arith.subf %51, %8 : vector<128x16xf32>
      %53 = math.absf %52 : vector<128x16xf32>
      %cst_19 = arith.constant 1.000000e+00 : f32
      %54 = vector.broadcast %cst_19 : f32 to vector<128x16xf32>
      %55 = arith.subf %54, %53 : vector<128x16xf32>
      %cst_20 = arith.constant 0.000000e+00 : f32
      %56 = vector.broadcast %cst_20 : f32 to vector<128x16xf32>
      %57 = arith.maximumf %56, %55 : vector<128x16xf32>
      %cst_21 = arith.constant 0.000000e+00 : f32
      %58 = vector.shape_cast %46 : vector<128x1xi1> to vector<128x1xi1>
      %59 = vector.broadcast %58 : vector<128x1xi1> to vector<128x16xi1>
      %60 = vector.broadcast %cst_21 : f32 to vector<128x16xf32>
      %61 = arith.select %59, %57, %60 : vector<128x16xi1>, vector<128x16xf32>
      %62 = arith.addf %14, %61 : vector<128x16xf32>
      %cst_22 = arith.constant 7.500000e-01 : f32
      %63 = vector.broadcast %cst_22 : f32 to vector<128x1xf32>
      %64 = arith.mulf %63, %10 : vector<128x1xf32>
      %65 = arith.addf %9, %64 : vector<128x1xf32>
      %cst_23 = arith.constant -1.000000e+00 : f32
      %66 = vector.broadcast %cst_23 : f32 to vector<128x1xf32>
      %67 = arith.cmpf oge, %65, %66 : vector<128x1xf32>
      %cst_24 = arith.constant 2.400000e+01 : f32
      %68 = vector.broadcast %cst_24 : f32 to vector<128x1xf32>
      %69 = arith.cmpf ole, %65, %68 : vector<128x1xf32>
      %70 = arith.andi %67, %69 : vector<128x1xi1>
      %cst_25 = arith.constant 0.000000e+00 : f32
      %cst_26 = arith.constant 2.300000e+01 : f32
      %71 = vector.broadcast %cst_25 : f32 to vector<128x1xf32>
      %72 = arith.maximumf %71, %65 : vector<128x1xf32>
      %73 = vector.broadcast %cst_26 : f32 to vector<128x1xf32>
      %74 = arith.minimumf %73, %72 : vector<128x1xf32>
      %75 = vector.broadcast %74 : vector<128x1xf32> to vector<128x24xf32>
      %76 = arith.subf %75, %6 : vector<128x24xf32>
      %77 = math.absf %76 : vector<128x24xf32>
      %cst_27 = arith.constant 1.000000e+00 : f32
      %78 = vector.broadcast %cst_27 : f32 to vector<128x24xf32>
      %79 = arith.subf %78, %77 : vector<128x24xf32>
      %cst_28 = arith.constant 0.000000e+00 : f32
      %80 = vector.broadcast %cst_28 : f32 to vector<128x24xf32>
      %81 = arith.maximumf %80, %79 : vector<128x24xf32>
      %cst_29 = arith.constant 0.000000e+00 : f32
      %82 = vector.shape_cast %70 : vector<128x1xi1> to vector<128x1xi1>
      %83 = vector.broadcast %82 : vector<128x1xi1> to vector<128x24xi1>
      %84 = vector.broadcast %cst_29 : f32 to vector<128x24xf32>
      %85 = arith.select %83, %81, %84 : vector<128x24xi1>, vector<128x24xf32>
      %86 = arith.addf %38, %85 : vector<128x24xf32>
      %cst_30 = arith.constant 7.500000e-01 : f32
      %87 = vector.broadcast %cst_30 : f32 to vector<128x1xf32>
      %88 = arith.mulf %87, %12 : vector<128x1xf32>
      %89 = arith.addf %11, %88 : vector<128x1xf32>
      %cst_31 = arith.constant -1.000000e+00 : f32
      %90 = vector.broadcast %cst_31 : f32 to vector<128x1xf32>
      %91 = arith.cmpf oge, %89, %90 : vector<128x1xf32>
      %cst_32 = arith.constant 1.600000e+01 : f32
      %92 = vector.broadcast %cst_32 : f32 to vector<128x1xf32>
      %93 = arith.cmpf ole, %89, %92 : vector<128x1xf32>
      %94 = arith.andi %91, %93 : vector<128x1xi1>
      %cst_33 = arith.constant 0.000000e+00 : f32
      %cst_34 = arith.constant 1.500000e+01 : f32
      %95 = vector.broadcast %cst_33 : f32 to vector<128x1xf32>
      %96 = arith.maximumf %95, %89 : vector<128x1xf32>
      %97 = vector.broadcast %cst_34 : f32 to vector<128x1xf32>
      %98 = arith.minimumf %97, %96 : vector<128x1xf32>
      %99 = vector.broadcast %98 : vector<128x1xf32> to vector<128x16xf32>
      %100 = arith.subf %99, %8 : vector<128x16xf32>
      %101 = math.absf %100 : vector<128x16xf32>
      %cst_35 = arith.constant 1.000000e+00 : f32
      %102 = vector.broadcast %cst_35 : f32 to vector<128x16xf32>
      %103 = arith.subf %102, %101 : vector<128x16xf32>
      %cst_36 = arith.constant 0.000000e+00 : f32
      %104 = vector.broadcast %cst_36 : f32 to vector<128x16xf32>
      %105 = arith.maximumf %104, %103 : vector<128x16xf32>
      %cst_37 = arith.constant 0.000000e+00 : f32
      %106 = vector.shape_cast %94 : vector<128x1xi1> to vector<128x1xi1>
      %107 = vector.broadcast %106 : vector<128x1xi1> to vector<128x16xi1>
      %108 = vector.broadcast %cst_37 : f32 to vector<128x16xf32>
      %109 = arith.select %107, %105, %108 : vector<128x16xi1>, vector<128x16xf32>
      %110 = arith.addf %62, %109 : vector<128x16xf32>
      %cst_38 = arith.constant 5.000000e-01 : f32
      %111 = vector.broadcast %cst_38 : f32 to vector<128x24xf32>
      %112 = arith.mulf %86, %111 : vector<128x24xf32>
      %cst_39 = arith.constant 5.000000e-01 : f32
      %113 = vector.broadcast %cst_39 : f32 to vector<128x16xf32>
      %114 = arith.mulf %110, %113 : vector<128x16xf32>
      %c0_40 = arith.constant 0 : index
      %c0_41 = arith.constant 0 : index
      %c0_42 = arith.constant 0 : index
      %c0_43 = arith.constant 0 : index
      %115 = vector.load %arg5[%c0_40, %c0_41, %c0_42, %c0_43] : memref<1x1x24x2048xf32, #tpu.memory_space<vmem>>, vector<1x1x24x2048xf32>
      %116 = vector.shape_cast %115 : vector<1x1x24x2048xf32> to vector<24x2048xf32>
      %cst_44 = arith.constant dense<0.000000e+00> : vector<128x2048xf32>
      %117 = tpu.matmul %112, %116, %cst_44 {dimension_numbers = #tpu.dot_dimension_numbers<[1], [0], [0], [1], [0, 0, 1, 1], [], []>} : vector<128x24xf32>, vector<24x2048xf32>, vector<128x2048xf32> -> vector<128x2048xf32>
      %118 = vector.shape_cast %117 : vector<128x2048xf32> to vector<128x16x128xf32>
      %119 = vector.shape_cast %114 : vector<128x16xf32> to vector<32x4x16xf32>
      %120 = vector.shape_cast %119 : vector<32x4x16xf32> to vector<32x1x4x16xf32>
      %121 = vector.shape_cast %120 : vector<32x1x4x16xf32> to vector<32x1x4x16xf32>
      %122 = vector.broadcast %121 : vector<32x1x4x16xf32> to vector<32x4x4x16xf32>
      %123 = vector.shape_cast %122 : vector<32x4x4x16xf32> to vector<128x4x16xf32>
      "tpu.trace_start"() <{level = 10 : i32, message = "mqw,mwc->mqc"}> : () -> ()
      %cst_45 = arith.constant dense<0.000000e+00> : vector<128x4x128xf32>
      %124 = tpu.matmul %123, %118, %cst_45 {dimension_numbers = #tpu.dot_dimension_numbers<[2], [1], [1], [2], [0, 0, 0, 1, 1, 2], [0], [0]>} : vector<128x4x16xf32>, vector<128x16x128xf32>, vector<128x4x128xf32> -> vector<128x4x128xf32>
      "tpu.trace_stop"() : () -> ()
      %125 = vector.shape_cast %124 : vector<128x4x128xf32> to vector<512x128xf32>
      %c0_46 = arith.constant 0 : index
      %c0_47 = arith.constant 0 : index
      %126 = vector.load %arg6[%c0_46, %c0_47] : memref<512x128xf32, #tpu.memory_space<vmem>>, vector<512x128xf32>
      tpu.vector_store %arg6[%c0_46, %c0_47], %125 {strides = array<i32>} : memref<512x128xf32, #tpu.memory_space<vmem>>, vector<512x128xf32>,
    } else {
    }
    return
  }
  func.func @transform_0(%arg0: i32, %arg1: i32, %arg2: memref<3xi32, #tpu.memory_space<smem>>, %arg3: memref<3xi32, #tpu.memory_space<smem>>) -> (i32, i32) {
    %c0_i32 = arith.constant 0 : i32
    %c0_i32_0 = arith.constant 0 : i32
    return %arg0, %c0_i32 : i32, i32
  }
  func.func @transform_1(%arg0: i32, %arg1: i32, %arg2: memref<3xi32, #tpu.memory_space<smem>>, %arg3: memref<3xi32, #tpu.memory_space<smem>>) -> (i32, i32, i32, i32) {
    %0 = arith.index_cast %arg0 : i32 to index
    %1 = memref.load %arg2[%0] : memref<3xi32, #tpu.memory_space<smem>>
    %c0_i32 = arith.constant 0 : i32
    %c0_i32_0 = arith.constant 0 : i32
    %c0_i32_1 = arith.constant 0 : i32
    return %1, %arg1, %c0_i32, %c0_i32_0 : i32, i32, i32, i32
  }
  func.func @transform_2(%arg0: i32, %arg1: i32, %arg2: memref<3xi32, #tpu.memory_space<smem>>, %arg3: memref<3xi32, #tpu.memory_space<smem>>) -> (i32, i32) {
    %c0_i32 = arith.constant 0 : i32
    return %arg0, %arg1 : i32, i32
  }
}

</mosaic_0001>

<llo_original>
// kernel: tpu_custom_call.1
$region0: #{tpu_custom_call.1}
  #allocation0 [shape = 'u32[]', space=smem, size = 0x4, offset = 0x4, fixed_abs, tag = 'smem constant byte address 0x4 - core index']
  #allocation1 [shape = 'u32[72,128]{1,0:T(1,128)}', space=vmem, size = 0x9000, scoped, tag = 'internal scratch']
  #allocation2 [shape = 's32[1]{0}', space=sflag, size = 0x4, scoped, tag = 'scoped memory for tpu_custom_call.1']
  #allocation3 [shape = 'u8[512]{0}', space=smem, size = 0x200, scoped, tag = 'prefetched SMEM operand 0']
  #allocation4 [shape = 'u8[512]{0}', space=smem, size = 0x200, scoped, tag = 'prefetched SMEM operand 1']
  %s0 = inlined_call_operand.vmem [shape: s32[3], index: 0, kind: input, shape index: {}]
  %s1 = inlined_call_operand.vmem [shape: s32[3], index: 1, kind: input, shape index: {}]
  %s2 = inlined_call_operand.vmem [shape: f32[384,4], index: 2, kind: input, shape index: {}]
  %s3 = inlined_call_operand.hbm [shape: f32[2,1,24,2048], index: 3, kind: input, shape index: {}]
  %s4 = inlined_call_operand.hbm [shape: f32[1536,128], index: 4, kind: output, shape index: {}]
  %s5 = sld [smem:[#allocation0]]
  $region49: #{tpu_custom_call.1} parent=0
    _
  %s7 = ssub.s32 1, %s5
  %s8 = scalar_select 0, %s7, %s5
  %s10 = sshll.u32 %s0, 4
  %s11 = int_to_ptr.vmem [resolvable:$true] %s10
  %13 = dma.vmem_to_smem %s11, 16, [#allocation3], [#allocation2]
  %s15 = sshll.u32 %s1, 4
  %s16 = int_to_ptr.vmem [resolvable:$true] %s15
  %18 = dma.vmem_to_smem %s16, 16, [#allocation4], [#allocation2]
  %20 = dma.done [#allocation2], 32
  %21 = sfence
  $region1: #{tpu_custom_call.1} parent=0
    #allocation5 [shape = 'u8[393216]{0}', space=vmem, size = 0x60000, scoped, tag = 'input window, operand 3']
    #allocation6 [shape = 's32[2]{0}', space=sflag, size = 0x8, scoped, tag = 'scoped memory for tpu_custom_call.1']
    #allocation7 [shape = 's32[2]{0}', space=sflag, size = 0x8, scoped, tag = 'scoped memory for tpu_custom_call.1']
    #allocation8 [shape = 'u8[524288]{0}', space=vmem, size = 0x80000, scoped, tag = 'output window, operand 0']
    %22 = vsyncpa [#allocation6], 0
    %s23 = scalar_lea.sflag [#allocation6], 1
    %24 = vsyncpa %s23, 0
    %25 = vsyncpa [#allocation7], 0
    %s26 = scalar_lea.sflag [#allocation7], 1
    %27 = vsyncpa %s26, 0
    loop: start=0, step=1, limit=5
    $region2: #{tpu_custom_call.1} parent=1 // loop_pre_header
      _
    $region3: #{tpu_custom_call.1} parent=1 // loop_header
      %s29 = sphi 0, %s33
      %p30 = scmp.ge.s32.totalorder %s29, 5
      %s36 = sphi 0, %s48
      %s37 = sphi 0, %s44
      %s38 = sphi 0, %s36
      %s39 = sphi 0, %s37
      %s40 = sphi 0, %s38
      %s41 = sphi 0, %s39
      %s51 = sphi 0, %s53
      %s54 = sphi 0, %s51
      %s55 = sphi 0, %s54
      %s71 = sphi 0, %s55
      %s81 = sphi 0, %s83
      %s84 = sphi 0, %s81
      %s85 = sphi 0, %s84
      %s101 = sphi 0, %s85
      %s109 = sphi 0, %s111
      %s112 = sphi 0, %s109
      %s113 = sphi 0, %s112
      %s129 = sphi 0, %s113
    $region4: #{tpu_custom_call.1} parent=1 // loop_header_branch
      %32 = sbr.rel (%p30) target = $region8
    $region5: #{tpu_custom_call.1} parent=1 // loop_body
      %s34 = ssub.s32 %s29, 1
      %s35 = ssub.s32 %s29, 2
      %s42 = sadd.s32 1, %s37
      %p43 = scmp.ge.s32.totalorder %s42, 1
      %s44 = scalar_select %p43, 0, %s42
      %s45 = sadd.s32 1, %s36
      %s46 = scalar_select %p43, %s45, %s36
      %p47 = scmp.ge.s32.totalorder %s46, 3
      %s48 = scalar_select %p47, 0, %s46
      %s49 = ssub.s32 %s36, %s48
      %p50 = scmp.eq.s32.totalorder %s49, 0
      %s52 = sadd.s32 %s51, 1
      %s53 = scalar_select %p50, %s51, %s52
      %p56 = pneg %p50
      %p57 = scmp.eq.s32.totalorder %s29, 2
      %p58 = por %p56, %p57
      %p59 = scmp.ne.s32.totalorder %s51, %s54
      %p60 = scmp.eq.s32.totalorder %s29, 0
      %p61 = por %p59, %p60
      %p62 = scmp.ne.s32.totalorder %s51, %s54
      %p63 = scmp.eq.s32.totalorder %s34, 2
      %p64 = por %p62, %p63
      %p65 = scmp.ne.s32.totalorder %s54, %s55
      %p66 = scmp.eq.s32.totalorder %s34, 0
      %p67 = por %p65, %p66
      %p68 = scmp.ne.s32.totalorder %s54, %s55
      %p69 = scmp.eq.s32.totalorder %s35, 2
      %p70 = por %p68, %p69
      %p72 = scmp.ne.s32.totalorder %s55, %s71
      %p73 = scmp.eq.s32.totalorder %s35, 0
      %p74 = por %p72, %p73
      %s75 = sld [smem:[#allocation3 + %s36]]
      %s76 = sld [smem:[#allocation3 + %s48]]
      %s77 = ssub.s32 %s75, %s76
      %s78 = ssub.s32 %s37, %s44
      %s79 = sor.u32 %s77, %s78
      %p80 = scmp.eq.s32.totalorder %s79, 0
      %s82 = sadd.s32 %s81, 1
      %s83 = scalar_select %p80, %s81, %s82
      %p86 = pneg %p80
      %p87 = scmp.eq.s32.totalorder %s29, 2
      %p88 = por %p86, %p87
      %p89 = scmp.ne.s32.totalorder %s81, %s84
      %p90 = scmp.eq.s32.totalorder %s29, 0
      %p91 = por %p89, %p90
      %p92 = scmp.ne.s32.totalorder %s81, %s84
      %p93 = scmp.eq.s32.totalorder %s34, 2
      %p94 = por %p92, %p93
      %p95 = scmp.ne.s32.totalorder %s84, %s85
      %p96 = scmp.eq.s32.totalorder %s34, 0
      %p97 = por %p95, %p96
      %p98 = scmp.ne.s32.totalorder %s84, %s85
      %p99 = scmp.eq.s32.totalorder %s35, 2
      %p100 = por %p98, %p99
      %p102 = scmp.ne.s32.totalorder %s85, %s101
      %p103 = scmp.eq.s32.totalorder %s35, 0
      %p104 = por %p102, %p103
      %s105 = ssub.s32 %s36, %s48
      %s106 = ssub.s32 %s37, %s44
      %s107 = sor.u32 %s105, %s106
      %p108 = scmp.eq.s32.totalorder %s107, 0
      %s110 = sadd.s32 %s109, 1
      %s111 = scalar_select %p108, %s109, %s110
      %p114 = pneg %p108
      %p115 = scmp.eq.s32.totalorder %s29, 2
      %p116 = por %p114, %p115
      %p117 = scmp.ne.s32.totalorder %s109, %s112
      %p118 = scmp.eq.s32.totalorder %s29, 0
      %p119 = por %p117, %p118
      %p120 = scmp.ne.s32.totalorder %s109, %s112
      %p121 = scmp.eq.s32.totalorder %s34, 2
      %p122 = por %p120, %p121
      %p123 = scmp.ne.s32.totalorder %s112, %s113
      %p124 = scmp.eq.s32.totalorder %s34, 0
      %p125 = por %p123, %p124
      %p126 = scmp.ne.s32.totalorder %s112, %s113
      %p127 = scmp.eq.s32.totalorder %s35, 2
      %p128 = por %p126, %p127
      %p130 = scmp.ne.s32.totalorder %s113, %s129
      %p131 = scmp.eq.s32.totalorder %s35, 0
      %p132 = por %p130, %p131
      %p133 = scmp.le.s32.totalorder 1, %s29
      %p134 = scmp.lt.s32.totalorder %s29, 4
      %p135 = pnand %p133, %p134
      %p136 = pneg %p135
      // Predicated region
      $region9: #{tpu_custom_call.1} parent=5 // pred_check
        _
      $region10: #{tpu_custom_call.1} parent=5 // pred_check_branch
        %138 = sbr.rel (%p135) target = $region12
      $region11: #{tpu_custom_call.1} parent=5 // pred_region
        %s139 = ssub.s32 %s29, 1
      $region12: #{tpu_custom_call.1} parent=5 // pred_fallthru
        _
      %p140 = scmp.lt.s32.totalorder %s29, 3
      // Predicated region
      $region13: #{tpu_custom_call.1} parent=5 // pred_check
        %p141 = pneg %p140
      $region14: #{tpu_custom_call.1} parent=5 // pred_check_branch
        %143 = sbr.rel (%p141) target = $region16
      $region15: #{tpu_custom_call.1} parent=5 // pred_region
        // Predicated region
        $region17: #{tpu_custom_call.1} parent=15 // pred_check
          %p144 = pneg %p61
        $region18: #{tpu_custom_call.1} parent=15 // pred_check_branch
          %146 = sbr.rel (%p144) target = $region20
        $region19: #{tpu_custom_call.1} parent=15 // pred_region
          %s147 = smul.u32 16, %s36
          %p148 = scmp.lt.s32.totalorder %s147, 47
          %s149 = scalar_select %p148, %s147, 47
          %s150 = smul.addr %s149, 8
          %s151 = scalar_lea.vmem %s2, %s150
          %s152 = smul.u32 16, %s36
        $region20: #{tpu_custom_call.1} parent=15 // pred_fallthru
          _
        // Predicated region
        $region21: #{tpu_custom_call.1} parent=15 // pred_check
          %p153 = pneg %p91
        $region22: #{tpu_custom_call.1} parent=15 // pred_check_branch
          %155 = sbr.rel (%p153) target = $region24
        $region23: #{tpu_custom_call.1} parent=15 // pred_region
          %s156 = sand.u32 %s81, 1
          %s157 = scalar_lea.sflag [#allocation6], %s156
          %s158 = sand.u32 %s81, 1
          %s159 = smul.addr %s158, 384
          %s160 = scalar_lea.vmem [#allocation5], %s159
          %s161 = sld [smem:[#allocation3 + %s36]]
          %163 = vsyncadd %s157, 0
          %s164 = smul.addr %s37, 48
          %s165 = smul.addr %s161, 48
          %s166 = sadd.s32 %s164, %s165
          %s167 = smul.addr %s166, 8
          %s168 = scalar_lea.hbm %s3, %s167
          %s169 = sshll.u32 %s168, 4
          %s170 = int_to_ptr.hbm [resolvable:$true] %s169
          %s171 = sshll.u32 %s160, 4
          %s172 = int_to_ptr.vmem [resolvable:$true] %s171
          %177 = dma.hbm_to_vmem [thread:$0]  %s170, 6144, %s172, %s157, 2048, 2048, 128
        $region24: #{tpu_custom_call.1} parent=15 // pred_fallthru
          _
      $region16: #{tpu_custom_call.1} parent=5 // pred_fallthru
        _
      %p178 = scmp.le.s32.totalorder 1, %s29
      %p179 = scmp.lt.s32.totalorder %s29, 4
      %p180 = pnand %p178, %p179
      %p181 = pneg %p180
      // Predicated region
      $region25: #{tpu_custom_call.1} parent=5 // pred_check
        _
      $region26: #{tpu_custom_call.1} parent=5 // pred_check_branch
        %183 = sbr.rel (%p180) target = $region28
      $region27: #{tpu_custom_call.1} parent=5 // pred_region
        %s184 = ssub.s32 %s29, 1
        %s185 = sand.u32 %s84, 1
        %s186 = scalar_lea.sflag [#allocation6], %s185
        %s187 = sand.u32 %s84, 1
        %s188 = smul.addr %s187, 384
        %s189 = scalar_lea.vmem [#allocation5], %s188
        // Predicated region
        $region29: #{tpu_custom_call.1} parent=27 // pred_check
          %p190 = pneg %p97
        $region30: #{tpu_custom_call.1} parent=27 // pred_check_branch
          %192 = sbr.rel (%p190) target = $region32
        $region31: #{tpu_custom_call.1} parent=27 // pred_region
          %194 = dma.done %s186, 6144
        $region32: #{tpu_custom_call.1} parent=27 // pred_fallthru
          _
        %s195 = smul.u32 16, %s38
        %p196 = scmp.lt.s32.totalorder %s195, 47
        %s197 = scalar_select %p196, %s195, 47
        %s198 = smul.addr %s197, 8
        %s199 = scalar_lea.vmem %s2, %s198
        %p200 = pneg %p67
        %p201 = pneg %p64
        %s202 = sand.u32 %s84, 1
        %s203 = scalar_lea.sflag [#allocation6], %s202
        %s204 = sand.u32 %s84, 1
        %s205 = smul.addr %s204, 384
        %s206 = scalar_lea.vmem [#allocation5], %s205
        %p207 = pneg %p97
        %p208 = pneg %p94
        %p209 = pneg %p125
        %p210 = pneg %p122
        %s211 = sand.u32 %s112, 1
        %s212 = scalar_lea.sflag [#allocation7], %s211
        %s213 = sand.u32 %s112, 1
        %s214 = smul.addr %s213, 512
        %s215 = scalar_lea.vmem [#allocation8], %s214
        %s216 = smul.u32 16, %s38
        %p217 = scmp.lt.s32.totalorder %s216, 47
        %s218 = scalar_select %p217, %s216, 47
        %s219 = smul.addr %s218, 8
        %s220 = scalar_lea.vmem %s2, %s219
        %s221 = smul.u32 16, %s38
        %s222 = sld [smem:[#allocation3 + %s38]]
        %s223 = smul.u32 64, %s38
        %s224 = sld [smem:[#allocation4 + %s38]]
        %p225 = scmp.gt.s32.totalorder %s224, 0
        // Predicated region
        $region33: #{tpu_custom_call.1} parent=27 // pred_check
          %p226 = pneg %p225
        $region34: #{tpu_custom_call.1} parent=27 // pred_check_branch
          %228 = sbr.rel (%p226) target = $region36
        $region35: #{tpu_custom_call.1} parent=27 // pred_region
          %v229 = vlaneseq
          %v230 = vand.u32 %v229, 127
          %v231 = vcvt.s32.f32 %v230
          %v232 = vld [vmem:[%s220] sm:$0xff]
          %v233 = vld [vmem:[%s220 + $0x8] sm:$0xff]
          %v234 = vld [vmem:[%s220 + $0x10] sm:$0xff]
          %v235 = vld [vmem:[%s220 + $0x18] sm:$0xff]
          %v236 = vld [vmem:[%s220 + $0x20] sm:$0xff]
          %v237 = vld [vmem:[%s220 + $0x28] sm:$0xff]
          %v238 = vld [vmem:[%s220 + $0x30] sm:$0xff]
          %v239 = vld [vmem:[%s220 + $0x38] sm:$0xff]
          %v240 = vld [vmem:[%s220 + $0x40] sm:$0xff]
          %v241 = vld [vmem:[%s220 + $0x48] sm:$0xff]
          %v242 = vld [vmem:[%s220 + $0x50] sm:$0xff]
          %v243 = vld [vmem:[%s220 + $0x58] sm:$0xff]
          %v244 = vld [vmem:[%s220 + $0x60] sm:$0xff]
          %v245 = vld [vmem:[%s220 + $0x68] sm:$0xff]
          %v246 = vld [vmem:[%s220 + $0x70] sm:$0xff]
          %v247 = vld [vmem:[%s220 + $0x78] sm:$0xff]
          %v248 = vmul.f32 %v232, 0.25
          %v249 = vmul.f32 %v233, 0.25
          %v250 = vmul.f32 %v234, 0.25
          %v251 = vmul.f32 %v235, 0.25
          %v252 = vmul.f32 %v236, 0.25
          %v253 = vmul.f32 %v237, 0.25
          %v254 = vmul.f32 %v238, 0.25
          %v255 = vmul.f32 %v239, 0.25
          %v256 = vmul.f32 %v240, 0.25
          %v257 = vmul.f32 %v241, 0.25
          %v258 = vmul.f32 %v242, 0.25
          %v259 = vmul.f32 %v243, 0.25
          %v260 = vmul.f32 %v244, 0.25
          %v261 = vmul.f32 %v245, 0.25
          %v262 = vmul.f32 %v246, 0.25
          %v263 = vmul.f32 %v247, 0.25
          %280 = vrot.lane.b32.xlu0 %v248, 127
          %v281 = vpop.permute.xlu0 %280
          %282 = vrot.lane.b32.xlu0 %v249, 127
          %v283 = vpop.permute.xlu0 %282
          %284 = vrot.lane.b32.xlu0 %v250, 127
          %v285 = vpop.permute.xlu0 %284
          %286 = vrot.lane.b32.xlu0 %v251, 127
          %v287 = vpop.permute.xlu0 %286
          %288 = vrot.lane.b32.xlu0 %v252, 127
          %v289 = vpop.permute.xlu0 %288
          %290 = vrot.lane.b32.xlu0 %v253, 127
          %v291 = vpop.permute.xlu0 %290
          %292 = vrot.lane.b32.xlu0 %v254, 127
          %v293 = vpop.permute.xlu0 %292
          %294 = vrot.lane.b32.xlu0 %v255, 127
          %v295 = vpop.permute.xlu0 %294
          %296 = vrot.lane.b32.xlu0 %v256, 127
          %v297 = vpop.permute.xlu0 %296
          %298 = vrot.lane.b32.xlu0 %v257, 127
          %v299 = vpop.permute.xlu0 %298
          %300 = vrot.lane.b32.xlu0 %v258, 127
          %v301 = vpop.permute.xlu0 %300
          %302 = vrot.lane.b32.xlu0 %v259, 127
          %v303 = vpop.permute.xlu0 %302
          %304 = vrot.lane.b32.xlu0 %v260, 127
          %v305 = vpop.permute.xlu0 %304
          %306 = vrot.lane.b32.xlu0 %v261, 127
          %v307 = vpop.permute.xlu0 %306
          %308 = vrot.lane.b32.xlu0 %v262, 127
          %v309 = vpop.permute.xlu0 %308
          %310 = vrot.lane.b32.xlu0 %v263, 127
          %v311 = vpop.permute.xlu0 %310
          %v328 = vadd.f32 %v232, %v281
          %v329 = vadd.f32 %v233, %v283
          %v330 = vadd.f32 %v234, %v285
          %v331 = vadd.f32 %v235, %v287
          %v332 = vadd.f32 %v236, %v289
          %v333 = vadd.f32 %v237, %v291
          %v334 = vadd.f32 %v238, %v293
          %v335 = vadd.f32 %v239, %v295
          %v336 = vadd.f32 %v240, %v297
          %v337 = vadd.f32 %v241, %v299
          %v338 = vadd.f32 %v242, %v301
          %v339 = vadd.f32 %v243, %v303
          %v340 = vadd.f32 %v244, %v305
          %v341 = vadd.f32 %v245, %v307
          %v342 = vadd.f32 %v246, %v309
          %v343 = vadd.f32 %v247, %v311
          %vm344 = vcmp.ge.f32.partialorder %v328, -1.0
          %vm345 = vcmp.ge.f32.partialorder %v329, -1.0
          %vm346 = vcmp.ge.f32.partialorder %v330, -1.0
          %vm347 = vcmp.ge.f32.partialorder %v331, -1.0
          %vm348 = vcmp.ge.f32.partialorder %v332, -1.0
          %vm349 = vcmp.ge.f32.partialorder %v333, -1.0
          %vm350 = vcmp.ge.f32.partialorder %v334, -1.0
          %vm351 = vcmp.ge.f32.partialorder %v335, -1.0
          %vm352 = vcmp.ge.f32.partialorder %v336, -1.0
          %vm353 = vcmp.ge.f32.partialorder %v337, -1.0
          %vm354 = vcmp.ge.f32.partialorder %v338, -1.0
          %vm355 = vcmp.ge.f32.partialorder %v339, -1.0
          %vm356 = vcmp.ge.f32.partialorder %v340, -1.0
          %vm357 = vcmp.ge.f32.partialorder %v341, -1.0
          %vm358 = vcmp.ge.f32.partialorder %v342, -1.0
          %vm359 = vcmp.ge.f32.partialorder %v343, -1.0
          %vm360 = vcmp.le.f32.partialorder %v328, 24.0
          %vm361 = vcmp.le.f32.partialorder %v329, 24.0
          %vm362 = vcmp.le.f32.partialorder %v330, 24.0
          %vm363 = vcmp.le.f32.partialorder %v331, 24.0
          %vm364 = vcmp.le.f32.partialorder %v332, 24.0
          %vm365 = vcmp.le.f32.partialorder %v333, 24.0
          %vm366 = vcmp.le.f32.partialorder %v334, 24.0
          %vm367 = vcmp.le.f32.partialorder %v335, 24.0
          %vm368 = vcmp.le.f32.partialorder %v336, 24.0
          %vm369 = vcmp.le.f32.partialorder %v337, 24.0
          %vm370 = vcmp.le.f32.partialorder %v338, 24.0
          %vm371 = vcmp.le.f32.partialorder %v339, 24.0
          %vm372 = vcmp.le.f32.partialorder %v340, 24.0
          %vm373 = vcmp.le.f32.partialorder %v341, 24.0
          %vm374 = vcmp.le.f32.partialorder %v342, 24.0
          %vm375 = vcmp.le.f32.partialorder %v343, 24.0
          %vm376 = vmand %vm344, %vm360
          %vm377 = vmand %vm345, %vm361
          %vm378 = vmand %vm346, %vm362
          %vm379 = vmand %vm347, %vm363
          %vm380 = vmand %vm348, %vm364
          %vm381 = vmand %vm349, %vm365
          %vm382 = vmand %vm350, %vm366
          %vm383 = vmand %vm351, %vm367
          %vm384 = vmand %vm352, %vm368
          %vm385 = vmand %vm353, %vm369
          %vm386 = vmand %vm354, %vm370
          %vm387 = vmand %vm355, %vm371
          %vm388 = vmand %vm356, %vm372
          %vm389 = vmand %vm357, %vm373
          %vm390 = vmand %vm358, %vm374
          %vm391 = vmand %vm359, %vm375
          %v392 = vmax.f32 %v328, 0.0
          %v393 = vmax.f32 %v329, 0.0
          %v394 = vmax.f32 %v330, 0.0
          %v395 = vmax.f32 %v331, 0.0
          %v396 = vmax.f32 %v332, 0.0
          %v397 = vmax.f32 %v333, 0.0
          %v398 = vmax.f32 %v334, 0.0
          %v399 = vmax.f32 %v335, 0.0
          %v400 = vmax.f32 %v336, 0.0
          %v401 = vmax.f32 %v337, 0.0
          %v402 = vmax.f32 %v338, 0.0
          %v403 = vmax.f32 %v339, 0.0
          %v404 = vmax.f32 %v340, 0.0
          %v405 = vmax.f32 %v341, 0.0
          %v406 = vmax.f32 %v342, 0.0
          %v407 = vmax.f32 %v343, 0.0
          %v408 = vmin.f32 %v392, 23.0
          %v409 = vmin.f32 %v393, 23.0
          %v410 = vmin.f32 %v394, 23.0
          %v411 = vmin.f32 %v395, 23.0
          %v412 = vmin.f32 %v396, 23.0
          %v413 = vmin.f32 %v397, 23.0
          %v414 = vmin.f32 %v398, 23.0
          %v415 = vmin.f32 %v399, 23.0
          %v416 = vmin.f32 %v400, 23.0
          %v417 = vmin.f32 %v401, 23.0
          %v418 = vmin.f32 %v402, 23.0
          %v419 = vmin.f32 %v403, 23.0
          %v420 = vmin.f32 %v404, 23.0
          %v421 = vmin.f32 %v405, 23.0
          %v422 = vmin.f32 %v406, 23.0
          %v423 = vmin.f32 %v407, 23.0
          %425 = vset.pattern.permute.xlu0 0
          %426 = vperm.xlu0 %425, %v408
          %v427 = vpop.permute.xlu0 %426
          %430 = vset.pattern.permute.xlu0 0
          %431 = vperm.xlu0 %430, %v409
          %v432 = vpop.permute.xlu0 %431
          %435 = vset.pattern.permute.xlu0 0
          %436 = vperm.xlu0 %435, %v410
          %v437 = vpop.permute.xlu0 %436
          %440 = vset.pattern.permute.xlu0 0
          %441 = vperm.xlu0 %440, %v411
          %v442 = vpop.permute.xlu0 %441
          %445 = vset.pattern.permute.xlu0 0
          %446 = vperm.xlu0 %445, %v412
          %v447 = vpop.permute.xlu0 %446
          %450 = vset.pattern.permute.xlu0 0
          %451 = vperm.xlu0 %450, %v413
          %v452 = vpop.permute.xlu0 %451
          %455 = vset.pattern.permute.xlu0 0
          %456 = vperm.xlu0 %455, %v414
          %v457 = vpop.permute.xlu0 %456
          %460 = vset.pattern.permute.xlu0 0
          %461 = vperm.xlu0 %460, %v415
          %v462 = vpop.permute.xlu0 %461
          %465 = vset.pattern.permute.xlu0 0
          %466 = vperm.xlu0 %465, %v416
          %v467 = vpop.permute.xlu0 %466
          %470 = vset.pattern.permute.xlu0 0
          %471 = vperm.xlu0 %470, %v417
          %v472 = vpop.permute.xlu0 %471
          %475 = vset.pattern.permute.xlu0 0
          %476 = vperm.xlu0 %475, %v418
          %v477 = vpop.permute.xlu0 %476
          %480 = vset.pattern.permute.xlu0 0
          %481 = vperm.xlu0 %480, %v419
          %v482 = vpop.permute.xlu0 %481
          %485 = vset.pattern.permute.xlu0 0
          %486 = vperm.xlu0 %485, %v420
          %v487 = vpop.permute.xlu0 %486
          %490 = vset.pattern.permute.xlu0 0
          %491 = vperm.xlu0 %490, %v421
          %v492 = vpop.permute.xlu0 %491
          %495 = vset.pattern.permute.xlu0 0
          %496 = vperm.xlu0 %495, %v422
          %v497 = vpop.permute.xlu0 %496
          %500 = vset.pattern.permute.xlu0 0
          %501 = vperm.xlu0 %500, %v423
          %v502 = vpop.permute.xlu0 %501
          %v504 = vsub.f32 %v427, %v231
          %v505 = vsub.f32 %v432, %v231
          %v506 = vsub.f32 %v437, %v231
          %v507 = vsub.f32 %v442, %v231
          %v508 = vsub.f32 %v447, %v231
          %v509 = vsub.f32 %v452, %v231
          %v510 = vsub.f32 %v457, %v231
          %v511 = vsub.f32 %v462, %v231
          %v512 = vsub.f32 %v467, %v231
          %v513 = vsub.f32 %v472, %v231
          %v514 = vsub.f32 %v477, %v231
          %v515 = vsub.f32 %v482, %v231
          %v516 = vsub.f32 %v487, %v231
          %v517 = vsub.f32 %v492, %v231
          %v518 = vsub.f32 %v497, %v231
          %v519 = vsub.f32 %v502, %v231
          %v520 = vand.u32 2147483647, %v504
          %v521 = vand.u32 2147483647, %v505
          %v522 = vand.u32 2147483647, %v506
          %v523 = vand.u32 2147483647, %v507
          %v524 = vand.u32 2147483647, %v508
          %v525 = vand.u32 2147483647, %v509
          %v526 = vand.u32 2147483647, %v510
          %v527 = vand.u32 2147483647, %v511
          %v528 = vand.u32 2147483647, %v512
          %v529 = vand.u32 2147483647, %v513
          %v530 = vand.u32 2147483647, %v514
          %v531 = vand.u32 2147483647, %v515
          %v532 = vand.u32 2147483647, %v516
          %v533 = vand.u32 2147483647, %v517
          %v534 = vand.u32 2147483647, %v518
          %v535 = vand.u32 2147483647, %v519
          %v536 = vsub.f32 1.0, %v520
          %v537 = vsub.f32 1.0, %v521
          %v538 = vsub.f32 1.0, %v522
          %v539 = vsub.f32 1.0, %v523
          %v540 = vsub.f32 1.0, %v524
          %v541 = vsub.f32 1.0, %v525
          %v542 = vsub.f32 1.0, %v526
          %v543 = vsub.f32 1.0, %v527
          %v544 = vsub.f32 1.0, %v528
          %v545 = vsub.f32 1.0, %v529
          %v546 = vsub.f32 1.0, %v530
          %v547 = vsub.f32 1.0, %v531
          %v548 = vsub.f32 1.0, %v532
          %v549 = vsub.f32 1.0, %v533
          %v550 = vsub.f32 1.0, %v534
          %v551 = vsub.f32 1.0, %v535
          %v552 = vmax.f32 %v536, 0.0
          %v553 = vmax.f32 %v537, 0.0
          %v554 = vmax.f32 %v538, 0.0
          %v555 = vmax.f32 %v539, 0.0
          %v556 = vmax.f32 %v540, 0.0
          %v557 = vmax.f32 %v541, 0.0
          %v558 = vmax.f32 %v542, 0.0
          %v559 = vmax.f32 %v543, 0.0
          %v560 = vmax.f32 %v544, 0.0
          %v561 = vmax.f32 %v545, 0.0
          %v562 = vmax.f32 %v546, 0.0
          %v563 = vmax.f32 %v547, 0.0
          %v564 = vmax.f32 %v548, 0.0
          %v565 = vmax.f32 %v549, 0.0
          %v566 = vmax.f32 %v550, 0.0
          %v567 = vmax.f32 %v551, 0.0
          %v568 = vsel %vm376, 1, 0
          %v569 = vsel %vm377, 1, 0
          %v570 = vsel %vm378, 1, 0
          %v571 = vsel %vm379, 1, 0
          %v572 = vsel %vm380, 1, 0
          %v573 = vsel %vm381, 1, 0
          %v574 = vsel %vm382, 1, 0
          %v575 = vsel %vm383, 1, 0
          %v576 = vsel %vm384, 1, 0
          %v577 = vsel %vm385, 1, 0
          %v578 = vsel %vm386, 1, 0
          %v579 = vsel %vm387, 1, 0
          %v580 = vsel %vm388, 1, 0
          %v581 = vsel %vm389, 1, 0
          %v582 = vsel %vm390, 1, 0
          %v583 = vsel %vm391, 1, 0
          %584 = vset.pattern.permute.xlu0 0
          %585 = vperm.xlu0 %584, %v568
          %v586 = vpop.permute.xlu0 %585
          %587 = vset.pattern.permute.xlu0 0
          %588 = vperm.xlu0 %587, %v569
          %v589 = vpop.permute.xlu0 %588
          %590 = vset.pattern.permute.xlu0 0
          %591 = vperm.xlu0 %590, %v570
          %v592 = vpop.permute.xlu0 %591
          %593 = vset.pattern.permute.xlu0 0
          %594 = vperm.xlu0 %593, %v571
          %v595 = vpop.permute.xlu0 %594
          %596 = vset.pattern.permute.xlu0 0
          %597 = vperm.xlu0 %596, %v572
          %v598 = vpop.permute.xlu0 %597
          %599 = vset.pattern.permute.xlu0 0
          %600 = vperm.xlu0 %599, %v573
          %v601 = vpop.permute.xlu0 %600
          %602 = vset.pattern.permute.xlu0 0
          %603 = vperm.xlu0 %602, %v574
          %v604 = vpop.permute.xlu0 %603
          %605 = vset.pattern.permute.xlu0 0
          %606 = vperm.xlu0 %605, %v575
          %v607 = vpop.permute.xlu0 %606
          %608 = vset.pattern.permute.xlu0 0
          %609 = vperm.xlu0 %608, %v576
          %v610 = vpop.permute.xlu0 %609
          %611 = vset.pattern.permute.xlu0 0
          %612 = vperm.xlu0 %611, %v577
          %v613 = vpop.permute.xlu0 %612
          %614 = vset.pattern.permute.xlu0 0
          %615 = vperm.xlu0 %614, %v578
          %v616 = vpop.permute.xlu0 %615
          %617 = vset.pattern.permute.xlu0 0
          %618 = vperm.xlu0 %617, %v579
          %v619 = vpop.permute.xlu0 %618
          %620 = vset.pattern.permute.xlu0 0
          %621 = vperm.xlu0 %620, %v580
          %v622 = vpop.permute.xlu0 %621
          %623 = vset.pattern.permute.xlu0 0
          %624 = vperm.xlu0 %623, %v581
          %v625 = vpop.permute.xlu0 %624
          %626 = vset.pattern.permute.xlu0 0
          %627 = vperm.xlu0 %626, %v582
          %v628 = vpop.permute.xlu0 %627
          %629 = vset.pattern.permute.xlu0 0
          %630 = vperm.xlu0 %629, %v583
          %v631 = vpop.permute.xlu0 %630
          %vm632 = vcmp.eq.s32.totalorder %v586, 1
          %vm633 = vcmp.eq.s32.totalorder %v589, 1
          %vm634 = vcmp.eq.s32.totalorder %v592, 1
          %vm635 = vcmp.eq.s32.totalorder %v595, 1
          %vm636 = vcmp.eq.s32.totalorder %v598, 1
          %vm637 = vcmp.eq.s32.totalorder %v601, 1
          %vm638 = vcmp.eq.s32.totalorder %v604, 1
          %vm639 = vcmp.eq.s32.totalorder %v607, 1
          %vm640 = vcmp.eq.s32.totalorder %v610, 1
          %vm641 = vcmp.eq.s32.totalorder %v613, 1
          %vm642 = vcmp.eq.s32.totalorder %v616, 1
          %vm643 = vcmp.eq.s32.totalorder %v619, 1
          %vm644 = vcmp.eq.s32.totalorder %v622, 1
          %vm645 = vcmp.eq.s32.totalorder %v625, 1
          %vm646 = vcmp.eq.s32.totalorder %v628, 1
          %vm647 = vcmp.eq.s32.totalorder %v631, 1
          %v648 = vsel %vm632, %v552, 0.0
          %v649 = vsel %vm633, %v553, 0.0
          %v650 = vsel %vm634, %v554, 0.0
          %v651 = vsel %vm635, %v555, 0.0
          %v652 = vsel %vm636, %v556, 0.0
          %v653 = vsel %vm637, %v557, 0.0
          %v654 = vsel %vm638, %v558, 0.0
          %v655 = vsel %vm639, %v559, 0.0
          %v656 = vsel %vm640, %v560, 0.0
          %v657 = vsel %vm641, %v561, 0.0
          %v658 = vsel %vm642, %v562, 0.0
          %v659 = vsel %vm643, %v563, 0.0
          %v660 = vsel %vm644, %v564, 0.0
          %v661 = vsel %vm645, %v565, 0.0
          %v662 = vsel %vm646, %v566, 0.0
          %v663 = vsel %vm647, %v567, 0.0
          %v664 = vadd.f32 %v648, 0.0
          %v665 = vadd.f32 %v649, 0.0
          %v666 = vadd.f32 %v650, 0.0
          %v667 = vadd.f32 %v651, 0.0
          %v668 = vadd.f32 %v652, 0.0
          %v669 = vadd.f32 %v653, 0.0
          %v670 = vadd.f32 %v654, 0.0
          %v671 = vadd.f32 %v655, 0.0
          %v672 = vadd.f32 %v656, 0.0
          %v673 = vadd.f32 %v657, 0.0
          %v674 = vadd.f32 %v658, 0.0
          %v675 = vadd.f32 %v659, 0.0
          %v676 = vadd.f32 %v660, 0.0
          %v677 = vadd.f32 %v661, 0.0
          %v678 = vadd.f32 %v662, 0.0
          %v679 = vadd.f32 %v663, 0.0
          %vm680 = vcmp.le.f32.partialorder %v328, 16.0
          %vm681 = vcmp.le.f32.partialorder %v329, 16.0
          %vm682 = vcmp.le.f32.partialorder %v330, 16.0
          %vm683 = vcmp.le.f32.partialorder %v331, 16.0
          %vm684 = vcmp.le.f32.partialorder %v332, 16.0
          %vm685 = vcmp.le.f32.partialorder %v333, 16.0
          %vm686 = vcmp.le.f32.partialorder %v334, 16.0
          %vm687 = vcmp.le.f32.partialorder %v335, 16.0
          %vm688 = vcmp.le.f32.partialorder %v336, 16.0
          %vm689 = vcmp.le.f32.partialorder %v337, 16.0
          %vm690 = vcmp.le.f32.partialorder %v338, 16.0
          %vm691 = vcmp.le.f32.partialorder %v339, 16.0
          %vm692 = vcmp.le.f32.partialorder %v340, 16.0
          %vm693 = vcmp.le.f32.partialorder %v341, 16.0
          %vm694 = vcmp.le.f32.partialorder %v342, 16.0
          %vm695 = vcmp.le.f32.partialorder %v343, 16.0
          %vm696 = vmand %vm344, %vm680
          %vm697 = vmand %vm345, %vm681
          %vm698 = vmand %vm346, %vm682
          %vm699 = vmand %vm347, %vm683
          %vm700 = vmand %vm348, %vm684
          %vm701 = vmand %vm349, %vm685
          %vm702 = vmand %vm350, %vm686
          %vm703 = vmand %vm351, %vm687
          %vm704 = vmand %vm352, %vm688
          %vm705 = vmand %vm353, %vm689
          %vm706 = vmand %vm354, %vm690
          %vm707 = vmand %vm355, %vm691
          %vm708 = vmand %vm356, %vm692
          %vm709 = vmand %vm357, %vm693
          %vm710 = vmand %vm358, %vm694
          %vm711 = vmand %vm359, %vm695
          %v712 = vmin.f32 %v392, 15.0
          %v713 = vmin.f32 %v393, 15.0
          %v714 = vmin.f32 %v394, 15.0
          %v715 = vmin.f32 %v395, 15.0
          %v716 = vmin.f32 %v396, 15.0
          %v717 = vmin.f32 %v397, 15.0
          %v718 = vmin.f32 %v398, 15.0
          %v719 = vmin.f32 %v399, 15.0
          %v720 = vmin.f32 %v400, 15.0
          %v721 = vmin.f32 %v401, 15.0
          %v722 = vmin.f32 %v402, 15.0
          %v723 = vmin.f32 %v403, 15.0
          %v724 = vmin.f32 %v404, 15.0
          %v725 = vmin.f32 %v405, 15.0
          %v726 = vmin.f32 %v406, 15.0
          %v727 = vmin.f32 %v407, 15.0
          %729 = vset.pattern.permute.xlu0 2
          %730 = vperm.xlu0 %729, %v712
          %v731 = vpop.permute.xlu0 %730
          %734 = vset.pattern.permute.xlu0 2
          %735 = vperm.xlu0 %734, %v713
          %v736 = vpop.permute.xlu0 %735
          %739 = vset.pattern.permute.xlu0 2
          %740 = vperm.xlu0 %739, %v714
          %v741 = vpop.permute.xlu0 %740
          %744 = vset.pattern.permute.xlu0 2
          %745 = vperm.xlu0 %744, %v715
          %v746 = vpop.permute.xlu0 %745
          %749 = vset.pattern.permute.xlu0 2
          %750 = vperm.xlu0 %749, %v716
          %v751 = vpop.permute.xlu0 %750
          %754 = vset.pattern.permute.xlu0 2
          %755 = vperm.xlu0 %754, %v717
          %v756 = vpop.permute.xlu0 %755
          %759 = vset.pattern.permute.xlu0 2
          %760 = vperm.xlu0 %759, %v718
          %v761 = vpop.permute.xlu0 %760
          %764 = vset.pattern.permute.xlu0 2
          %765 = vperm.xlu0 %764, %v719
          %v766 = vpop.permute.xlu0 %765
          %769 = vset.pattern.permute.xlu0 2
          %770 = vperm.xlu0 %769, %v720
          %v771 = vpop.permute.xlu0 %770
          %774 = vset.pattern.permute.xlu0 2
          %775 = vperm.xlu0 %774, %v721
          %v776 = vpop.permute.xlu0 %775
          %779 = vset.pattern.permute.xlu0 2
          %780 = vperm.xlu0 %779, %v722
          %v781 = vpop.permute.xlu0 %780
          %784 = vset.pattern.permute.xlu0 2
          %785 = vperm.xlu0 %784, %v723
          %v786 = vpop.permute.xlu0 %785
          %789 = vset.pattern.permute.xlu0 2
          %790 = vperm.xlu0 %789, %v724
          %v791 = vpop.permute.xlu0 %790
          %794 = vset.pattern.permute.xlu0 2
          %795 = vperm.xlu0 %794, %v725
          %v796 = vpop.permute.xlu0 %795
          %799 = vset.pattern.permute.xlu0 2
          %800 = vperm.xlu0 %799, %v726
          %v801 = vpop.permute.xlu0 %800
          %804 = vset.pattern.permute.xlu0 2
          %805 = vperm.xlu0 %804, %v727
          %v806 = vpop.permute.xlu0 %805
          %v808 = vsub.f32 %v731, %v231
          %v809 = vsub.f32 %v736, %v231
          %v810 = vsub.f32 %v741, %v231
          %v811 = vsub.f32 %v746, %v231
          %v812 = vsub.f32 %v751, %v231
          %v813 = vsub.f32 %v756, %v231
          %v814 = vsub.f32 %v761, %v231
          %v815 = vsub.f32 %v766, %v231
          %v816 = vsub.f32 %v771, %v231
          %v817 = vsub.f32 %v776, %v231
          %v818 = vsub.f32 %v781, %v231
          %v819 = vsub.f32 %v786, %v231
          %v820 = vsub.f32 %v791, %v231
          %v821 = vsub.f32 %v796, %v231
          %v822 = vsub.f32 %v801, %v231
          %v823 = vsub.f32 %v806, %v231
          %v824 = vand.u32 2147483647, %v808
          %v825 = vand.u32 2147483647, %v809
          %v826 = vand.u32 2147483647, %v810
          %v827 = vand.u32 2147483647, %v811
          %v828 = vand.u32 2147483647, %v812
          %v829 = vand.u32 2147483647, %v813
          %v830 = vand.u32 2147483647, %v814
          %v831 = vand.u32 2147483647, %v815
          %v832 = vand.u32 2147483647, %v816
          %v833 = vand.u32 2147483647, %v817
          %v834 = vand.u32 2147483647, %v818
          %v835 = vand.u32 2147483647, %v819
          %v836 = vand.u32 2147483647, %v820
          %v837 = vand.u32 2147483647, %v821
          %v838 = vand.u32 2147483647, %v822
          %v839 = vand.u32 2147483647, %v823
          %v840 = vsub.f32 1.0, %v824
          %v841 = vsub.f32 1.0, %v825
          %v842 = vsub.f32 1.0, %v826
          %v843 = vsub.f32 1.0, %v827
          %v844 = vsub.f32 1.0, %v828
          %v845 = vsub.f32 1.0, %v829
          %v846 = vsub.f32 1.0, %v830
          %v847 = vsub.f32 1.0, %v831
          %v848 = vsub.f32 1.0, %v832
          %v849 = vsub.f32 1.0, %v833
          %v850 = vsub.f32 1.0, %v834
          %v851 = vsub.f32 1.0, %v835
          %v852 = vsub.f32 1.0, %v836
          %v853 = vsub.f32 1.0, %v837
          %v854 = vsub.f32 1.0, %v838
          %v855 = vsub.f32 1.0, %v839
          %v856 = vmax.f32 %v840, 0.0
          %v857 = vmax.f32 %v841, 0.0
          %v858 = vmax.f32 %v842, 0.0
          %v859 = vmax.f32 %v843, 0.0
          %v860 = vmax.f32 %v844, 0.0
          %v861 = vmax.f32 %v845, 0.0
          %v862 = vmax.f32 %v846, 0.0
          %v863 = vmax.f32 %v847, 0.0
          %v864 = vmax.f32 %v848, 0.0
          %v865 = vmax.f32 %v849, 0.0
          %v866 = vmax.f32 %v850, 0.0
          %v867 = vmax.f32 %v851, 0.0
          %v868 = vmax.f32 %v852, 0.0
          %v869 = vmax.f32 %v853, 0.0
          %v870 = vmax.f32 %v854, 0.0
          %v871 = vmax.f32 %v855, 0.0
          %v872 = vsel %vm696, 1, 0
          %v873 = vsel %vm697, 1, 0
          %v874 = vsel %vm698, 1, 0
          %v875 = vsel %vm699, 1, 0
          %v876 = vsel %vm700, 1, 0
          %v877 = vsel %vm701, 1, 0
          %v878 = vsel %vm702, 1, 0
          %v879 = vsel %vm703, 1, 0
          %v880 = vsel %vm704, 1, 0
          %v881 = vsel %vm705, 1, 0
          %v882 = vsel %vm706, 1, 0
          %v883 = vsel %vm707, 1, 0
          %v884 = vsel %vm708, 1, 0
          %v885 = vsel %vm709, 1, 0
          %v886 = vsel %vm710, 1, 0
          %v887 = vsel %vm711, 1, 0
          %888 = vset.pattern.permute.xlu0 2
          %889 = vperm.xlu0 %888, %v872
          %v890 = vpop.permute.xlu0 %889
          %891 = vset.pattern.permute.xlu0 2
          %892 = vperm.xlu0 %891, %v873
          %v893 = vpop.permute.xlu0 %892
          %894 = vset.pattern.permute.xlu0 2
          %895 = vperm.xlu0 %894, %v874
          %v896 = vpop.permute.xlu0 %895
          %897 = vset.pattern.permute.xlu0 2
          %898 = vperm.xlu0 %897, %v875
          %v899 = vpop.permute.xlu0 %898
          %900 = vset.pattern.permute.xlu0 2
          %901 = vperm.xlu0 %900, %v876
          %v902 = vpop.permute.xlu0 %901
          %903 = vset.pattern.permute.xlu0 2
          %904 = vperm.xlu0 %903, %v877
          %v905 = vpop.permute.xlu0 %904
          %906 = vset.pattern.permute.xlu0 2
          %907 = vperm.xlu0 %906, %v878
          %v908 = vpop.permute.xlu0 %907
          %909 = vset.pattern.permute.xlu0 2
          %910 = vperm.xlu0 %909, %v879
          %v911 = vpop.permute.xlu0 %910
          %912 = vset.pattern.permute.xlu0 2
          %913 = vperm.xlu0 %912, %v880
          %v914 = vpop.permute.xlu0 %913
          %915 = vset.pattern.permute.xlu0 2
          %916 = vperm.xlu0 %915, %v881
          %v917 = vpop.permute.xlu0 %916
          %918 = vset.pattern.permute.xlu0 2
          %919 = vperm.xlu0 %918, %v882
          %v920 = vpop.permute.xlu0 %919
          %921 = vset.pattern.permute.xlu0 2
          %922 = vperm.xlu0 %921, %v883
          %v923 = vpop.permute.xlu0 %922
          %924 = vset.pattern.permute.xlu0 2
          %925 = vperm.xlu0 %924, %v884
          %v926 = vpop.permute.xlu0 %925
          %927 = vset.pattern.permute.xlu0 2
          %928 = vperm.xlu0 %927, %v885
          %v929 = vpop.permute.xlu0 %928
          %930 = vset.pattern.permute.xlu0 2
          %931 = vperm.xlu0 %930, %v886
          %v932 = vpop.permute.xlu0 %931
          %933 = vset.pattern.permute.xlu0 2
          %934 = vperm.xlu0 %933, %v887
          %v935 = vpop.permute.xlu0 %934
          %vm936 = vcmp.eq.s32.totalorder %v890, 1
          %vm937 = vcmp.eq.s32.totalorder %v893, 1
          %vm938 = vcmp.eq.s32.totalorder %v896, 1
          %vm939 = vcmp.eq.s32.totalorder %v899, 1
          %vm940 = vcmp.eq.s32.totalorder %v902, 1
          %vm941 = vcmp.eq.s32.totalorder %v905, 1
          %vm942 = vcmp.eq.s32.totalorder %v908, 1
          %vm943 = vcmp.eq.s32.totalorder %v911, 1
          %vm944 = vcmp.eq.s32.totalorder %v914, 1
          %vm945 = vcmp.eq.s32.totalorder %v917, 1
          %vm946 = vcmp.eq.s32.totalorder %v920, 1
          %vm947 = vcmp.eq.s32.totalorder %v923, 1
          %vm948 = vcmp.eq.s32.totalorder %v926, 1
          %vm949 = vcmp.eq.s32.totalorder %v929, 1
          %vm950 = vcmp.eq.s32.totalorder %v932, 1
          %vm951 = vcmp.eq.s32.totalorder %v935, 1
          %v952 = vsel %vm936, %v856, 0.0
          %v953 = vsel %vm937, %v857, 0.0
          %v954 = vsel %vm938, %v858, 0.0
          %v955 = vsel %vm939, %v859, 0.0
          %v956 = vsel %vm940, %v860, 0.0
          %v957 = vsel %vm941, %v861, 0.0
          %v958 = vsel %vm942, %v862, 0.0
          %v959 = vsel %vm943, %v863, 0.0
          %v960 = vsel %vm944, %v864, 0.0
          %v961 = vsel %vm945, %v865, 0.0
          %v962 = vsel %vm946, %v866, 0.0
          %v963 = vsel %vm947, %v867, 0.0
          %v964 = vsel %vm948, %v868, 0.0
          %v965 = vsel %vm949, %v869, 0.0
          %v966 = vsel %vm950, %v870, 0.0
          %v967 = vsel %vm951, %v871, 0.0
          %v968 = vadd.f32 %v952, 0.0
          %v969 = vadd.f32 %v953, 0.0
          %v970 = vadd.f32 %v954, 0.0
          %v971 = vadd.f32 %v955, 0.0
          %v972 = vadd.f32 %v956, 0.0
          %v973 = vadd.f32 %v957, 0.0
          %v974 = vadd.f32 %v958, 0.0
          %v975 = vadd.f32 %v959, 0.0
          %v976 = vadd.f32 %v960, 0.0
          %v977 = vadd.f32 %v961, 0.0
          %v978 = vadd.f32 %v962, 0.0
          %v979 = vadd.f32 %v963, 0.0
          %v980 = vadd.f32 %v964, 0.0
          %v981 = vadd.f32 %v965, 0.0
          %v982 = vadd.f32 %v966, 0.0
          %v983 = vadd.f32 %v967, 0.0
          %v984 = vmul.f32 %v232, 0.75
          %v985 = vmul.f32 %v233, 0.75
          %v986 = vmul.f32 %v234, 0.75
          %v987 = vmul.f32 %v235, 0.75
          %v988 = vmul.f32 %v236, 0.75
          %v989 = vmul.f32 %v237, 0.75
          %v990 = vmul.f32 %v238, 0.75
          %v991 = vmul.f32 %v239, 0.75
          %v992 = vmul.f32 %v240, 0.75
          %v993 = vmul.f32 %v241, 0.75
          %v994 = vmul.f32 %v242, 0.75
          %v995 = vmul.f32 %v243, 0.75
          %v996 = vmul.f32 %v244, 0.75
          %v997 = vmul.f32 %v245, 0.75
          %v998 = vmul.f32 %v246, 0.75
          %v999 = vmul.f32 %v247, 0.75
          %1016 = vrot.lane.b32.xlu0 %v984, 127
          %v1017 = vpop.permute.xlu0 %1016
          %1018 = vrot.lane.b32.xlu0 %v985, 127
          %v1019 = vpop.permute.xlu0 %1018
          %1020 = vrot.lane.b32.xlu0 %v986, 127
          %v1021 = vpop.permute.xlu0 %1020
          %1022 = vrot.lane.b32.xlu0 %v987, 127
          %v1023 = vpop.permute.xlu0 %1022
          %1024 = vrot.lane.b32.xlu0 %v988, 127
          %v1025 = vpop.permute.xlu0 %1024
          %1026 = vrot.lane.b32.xlu0 %v989, 127
          %v1027 = vpop.permute.xlu0 %1026
          %1028 = vrot.lane.b32.xlu0 %v990, 127
          %v1029 = vpop.permute.xlu0 %1028
          %1030 = vrot.lane.b32.xlu0 %v991, 127
          %v1031 = vpop.permute.xlu0 %1030
          %1032 = vrot.lane.b32.xlu0 %v992, 127
          %v1033 = vpop.permute.xlu0 %1032
          %1034 = vrot.lane.b32.xlu0 %v993, 127
          %v1035 = vpop.permute.xlu0 %1034
          %1036 = vrot.lane.b32.xlu0 %v994, 127
          %v1037 = vpop.permute.xlu0 %1036
          %1038 = vrot.lane.b32.xlu0 %v995, 127
          %v1039 = vpop.permute.xlu0 %1038
          %1040 = vrot.lane.b32.xlu0 %v996, 127
          %v1041 = vpop.permute.xlu0 %1040
          %1042 = vrot.lane.b32.xlu0 %v997, 127
          %v1043 = vpop.permute.xlu0 %1042
          %1044 = vrot.lane.b32.xlu0 %v998, 127
          %v1045 = vpop.permute.xlu0 %1044
          %1046 = vrot.lane.b32.xlu0 %v999, 127
          %v1047 = vpop.permute.xlu0 %1046
          %v1064 = vadd.f32 %v232, %v1017
          %v1065 = vadd.f32 %v233, %v1019
          %v1066 = vadd.f32 %v234, %v1021
          %v1067 = vadd.f32 %v235, %v1023
          %v1068 = vadd.f32 %v236, %v1025
          %v1069 = vadd.f32 %v237, %v1027
          %v1070 = vadd.f32 %v238, %v1029
          %v1071 = vadd.f32 %v239, %v1031
          %v1072 = vadd.f32 %v240, %v1033
          %v1073 = vadd.f32 %v241, %v1035
          %v1074 = vadd.f32 %v242, %v1037
          %v1075 = vadd.f32 %v243, %v1039
          %v1076 = vadd.f32 %v244, %v1041
          %v1077 = vadd.f32 %v245, %v1043
          %v1078 = vadd.f32 %v246, %v1045
          %v1079 = vadd.f32 %v247, %v1047
          %vm1080 = vcmp.ge.f32.partialorder %v1064, -1.0
          %vm1081 = vcmp.ge.f32.partialorder %v1065, -1.0
          %vm1082 = vcmp.ge.f32.partialorder %v1066, -1.0
          %vm1083 = vcmp.ge.f32.partialorder %v1067, -1.0
          %vm1084 = vcmp.ge.f32.partialorder %v1068, -1.0
          %vm1085 = vcmp.ge.f32.partialorder %v1069, -1.0
          %vm1086 = vcmp.ge.f32.partialorder %v1070, -1.0
          %vm1087 = vcmp.ge.f32.partialorder %v1071, -1.0
          %vm1088 = vcmp.ge.f32.partialorder %v1072, -1.0
          %vm1089 = vcmp.ge.f32.partialorder %v1073, -1.0
          %vm1090 = vcmp.ge.f32.partialorder %v1074, -1.0
          %vm1091 = vcmp.ge.f32.partialorder %v1075, -1.0
          %vm1092 = vcmp.ge.f32.partialorder %v1076, -1.0
          %vm1093 = vcmp.ge.f32.partialorder %v1077, -1.0
          %vm1094 = vcmp.ge.f32.partialorder %v1078, -1.0
          %vm1095 = vcmp.ge.f32.partialorder %v1079, -1.0
          %vm1096 = vcmp.le.f32.partialorder %v1064, 24.0
          %vm1097 = vcmp.le.f32.partialorder %v1065, 24.0
          %vm1098 = vcmp.le.f32.partialorder %v1066, 24.0
          %vm1099 = vcmp.le.f32.partialorder %v1067, 24.0
          %vm1100 = vcmp.le.f32.partialorder %v1068, 24.0
          %vm1101 = vcmp.le.f32.partialorder %v1069, 24.0
          %vm1102 = vcmp.le.f32.partialorder %v1070, 24.0
          %vm1103 = vcmp.le.f32.partialorder %v1071, 24.0
          %vm1104 = vcmp.le.f32.partialorder %v1072, 24.0
          %vm1105 = vcmp.le.f32.partialorder %v1073, 24.0
          %vm1106 = vcmp.le.f32.partialorder %v1074, 24.0
          %vm1107 = vcmp.le.f32.partialorder %v1075, 24.0
          %vm1108 = vcmp.le.f32.partialorder %v1076, 24.0
          %vm1109 = vcmp.le.f32.partialorder %v1077, 24.0
          %vm1110 = vcmp.le.f32.partialorder %v1078, 24.0
          %vm1111 = vcmp.le.f32.partialorder %v1079, 24.0
          %vm1112 = vmand %vm1080, %vm1096
          %vm1113 = vmand %vm1081, %vm1097
          %vm1114 = vmand %vm1082, %vm1098
          %vm1115 = vmand %vm1083, %vm1099
          %vm1116 = vmand %vm1084, %vm1100
          %vm1117 = vmand %vm1085, %vm1101
          %vm1118 = vmand %vm1086, %vm1102
          %vm1119 = vmand %vm1087, %vm1103
          %vm1120 = vmand %vm1088, %vm1104
          %vm1121 = vmand %vm1089, %vm1105
          %vm1122 = vmand %vm1090, %vm1106
          %vm1123 = vmand %vm1091, %vm1107
          %vm1124 = vmand %vm1092, %vm1108
          %vm1125 = vmand %vm1093, %vm1109
          %vm1126 = vmand %vm1094, %vm1110
          %vm1127 = vmand %vm1095, %vm1111
          %v1128 = vmax.f32 %v1064, 0.0
          %v1129 = vmax.f32 %v1065, 0.0
          %v1130 = vmax.f32 %v1066, 0.0
          %v1131 = vmax.f32 %v1067, 0.0
          %v1132 = vmax.f32 %v1068, 0.0
          %v1133 = vmax.f32 %v1069, 0.0
          %v1134 = vmax.f32 %v1070, 0.0
          %v1135 = vmax.f32 %v1071, 0.0
          %v1136 = vmax.f32 %v1072, 0.0
          %v1137 = vmax.f32 %v1073, 0.0
          %v1138 = vmax.f32 %v1074, 0.0
          %v1139 = vmax.f32 %v1075, 0.0
          %v1140 = vmax.f32 %v1076, 0.0
          %v1141 = vmax.f32 %v1077, 0.0
          %v1142 = vmax.f32 %v1078, 0.0
          %v1143 = vmax.f32 %v1079, 0.0
          %v1144 = vmin.f32 %v1128, 23.0
          %v1145 = vmin.f32 %v1129, 23.0
          %v1146 = vmin.f32 %v1130, 23.0
          %v1147 = vmin.f32 %v1131, 23.0
          %v1148 = vmin.f32 %v1132, 23.0
          %v1149 = vmin.f32 %v1133, 23.0
          %v1150 = vmin.f32 %v1134, 23.0
          %v1151 = vmin.f32 %v1135, 23.0
          %v1152 = vmin.f32 %v1136, 23.0
          %v1153 = vmin.f32 %v1137, 23.0
          %v1154 = vmin.f32 %v1138, 23.0
          %v1155 = vmin.f32 %v1139, 23.0
          %v1156 = vmin.f32 %v1140, 23.0
          %v1157 = vmin.f32 %v1141, 23.0
          %v1158 = vmin.f32 %v1142, 23.0
          %v1159 = vmin.f32 %v1143, 23.0
          %1161 = vset.pattern.permute.xlu0 0
          %1162 = vperm.xlu0 %1161, %v1144
          %v1163 = vpop.permute.xlu0 %1162
          %1166 = vset.pattern.permute.xlu0 0
          %1167 = vperm.xlu0 %1166, %v1145
          %v1168 = vpop.permute.xlu0 %1167
          %1171 = vset.pattern.permute.xlu0 0
          %1172 = vperm.xlu0 %1171, %v1146
          %v1173 = vpop.permute.xlu0 %1172
          %1176 = vset.pattern.permute.xlu0 0
          %1177 = vperm.xlu0 %1176, %v1147
          %v1178 = vpop.permute.xlu0 %1177
          %1181 = vset.pattern.permute.xlu0 0
          %1182 = vperm.xlu0 %1181, %v1148
          %v1183 = vpop.permute.xlu0 %1182
          %1186 = vset.pattern.permute.xlu0 0
          %1187 = vperm.xlu0 %1186, %v1149
          %v1188 = vpop.permute.xlu0 %1187
          %1191 = vset.pattern.permute.xlu0 0
          %1192 = vperm.xlu0 %1191, %v1150
          %v1193 = vpop.permute.xlu0 %1192
          %1196 = vset.pattern.permute.xlu0 0
          %1197 = vperm.xlu0 %1196, %v1151
          %v1198 = vpop.permute.xlu0 %1197
          %1201 = vset.pattern.permute.xlu0 0
          %1202 = vperm.xlu0 %1201, %v1152
          %v1203 = vpop.permute.xlu0 %1202
          %1206 = vset.pattern.permute.xlu0 0
          %1207 = vperm.xlu0 %1206, %v1153
          %v1208 = vpop.permute.xlu0 %1207
          %1211 = vset.pattern.permute.xlu0 0
          %1212 = vperm.xlu0 %1211, %v1154
          %v1213 = vpop.permute.xlu0 %1212
          %1216 = vset.pattern.permute.xlu0 0
          %1217 = vperm.xlu0 %1216, %v1155
          %v1218 = vpop.permute.xlu0 %1217
          %1221 = vset.pattern.permute.xlu0 0
          %1222 = vperm.xlu0 %1221, %v1156
          %v1223 = vpop.permute.xlu0 %1222
          %1226 = vset.pattern.permute.xlu0 0
          %1227 = vperm.xlu0 %1226, %v1157
          %v1228 = vpop.permute.xlu0 %1227
          %1231 = vset.pattern.permute.xlu0 0
          %1232 = vperm.xlu0 %1231, %v1158
          %v1233 = vpop.permute.xlu0 %1232
          %1236 = vset.pattern.permute.xlu0 0
          %1237 = vperm.xlu0 %1236, %v1159
          %v1238 = vpop.permute.xlu0 %1237
          %v1240 = vsub.f32 %v1163, %v231
          %v1241 = vsub.f32 %v1168, %v231
          %v1242 = vsub.f32 %v1173, %v231
          %v1243 = vsub.f32 %v1178, %v231
          %v1244 = vsub.f32 %v1183, %v231
          %v1245 = vsub.f32 %v1188, %v231
          %v1246 = vsub.f32 %v1193, %v231
          %v1247 = vsub.f32 %v1198, %v231
          %v1248 = vsub.f32 %v1203, %v231
          %v1249 = vsub.f32 %v1208, %v231
          %v1250 = vsub.f32 %v1213, %v231
          %v1251 = vsub.f32 %v1218, %v231
          %v1252 = vsub.f32 %v1223, %v231
          %v1253 = vsub.f32 %v1228, %v231
          %v1254 = vsub.f32 %v1233, %v231
          %v1255 = vsub.f32 %v1238, %v231
          %v1256 = vand.u32 2147483647, %v1240
          %v1257 = vand.u32 2147483647, %v1241
          %v1258 = vand.u32 2147483647, %v1242
          %v1259 = vand.u32 2147483647, %v1243
          %v1260 = vand.u32 2147483647, %v1244
          %v1261 = vand.u32 2147483647, %v1245
          %v1262 = vand.u32 2147483647, %v1246
          %v1263 = vand.u32 2147483647, %v1247
          %v1264 = vand.u32 2147483647, %v1248
          %v1265 = vand.u32 2147483647, %v1249
          %v1266 = vand.u32 2147483647, %v1250
          %v1267 = vand.u32 2147483647, %v1251
          %v1268 = vand.u32 2147483647, %v1252
          %v1269 = vand.u32 2147483647, %v1253
          %v1270 = vand.u32 2147483647, %v1254
          %v1271 = vand.u32 2147483647, %v1255
          %v1272 = vsub.f32 1.0, %v1256
          %v1273 = vsub.f32 1.0, %v1257
          %v1274 = vsub.f32 1.0, %v1258
          %v1275 = vsub.f32 1.0, %v1259
          %v1276 = vsub.f32 1.0, %v1260
          %v1277 = vsub.f32 1.0, %v1261
          %v1278 = vsub.f32 1.0, %v1262
          %v1279 = vsub.f32 1.0, %v1263
          %v1280 = vsub.f32 1.0, %v1264
          %v1281 = vsub.f32 1.0, %v1265
          %v1282 = vsub.f32 1.0, %v1266
          %v1283 = vsub.f32 1.0, %v1267
          %v1284 = vsub.f32 1.0, %v1268
          %v1285 = vsub.f32 1.0, %v1269
          %v1286 = vsub.f32 1.0, %v1270
          %v1287 = vsub.f32 1.0, %v1271
          %v1288 = vmax.f32 %v1272, 0.0
          %v1289 = vmax.f32 %v1273, 0.0
          %v1290 = vmax.f32 %v1274, 0.0
          %v1291 = vmax.f32 %v1275, 0.0
          %v1292 = vmax.f32 %v1276, 0.0
          %v1293 = vmax.f32 %v1277, 0.0
          %v1294 = vmax.f32 %v1278, 0.0
          %v1295 = vmax.f32 %v1279, 0.0
          %v1296 = vmax.f32 %v1280, 0.0
          %v1297 = vmax.f32 %v1281, 0.0
          %v1298 = vmax.f32 %v1282, 0.0
          %v1299 = vmax.f32 %v1283, 0.0
          %v1300 = vmax.f32 %v1284, 0.0
          %v1301 = vmax.f32 %v1285, 0.0
          %v1302 = vmax.f32 %v1286, 0.0
          %v1303 = vmax.f32 %v1287, 0.0
          %v1304 = vsel %vm1112, 1, 0
          %v1305 = vsel %vm1113, 1, 0
          %v1306 = vsel %vm1114, 1, 0
          %v1307 = vsel %vm1115, 1, 0
          %v1308 = vsel %vm1116, 1, 0
          %v1309 = vsel %vm1117, 1, 0
          %v1310 = vsel %vm1118, 1, 0
          %v1311 = vsel %vm1119, 1, 0
          %v1312 = vsel %vm1120, 1, 0
          %v1313 = vsel %vm1121, 1, 0
          %v1314 = vsel %vm1122, 1, 0
          %v1315 = vsel %vm1123, 1, 0
          %v1316 = vsel %vm1124, 1, 0
          %v1317 = vsel %vm1125, 1, 0
          %v1318 = vsel %vm1126, 1, 0
          %v1319 = vsel %vm1127, 1, 0
          %1320 = vset.pattern.permute.xlu0 0
          %1321 = vperm.xlu0 %1320, %v1304
          %v1322 = vpop.permute.xlu0 %1321
          %1323 = vset.pattern.permute.xlu0 0
          %1324 = vperm.xlu0 %1323, %v1305
          %v1325 = vpop.permute.xlu0 %1324
          %1326 = vset.pattern.permute.xlu0 0
          %1327 = vperm.xlu0 %1326, %v1306
          %v1328 = vpop.permute.xlu0 %1327
          %1329 = vset.pattern.permute.xlu0 0
          %1330 = vperm.xlu0 %1329, %v1307
          %v1331 = vpop.permute.xlu0 %1330
          %1332 = vset.pattern.permute.xlu0 0
          %1333 = vperm.xlu0 %1332, %v1308
          %v1334 = vpop.permute.xlu0 %1333
          %1335 = vset.pattern.permute.xlu0 0
          %1336 = vperm.xlu0 %1335, %v1309
          %v1337 = vpop.permute.xlu0 %1336
          %1338 = vset.pattern.permute.xlu0 0
          %1339 = vperm.xlu0 %1338, %v1310
          %v1340 = vpop.permute.xlu0 %1339
          %1341 = vset.pattern.permute.xlu0 0
          %1342 = vperm.xlu0 %1341, %v1311
          %v1343 = vpop.permute.xlu0 %1342
          %1344 = vset.pattern.permute.xlu0 0
          %1345 = vperm.xlu0 %1344, %v1312
          %v1346 = vpop.permute.xlu0 %1345
          %1347 = vset.pattern.permute.xlu0 0
          %1348 = vperm.xlu0 %1347, %v1313
          %v1349 = vpop.permute.xlu0 %1348
          %1350 = vset.pattern.permute.xlu0 0
          %1351 = vperm.xlu0 %1350, %v1314
          %v1352 = vpop.permute.xlu0 %1351
          %1353 = vset.pattern.permute.xlu0 0
          %1354 = vperm.xlu0 %1353, %v1315
          %v1355 = vpop.permute.xlu0 %1354
          %1356 = vset.pattern.permute.xlu0 0
          %1357 = vperm.xlu0 %1356, %v1316
          %v1358 = vpop.permute.xlu0 %1357
          %1359 = vset.pattern.permute.xlu0 0
          %1360 = vperm.xlu0 %1359, %v1317
          %v1361 = vpop.permute.xlu0 %1360
          %1362 = vset.pattern.permute.xlu0 0
          %1363 = vperm.xlu0 %1362, %v1318
          %v1364 = vpop.permute.xlu0 %1363
          %1365 = vset.pattern.permute.xlu0 0
          %1366 = vperm.xlu0 %1365, %v1319
          %v1367 = vpop.permute.xlu0 %1366
          %vm1368 = vcmp.eq.s32.totalorder %v1322, 1
          %vm1369 = vcmp.eq.s32.totalorder %v1325, 1
          %vm1370 = vcmp.eq.s32.totalorder %v1328, 1
          %vm1371 = vcmp.eq.s32.totalorder %v1331, 1
          %vm1372 = vcmp.eq.s32.totalorder %v1334, 1
          %vm1373 = vcmp.eq.s32.totalorder %v1337, 1
          %vm1374 = vcmp.eq.s32.totalorder %v1340, 1
          %vm1375 = vcmp.eq.s32.totalorder %v1343, 1
          %vm1376 = vcmp.eq.s32.totalorder %v1346, 1
          %vm1377 = vcmp.eq.s32.totalorder %v1349, 1
          %vm1378 = vcmp.eq.s32.totalorder %v1352, 1
          %vm1379 = vcmp.eq.s32.totalorder %v1355, 1
          %vm1380 = vcmp.eq.s32.totalorder %v1358, 1
          %vm1381 = vcmp.eq.s32.totalorder %v1361, 1
          %vm1382 = vcmp.eq.s32.totalorder %v1364, 1
          %vm1383 = vcmp.eq.s32.totalorder %v1367, 1
          %v1384 = vsel %vm1368, %v1288, 0.0
          %v1385 = vsel %vm1369, %v1289, 0.0
          %v1386 = vsel %vm1370, %v1290, 0.0
          %v1387 = vsel %vm1371, %v1291, 0.0
          %v1388 = vsel %vm1372, %v1292, 0.0
          %v1389 = vsel %vm1373, %v1293, 0.0
          %v1390 = vsel %vm1374, %v1294, 0.0
          %v1391 = vsel %vm1375, %v1295, 0.0
          %v1392 = vsel %vm1376, %v1296, 0.0
          %v1393 = vsel %vm1377, %v1297, 0.0
          %v1394 = vsel %vm1378, %v1298, 0.0
          %v1395 = vsel %vm1379, %v1299, 0.0
          %v1396 = vsel %vm1380, %v1300, 0.0
          %v1397 = vsel %vm1381, %v1301, 0.0
          %v1398 = vsel %vm1382, %v1302, 0.0
          %v1399 = vsel %vm1383, %v1303, 0.0
          %v1400 = vadd.f32 %v664, %v1384
          %v1401 = vadd.f32 %v665, %v1385
          %v1402 = vadd.f32 %v666, %v1386
          %v1403 = vadd.f32 %v667, %v1387
          %v1404 = vadd.f32 %v668, %v1388
          %v1405 = vadd.f32 %v669, %v1389
          %v1406 = vadd.f32 %v670, %v1390
          %v1407 = vadd.f32 %v671, %v1391
          %v1408 = vadd.f32 %v672, %v1392
          %v1409 = vadd.f32 %v673, %v1393
          %v1410 = vadd.f32 %v674, %v1394
          %v1411 = vadd.f32 %v675, %v1395
          %v1412 = vadd.f32 %v676, %v1396
          %v1413 = vadd.f32 %v677, %v1397
          %v1414 = vadd.f32 %v678, %v1398
          %v1415 = vadd.f32 %v679, %v1399
          %vm1416 = vcmp.le.f32.partialorder %v1064, 16.0
          %vm1417 = vcmp.le.f32.partialorder %v1065, 16.0
          %vm1418 = vcmp.le.f32.partialorder %v1066, 16.0
          %vm1419 = vcmp.le.f32.partialorder %v1067, 16.0
          %vm1420 = vcmp.le.f32.partialorder %v1068, 16.0
          %vm1421 = vcmp.le.f32.partialorder %v1069, 16.0
          %vm1422 = vcmp.le.f32.partialorder %v1070, 16.0
          %vm1423 = vcmp.le.f32.partialorder %v1071, 16.0
          %vm1424 = vcmp.le.f32.partialorder %v1072, 16.0
          %vm1425 = vcmp.le.f32.partialorder %v1073, 16.0
          %vm1426 = vcmp.le.f32.partialorder %v1074, 16.0
          %vm1427 = vcmp.le.f32.partialorder %v1075, 16.0
          %vm1428 = vcmp.le.f32.partialorder %v1076, 16.0
          %vm1429 = vcmp.le.f32.partialorder %v1077, 16.0
          %vm1430 = vcmp.le.f32.partialorder %v1078, 16.0
          %vm1431 = vcmp.le.f32.partialorder %v1079, 16.0
          %vm1432 = vmand %vm1080, %vm1416
          %vm1433 = vmand %vm1081, %vm1417
          %vm1434 = vmand %vm1082, %vm1418
          %vm1435 = vmand %vm1083, %vm1419
          %vm1436 = vmand %vm1084, %vm1420
          %vm1437 = vmand %vm1085, %vm1421
          %vm1438 = vmand %vm1086, %vm1422
          %vm1439 = vmand %vm1087, %vm1423
          %vm1440 = vmand %vm1088, %vm1424
          %vm1441 = vmand %vm1089, %vm1425
          %vm1442 = vmand %vm1090, %vm1426
          %vm1443 = vmand %vm1091, %vm1427
          %vm1444 = vmand %vm1092, %vm1428
          %vm1445 = vmand %vm1093, %vm1429
          %vm1446 = vmand %vm1094, %vm1430
          %vm1447 = vmand %vm1095, %vm1431
          %v1448 = vmin.f32 %v1128, 15.0
          %v1449 = vmin.f32 %v1129, 15.0
          %v1450 = vmin.f32 %v1130, 15.0
          %v1451 = vmin.f32 %v1131, 15.0
          %v1452 = vmin.f32 %v1132, 15.0
          %v1453 = vmin.f32 %v1133, 15.0
          %v1454 = vmin.f32 %v1134, 15.0
          %v1455 = vmin.f32 %v1135, 15.0
          %v1456 = vmin.f32 %v1136, 15.0
          %v1457 = vmin.f32 %v1137, 15.0
          %v1458 = vmin.f32 %v1138, 15.0
          %v1459 = vmin.f32 %v1139, 15.0
          %v1460 = vmin.f32 %v1140, 15.0
          %v1461 = vmin.f32 %v1141, 15.0
          %v1462 = vmin.f32 %v1142, 15.0
          %v1463 = vmin.f32 %v1143, 15.0
          %1465 = vset.pattern.permute.xlu0 2
          %1466 = vperm.xlu0 %1465, %v1448
          %v1467 = vpop.permute.xlu0 %1466
          %1470 = vset.pattern.permute.xlu0 2
          %1471 = vperm.xlu0 %1470, %v1449
          %v1472 = vpop.permute.xlu0 %1471
          %1475 = vset.pattern.permute.xlu0 2
          %1476 = vperm.xlu0 %1475, %v1450
          %v1477 = vpop.permute.xlu0 %1476
          %1480 = vset.pattern.permute.xlu0 2
          %1481 = vperm.xlu0 %1480, %v1451
          %v1482 = vpop.permute.xlu0 %1481
          %1485 = vset.pattern.permute.xlu0 2
          %1486 = vperm.xlu0 %1485, %v1452
          %v1487 = vpop.permute.xlu0 %1486
          %1490 = vset.pattern.permute.xlu0 2
          %1491 = vperm.xlu0 %1490, %v1453
          %v1492 = vpop.permute.xlu0 %1491
          %1495 = vset.pattern.permute.xlu0 2
          %1496 = vperm.xlu0 %1495, %v1454
          %v1497 = vpop.permute.xlu0 %1496
          %1500 = vset.pattern.permute.xlu0 2
          %1501 = vperm.xlu0 %1500, %v1455
          %v1502 = vpop.permute.xlu0 %1501
          %1505 = vset.pattern.permute.xlu0 2
          %1506 = vperm.xlu0 %1505, %v1456
          %v1507 = vpop.permute.xlu0 %1506
          %1510 = vset.pattern.permute.xlu0 2
          %1511 = vperm.xlu0 %1510, %v1457
          %v1512 = vpop.permute.xlu0 %1511
          %1515 = vset.pattern.permute.xlu0 2
          %1516 = vperm.xlu0 %1515, %v1458
          %v1517 = vpop.permute.xlu0 %1516
          %1520 = vset.pattern.permute.xlu0 2
          %1521 = vperm.xlu0 %1520, %v1459
          %v1522 = vpop.permute.xlu0 %1521
          %1525 = vset.pattern.permute.xlu0 2
          %1526 = vperm.xlu0 %1525, %v1460
          %v1527 = vpop.permute.xlu0 %1526
          %1530 = vset.pattern.permute.xlu0 2
          %1531 = vperm.xlu0 %1530, %v1461
          %v1532 = vpop.permute.xlu0 %1531
          %1535 = vset.pattern.permute.xlu0 2
          %1536 = vperm.xlu0 %1535, %v1462
          %v1537 = vpop.permute.xlu0 %1536
          %1540 = vset.pattern.permute.xlu0 2
          %1541 = vperm.xlu0 %1540, %v1463
          %v1542 = vpop.permute.xlu0 %1541
          %v1544 = vsub.f32 %v1467, %v231
          %v1545 = vsub.f32 %v1472, %v231
          %v1546 = vsub.f32 %v1477, %v231
          %v1547 = vsub.f32 %v1482, %v231
          %v1548 = vsub.f32 %v1487, %v231
          %v1549 = vsub.f32 %v1492, %v231
          %v1550 = vsub.f32 %v1497, %v231
          %v1551 = vsub.f32 %v1502, %v231
          %v1552 = vsub.f32 %v1507, %v231
          %v1553 = vsub.f32 %v1512, %v231
          %v1554 = vsub.f32 %v1517, %v231
          %v1555 = vsub.f32 %v1522, %v231
          %v1556 = vsub.f32 %v1527, %v231
          %v1557 = vsub.f32 %v1532, %v231
          %v1558 = vsub.f32 %v1537, %v231
          %v1559 = vsub.f32 %v1542, %v231
          %v1560 = vand.u32 2147483647, %v1544
          %v1561 = vand.u32 2147483647, %v1545
          %v1562 = vand.u32 2147483647, %v1546
          %v1563 = vand.u32 2147483647, %v1547
          %v1564 = vand.u32 2147483647, %v1548
          %v1565 = vand.u32 2147483647, %v1549
          %v1566 = vand.u32 2147483647, %v1550
          %v1567 = vand.u32 2147483647, %v1551
          %v1568 = vand.u32 2147483647, %v1552
          %v1569 = vand.u32 2147483647, %v1553
          %v1570 = vand.u32 2147483647, %v1554
          %v1571 = vand.u32 2147483647, %v1555
          %v1572 = vand.u32 2147483647, %v1556
          %v1573 = vand.u32 2147483647, %v1557
          %v1574 = vand.u32 2147483647, %v1558
          %v1575 = vand.u32 2147483647, %v1559
          %v1576 = vsub.f32 1.0, %v1560
          %v1577 = vsub.f32 1.0, %v1561
          %v1578 = vsub.f32 1.0, %v1562
          %v1579 = vsub.f32 1.0, %v1563
          %v1580 = vsub.f32 1.0, %v1564
          %v1581 = vsub.f32 1.0, %v1565
          %v1582 = vsub.f32 1.0, %v1566
          %v1583 = vsub.f32 1.0, %v1567
          %v1584 = vsub.f32 1.0, %v1568
          %v1585 = vsub.f32 1.0, %v1569
          %v1586 = vsub.f32 1.0, %v1570
          %v1587 = vsub.f32 1.0, %v1571
          %v1588 = vsub.f32 1.0, %v1572
          %v1589 = vsub.f32 1.0, %v1573
          %v1590 = vsub.f32 1.0, %v1574
          %v1591 = vsub.f32 1.0, %v1575
          %v1592 = vmax.f32 %v1576, 0.0
          %v1593 = vmax.f32 %v1577, 0.0
          %v1594 = vmax.f32 %v1578, 0.0
          %v1595 = vmax.f32 %v1579, 0.0
          %v1596 = vmax.f32 %v1580, 0.0
          %v1597 = vmax.f32 %v1581, 0.0
          %v1598 = vmax.f32 %v1582, 0.0
          %v1599 = vmax.f32 %v1583, 0.0
          %v1600 = vmax.f32 %v1584, 0.0
          %v1601 = vmax.f32 %v1585, 0.0
          %v1602 = vmax.f32 %v1586, 0.0
          %v1603 = vmax.f32 %v1587, 0.0
          %v1604 = vmax.f32 %v1588, 0.0
          %v1605 = vmax.f32 %v1589, 0.0
          %v1606 = vmax.f32 %v1590, 0.0
          %v1607 = vmax.f32 %v1591, 0.0
          %v1608 = vsel %vm1432, 1, 0
          %v1609 = vsel %vm1433, 1, 0
          %v1610 = vsel %vm1434, 1, 0
          %v1611 = vsel %vm1435, 1, 0
          %v1612 = vsel %vm1436, 1, 0
          %v1613 = vsel %vm1437, 1, 0
          %v1614 = vsel %vm1438, 1, 0
          %v1615 = vsel %vm1439, 1, 0
          %v1616 = vsel %vm1440, 1, 0
          %v1617 = vsel %vm1441, 1, 0
          %v1618 = vsel %vm1442, 1, 0
          %v1619 = vsel %vm1443, 1, 0
          %v1620 = vsel %vm1444, 1, 0
          %v1621 = vsel %vm1445, 1, 0
          %v1622 = vsel %vm1446, 1, 0
          %v1623 = vsel %vm1447, 1, 0
          %1624 = vset.pattern.permute.xlu0 2
          %1625 = vperm.xlu0 %1624, %v1608
          %v1626 = vpop.permute.xlu0 %1625
          %1627 = vset.pattern.permute.xlu0 2
          %1628 = vperm.xlu0 %1627, %v1609
          %v1629 = vpop.permute.xlu0 %1628
          %1630 = vset.pattern.permute.xlu0 2
          %1631 = vperm.xlu0 %1630, %v1610
          %v1632 = vpop.permute.xlu0 %1631
          %1633 = vset.pattern.permute.xlu0 2
          %1634 = vperm.xlu0 %1633, %v1611
          %v1635 = vpop.permute.xlu0 %1634
          %1636 = vset.pattern.permute.xlu0 2
          %1637 = vperm.xlu0 %1636, %v1612
          %v1638 = vpop.permute.xlu0 %1637
          %1639 = vset.pattern.permute.xlu0 2
          %1640 = vperm.xlu0 %1639, %v1613
          %v1641 = vpop.permute.xlu0 %1640
          %1642 = vset.pattern.permute.xlu0 2
          %1643 = vperm.xlu0 %1642, %v1614
          %v1644 = vpop.permute.xlu0 %1643
          %1645 = vset.pattern.permute.xlu0 2
          %1646 = vperm.xlu0 %1645, %v1615
          %v1647 = vpop.permute.xlu0 %1646
          %1648 = vset.pattern.permute.xlu0 2
          %1649 = vperm.xlu0 %1648, %v1616
          %v1650 = vpop.permute.xlu0 %1649
          %1651 = vset.pattern.permute.xlu0 2
          %1652 = vperm.xlu0 %1651, %v1617
          %v1653 = vpop.permute.xlu0 %1652
          %1654 = vset.pattern.permute.xlu0 2
          %1655 = vperm.xlu0 %1654, %v1618
          %v1656 = vpop.permute.xlu0 %1655
          %1657 = vset.pattern.permute.xlu0 2
          %1658 = vperm.xlu0 %1657, %v1619
          %v1659 = vpop.permute.xlu0 %1658
          %1660 = vset.pattern.permute.xlu0 2
          %1661 = vperm.xlu0 %1660, %v1620
          %v1662 = vpop.permute.xlu0 %1661
          %1663 = vset.pattern.permute.xlu0 2
          %1664 = vperm.xlu0 %1663, %v1621
          %v1665 = vpop.permute.xlu0 %1664
          %1666 = vset.pattern.permute.xlu0 2
          %1667 = vperm.xlu0 %1666, %v1622
          %v1668 = vpop.permute.xlu0 %1667
          %1669 = vset.pattern.permute.xlu0 2
          %1670 = vperm.xlu0 %1669, %v1623
          %v1671 = vpop.permute.xlu0 %1670
          %vm1672 = vcmp.eq.s32.totalorder %v1626, 1
          %vm1673 = vcmp.eq.s32.totalorder %v1629, 1
          %vm1674 = vcmp.eq.s32.totalorder %v1632, 1
          %vm1675 = vcmp.eq.s32.totalorder %v1635, 1
          %vm1676 = vcmp.eq.s32.totalorder %v1638, 1
          %vm1677 = vcmp.eq.s32.totalorder %v1641, 1
          %vm1678 = vcmp.eq.s32.totalorder %v1644, 1
          %vm1679 = vcmp.eq.s32.totalorder %v1647, 1
          %vm1680 = vcmp.eq.s32.totalorder %v1650, 1
          %vm1681 = vcmp.eq.s32.totalorder %v1653, 1
          %vm1682 = vcmp.eq.s32.totalorder %v1656, 1
          %vm1683 = vcmp.eq.s32.totalorder %v1659, 1
          %vm1684 = vcmp.eq.s32.totalorder %v1662, 1
          %vm1685 = vcmp.eq.s32.totalorder %v1665, 1
          %vm1686 = vcmp.eq.s32.totalorder %v1668, 1
          %vm1687 = vcmp.eq.s32.totalorder %v1671, 1
          %v1688 = vsel %vm1672, %v1592, 0.0
          %v1689 = vsel %vm1673, %v1593, 0.0
          %v1690 = vsel %vm1674, %v1594, 0.0
          %v1691 = vsel %vm1675, %v1595, 0.0
          %v1692 = vsel %vm1676, %v1596, 0.0
          %v1693 = vsel %vm1677, %v1597, 0.0
          %v1694 = vsel %vm1678, %v1598, 0.0
          %v1695 = vsel %vm1679, %v1599, 0.0
          %v1696 = vsel %vm1680, %v1600, 0.0
          %v1697 = vsel %vm1681, %v1601, 0.0
          %v1698 = vsel %vm1682, %v1602, 0.0
          %v1699 = vsel %vm1683, %v1603, 0.0
          %v1700 = vsel %vm1684, %v1604, 0.0
          %v1701 = vsel %vm1685, %v1605, 0.0
          %v1702 = vsel %vm1686, %v1606, 0.0
          %v1703 = vsel %vm1687, %v1607, 0.0
          %v1704 = vadd.f32 %v968, %v1688
          %v1705 = vadd.f32 %v969, %v1689
          %v1706 = vadd.f32 %v970, %v1690
          %v1707 = vadd.f32 %v971, %v1691
          %v1708 = vadd.f32 %v972, %v1692
          %v1709 = vadd.f32 %v973, %v1693
          %v1710 = vadd.f32 %v974, %v1694
          %v1711 = vadd.f32 %v975, %v1695
          %v1712 = vadd.f32 %v976, %v1696
          %v1713 = vadd.f32 %v977, %v1697
          %v1714 = vadd.f32 %v978, %v1698
          %v1715 = vadd.f32 %v979, %v1699
          %v1716 = vadd.f32 %v980, %v1700
          %v1717 = vadd.f32 %v981, %v1701
          %v1718 = vadd.f32 %v982, %v1702
          %v1719 = vadd.f32 %v983, %v1703
          %v1720 = vmul.f32 %v1400, 0.5
          %v1721 = vmul.f32 %v1401, 0.5
          %v1722 = vmul.f32 %v1402, 0.5
          %v1723 = vmul.f32 %v1403, 0.5
          %v1724 = vmul.f32 %v1404, 0.5
          %v1725 = vmul.f32 %v1405, 0.5
          %v1726 = vmul.f32 %v1406, 0.5
          %v1727 = vmul.f32 %v1407, 0.5
          %v1728 = vmul.f32 %v1408, 0.5
          %v1729 = vmul.f32 %v1409, 0.5
          %v1730 = vmul.f32 %v1410, 0.5
          %v1731 = vmul.f32 %v1411, 0.5
          %v1732 = vmul.f32 %v1412, 0.5
          %v1733 = vmul.f32 %v1413, 0.5
          %v1734 = vmul.f32 %v1414, 0.5
          %v1735 = vmul.f32 %v1415, 0.5
          %v1736 = vmul.f32 %v1704, 0.5
          %v1737 = vmul.f32 %v1705, 0.5
          %v1738 = vmul.f32 %v1706, 0.5
          %v1739 = vmul.f32 %v1707, 0.5
          %v1740 = vmul.f32 %v1708, 0.5
          %v1741 = vmul.f32 %v1709, 0.5
          %v1742 = vmul.f32 %v1710, 0.5
          %v1743 = vmul.f32 %v1711, 0.5
          %v1744 = vmul.f32 %v1712, 0.5
          %v1745 = vmul.f32 %v1713, 0.5
          %v1746 = vmul.f32 %v1714, 0.5
          %v1747 = vmul.f32 %v1715, 0.5
          %v1748 = vmul.f32 %v1716, 0.5
          %v1749 = vmul.f32 %v1717, 0.5
          %v1750 = vmul.f32 %v1718, 0.5
          %v1751 = vmul.f32 %v1719, 0.5
          %v1752 = vld [vmem:[%s189] sm:$0xff]
          %v1753 = vld [vmem:[%s189 + $0x8] sm:$0xff]
          %v1754 = vld [vmem:[%s189 + $0x10] sm:$0xff]
          %v1755 = vld [vmem:[%s189 + $0x18] sm:$0xff]
          %v1756 = vld [vmem:[%s189 + $0x20] sm:$0xff]
          %v1757 = vld [vmem:[%s189 + $0x28] sm:$0xff]
          %v1758 = vld [vmem:[%s189 + $0x30] sm:$0xff]
          %v1759 = vld [vmem:[%s189 + $0x38] sm:$0xff]
          %v1760 = vld [vmem:[%s189 + $0x40] sm:$0xff]
          %v1761 = vld [vmem:[%s189 + $0x48] sm:$0xff]
          %v1762 = vld [vmem:[%s189 + $0x50] sm:$0xff]
          %v1763 = vld [vmem:[%s189 + $0x58] sm:$0xff]
          %v1764 = vld [vmem:[%s189 + $0x60] sm:$0xff]
          %v1765 = vld [vmem:[%s189 + $0x68] sm:$0xff]
          %v1766 = vld [vmem:[%s189 + $0x70] sm:$0xff]
          %v1767 = vld [vmem:[%s189 + $0x78] sm:$0xff]
          %v1768 = vld [vmem:[%s189 + $0x80] sm:$0xff]
          %v1769 = vld [vmem:[%s189 + $0x88] sm:$0xff]
          %v1770 = vld [vmem:[%s189 + $0x90] sm:$0xff]
          %v1771 = vld [vmem:[%s189 + $0x98] sm:$0xff]
          %v1772 = vld [vmem:[%s189 + $0xa0] sm:$0xff]
          %v1773 = vld [vmem:[%s189 + $0xa8] sm:$0xff]
          %v1774 = vld [vmem:[%s189 + $0xb0] sm:$0xff]
          %v1775 = vld [vmem:[%s189 + $0xb8] sm:$0xff]
          %v1776 = vld [vmem:[%s189 + $0xc0] sm:$0xff]
          %v1777 = vld [vmem:[%s189 + $0xc8] sm:$0xff]
          %v1778 = vld [vmem:[%s189 + $0xd0] sm:$0xff]
          %v1779 = vld [vmem:[%s189 + $0xd8] sm:$0xff]
          %v1780 = vld [vmem:[%s189 + $0xe0] sm:$0xff]
          %v1781 = vld [vmem:[%s189 + $0xe8] sm:$0xff]
          %v1782 = vld [vmem:[%s189 + $0xf0] sm:$0xff]
          %v1783 = vld [vmem:[%s189 + $0xf8] sm:$0xff]
          %v1784 = vld [vmem:[%s189 + $0x100] sm:$0xff]
          %v1785 = vld [vmem:[%s189 + $0x108] sm:$0xff]
          %v1786 = vld [vmem:[%s189 + $0x110] sm:$0xff]
          %v1787 = vld [vmem:[%s189 + $0x118] sm:$0xff]
          %v1788 = vld [vmem:[%s189 + $0x120] sm:$0xff]
          %v1789 = vld [vmem:[%s189 + $0x128] sm:$0xff]
          %v1790 = vld [vmem:[%s189 + $0x130] sm:$0xff]
          %v1791 = vld [vmem:[%s189 + $0x138] sm:$0xff]
          %v1792 = vld [vmem:[%s189 + $0x140] sm:$0xff]
          %v1793 = vld [vmem:[%s189 + $0x148] sm:$0xff]
          %v1794 = vld [vmem:[%s189 + $0x150] sm:$0xff]
          %v1795 = vld [vmem:[%s189 + $0x158] sm:$0xff]
          %v1796 = vld [vmem:[%s189 + $0x160] sm:$0xff]
          %v1797 = vld [vmem:[%s189 + $0x168] sm:$0xff]
          %v1798 = vld [vmem:[%s189 + $0x170] sm:$0xff]
          %v1799 = vld [vmem:[%s189 + $0x178] sm:$0xff]
          %vm1800 = vcmask 195584
          %v1802 = vsel %vm1800, %v1720, 0
          %v1805 = vsel %vm1800, %v1721, 0
          %v1808 = vsel %vm1800, %v1722, 0
          %v1811 = vsel %vm1800, %v1723, 0
          %v1814 = vsel %vm1800, %v1724, 0
          %v1817 = vsel %vm1800, %v1725, 0
          %v1820 = vsel %vm1800, %v1726, 0
          %v1823 = vsel %vm1800, %v1727, 0
          %v1826 = vsel %vm1800, %v1728, 0
          %v1829 = vsel %vm1800, %v1729, 0
          %v1832 = vsel %vm1800, %v1730, 0
          %v1835 = vsel %vm1800, %v1731, 0
          %v1838 = vsel %vm1800, %v1732, 0
          %v1841 = vsel %vm1800, %v1733, 0
          %v1844 = vsel %vm1800, %v1734, 0
          %v1847 = vsel %vm1800, %v1735, 0
          %1849 = vmatpush.msra.mxu0 0.0
          %1850 = vmatpush.msra.mxu0 0.0
          %1851 = vmatpush.msra.mxu0 0.0
          %1852 = vmatpush.msra.mxu0 0.0
          %1853 = vmatpush.msra.mxu0 0.0
          %1854 = vmatpush.msra.mxu0 0.0
          %1855 = vmatpush.msra.mxu0 0.0
          %1856 = vmatpush.msra.mxu0 0.0
          %1857 = vmatpush.msra.mxu0 0.0
          %1858 = vmatpush.msra.mxu0 0.0
          %1859 = vmatpush.msra.mxu0 0.0
          %1860 = vmatpush.msra.mxu0 0.0
          %1861 = vmatpush.msra.mxu0 0.0
          %1862 = vmatpush.msra.mxu0 %v1784
          %1863 = vmatpush.msra.mxu0 %v1768
          %1864 = vmatpush.msra.mxu0 %v1752
          %1865 = vmatmul.f32.gmra.mxu0 %v1802
          %v1866 = vpop.f32.mrf.mxu0
          %v1867 = vadd.f32 0.0, %v1866
          %1868 = vmatmul.f32.gmra.mxu0 %v1805
          %v1869 = vpop.f32.mrf.mxu0
          %v1870 = vadd.f32 0.0, %v1869
          %1871 = vmatmul.f32.gmra.mxu0 %v1808
          %v1872 = vpop.f32.mrf.mxu0
          %v1873 = vadd.f32 0.0, %v1872
          %1874 = vmatmul.f32.gmra.mxu0 %v1811
          %v1875 = vpop.f32.mrf.mxu0
          %v1876 = vadd.f32 0.0, %v1875
          %1877 = vmatmul.f32.gmra.mxu0 %v1814
          %v1878 = vpop.f32.mrf.mxu0
          %v1879 = vadd.f32 0.0, %v1878
          %1880 = vmatmul.f32.gmra.mxu0 %v1817
          %v1881 = vpop.f32.mrf.mxu0
          %v1882 = vadd.f32 0.0, %v1881
          %1883 = vmatmul.f32.gmra.mxu0 %v1820
          %v1884 = vpop.f32.mrf.mxu0
          %v1885 = vadd.f32 0.0, %v1884
          %1886 = vmatmul.f32.gmra.mxu0 %v1823
          %v1887 = vpop.f32.mrf.mxu0
          %v1888 = vadd.f32 0.0, %v1887
          %1889 = vmatmul.f32.gmra.mxu0 %v1826
          %v1890 = vpop.f32.mrf.mxu0
          %v1891 = vadd.f32 0.0, %v1890
          %1892 = vmatmul.f32.gmra.mxu0 %v1829
          %v1893 = vpop.f32.mrf.mxu0
          %v1894 = vadd.f32 0.0, %v1893
          %1895 = vmatmul.f32.gmra.mxu0 %v1832
          %v1896 = vpop.f32.mrf.mxu0
          %v1897 = vadd.f32 0.0, %v1896
          %1898 = vmatmul.f32.gmra.mxu0 %v1835
          %v1899 = vpop.f32.mrf.mxu0
          %v1900 = vadd.f32 0.0, %v1899
          %1901 = vmatmul.f32.gmra.mxu0 %v1838
          %v1902 = vpop.f32.mrf.mxu0
          %v1903 = vadd.f32 0.0, %v1902
          %1904 = vmatmul.f32.gmra.mxu0 %v1841
          %v1905 = vpop.f32.mrf.mxu0
          %v1906 = vadd.f32 0.0, %v1905
          %1907 = vmatmul.f32.gmra.mxu0 %v1844
          %v1908 = vpop.f32.mrf.mxu0
          %v1909 = vadd.f32 0.0, %v1908
          %1910 = vmatmul.f32.gmra.mxu0 %v1847
          %v1911 = vpop.f32.mrf.mxu0
          %v1912 = vadd.f32 0.0, %v1911
          %1913 = vdwg.mxu0
          %1914 = vmatpush.msra.mxu0 0.0
          %1915 = vmatpush.msra.mxu0 0.0
          %1916 = vmatpush.msra.mxu0 0.0
          %1917 = vmatpush.msra.mxu0 0.0
          %1918 = vmatpush.msra.mxu0 0.0
          %1919 = vmatpush.msra.mxu0 0.0
          %1920 = vmatpush.msra.mxu0 0.0
          %1921 = vmatpush.msra.mxu0 0.0
          %1922 = vmatpush.msra.mxu0 0.0
          %1923 = vmatpush.msra.mxu0 0.0
          %1924 = vmatpush.msra.mxu0 0.0
          %1925 = vmatpush.msra.mxu0 0.0
          %1926 = vmatpush.msra.mxu0 0.0
          %1927 = vmatpush.msra.mxu0 %v1785
          %1928 = vmatpush.msra.mxu0 %v1769
          %1929 = vmatpush.msra.mxu0 %v1753
          %1930 = vmatmul.f32.gmra.mxu0 %v1802
          %v1931 = vpop.f32.mrf.mxu0
          %v1932 = vadd.f32 0.0, %v1931
          %1933 = vmatmul.f32.gmra.mxu0 %v1805
          %v1934 = vpop.f32.mrf.mxu0
          %v1935 = vadd.f32 0.0, %v1934
          %1936 = vmatmul.f32.gmra.mxu0 %v1808
          %v1937 = vpop.f32.mrf.mxu0
          %v1938 = vadd.f32 0.0, %v1937
          %1939 = vmatmul.f32.gmra.mxu0 %v1811
          %v1940 = vpop.f32.mrf.mxu0
          %v1941 = vadd.f32 0.0, %v1940
          %1942 = vmatmul.f32.gmra.mxu0 %v1814
          %v1943 = vpop.f32.mrf.mxu0
          %v1944 = vadd.f32 0.0, %v1943
          %1945 = vmatmul.f32.gmra.mxu0 %v1817
          %v1946 = vpop.f32.mrf.mxu0
          %v1947 = vadd.f32 0.0, %v1946
          %1948 = vmatmul.f32.gmra.mxu0 %v1820
          %v1949 = vpop.f32.mrf.mxu0
          %v1950 = vadd.f32 0.0, %v1949
          %1951 = vmatmul.f32.gmra.mxu0 %v1823
          %v1952 = vpop.f32.mrf.mxu0
          %v1953 = vadd.f32 0.0, %v1952
          %1954 = vmatmul.f32.gmra.mxu0 %v1826
          %v1955 = vpop.f32.mrf.mxu0
          %v1956 = vadd.f32 0.0, %v1955
          %1957 = vmatmul.f32.gmra.mxu0 %v1829
          %v1958 = vpop.f32.mrf.mxu0
          %v1959 = vadd.f32 0.0, %v1958
          %1960 = vmatmul.f32.gmra.mxu0 %v1832
          %v1961 = vpop.f32.mrf.mxu0
          %v1962 = vadd.f32 0.0, %v1961
          %1963 = vmatmul.f32.gmra.mxu0 %v1835
          %v1964 = vpop.f32.mrf.mxu0
          %v1965 = vadd.f32 0.0, %v1964
          %1966 = vmatmul.f32.gmra.mxu0 %v1838
          %v1967 = vpop.f32.mrf.mxu0
          %v1968 = vadd.f32 0.0, %v1967
          %1969 = vmatmul.f32.gmra.mxu0 %v1841
          %v1970 = vpop.f32.mrf.mxu0
          %v1971 = vadd.f32 0.0, %v1970
          %1972 = vmatmul.f32.gmra.mxu0 %v1844
          %v1973 = vpop.f32.mrf.mxu0
          %v1974 = vadd.f32 0.0, %v1973
          %1975 = vmatmul.f32.gmra.mxu0 %v1847
          %v1976 = vpop.f32.mrf.mxu0
          %v1977 = vadd.f32 0.0, %v1976
          %1978 = vdwg.mxu0
          %1979 = vmatpush.msra.mxu0 0.0
          %1980 = vmatpush.msra.mxu0 0.0
          %1981 = vmatpush.msra.mxu0 0.0
          %1982 = vmatpush.msra.mxu0 0.0
          %1983 = vmatpush.msra.mxu0 0.0
          %1984 = vmatpush.msra.mxu0 0.0
          %1985 = vmatpush.msra.mxu0 0.0
          %1986 = vmatpush.msra.mxu0 0.0
          %1987 = vmatpush.msra.mxu0 0.0
          %1988 = vmatpush.msra.mxu0 0.0
          %1989 = vmatpush.msra.mxu0 0.0
          %1990 = vmatpush.msra.mxu0 0.0
          %1991 = vmatpush.msra.mxu0 0.0
          %1992 = vmatpush.msra.mxu0 %v1786
          %1993 = vmatpush.msra.mxu0 %v1770
          %1994 = vmatpush.msra.mxu0 %v1754
          %1995 = vmatmul.f32.gmra.mxu0 %v1802
          %v1996 = vpop.f32.mrf.mxu0
          %v1997 = vadd.f32 0.0, %v1996
          %1998 = vmatmul.f32.gmra.mxu0 %v1805
          %v1999 = vpop.f32.mrf.mxu0
          %v2000 = vadd.f32 0.0, %v1999
          %2001 = vmatmul.f32.gmra.mxu0 %v1808
          %v2002 = vpop.f32.mrf.mxu0
          %v2003 = vadd.f32 0.0, %v2002
          %2004 = vmatmul.f32.gmra.mxu0 %v1811
          %v2005 = vpop.f32.mrf.mxu0
          %v2006 = vadd.f32 0.0, %v2005
          %2007 = vmatmul.f32.gmra.mxu0 %v1814
          %v2008 = vpop.f32.mrf.mxu0
          %v2009 = vadd.f32 0.0, %v2008
          %2010 = vmatmul.f32.gmra.mxu0 %v1817
          %v2011 = vpop.f32.mrf.mxu0
          %v2012 = vadd.f32 0.0, %v2011
          %2013 = vmatmul.f32.gmra.mxu0 %v1820
          %v2014 = vpop.f32.mrf.mxu0
          %v2015 = vadd.f32 0.0, %v2014
          %2016 = vmatmul.f32.gmra.mxu0 %v1823
          %v2017 = vpop.f32.mrf.mxu0
          %v2018 = vadd.f32 0.0, %v2017
          %2019 = vmatmul.f32.gmra.mxu0 %v1826
          %v2020 = vpop.f32.mrf.mxu0
          %v2021 = vadd.f32 0.0, %v2020
          %2022 = vmatmul.f32.gmra.mxu0 %v1829
          %v2023 = vpop.f32.mrf.mxu0
          %v2024 = vadd.f32 0.0, %v2023
          %2025 = vmatmul.f32.gmra.mxu0 %v1832
          %v2026 = vpop.f32.mrf.mxu0
          %v2027 = vadd.f32 0.0, %v2026
          %2028 = vmatmul.f32.gmra.mxu0 %v1835
          %v2029 = vpop.f32.mrf.mxu0
          %v2030 = vadd.f32 0.0, %v2029
          %2031 = vmatmul.f32.gmra.mxu0 %v1838
          %v2032 = vpop.f32.mrf.mxu0
          %v2033 = vadd.f32 0.0, %v2032
          %2034 = vmatmul.f32.gmra.mxu0 %v1841
          %v2035 = vpop.f32.mrf.mxu0
          %v2036 = vadd.f32 0.0, %v2035
          %2037 = vmatmul.f32.gmra.mxu0 %v1844
          %v2038 = vpop.f32.mrf.mxu0
          %v2039 = vadd.f32 0.0, %v2038
          %2040 = vmatmul.f32.gmra.mxu0 %v1847
          %v2041 = vpop.f32.mrf.mxu0
          %v2042 = vadd.f32 0.0, %v2041
          %2043 = vdwg.mxu0
          %2044 = vmatpush.msra.mxu0 0.0
          %2045 = vmatpush.msra.mxu0 0.0
          %2046 = vmatpush.msra.mxu0 0.0
          %2047 = vmatpush.msra.mxu0 0.0
          %2048 = vmatpush.msra.mxu0 0.0
          %2049 = vmatpush.msra.mxu0 0.0
          %2050 = vmatpush.msra.mxu0 0.0
          %2051 = vmatpush.msra.mxu0 0.0
          %2052 = vmatpush.msra.mxu0 0.0
          %2053 = vmatpush.msra.mxu0 0.0
          %2054 = vmatpush.msra.mxu0 0.0
          %2055 = vmatpush.msra.mxu0 0.0
          %2056 = vmatpush.msra.mxu0 0.0
          %2057 = vmatpush.msra.mxu0 %v1787
          %2058 = vmatpush.msra.mxu0 %v1771
          %2059 = vmatpush.msra.mxu0 %v1755
          %2060 = vmatmul.f32.gmra.mxu0 %v1802
          %v2061 = vpop.f32.mrf.mxu0
          %v2062 = vadd.f32 0.0, %v2061
          %2063 = vmatmul.f32.gmra.mxu0 %v1805
          %v2064 = vpop.f32.mrf.mxu0
          %v2065 = vadd.f32 0.0, %v2064
          %2066 = vmatmul.f32.gmra.mxu0 %v1808
          %v2067 = vpop.f32.mrf.mxu0
          %v2068 = vadd.f32 0.0, %v2067
          %2069 = vmatmul.f32.gmra.mxu0 %v1811
          %v2070 = vpop.f32.mrf.mxu0
          %v2071 = vadd.f32 0.0, %v2070
          %2072 = vmatmul.f32.gmra.mxu0 %v1814
          %v2073 = vpop.f32.mrf.mxu0
          %v2074 = vadd.f32 0.0, %v2073
          %2075 = vmatmul.f32.gmra.mxu0 %v1817
          %v2076 = vpop.f32.mrf.mxu0
          %v2077 = vadd.f32 0.0, %v2076
          %2078 = vmatmul.f32.gmra.mxu0 %v1820
          %v2079 = vpop.f32.mrf.mxu0
          %v2080 = vadd.f32 0.0, %v2079
          %2081 = vmatmul.f32.gmra.mxu0 %v1823
          %v2082 = vpop.f32.mrf.mxu0
          %v2083 = vadd.f32 0.0, %v2082
          %2084 = vmatmul.f32.gmra.mxu0 %v1826
          %v2085 = vpop.f32.mrf.mxu0
          %v2086 = vadd.f32 0.0, %v2085
          %2087 = vmatmul.f32.gmra.mxu0 %v1829
          %v2088 = vpop.f32.mrf.mxu0
          %v2089 = vadd.f32 0.0, %v2088
          %2090 = vmatmul.f32.gmra.mxu0 %v1832
          %v2091 = vpop.f32.mrf.mxu0
          %v2092 = vadd.f32 0.0, %v2091
          %2093 = vmatmul.f32.gmra.mxu0 %v1835
          %v2094 = vpop.f32.mrf.mxu0
          %v2095 = vadd.f32 0.0, %v2094
          %2096 = vmatmul.f32.gmra.mxu0 %v1838
          %v2097 = vpop.f32.mrf.mxu0
          %v2098 = vadd.f32 0.0, %v2097
          %2099 = vmatmul.f32.gmra.mxu0 %v1841
          %v2100 = vpop.f32.mrf.mxu0
          %v2101 = vadd.f32 0.0, %v2100
          %2102 = vmatmul.f32.gmra.mxu0 %v1844
          %v2103 = vpop.f32.mrf.mxu0
          %v2104 = vadd.f32 0.0, %v2103
          %2105 = vmatmul.f32.gmra.mxu0 %v1847
          %v2106 = vpop.f32.mrf.mxu0
          %v2107 = vadd.f32 0.0, %v2106
          %2108 = vdwg.mxu0
          %2109 = vmatpush.msra.mxu0 0.0
          %2110 = vmatpush.msra.mxu0 0.0
          %2111 = vmatpush.msra.mxu0 0.0
          %2112 = vmatpush.msra.mxu0 0.0
          %2113 = vmatpush.msra.mxu0 0.0
          %2114 = vmatpush.msra.mxu0 0.0
          %2115 = vmatpush.msra.mxu0 0.0
          %2116 = vmatpush.msra.mxu0 0.0
          %2117 = vmatpush.msra.mxu0 0.0
          %2118 = vmatpush.msra.mxu0 0.0
          %2119 = vmatpush.msra.mxu0 0.0
          %2120 = vmatpush.msra.mxu0 0.0
          %2121 = vmatpush.msra.mxu0 0.0
          %2122 = vmatpush.msra.mxu0 %v1788
          %2123 = vmatpush.msra.mxu0 %v1772
          %2124 = vmatpush.msra.mxu0 %v1756
          %2125 = vmatmul.f32.gmra.mxu0 %v1802
          %v2126 = vpop.f32.mrf.mxu0
          %v2127 = vadd.f32 0.0, %v2126
          %2128 = vmatmul.f32.gmra.mxu0 %v1805
          %v2129 = vpop.f32.mrf.mxu0
          %v2130 = vadd.f32 0.0, %v2129
          %2131 = vmatmul.f32.gmra.mxu0 %v1808
          %v2132 = vpop.f32.mrf.mxu0
          %v2133 = vadd.f32 0.0, %v2132
          %2134 = vmatmul.f32.gmra.mxu0 %v1811
          %v2135 = vpop.f32.mrf.mxu0
          %v2136 = vadd.f32 0.0, %v2135
          %2137 = vmatmul.f32.gmra.mxu0 %v1814
          %v2138 = vpop.f32.mrf.mxu0
          %v2139 = vadd.f32 0.0, %v2138
          %2140 = vmatmul.f32.gmra.mxu0 %v1817
          %v2141 = vpop.f32.mrf.mxu0
          %v2142 = vadd.f32 0.0, %v2141
          %2143 = vmatmul.f32.gmra.mxu0 %v1820
          %v2144 = vpop.f32.mrf.mxu0
          %v2145 = vadd.f32 0.0, %v2144
          %2146 = vmatmul.f32.gmra.mxu0 %v1823
          %v2147 = vpop.f32.mrf.mxu0
          %v2148 = vadd.f32 0.0, %v2147
          %2149 = vmatmul.f32.gmra.mxu0 %v1826
          %v2150 = vpop.f32.mrf.mxu0
          %v2151 = vadd.f32 0.0, %v2150
          %2152 = vmatmul.f32.gmra.mxu0 %v1829
          %v2153 = vpop.f32.mrf.mxu0
          %v2154 = vadd.f32 0.0, %v2153
          %2155 = vmatmul.f32.gmra.mxu0 %v1832
          %v2156 = vpop.f32.mrf.mxu0
          %v2157 = vadd.f32 0.0, %v2156
          %2158 = vmatmul.f32.gmra.mxu0 %v1835
          %v2159 = vpop.f32.mrf.mxu0
          %v2160 = vadd.f32 0.0, %v2159
          %2161 = vmatmul.f32.gmra.mxu0 %v1838
          %v2162 = vpop.f32.mrf.mxu0
          %v2163 = vadd.f32 0.0, %v2162
          %2164 = vmatmul.f32.gmra.mxu0 %v1841
          %v2165 = vpop.f32.mrf.mxu0
          %v2166 = vadd.f32 0.0, %v2165
          %2167 = vmatmul.f32.gmra.mxu0 %v1844
          %v2168 = vpop.f32.mrf.mxu0
          %v2169 = vadd.f32 0.0, %v2168
          %2170 = vmatmul.f32.gmra.mxu0 %v1847
          %v2171 = vpop.f32.mrf.mxu0
          %v2172 = vadd.f32 0.0, %v2171
          %2173 = vdwg.mxu0
          %2174 = vmatpush.msra.mxu0 0.0
          %2175 = vmatpush.msra.mxu0 0.0
          %2176 = vmatpush.msra.mxu0 0.0
          %2177 = vmatpush.msra.mxu0 0.0
          %2178 = vmatpush.msra.mxu0 0.0
          %2179 = vmatpush.msra.mxu0 0.0
          %2180 = vmatpush.msra.mxu0 0.0
          %2181 = vmatpush.msra.mxu0 0.0
          %2182 = vmatpush.msra.mxu0 0.0
          %2183 = vmatpush.msra.mxu0 0.0
          %2184 = vmatpush.msra.mxu0 0.0
          %2185 = vmatpush.msra.mxu0 0.0
          %2186 = vmatpush.msra.mxu0 0.0
          %2187 = vmatpush.msra.mxu0 %v1789
          %2188 = vmatpush.msra.mxu0 %v1773
          %2189 = vmatpush.msra.mxu0 %v1757
          %2190 = vmatmul.f32.gmra.mxu0 %v1802
          %v2191 = vpop.f32.mrf.mxu0
          %v2192 = vadd.f32 0.0, %v2191
          %2193 = vmatmul.f32.gmra.mxu0 %v1805
          %v2194 = vpop.f32.mrf.mxu0
          %v2195 = vadd.f32 0.0, %v2194
          %2196 = vmatmul.f32.gmra.mxu0 %v1808
          %v2197 = vpop.f32.mrf.mxu0
          %v2198 = vadd.f32 0.0, %v2197
          %2199 = vmatmul.f32.gmra.mxu0 %v1811
          %v2200 = vpop.f32.mrf.mxu0
          %v2201 = vadd.f32 0.0, %v2200
          %2202 = vmatmul.f32.gmra.mxu0 %v1814
          %v2203 = vpop.f32.mrf.mxu0
          %v2204 = vadd.f32 0.0, %v2203
          %2205 = vmatmul.f32.gmra.mxu0 %v1817
          %v2206 = vpop.f32.mrf.mxu0
          %v2207 = vadd.f32 0.0, %v2206
          %2208 = vmatmul.f32.gmra.mxu0 %v1820
          %v2209 = vpop.f32.mrf.mxu0
          %v2210 = vadd.f32 0.0, %v2209
          %2211 = vmatmul.f32.gmra.mxu0 %v1823
          %v2212 = vpop.f32.mrf.mxu0
          %v2213 = vadd.f32 0.0, %v2212
          %2214 = vmatmul.f32.gmra.mxu0 %v1826
          %v2215 = vpop.f32.mrf.mxu0
          %v2216 = vadd.f32 0.0, %v2215
          %2217 = vmatmul.f32.gmra.mxu0 %v1829
          %v2218 = vpop.f32.mrf.mxu0
          %v2219 = vadd.f32 0.0, %v2218
          %2220 = vmatmul.f32.gmra.mxu0 %v1832
          %v2221 = vpop.f32.mrf.mxu0
          %v2222 = vadd.f32 0.0, %v2221
          %2223 = vmatmul.f32.gmra.mxu0 %v1835
          %v2224 = vpop.f32.mrf.mxu0
          %v2225 = vadd.f32 0.0, %v2224
          %2226 = vmatmul.f32.gmra.mxu0 %v1838
          %v2227 = vpop.f32.mrf.mxu0
          %v2228 = vadd.f32 0.0, %v2227
          %2229 = vmatmul.f32.gmra.mxu0 %v1841
          %v2230 = vpop.f32.mrf.mxu0
          %v2231 = vadd.f32 0.0, %v2230
          %2232 = vmatmul.f32.gmra.mxu0 %v1844
          %v2233 = vpop.f32.mrf.mxu0
          %v2234 = vadd.f32 0.0, %v2233
          %2235 = vmatmul.f32.gmra.mxu0 %v1847
          %v2236 = vpop.f32.mrf.mxu0
          %v2237 = vadd.f32 0.0, %v2236
          %2238 = vdwg.mxu0
          %2239 = vmatpush.msra.mxu0 0.0
          %2240 = vmatpush.msra.mxu0 0.0
          %2241 = vmatpush.msra.mxu0 0.0
          %2242 = vmatpush.msra.mxu0 0.0
          %2243 = vmatpush.msra.mxu0 0.0
          %2244 = vmatpush.msra.mxu0 0.0
          %2245 = vmatpush.msra.mxu0 0.0
          %2246 = vmatpush.msra.mxu0 0.0
          %2247 = vmatpush.msra.mxu0 0.0
          %2248 = vmatpush.msra.mxu0 0.0
          %2249 = vmatpush.msra.mxu0 0.0
          %2250 = vmatpush.msra.mxu0 0.0
          %2251 = vmatpush.msra.mxu0 0.0
          %2252 = vmatpush.msra.mxu0 %v1790
          %2253 = vmatpush.msra.mxu0 %v1774
          %2254 = vmatpush.msra.mxu0 %v1758
          %2255 = vmatmul.f32.gmra.mxu0 %v1802
          %v2256 = vpop.f32.mrf.mxu0
          %v2257 = vadd.f32 0.0, %v2256
          %2258 = vmatmul.f32.gmra.mxu0 %v1805
          %v2259 = vpop.f32.mrf.mxu0
          %v2260 = vadd.f32 0.0, %v2259
          %2261 = vmatmul.f32.gmra.mxu0 %v1808
          %v2262 = vpop.f32.mrf.mxu0
          %v2263 = vadd.f32 0.0, %v2262
          %2264 = vmatmul.f32.gmra.mxu0 %v1811
          %v2265 = vpop.f32.mrf.mxu0
          %v2266 = vadd.f32 0.0, %v2265
          %2267 = vmatmul.f32.gmra.mxu0 %v1814
          %v2268 = vpop.f32.mrf.mxu0
          %v2269 = vadd.f32 0.0, %v2268
          %2270 = vmatmul.f32.gmra.mxu0 %v1817
          %v2271 = vpop.f32.mrf.mxu0
          %v2272 = vadd.f32 0.0, %v2271
          %2273 = vmatmul.f32.gmra.mxu0 %v1820
          %v2274 = vpop.f32.mrf.mxu0
          %v2275 = vadd.f32 0.0, %v2274
          %2276 = vmatmul.f32.gmra.mxu0 %v1823
          %v2277 = vpop.f32.mrf.mxu0
          %v2278 = vadd.f32 0.0, %v2277
          %2279 = vmatmul.f32.gmra.mxu0 %v1826
          %v2280 = vpop.f32.mrf.mxu0
          %v2281 = vadd.f32 0.0, %v2280
          %2282 = vmatmul.f32.gmra.mxu0 %v1829
          %v2283 = vpop.f32.mrf.mxu0
          %v2284 = vadd.f32 0.0, %v2283
          %2285 = vmatmul.f32.gmra.mxu0 %v1832
          %v2286 = vpop.f32.mrf.mxu0
          %v2287 = vadd.f32 0.0, %v2286
          %2288 = vmatmul.f32.gmra.mxu0 %v1835
          %v2289 = vpop.f32.mrf.mxu0
          %v2290 = vadd.f32 0.0, %v2289
          %2291 = vmatmul.f32.gmra.mxu0 %v1838
          %v2292 = vpop.f32.mrf.mxu0
          %v2293 = vadd.f32 0.0, %v2292
          %2294 = vmatmul.f32.gmra.mxu0 %v1841
          %v2295 = vpop.f32.mrf.mxu0
          %v2296 = vadd.f32 0.0, %v2295
          %2297 = vmatmul.f32.gmra.mxu0 %v1844
          %v2298 = vpop.f32.mrf.mxu0
          %v2299 = vadd.f32 0.0, %v2298
          %2300 = vmatmul.f32.gmra.mxu0 %v1847
          %v2301 = vpop.f32.mrf.mxu0
          %v2302 = vadd.f32 0.0, %v2301
          %2303 = vdwg.mxu0
          %2304 = vmatpush.msra.mxu0 0.0
          %2305 = vmatpush.msra.mxu0 0.0
          %2306 = vmatpush.msra.mxu0 0.0
          %2307 = vmatpush.msra.mxu0 0.0
          %2308 = vmatpush.msra.mxu0 0.0
          %2309 = vmatpush.msra.mxu0 0.0
          %2310 = vmatpush.msra.mxu0 0.0
          %2311 = vmatpush.msra.mxu0 0.0
          %2312 = vmatpush.msra.mxu0 0.0
          %2313 = vmatpush.msra.mxu0 0.0
          %2314 = vmatpush.msra.mxu0 0.0
          %2315 = vmatpush.msra.mxu0 0.0
          %2316 = vmatpush.msra.mxu0 0.0
          %2317 = vmatpush.msra.mxu0 %v1791
          %2318 = vmatpush.msra.mxu0 %v1775
          %2319 = vmatpush.msra.mxu0 %v1759
          %2320 = vmatmul.f32.gmra.mxu0 %v1802
          %v2321 = vpop.f32.mrf.mxu0
          %v2322 = vadd.f32 0.0, %v2321
          %2323 = vmatmul.f32.gmra.mxu0 %v1805
          %v2324 = vpop.f32.mrf.mxu0
          %v2325 = vadd.f32 0.0, %v2324
          %2326 = vmatmul.f32.gmra.mxu0 %v1808
          %v2327 = vpop.f32.mrf.mxu0
          %v2328 = vadd.f32 0.0, %v2327
          %2329 = vmatmul.f32.gmra.mxu0 %v1811
          %v2330 = vpop.f32.mrf.mxu0
          %v2331 = vadd.f32 0.0, %v2330
          %2332 = vmatmul.f32.gmra.mxu0 %v1814
          %v2333 = vpop.f32.mrf.mxu0
          %v2334 = vadd.f32 0.0, %v2333
          %2335 = vmatmul.f32.gmra.mxu0 %v1817
          %v2336 = vpop.f32.mrf.mxu0
          %v2337 = vadd.f32 0.0, %v2336
          %2338 = vmatmul.f32.gmra.mxu0 %v1820
          %v2339 = vpop.f32.mrf.mxu0
          %v2340 = vadd.f32 0.0, %v2339
          %2341 = vmatmul.f32.gmra.mxu0 %v1823
          %v2342 = vpop.f32.mrf.mxu0
          %v2343 = vadd.f32 0.0, %v2342
          %2344 = vmatmul.f32.gmra.mxu0 %v1826
          %v2345 = vpop.f32.mrf.mxu0
          %v2346 = vadd.f32 0.0, %v2345
          %2347 = vmatmul.f32.gmra.mxu0 %v1829
          %v2348 = vpop.f32.mrf.mxu0
          %v2349 = vadd.f32 0.0, %v2348
          %2350 = vmatmul.f32.gmra.mxu0 %v1832
          %v2351 = vpop.f32.mrf.mxu0
          %v2352 = vadd.f32 0.0, %v2351
          %2353 = vmatmul.f32.gmra.mxu0 %v1835
          %v2354 = vpop.f32.mrf.mxu0
          %v2355 = vadd.f32 0.0, %v2354
          %2356 = vmatmul.f32.gmra.mxu0 %v1838
          %v2357 = vpop.f32.mrf.mxu0
          %v2358 = vadd.f32 0.0, %v2357
          %2359 = vmatmul.f32.gmra.mxu0 %v1841
          %v2360 = vpop.f32.mrf.mxu0
          %v2361 = vadd.f32 0.0, %v2360
          %2362 = vmatmul.f32.gmra.mxu0 %v1844
          %v2363 = vpop.f32.mrf.mxu0
          %v2364 = vadd.f32 0.0, %v2363
          %2365 = vmatmul.f32.gmra.mxu0 %v1847
          %v2366 = vpop.f32.mrf.mxu0
          %v2367 = vadd.f32 0.0, %v2366
          %2368 = vdwg.mxu0
          %2369 = vmatpush.msra.mxu0 0.0
          %2370 = vmatpush.msra.mxu0 0.0
          %2371 = vmatpush.msra.mxu0 0.0
          %2372 = vmatpush.msra.mxu0 0.0
          %2373 = vmatpush.msra.mxu0 0.0
          %2374 = vmatpush.msra.mxu0 0.0
          %2375 = vmatpush.msra.mxu0 0.0
          %2376 = vmatpush.msra.mxu0 0.0
          %2377 = vmatpush.msra.mxu0 0.0
          %2378 = vmatpush.msra.mxu0 0.0
          %2379 = vmatpush.msra.mxu0 0.0
          %2380 = vmatpush.msra.mxu0 0.0
          %2381 = vmatpush.msra.mxu0 0.0
          %2382 = vmatpush.msra.mxu0 %v1792
          %2383 = vmatpush.msra.mxu0 %v1776
          %2384 = vmatpush.msra.mxu0 %v1760
          %2385 = vmatmul.f32.gmra.mxu0 %v1802
          %v2386 = vpop.f32.mrf.mxu0
          %v2387 = vadd.f32 0.0, %v2386
          %2388 = vmatmul.f32.gmra.mxu0 %v1805
          %v2389 = vpop.f32.mrf.mxu0
          %v2390 = vadd.f32 0.0, %v2389
          %2391 = vmatmul.f32.gmra.mxu0 %v1808
          %v2392 = vpop.f32.mrf.mxu0
          %v2393 = vadd.f32 0.0, %v2392
          %2394 = vmatmul.f32.gmra.mxu0 %v1811
          %v2395 = vpop.f32.mrf.mxu0
          %v2396 = vadd.f32 0.0, %v2395
          %2397 = vmatmul.f32.gmra.mxu0 %v1814
          %v2398 = vpop.f32.mrf.mxu0
          %v2399 = vadd.f32 0.0, %v2398
          %2400 = vmatmul.f32.gmra.mxu0 %v1817
          %v2401 = vpop.f32.mrf.mxu0
          %v2402 = vadd.f32 0.0, %v2401
          %2403 = vmatmul.f32.gmra.mxu0 %v1820
          %v2404 = vpop.f32.mrf.mxu0
          %v2405 = vadd.f32 0.0, %v2404
          %2406 = vmatmul.f32.gmra.mxu0 %v1823
          %v2407 = vpop.f32.mrf.mxu0
          %v2408 = vadd.f32 0.0, %v2407
          %2409 = vmatmul.f32.gmra.mxu0 %v1826
          %v2410 = vpop.f32.mrf.mxu0
          %v2411 = vadd.f32 0.0, %v2410
          %2412 = vmatmul.f32.gmra.mxu0 %v1829
          %v2413 = vpop.f32.mrf.mxu0
          %v2414 = vadd.f32 0.0, %v2413
          %2415 = vmatmul.f32.gmra.mxu0 %v1832
          %v2416 = vpop.f32.mrf.mxu0
          %v2417 = vadd.f32 0.0, %v2416
          %2418 = vmatmul.f32.gmra.mxu0 %v1835
          %v2419 = vpop.f32.mrf.mxu0
          %v2420 = vadd.f32 0.0, %v2419
          %2421 = vmatmul.f32.gmra.mxu0 %v1838
          %v2422 = vpop.f32.mrf.mxu0
          %v2423 = vadd.f32 0.0, %v2422
          %2424 = vmatmul.f32.gmra.mxu0 %v1841
          %v2425 = vpop.f32.mrf.mxu0
          %v2426 = vadd.f32 0.0, %v2425
          %2427 = vmatmul.f32.gmra.mxu0 %v1844
          %v2428 = vpop.f32.mrf.mxu0
          %v2429 = vadd.f32 0.0, %v2428
          %2430 = vmatmul.f32.gmra.mxu0 %v1847
          %v2431 = vpop.f32.mrf.mxu0
          %v2432 = vadd.f32 0.0, %v2431
          %2433 = vdwg.mxu0
          %2434 = vmatpush.msra.mxu0 0.0
          %2435 = vmatpush.msra.mxu0 0.0
          %2436 = vmatpush.msra.mxu0 0.0
          %2437 = vmatpush.msra.mxu0 0.0
          %2438 = vmatpush.msra.mxu0 0.0
          %2439 = vmatpush.msra.mxu0 0.0
          %2440 = vmatpush.msra.mxu0 0.0
          %2441 = vmatpush.msra.mxu0 0.0
          %2442 = vmatpush.msra.mxu0 0.0
          %2443 = vmatpush.msra.mxu0 0.0
          %2444 = vmatpush.msra.mxu0 0.0
          %2445 = vmatpush.msra.mxu0 0.0
          %2446 = vmatpush.msra.mxu0 0.0
          %2447 = vmatpush.msra.mxu0 %v1793
          %2448 = vmatpush.msra.mxu0 %v1777
          %2449 = vmatpush.msra.mxu0 %v1761
          %2450 = vmatmul.f32.gmra.mxu0 %v1802
          %v2451 = vpop.f32.mrf.mxu0
          %v2452 = vadd.f32 0.0, %v2451
          %2453 = vmatmul.f32.gmra.mxu0 %v1805
          %v2454 = vpop.f32.mrf.mxu0
          %v2455 = vadd.f32 0.0, %v2454
          %2456 = vmatmul.f32.gmra.mxu0 %v1808
          %v2457 = vpop.f32.mrf.mxu0
          %v2458 = vadd.f32 0.0, %v2457
          %2459 = vmatmul.f32.gmra.mxu0 %v1811
          %v2460 = vpop.f32.mrf.mxu0
          %v2461 = vadd.f32 0.0, %v2460
          %2462 = vmatmul.f32.gmra.mxu0 %v1814
          %v2463 = vpop.f32.mrf.mxu0
          %v2464 = vadd.f32 0.0, %v2463
          %2465 = vmatmul.f32.gmra.mxu0 %v1817
          %v2466 = vpop.f32.mrf.mxu0
          %v2467 = vadd.f32 0.0, %v2466
          %2468 = vmatmul.f32.gmra.mxu0 %v1820
          %v2469 = vpop.f32.mrf.mxu0
          %v2470 = vadd.f32 0.0, %v2469
          %2471 = vmatmul.f32.gmra.mxu0 %v1823
          %v2472 = vpop.f32.mrf.mxu0
          %v2473 = vadd.f32 0.0, %v2472
          %2474 = vmatmul.f32.gmra.mxu0 %v1826
          %v2475 = vpop.f32.mrf.mxu0
          %v2476 = vadd.f32 0.0, %v2475
          %2477 = vmatmul.f32.gmra.mxu0 %v1829
          %v2478 = vpop.f32.mrf.mxu0
          %v2479 = vadd.f32 0.0, %v2478
          %2480 = vmatmul.f32.gmra.mxu0 %v1832
          %v2481 = vpop.f32.mrf.mxu0
          %v2482 = vadd.f32 0.0, %v2481
          %2483 = vmatmul.f32.gmra.mxu0 %v1835
          %v2484 = vpop.f32.mrf.mxu0
          %v2485 = vadd.f32 0.0, %v2484
          %2486 = vmatmul.f32.gmra.mxu0 %v1838
          %v2487 = vpop.f32.mrf.mxu0
          %v2488 = vadd.f32 0.0, %v2487
          %2489 = vmatmul.f32.gmra.mxu0 %v1841
          %v2490 = vpop.f32.mrf.mxu0
          %v2491 = vadd.f32 0.0, %v2490
          %2492 = vmatmul.f32.gmra.mxu0 %v1844
          %v2493 = vpop.f32.mrf.mxu0
          %v2494 = vadd.f32 0.0, %v2493
          %2495 = vmatmul.f32.gmra.mxu0 %v1847
          %v2496 = vpop.f32.mrf.mxu0
          %v2497 = vadd.f32 0.0, %v2496
          %2498 = vdwg.mxu0
          %2499 = vmatpush.msra.mxu0 0.0
          %2500 = vmatpush.msra.mxu0 0.0
          %2501 = vmatpush.msra.mxu0 0.0
          %2502 = vmatpush.msra.mxu0 0.0
          %2503 = vmatpush.msra.mxu0 0.0
          %2504 = vmatpush.msra.mxu0 0.0
          %2505 = vmatpush.msra.mxu0 0.0
          %2506 = vmatpush.msra.mxu0 0.0
          %2507 = vmatpush.msra.mxu0 0.0
          %2508 = vmatpush.msra.mxu0 0.0
          %2509 = vmatpush.msra.mxu0 0.0
          %2510 = vmatpush.msra.mxu0 0.0
          %2511 = vmatpush.msra.mxu0 0.0
          %2512 = vmatpush.msra.mxu0 %v1794
          %2513 = vmatpush.msra.mxu0 %v1778
          %2514 = vmatpush.msra.mxu0 %v1762
          %2515 = vmatmul.f32.gmra.mxu0 %v1802
          %v2516 = vpop.f32.mrf.mxu0
          %v2517 = vadd.f32 0.0, %v2516
          %2518 = vmatmul.f32.gmra.mxu0 %v1805
          %v2519 = vpop.f32.mrf.mxu0
          %v2520 = vadd.f32 0.0, %v2519
          %2521 = vmatmul.f32.gmra.mxu0 %v1808
          %v2522 = vpop.f32.mrf.mxu0
          %v2523 = vadd.f32 0.0, %v2522
          %2524 = vmatmul.f32.gmra.mxu0 %v1811
          %v2525 = vpop.f32.mrf.mxu0
          %v2526 = vadd.f32 0.0, %v2525
          %2527 = vmatmul.f32.gmra.mxu0 %v1814
          %v2528 = vpop.f32.mrf.mxu0
          %v2529 = vadd.f32 0.0, %v2528
          %2530 = vmatmul.f32.gmra.mxu0 %v1817
          %v2531 = vpop.f32.mrf.mxu0
          %v2532 = vadd.f32 0.0, %v2531
          %2533 = vmatmul.f32.gmra.mxu0 %v1820
          %v2534 = vpop.f32.mrf.mxu0
          %v2535 = vadd.f32 0.0, %v2534
          %2536 = vmatmul.f32.gmra.mxu0 %v1823
          %v2537 = vpop.f32.mrf.mxu0
          %v2538 = vadd.f32 0.0, %v2537
          %2539 = vmatmul.f32.gmra.mxu0 %v1826
          %v2540 = vpop.f32.mrf.mxu0
          %v2541 = vadd.f32 0.0, %v2540
          %2542 = vmatmul.f32.gmra.mxu0 %v1829
          %v2543 = vpop.f32.mrf.mxu0
          %v2544 = vadd.f32 0.0, %v2543
          %2545 = vmatmul.f32.gmra.mxu0 %v1832
          %v2546 = vpop.f32.mrf.mxu0
          %v2547 = vadd.f32 0.0, %v2546
          %2548 = vmatmul.f32.gmra.mxu0 %v1835
          %v2549 = vpop.f32.mrf.mxu0
          %v2550 = vadd.f32 0.0, %v2549
          %2551 = vmatmul.f32.gmra.mxu0 %v1838
          %v2552 = vpop.f32.mrf.mxu0
          %v2553 = vadd.f32 0.0, %v2552
          %2554 = vmatmul.f32.gmra.mxu0 %v1841
          %v2555 = vpop.f32.mrf.mxu0
          %v2556 = vadd.f32 0.0, %v2555
          %2557 = vmatmul.f32.gmra.mxu0 %v1844
          %v2558 = vpop.f32.mrf.mxu0
          %v2559 = vadd.f32 0.0, %v2558
          %2560 = vmatmul.f32.gmra.mxu0 %v1847
          %v2561 = vpop.f32.mrf.mxu0
          %v2562 = vadd.f32 0.0, %v2561
          %2563 = vdwg.mxu0
          %2564 = vmatpush.msra.mxu0 0.0
          %2565 = vmatpush.msra.mxu0 0.0
          %2566 = vmatpush.msra.mxu0 0.0
          %2567 = vmatpush.msra.mxu0 0.0
          %2568 = vmatpush.msra.mxu0 0.0
          %2569 = vmatpush.msra.mxu0 0.0
          %2570 = vmatpush.msra.mxu0 0.0
          %2571 = vmatpush.msra.mxu0 0.0
          %2572 = vmatpush.msra.mxu0 0.0
          %2573 = vmatpush.msra.mxu0 0.0
          %2574 = vmatpush.msra.mxu0 0.0
          %2575 = vmatpush.msra.mxu0 0.0
          %2576 = vmatpush.msra.mxu0 0.0
          %2577 = vmatpush.msra.mxu0 %v1795
          %2578 = vmatpush.msra.mxu0 %v1779
          %2579 = vmatpush.msra.mxu0 %v1763
          %2580 = vmatmul.f32.gmra.mxu0 %v1802
          %v2581 = vpop.f32.mrf.mxu0
          %v2582 = vadd.f32 0.0, %v2581
          %2583 = vmatmul.f32.gmra.mxu0 %v1805
          %v2584 = vpop.f32.mrf.mxu0
          %v2585 = vadd.f32 0.0, %v2584
          %2586 = vmatmul.f32.gmra.mxu0 %v1808
          %v2587 = vpop.f32.mrf.mxu0
          %v2588 = vadd.f32 0.0, %v2587
          %2589 = vmatmul.f32.gmra.mxu0 %v1811
          %v2590 = vpop.f32.mrf.mxu0
          %v2591 = vadd.f32 0.0, %v2590
          %2592 = vmatmul.f32.gmra.mxu0 %v1814
          %v2593 = vpop.f32.mrf.mxu0
          %v2594 = vadd.f32 0.0, %v2593
          %2595 = vmatmul.f32.gmra.mxu0 %v1817
          %v2596 = vpop.f32.mrf.mxu0
          %v2597 = vadd.f32 0.0, %v2596
          %2598 = vmatmul.f32.gmra.mxu0 %v1820
          %v2599 = vpop.f32.mrf.mxu0
          %v2600 = vadd.f32 0.0, %v2599
          %2601 = vmatmul.f32.gmra.mxu0 %v1823
          %v2602 = vpop.f32.mrf.mxu0
          %v2603 = vadd.f32 0.0, %v2602
          %2604 = vmatmul.f32.gmra.mxu0 %v1826
          %v2605 = vpop.f32.mrf.mxu0
          %v2606 = vadd.f32 0.0, %v2605
          %2607 = vmatmul.f32.gmra.mxu0 %v1829
          %v2608 = vpop.f32.mrf.mxu0
          %v2609 = vadd.f32 0.0, %v2608
          %2610 = vmatmul.f32.gmra.mxu0 %v1832
          %v2611 = vpop.f32.mrf.mxu0
          %v2612 = vadd.f32 0.0, %v2611
          %2613 = vmatmul.f32.gmra.mxu0 %v1835
          %v2614 = vpop.f32.mrf.mxu0
          %v2615 = vadd.f32 0.0, %v2614
          %2616 = vmatmul.f32.gmra.mxu0 %v1838
          %v2617 = vpop.f32.mrf.mxu0
          %v2618 = vadd.f32 0.0, %v2617
          %2619 = vmatmul.f32.gmra.mxu0 %v1841
          %v2620 = vpop.f32.mrf.mxu0
          %v2621 = vadd.f32 0.0, %v2620
          %2622 = vmatmul.f32.gmra.mxu0 %v1844
          %v2623 = vpop.f32.mrf.mxu0
          %v2624 = vadd.f32 0.0, %v2623
          %2625 = vmatmul.f32.gmra.mxu0 %v1847
          %v2626 = vpop.f32.mrf.mxu0
          %v2627 = vadd.f32 0.0, %v2626
          %2628 = vdwg.mxu0
          %2629 = vmatpush.msra.mxu0 0.0
          %2630 = vmatpush.msra.mxu0 0.0
          %2631 = vmatpush.msra.mxu0 0.0
          %2632 = vmatpush.msra.mxu0 0.0
          %2633 = vmatpush.msra.mxu0 0.0
          %2634 = vmatpush.msra.mxu0 0.0
          %2635 = vmatpush.msra.mxu0 0.0
          %2636 = vmatpush.msra.mxu0 0.0
          %2637 = vmatpush.msra.mxu0 0.0
          %2638 = vmatpush.msra.mxu0 0.0
          %2639 = vmatpush.msra.mxu0 0.0
          %2640 = vmatpush.msra.mxu0 0.0
          %2641 = vmatpush.msra.mxu0 0.0
          %2642 = vmatpush.msra.mxu0 %v1796
          %2643 = vmatpush.msra.mxu0 %v1780
          %2644 = vmatpush.msra.mxu0 %v1764
          %2645 = vmatmul.f32.gmra.mxu0 %v1802
          %v2646 = vpop.f32.mrf.mxu0
          %v2647 = vadd.f32 0.0, %v2646
          %2648 = vmatmul.f32.gmra.mxu0 %v1805
          %v2649 = vpop.f32.mrf.mxu0
          %v2650 = vadd.f32 0.0, %v2649
          %2651 = vmatmul.f32.gmra.mxu0 %v1808
          %v2652 = vpop.f32.mrf.mxu0
          %v2653 = vadd.f32 0.0, %v2652
          %2654 = vmatmul.f32.gmra.mxu0 %v1811
          %v2655 = vpop.f32.mrf.mxu0
          %v2656 = vadd.f32 0.0, %v2655
          %2657 = vmatmul.f32.gmra.mxu0 %v1814
          %v2658 = vpop.f32.mrf.mxu0
          %v2659 = vadd.f32 0.0, %v2658
          %2660 = vmatmul.f32.gmra.mxu0 %v1817
          %v2661 = vpop.f32.mrf.mxu0
          %v2662 = vadd.f32 0.0, %v2661
          %2663 = vmatmul.f32.gmra.mxu0 %v1820
          %v2664 = vpop.f32.mrf.mxu0
          %v2665 = vadd.f32 0.0, %v2664
          %2666 = vmatmul.f32.gmra.mxu0 %v1823
          %v2667 = vpop.f32.mrf.mxu0
          %v2668 = vadd.f32 0.0, %v2667
          %2669 = vmatmul.f32.gmra.mxu0 %v1826
          %v2670 = vpop.f32.mrf.mxu0
          %v2671 = vadd.f32 0.0, %v2670
          %2672 = vmatmul.f32.gmra.mxu0 %v1829
          %v2673 = vpop.f32.mrf.mxu0
          %v2674 = vadd.f32 0.0, %v2673
          %2675 = vmatmul.f32.gmra.mxu0 %v1832
          %v2676 = vpop.f32.mrf.mxu0
          %v2677 = vadd.f32 0.0, %v2676
          %2678 = vmatmul.f32.gmra.mxu0 %v1835
          %v2679 = vpop.f32.mrf.mxu0
          %v2680 = vadd.f32 0.0, %v2679
          %2681 = vmatmul.f32.gmra.mxu0 %v1838
          %v2682 = vpop.f32.mrf.mxu0
          %v2683 = vadd.f32 0.0, %v2682
          %2684 = vmatmul.f32.gmra.mxu0 %v1841
          %v2685 = vpop.f32.mrf.mxu0
          %v2686 = vadd.f32 0.0, %v2685
          %2687 = vmatmul.f32.gmra.mxu0 %v1844
          %v2688 = vpop.f32.mrf.mxu0
          %v2689 = vadd.f32 0.0, %v2688
          %2690 = vmatmul.f32.gmra.mxu0 %v1847
          %v2691 = vpop.f32.mrf.mxu0
          %v2692 = vadd.f32 0.0, %v2691
          %2693 = vdwg.mxu0
          %2694 = vmatpush.msra.mxu0 0.0
          %2695 = vmatpush.msra.mxu0 0.0
          %2696 = vmatpush.msra.mxu0 0.0
          %2697 = vmatpush.msra.mxu0 0.0
          %2698 = vmatpush.msra.mxu0 0.0
          %2699 = vmatpush.msra.mxu0 0.0
          %2700 = vmatpush.msra.mxu0 0.0
          %2701 = vmatpush.msra.mxu0 0.0
          %2702 = vmatpush.msra.mxu0 0.0
          %2703 = vmatpush.msra.mxu0 0.0
          %2704 = vmatpush.msra.mxu0 0.0
          %2705 = vmatpush.msra.mxu0 0.0
          %2706 = vmatpush.msra.mxu0 0.0
          %2707 = vmatpush.msra.mxu0 %v1797
          %2708 = vmatpush.msra.mxu0 %v1781
          %2709 = vmatpush.msra.mxu0 %v1765
          %2710 = vmatmul.f32.gmra.mxu0 %v1802
          %v2711 = vpop.f32.mrf.mxu0
          %v2712 = vadd.f32 0.0, %v2711
          %2713 = vmatmul.f32.gmra.mxu0 %v1805
          %v2714 = vpop.f32.mrf.mxu0
          %v2715 = vadd.f32 0.0, %v2714
          %2716 = vmatmul.f32.gmra.mxu0 %v1808
          %v2717 = vpop.f32.mrf.mxu0
          %v2718 = vadd.f32 0.0, %v2717
          %2719 = vmatmul.f32.gmra.mxu0 %v1811
          %v2720 = vpop.f32.mrf.mxu0
          %v2721 = vadd.f32 0.0, %v2720
          %2722 = vmatmul.f32.gmra.mxu0 %v1814
          %v2723 = vpop.f32.mrf.mxu0
          %v2724 = vadd.f32 0.0, %v2723
          %2725 = vmatmul.f32.gmra.mxu0 %v1817
          %v2726 = vpop.f32.mrf.mxu0
          %v2727 = vadd.f32 0.0, %v2726
          %2728 = vmatmul.f32.gmra.mxu0 %v1820
          %v2729 = vpop.f32.mrf.mxu0
          %v2730 = vadd.f32 0.0, %v2729
          %2731 = vmatmul.f32.gmra.mxu0 %v1823
          %v2732 = vpop.f32.mrf.mxu0
          %v2733 = vadd.f32 0.0, %v2732
          %2734 = vmatmul.f32.gmra.mxu0 %v1826
          %v2735 = vpop.f32.mrf.mxu0
          %v2736 = vadd.f32 0.0, %v2735
          %2737 = vmatmul.f32.gmra.mxu0 %v1829
          %v2738 = vpop.f32.mrf.mxu0
          %v2739 = vadd.f32 0.0, %v2738
          %2740 = vmatmul.f32.gmra.mxu0 %v1832
          %v2741 = vpop.f32.mrf.mxu0
          %v2742 = vadd.f32 0.0, %v2741
          %2743 = vmatmul.f32.gmra.mxu0 %v1835
          %v2744 = vpop.f32.mrf.mxu0
          %v2745 = vadd.f32 0.0, %v2744
          %2746 = vmatmul.f32.gmra.mxu0 %v1838
          %v2747 = vpop.f32.mrf.mxu0
          %v2748 = vadd.f32 0.0, %v2747
          %2749 = vmatmul.f32.gmra.mxu0 %v1841
          %v2750 = vpop.f32.mrf.mxu0
          %v2751 = vadd.f32 0.0, %v2750
          %2752 = vmatmul.f32.gmra.mxu0 %v1844
          %v2753 = vpop.f32.mrf.mxu0
          %v2754 = vadd.f32 0.0, %v2753
          %2755 = vmatmul.f32.gmra.mxu0 %v1847
          %v2756 = vpop.f32.mrf.mxu0
          %v2757 = vadd.f32 0.0, %v2756
          %2758 = vdwg.mxu0
          %2759 = vmatpush.msra.mxu0 0.0
          %2760 = vmatpush.msra.mxu0 0.0
          %2761 = vmatpush.msra.mxu0 0.0
          %2762 = vmatpush.msra.mxu0 0.0
          %2763 = vmatpush.msra.mxu0 0.0
          %2764 = vmatpush.msra.mxu0 0.0
          %2765 = vmatpush.msra.mxu0 0.0
          %2766 = vmatpush.msra.mxu0 0.0
          %2767 = vmatpush.msra.mxu0 0.0
          %2768 = vmatpush.msra.mxu0 0.0
          %2769 = vmatpush.msra.mxu0 0.0
          %2770 = vmatpush.msra.mxu0 0.0
          %2771 = vmatpush.msra.mxu0 0.0
          %2772 = vmatpush.msra.mxu0 %v1798
          %2773 = vmatpush.msra.mxu0 %v1782
          %2774 = vmatpush.msra.mxu0 %v1766
          %2775 = vmatmul.f32.gmra.mxu0 %v1802
          %v2776 = vpop.f32.mrf.mxu0
          %v2777 = vadd.f32 0.0, %v2776
          %2778 = vmatmul.f32.gmra.mxu0 %v1805
          %v2779 = vpop.f32.mrf.mxu0
          %v2780 = vadd.f32 0.0, %v2779
          %2781 = vmatmul.f32.gmra.mxu0 %v1808
          %v2782 = vpop.f32.mrf.mxu0
          %v2783 = vadd.f32 0.0, %v2782
          %2784 = vmatmul.f32.gmra.mxu0 %v1811
          %v2785 = vpop.f32.mrf.mxu0
          %v2786 = vadd.f32 0.0, %v2785
          %2787 = vmatmul.f32.gmra.mxu0 %v1814
          %v2788 = vpop.f32.mrf.mxu0
          %v2789 = vadd.f32 0.0, %v2788
          %2790 = vmatmul.f32.gmra.mxu0 %v1817
          %v2791 = vpop.f32.mrf.mxu0
          %v2792 = vadd.f32 0.0, %v2791
          %2793 = vmatmul.f32.gmra.mxu0 %v1820
          %v2794 = vpop.f32.mrf.mxu0
          %v2795 = vadd.f32 0.0, %v2794
          %2796 = vmatmul.f32.gmra.mxu0 %v1823
          %v2797 = vpop.f32.mrf.mxu0
          %v2798 = vadd.f32 0.0, %v2797
          %2799 = vmatmul.f32.gmra.mxu0 %v1826
          %v2800 = vpop.f32.mrf.mxu0
          %v2801 = vadd.f32 0.0, %v2800
          %2802 = vmatmul.f32.gmra.mxu0 %v1829
          %v2803 = vpop.f32.mrf.mxu0
          %v2804 = vadd.f32 0.0, %v2803
          %2805 = vmatmul.f32.gmra.mxu0 %v1832
          %v2806 = vpop.f32.mrf.mxu0
          %v2807 = vadd.f32 0.0, %v2806
          %2808 = vmatmul.f32.gmra.mxu0 %v1835
          %v2809 = vpop.f32.mrf.mxu0
          %v2810 = vadd.f32 0.0, %v2809
          %2811 = vmatmul.f32.gmra.mxu0 %v1838
          %v2812 = vpop.f32.mrf.mxu0
          %v2813 = vadd.f32 0.0, %v2812
          %2814 = vmatmul.f32.gmra.mxu0 %v1841
          %v2815 = vpop.f32.mrf.mxu0
          %v2816 = vadd.f32 0.0, %v2815
          %2817 = vmatmul.f32.gmra.mxu0 %v1844
          %v2818 = vpop.f32.mrf.mxu0
          %v2819 = vadd.f32 0.0, %v2818
          %2820 = vmatmul.f32.gmra.mxu0 %v1847
          %v2821 = vpop.f32.mrf.mxu0
          %v2822 = vadd.f32 0.0, %v2821
          %2823 = vdwg.mxu0
          %2824 = vmatpush.msra.mxu0 0.0
          %2825 = vmatpush.msra.mxu0 0.0
          %2826 = vmatpush.msra.mxu0 0.0
          %2827 = vmatpush.msra.mxu0 0.0
          %2828 = vmatpush.msra.mxu0 0.0
          %2829 = vmatpush.msra.mxu0 0.0
          %2830 = vmatpush.msra.mxu0 0.0
          %2831 = vmatpush.msra.mxu0 0.0
          %2832 = vmatpush.msra.mxu0 0.0
          %2833 = vmatpush.msra.mxu0 0.0
          %2834 = vmatpush.msra.mxu0 0.0
          %2835 = vmatpush.msra.mxu0 0.0
          %2836 = vmatpush.msra.mxu0 0.0
          %2837 = vmatpush.msra.mxu0 %v1799
          %2838 = vmatpush.msra.mxu0 %v1783
          %2839 = vmatpush.msra.mxu0 %v1767
          %2840 = vmatmul.f32.gmra.mxu0 %v1802
          %v2841 = vpop.f32.mrf.mxu0
          %v2842 = vadd.f32 0.0, %v2841
          %2843 = vmatmul.f32.gmra.mxu0 %v1805
          %v2844 = vpop.f32.mrf.mxu0
          %v2845 = vadd.f32 0.0, %v2844
          %2846 = vmatmul.f32.gmra.mxu0 %v1808
          %v2847 = vpop.f32.mrf.mxu0
          %v2848 = vadd.f32 0.0, %v2847
          %2849 = vmatmul.f32.gmra.mxu0 %v1811
          %v2850 = vpop.f32.mrf.mxu0
          %v2851 = vadd.f32 0.0, %v2850
          %2852 = vmatmul.f32.gmra.mxu0 %v1814
          %v2853 = vpop.f32.mrf.mxu0
          %v2854 = vadd.f32 0.0, %v2853
          %2855 = vmatmul.f32.gmra.mxu0 %v1817
          %v2856 = vpop.f32.mrf.mxu0
          %v2857 = vadd.f32 0.0, %v2856
          %2858 = vmatmul.f32.gmra.mxu0 %v1820
          %v2859 = vpop.f32.mrf.mxu0
          %v2860 = vadd.f32 0.0, %v2859
          %2861 = vmatmul.f32.gmra.mxu0 %v1823
          %v2862 = vpop.f32.mrf.mxu0
          %v2863 = vadd.f32 0.0, %v2862
          %2864 = vmatmul.f32.gmra.mxu0 %v1826
          %v2865 = vpop.f32.mrf.mxu0
          %v2866 = vadd.f32 0.0, %v2865
          %2867 = vmatmul.f32.gmra.mxu0 %v1829
          %v2868 = vpop.f32.mrf.mxu0
          %v2869 = vadd.f32 0.0, %v2868
          %2870 = vmatmul.f32.gmra.mxu0 %v1832
          %v2871 = vpop.f32.mrf.mxu0
          %v2872 = vadd.f32 0.0, %v2871
          %2873 = vmatmul.f32.gmra.mxu0 %v1835
          %v2874 = vpop.f32.mrf.mxu0
          %v2875 = vadd.f32 0.0, %v2874
          %2876 = vmatmul.f32.gmra.mxu0 %v1838
          %v2877 = vpop.f32.mrf.mxu0
          %v2878 = vadd.f32 0.0, %v2877
          %2879 = vmatmul.f32.gmra.mxu0 %v1841
          %v2880 = vpop.f32.mrf.mxu0
          %v2881 = vadd.f32 0.0, %v2880
          %2882 = vmatmul.f32.gmra.mxu0 %v1844
          %v2883 = vpop.f32.mrf.mxu0
          %v2884 = vadd.f32 0.0, %v2883
          %2885 = vmatmul.f32.gmra.mxu0 %v1847
          %v2886 = vpop.f32.mrf.mxu0
          %v2887 = vadd.f32 0.0, %v2886
          %2888 = vdwg.mxu0
          %v2889 = vrot.slane %v1997, 4
          %vm2890 = vcmask 1047556
          %v2891 = vsel %vm2890, %v2889, %v1867
          %v2892 = vrot.slane %v1867, 4
          %v2893 = vsel %vm2890, %v1997, %v2892
          %v2895 = vunpack.c.l.s4 1983009808
          %v2896 = vunpack.c.0.s8 %v2895
          %v2897 = vperm.slane %v2891, %v2896
          %v2899 = vunpack.c.l.s4 1983009808
          %v2900 = vunpack.c.0.s8 %v2899
          %v2901 = vperm.slane %v2893, %v2900
          %v2902 = vrot.slane %v2062, 4
          %v2903 = vsel %vm2890, %v2902, %v1932
          %v2904 = vrot.slane %v1932, 4
          %v2905 = vsel %vm2890, %v2062, %v2904
          %v2907 = vunpack.c.l.s4 1983009808
          %v2908 = vunpack.c.0.s8 %v2907
          %v2909 = vperm.slane %v2903, %v2908
          %v2911 = vunpack.c.l.s4 1983009808
          %v2912 = vunpack.c.0.s8 %v2911
          %v2913 = vperm.slane %v2905, %v2912
          %v2914 = vrot.slane %v2257, 4
          %v2915 = vsel %vm2890, %v2914, %v2127
          %v2916 = vrot.slane %v2127, 4
          %v2917 = vsel %vm2890, %v2257, %v2916
          %v2919 = vunpack.c.l.s4 1983009808
          %v2920 = vunpack.c.0.s8 %v2919
          %v2921 = vperm.slane %v2915, %v2920
          %v2923 = vunpack.c.l.s4 1983009808
          %v2924 = vunpack.c.0.s8 %v2923
          %v2925 = vperm.slane %v2917, %v2924
          %v2926 = vrot.slane %v2322, 4
          %v2927 = vsel %vm2890, %v2926, %v2192
          %v2928 = vrot.slane %v2192, 4
          %v2929 = vsel %vm2890, %v2322, %v2928
          %v2931 = vunpack.c.l.s4 1983009808
          %v2932 = vunpack.c.0.s8 %v2931
          %v2933 = vperm.slane %v2927, %v2932
          %v2935 = vunpack.c.l.s4 1983009808
          %v2936 = vunpack.c.0.s8 %v2935
          %v2937 = vperm.slane %v2929, %v2936
          %v2938 = vrot.slane %v2909, 4
          %v2939 = vsel %vm2890, %v2938, %v2897
          %v2940 = vrot.slane %v2897, 4
          %v2941 = vsel %vm2890, %v2909, %v2940
          %v2943 = vunpack.c.l.s4 1934713408
          %v2944 = vunpack.c.0.s8 %v2943
          %v2945 = vperm.slane %v2939, %v2944
          %v2947 = vunpack.c.l.s4 1934713408
          %v2948 = vunpack.c.0.s8 %v2947
          %v2949 = vperm.slane %v2941, %v2948
          %v2950 = vrot.slane %v2913, 4
          %v2951 = vsel %vm2890, %v2950, %v2901
          %v2952 = vrot.slane %v2901, 4
          %v2953 = vsel %vm2890, %v2913, %v2952
          %v2955 = vunpack.c.l.s4 1934713408
          %v2956 = vunpack.c.0.s8 %v2955
          %v2957 = vperm.slane %v2951, %v2956
          %v2959 = vunpack.c.l.s4 1934713408
          %v2960 = vunpack.c.0.s8 %v2959
          %v2961 = vperm.slane %v2953, %v2960
          %v2962 = vrot.slane %v2933, 4
          %v2963 = vsel %vm2890, %v2962, %v2921
          %v2964 = vrot.slane %v2921, 4
          %v2965 = vsel %vm2890, %v2933, %v2964
          %v2967 = vunpack.c.l.s4 1934713408
          %v2968 = vunpack.c.0.s8 %v2967
          %v2969 = vperm.slane %v2963, %v2968
          %v2971 = vunpack.c.l.s4 1934713408
          %v2972 = vunpack.c.0.s8 %v2971
          %v2973 = vperm.slane %v2965, %v2972
          %v2974 = vrot.slane %v2937, 4
          %v2975 = vsel %vm2890, %v2974, %v2925
          %v2976 = vrot.slane %v2925, 4
          %v2977 = vsel %vm2890, %v2937, %v2976
          %v2979 = vunpack.c.l.s4 1934713408
          %v2980 = vunpack.c.0.s8 %v2979
          %v2981 = vperm.slane %v2975, %v2980
          %v2983 = vunpack.c.l.s4 1934713408
          %v2984 = vunpack.c.0.s8 %v2983
          %v2985 = vperm.slane %v2977, %v2984
          %v2986 = vrot.slane %v2969, 4
          %v2987 = vsel %vm2890, %v2986, %v2945
          %v2988 = vrot.slane %v2945, 4
          %v2989 = vsel %vm2890, %v2969, %v2988
          %v2990 = vrot.slane %v2973, 4
          %v2991 = vsel %vm2890, %v2990, %v2949
          %v2992 = vrot.slane %v2949, 4
          %v2993 = vsel %vm2890, %v2973, %v2992
          %v2994 = vrot.slane %v2981, 4
          %v2995 = vsel %vm2890, %v2994, %v2957
          %v2996 = vrot.slane %v2957, 4
          %v2997 = vsel %vm2890, %v2981, %v2996
          %v2998 = vrot.slane %v2985, 4
          %v2999 = vsel %vm2890, %v2998, %v2961
          %v3000 = vrot.slane %v2961, 4
          %v3001 = vsel %vm2890, %v2985, %v3000
          %v3002 = vrot.slane %v2517, 4
          %v3003 = vsel %vm2890, %v3002, %v2387
          %v3004 = vrot.slane %v2387, 4
          %v3005 = vsel %vm2890, %v2517, %v3004
          %v3007 = vunpack.c.l.s4 1983009808
          %v3008 = vunpack.c.0.s8 %v3007
          %v3009 = vperm.slane %v3003, %v3008
          %v3011 = vunpack.c.l.s4 1983009808
          %v3012 = vunpack.c.0.s8 %v3011
          %v3013 = vperm.slane %v3005, %v3012
          %v3014 = vrot.slane %v2582, 4
          %v3015 = vsel %vm2890, %v3014, %v2452
          %v3016 = vrot.slane %v2452, 4
          %v3017 = vsel %vm2890, %v2582, %v3016
          %v3019 = vunpack.c.l.s4 1983009808
          %v3020 = vunpack.c.0.s8 %v3019
          %v3021 = vperm.slane %v3015, %v3020
          %v3023 = vunpack.c.l.s4 1983009808
          %v3024 = vunpack.c.0.s8 %v3023
          %v3025 = vperm.slane %v3017, %v3024
          %v3026 = vrot.slane %v2777, 4
          %v3027 = vsel %vm2890, %v3026, %v2647
          %v3028 = vrot.slane %v2647, 4
          %v3029 = vsel %vm2890, %v2777, %v3028
          %v3031 = vunpack.c.l.s4 1983009808
          %v3032 = vunpack.c.0.s8 %v3031
          %v3033 = vperm.slane %v3027, %v3032
          %v3035 = vunpack.c.l.s4 1983009808
          %v3036 = vunpack.c.0.s8 %v3035
          %v3037 = vperm.slane %v3029, %v3036
          %v3038 = vrot.slane %v2842, 4
          %v3039 = vsel %vm2890, %v3038, %v2712
          %v3040 = vrot.slane %v2712, 4
          %v3041 = vsel %vm2890, %v2842, %v3040
          %v3043 = vunpack.c.l.s4 1983009808
          %v3044 = vunpack.c.0.s8 %v3043
          %v3045 = vperm.slane %v3039, %v3044
          %v3047 = vunpack.c.l.s4 1983009808
          %v3048 = vunpack.c.0.s8 %v3047
          %v3049 = vperm.slane %v3041, %v3048
          %v3050 = vrot.slane %v3021, 4
          %v3051 = vsel %vm2890, %v3050, %v3009
          %v3052 = vrot.slane %v3009, 4
          %v3053 = vsel %vm2890, %v3021, %v3052
          %v3055 = vunpack.c.l.s4 1934713408
          %v3056 = vunpack.c.0.s8 %v3055
          %v3057 = vperm.slane %v3051, %v3056
          %v3059 = vunpack.c.l.s4 1934713408
          %v3060 = vunpack.c.0.s8 %v3059
          %v3061 = vperm.slane %v3053, %v3060
          %v3062 = vrot.slane %v3025, 4
          %v3063 = vsel %vm2890, %v3062, %v3013
          %v3064 = vrot.slane %v3013, 4
          %v3065 = vsel %vm2890, %v3025, %v3064
          %v3067 = vunpack.c.l.s4 1934713408
          %v3068 = vunpack.c.0.s8 %v3067
          %v3069 = vperm.slane %v3063, %v3068
          %v3071 = vunpack.c.l.s4 1934713408
          %v3072 = vunpack.c.0.s8 %v3071
          %v3073 = vperm.slane %v3065, %v3072
          %v3074 = vrot.slane %v3045, 4
          %v3075 = vsel %vm2890, %v3074, %v3033
          %v3076 = vrot.slane %v3033, 4
          %v3077 = vsel %vm2890, %v3045, %v3076
          %v3079 = vunpack.c.l.s4 1934713408
          %v3080 = vunpack.c.0.s8 %v3079
          %v3081 = vperm.slane %v3075, %v3080
          %v3083 = vunpack.c.l.s4 1934713408
          %v3084 = vunpack.c.0.s8 %v3083
          %v3085 = vperm.slane %v3077, %v3084
          %v3086 = vrot.slane %v3049, 4
          %v3087 = vsel %vm2890, %v3086, %v3037
          %v3088 = vrot.slane %v3037, 4
          %v3089 = vsel %vm2890, %v3049, %v3088
          %v3091 = vunpack.c.l.s4 1934713408
          %v3092 = vunpack.c.0.s8 %v3091
          %v3093 = vperm.slane %v3087, %v3092
          %v3095 = vunpack.c.l.s4 1934713408
          %v3096 = vunpack.c.0.s8 %v3095
          %v3097 = vperm.slane %v3089, %v3096
          %v3098 = vrot.slane %v3081, 4
          %v3099 = vsel %vm2890, %v3098, %v3057
          %v3100 = vrot.slane %v3057, 4
          %v3101 = vsel %vm2890, %v3081, %v3100
          %v3102 = vrot.slane %v3085, 4
          %v3103 = vsel %vm2890, %v3102, %v3061
          %v3104 = vrot.slane %v3061, 4
          %v3105 = vsel %vm2890, %v3085, %v3104
          %v3106 = vrot.slane %v3093, 4
          %v3107 = vsel %vm2890, %v3106, %v3069
          %v3108 = vrot.slane %v3069, 4
          %v3109 = vsel %vm2890, %v3093, %v3108
          %v3110 = vrot.slane %v3097, 4
          %v3111 = vsel %vm2890, %v3110, %v3073
          %v3112 = vrot.slane %v3073, 4
          %v3113 = vsel %vm2890, %v3097, %v3112
          %v3114 = vrot.slane %v2000, 4
          %v3115 = vsel %vm2890, %v3114, %v1870
          %v3116 = vrot.slane %v1870, 4
          %v3117 = vsel %vm2890, %v2000, %v3116
          %v3119 = vunpack.c.l.s4 1983009808
          %v3120 = vunpack.c.0.s8 %v3119
          %v3121 = vperm.slane %v3115, %v3120
          %v3123 = vunpack.c.l.s4 1983009808
          %v3124 = vunpack.c.0.s8 %v3123
          %v3125 = vperm.slane %v3117, %v3124
          %v3126 = vrot.slane %v2065, 4
          %v3127 = vsel %vm2890, %v3126, %v1935
          %v3128 = vrot.slane %v1935, 4
          %v3129 = vsel %vm2890, %v2065, %v3128
          %v3131 = vunpack.c.l.s4 1983009808
          %v3132 = vunpack.c.0.s8 %v3131
          %v3133 = vperm.slane %v3127, %v3132
          %v3135 = vunpack.c.l.s4 1983009808
          %v3136 = vunpack.c.0.s8 %v3135
          %v3137 = vperm.slane %v3129, %v3136
          %v3138 = vrot.slane %v2260, 4
          %v3139 = vsel %vm2890, %v3138, %v2130
          %v3140 = vrot.slane %v2130, 4
          %v3141 = vsel %vm2890, %v2260, %v3140
          %v3143 = vunpack.c.l.s4 1983009808
          %v3144 = vunpack.c.0.s8 %v3143
          %v3145 = vperm.slane %v3139, %v3144
          %v3147 = vunpack.c.l.s4 1983009808
          %v3148 = vunpack.c.0.s8 %v3147
          %v3149 = vperm.slane %v3141, %v3148
          %v3150 = vrot.slane %v2325, 4
          %v3151 = vsel %vm2890, %v3150, %v2195
          %v3152 = vrot.slane %v2195, 4
          %v3153 = vsel %vm2890, %v2325, %v3152
          %v3155 = vunpack.c.l.s4 1983009808
          %v3156 = vunpack.c.0.s8 %v3155
          %v3157 = vperm.slane %v3151, %v3156
          %v3159 = vunpack.c.l.s4 1983009808
          %v3160 = vunpack.c.0.s8 %v3159
          %v3161 = vperm.slane %v3153, %v3160
          %v3162 = vrot.slane %v3133, 4
          %v3163 = vsel %vm2890, %v3162, %v3121
          %v3164 = vrot.slane %v3121, 4
          %v3165 = vsel %vm2890, %v3133, %v3164
          %v3167 = vunpack.c.l.s4 1934713408
          %v3168 = vunpack.c.0.s8 %v3167
          %v3169 = vperm.slane %v3163, %v3168
          %v3171 = vunpack.c.l.s4 1934713408
          %v3172 = vunpack.c.0.s8 %v3171
          %v3173 = vperm.slane %v3165, %v3172
          %v3174 = vrot.slane %v3137, 4
          %v3175 = vsel %vm2890, %v3174, %v3125
          %v3176 = vrot.slane %v3125, 4
          %v3177 = vsel %vm2890, %v3137, %v3176
          %v3179 = vunpack.c.l.s4 1934713408
          %v3180 = vunpack.c.0.s8 %v3179
          %v3181 = vperm.slane %v3175, %v3180
          %v3183 = vunpack.c.l.s4 1934713408
          %v3184 = vunpack.c.0.s8 %v3183
          %v3185 = vperm.slane %v3177, %v3184
          %v3186 = vrot.slane %v3157, 4
          %v3187 = vsel %vm2890, %v3186, %v3145
          %v3188 = vrot.slane %v3145, 4
          %v3189 = vsel %vm2890, %v3157, %v3188
          %v3191 = vunpack.c.l.s4 1934713408
          %v3192 = vunpack.c.0.s8 %v3191
          %v3193 = vperm.slane %v3187, %v3192
          %v3195 = vunpack.c.l.s4 1934713408
          %v3196 = vunpack.c.0.s8 %v3195
          %v3197 = vperm.slane %v3189, %v3196
          %v3198 = vrot.slane %v3161, 4
          %v3199 = vsel %vm2890, %v3198, %v3149
          %v3200 = vrot.slane %v3149, 4
          %v3201 = vsel %vm2890, %v3161, %v3200
          %v3203 = vunpack.c.l.s4 1934713408
          %v3204 = vunpack.c.0.s8 %v3203
          %v3205 = vperm.slane %v3199, %v3204
          %v3207 = vunpack.c.l.s4 1934713408
          %v3208 = vunpack.c.0.s8 %v3207
          %v3209 = vperm.slane %v3201, %v3208
          %v3210 = vrot.slane %v3193, 4
          %v3211 = vsel %vm2890, %v3210, %v3169
          %v3212 = vrot.slane %v3169, 4
          %v3213 = vsel %vm2890, %v3193, %v3212
          %v3214 = vrot.slane %v3197, 4
          %v3215 = vsel %vm2890, %v3214, %v3173
          %v3216 = vrot.slane %v3173, 4
          %v3217 = vsel %vm2890, %v3197, %v3216
          %v3218 = vrot.slane %v3205, 4
          %v3219 = vsel %vm2890, %v3218, %v3181
          %v3220 = vrot.slane %v3181, 4
          %v3221 = vsel %vm2890, %v3205, %v3220
          %v3222 = vrot.slane %v3209, 4
          %v3223 = vsel %vm2890, %v3222, %v3185
          %v3224 = vrot.slane %v3185, 4
          %v3225 = vsel %vm2890, %v3209, %v3224
          %v3226 = vrot.slane %v2520, 4
          %v3227 = vsel %vm2890, %v3226, %v2390
          %v3228 = vrot.slane %v2390, 4
          %v3229 = vsel %vm2890, %v2520, %v3228
          %v3231 = vunpack.c.l.s4 1983009808
          %v3232 = vunpack.c.0.s8 %v3231
          %v3233 = vperm.slane %v3227, %v3232
          %v3235 = vunpack.c.l.s4 1983009808
          %v3236 = vunpack.c.0.s8 %v3235
          %v3237 = vperm.slane %v3229, %v3236
          %v3238 = vrot.slane %v2585, 4
          %v3239 = vsel %vm2890, %v3238, %v2455
          %v3240 = vrot.slane %v2455, 4
          %v3241 = vsel %vm2890, %v2585, %v3240
          %v3243 = vunpack.c.l.s4 1983009808
          %v3244 = vunpack.c.0.s8 %v3243
          %v3245 = vperm.slane %v3239, %v3244
          %v3247 = vunpack.c.l.s4 1983009808
          %v3248 = vunpack.c.0.s8 %v3247
          %v3249 = vperm.slane %v3241, %v3248
          %v3250 = vrot.slane %v2780, 4
          %v3251 = vsel %vm2890, %v3250, %v2650
          %v3252 = vrot.slane %v2650, 4
          %v3253 = vsel %vm2890, %v2780, %v3252
          %v3255 = vunpack.c.l.s4 1983009808
          %v3256 = vunpack.c.0.s8 %v3255
          %v3257 = vperm.slane %v3251, %v3256
          %v3259 = vunpack.c.l.s4 1983009808
          %v3260 = vunpack.c.0.s8 %v3259
          %v3261 = vperm.slane %v3253, %v3260
          %v3262 = vrot.slane %v2845, 4
          %v3263 = vsel %vm2890, %v3262, %v2715
          %v3264 = vrot.slane %v2715, 4
          %v3265 = vsel %vm2890, %v2845, %v3264
          %v3267 = vunpack.c.l.s4 1983009808
          %v3268 = vunpack.c.0.s8 %v3267
          %v3269 = vperm.slane %v3263, %v3268
          %v3271 = vunpack.c.l.s4 1983009808
          %v3272 = vunpack.c.0.s8 %v3271
          %v3273 = vperm.slane %v3265, %v3272
          %v3274 = vrot.slane %v3245, 4
          %v3275 = vsel %vm2890, %v3274, %v3233
          %v3276 = vrot.slane %v3233, 4
          %v3277 = vsel %vm2890, %v3245, %v3276
          %v3279 = vunpack.c.l.s4 1934713408
          %v3280 = vunpack.c.0.s8 %v3279
          %v3281 = vperm.slane %v3275, %v3280
          %v3283 = vunpack.c.l.s4 1934713408
          %v3284 = vunpack.c.0.s8 %v3283
          %v3285 = vperm.slane %v3277, %v3284
          %v3286 = vrot.slane %v3249, 4
          %v3287 = vsel %vm2890, %v3286, %v3237
          %v3288 = vrot.slane %v3237, 4
          %v3289 = vsel %vm2890, %v3249, %v3288
          %v3291 = vunpack.c.l.s4 1934713408
          %v3292 = vunpack.c.0.s8 %v3291
          %v3293 = vperm.slane %v3287, %v3292
          %v3295 = vunpack.c.l.s4 1934713408
          %v3296 = vunpack.c.0.s8 %v3295
          %v3297 = vperm.slane %v3289, %v3296
          %v3298 = vrot.slane %v3269, 4
          %v3299 = vsel %vm2890, %v3298, %v3257
          %v3300 = vrot.slane %v3257, 4
          %v3301 = vsel %vm2890, %v3269, %v3300
          %v3303 = vunpack.c.l.s4 1934713408
          %v3304 = vunpack.c.0.s8 %v3303
          %v3305 = vperm.slane %v3299, %v3304
          %v3307 = vunpack.c.l.s4 1934713408
          %v3308 = vunpack.c.0.s8 %v3307
          %v3309 = vperm.slane %v3301, %v3308
          %v3310 = vrot.slane %v3273, 4
          %v3311 = vsel %vm2890, %v3310, %v3261
          %v3312 = vrot.slane %v3261, 4
          %v3313 = vsel %vm2890, %v3273, %v3312
          %v3315 = vunpack.c.l.s4 1934713408
          %v3316 = vunpack.c.0.s8 %v3315
          %v3317 = vperm.slane %v3311, %v3316
          %v3319 = vunpack.c.l.s4 1934713408
          %v3320 = vunpack.c.0.s8 %v3319
          %v3321 = vperm.slane %v3313, %v3320
          %v3322 = vrot.slane %v3305, 4
          %v3323 = vsel %vm2890, %v3322, %v3281
          %v3324 = vrot.slane %v3281, 4
          %v3325 = vsel %vm2890, %v3305, %v3324
          %v3326 = vrot.slane %v3309, 4
          %v3327 = vsel %vm2890, %v3326, %v3285
          %v3328 = vrot.slane %v3285, 4
          %v3329 = vsel %vm2890, %v3309, %v3328
          %v3330 = vrot.slane %v3317, 4
          %v3331 = vsel %vm2890, %v3330, %v3293
          %v3332 = vrot.slane %v3293, 4
          %v3333 = vsel %vm2890, %v3317, %v3332
          %v3334 = vrot.slane %v3321, 4
          %v3335 = vsel %vm2890, %v3334, %v3297
          %v3336 = vrot.slane %v3297, 4
          %v3337 = vsel %vm2890, %v3321, %v3336
          %v3338 = vrot.slane %v2003, 4
          %v3339 = vsel %vm2890, %v3338, %v1873
          %v3340 = vrot.slane %v1873, 4
          %v3341 = vsel %vm2890, %v2003, %v3340
          %v3343 = vunpack.c.l.s4 1983009808
          %v3344 = vunpack.c.0.s8 %v3343
          %v3345 = vperm.slane %v3339, %v3344
          %v3347 = vunpack.c.l.s4 1983009808
          %v3348 = vunpack.c.0.s8 %v3347
          %v3349 = vperm.slane %v3341, %v3348
          %v3350 = vrot.slane %v2068, 4
          %v3351 = vsel %vm2890, %v3350, %v1938
          %v3352 = vrot.slane %v1938, 4
          %v3353 = vsel %vm2890, %v2068, %v3352
          %v3355 = vunpack.c.l.s4 1983009808
          %v3356 = vunpack.c.0.s8 %v3355
          %v3357 = vperm.slane %v3351, %v3356
          %v3359 = vunpack.c.l.s4 1983009808
          %v3360 = vunpack.c.0.s8 %v3359
          %v3361 = vperm.slane %v3353, %v3360
          %v3362 = vrot.slane %v2263, 4
          %v3363 = vsel %vm2890, %v3362, %v2133
          %v3364 = vrot.slane %v2133, 4
          %v3365 = vsel %vm2890, %v2263, %v3364
          %v3367 = vunpack.c.l.s4 1983009808
          %v3368 = vunpack.c.0.s8 %v3367
          %v3369 = vperm.slane %v3363, %v3368
          %v3371 = vunpack.c.l.s4 1983009808
          %v3372 = vunpack.c.0.s8 %v3371
          %v3373 = vperm.slane %v3365, %v3372
          %v3374 = vrot.slane %v2328, 4
          %v3375 = vsel %vm2890, %v3374, %v2198
          %v3376 = vrot.slane %v2198, 4
          %v3377 = vsel %vm2890, %v2328, %v3376
          %v3379 = vunpack.c.l.s4 1983009808
          %v3380 = vunpack.c.0.s8 %v3379
          %v3381 = vperm.slane %v3375, %v3380
          %v3383 = vunpack.c.l.s4 1983009808
          %v3384 = vunpack.c.0.s8 %v3383
          %v3385 = vperm.slane %v3377, %v3384
          %v3386 = vrot.slane %v3357, 4
          %v3387 = vsel %vm2890, %v3386, %v3345
          %v3388 = vrot.slane %v3345, 4
          %v3389 = vsel %vm2890, %v3357, %v3388
          %v3391 = vunpack.c.l.s4 1934713408
          %v3392 = vunpack.c.0.s8 %v3391
          %v3393 = vperm.slane %v3387, %v3392
          %v3395 = vunpack.c.l.s4 1934713408
          %v3396 = vunpack.c.0.s8 %v3395
          %v3397 = vperm.slane %v3389, %v3396
          %v3398 = vrot.slane %v3361, 4
          %v3399 = vsel %vm2890, %v3398, %v3349
          %v3400 = vrot.slane %v3349, 4
          %v3401 = vsel %vm2890, %v3361, %v3400
          %v3403 = vunpack.c.l.s4 1934713408
          %v3404 = vunpack.c.0.s8 %v3403
          %v3405 = vperm.slane %v3399, %v3404
          %v3407 = vunpack.c.l.s4 1934713408
          %v3408 = vunpack.c.0.s8 %v3407
          %v3409 = vperm.slane %v3401, %v3408
          %v3410 = vrot.slane %v3381, 4
          %v3411 = vsel %vm2890, %v3410, %v3369
          %v3412 = vrot.slane %v3369, 4
          %v3413 = vsel %vm2890, %v3381, %v3412
          %v3415 = vunpack.c.l.s4 1934713408
          %v3416 = vunpack.c.0.s8 %v3415
          %v3417 = vperm.slane %v3411, %v3416
          %v3419 = vunpack.c.l.s4 1934713408
          %v3420 = vunpack.c.0.s8 %v3419
          %v3421 = vperm.slane %v3413, %v3420
          %v3422 = vrot.slane %v3385, 4
          %v3423 = vsel %vm2890, %v3422, %v3373
          %v3424 = vrot.slane %v3373, 4
          %v3425 = vsel %vm2890, %v3385, %v3424
          %v3427 = vunpack.c.l.s4 1934713408
          %v3428 = vunpack.c.0.s8 %v3427
          %v3429 = vperm.slane %v3423, %v3428
          %v3431 = vunpack.c.l.s4 1934713408
          %v3432 = vunpack.c.0.s8 %v3431
          %v3433 = vperm.slane %v3425, %v3432
          %v3434 = vrot.slane %v3417, 4
          %v3435 = vsel %vm2890, %v3434, %v3393
          %v3436 = vrot.slane %v3393, 4
          %v3437 = vsel %vm2890, %v3417, %v3436
          %v3438 = vrot.slane %v3421, 4
          %v3439 = vsel %vm2890, %v3438, %v3397
          %v3440 = vrot.slane %v3397, 4
          %v3441 = vsel %vm2890, %v3421, %v3440
          %v3442 = vrot.slane %v3429, 4
          %v3443 = vsel %vm2890, %v3442, %v3405
          %v3444 = vrot.slane %v3405, 4
          %v3445 = vsel %vm2890, %v3429, %v3444
          %v3446 = vrot.slane %v3433, 4
          %v3447 = vsel %vm2890, %v3446, %v3409
          %v3448 = vrot.slane %v3409, 4
          %v3449 = vsel %vm2890, %v3433, %v3448
          %v3450 = vrot.slane %v2523, 4
          %v3451 = vsel %vm2890, %v3450, %v2393
          %v3452 = vrot.slane %v2393, 4
          %v3453 = vsel %vm2890, %v2523, %v3452
          %v3455 = vunpack.c.l.s4 1983009808
          %v3456 = vunpack.c.0.s8 %v3455
          %v3457 = vperm.slane %v3451, %v3456
          %v3459 = vunpack.c.l.s4 1983009808
          %v3460 = vunpack.c.0.s8 %v3459
          %v3461 = vperm.slane %v3453, %v3460
          %v3462 = vrot.slane %v2588, 4
          %v3463 = vsel %vm2890, %v3462, %v2458
          %v3464 = vrot.slane %v2458, 4
          %v3465 = vsel %vm2890, %v2588, %v3464
          %v3467 = vunpack.c.l.s4 1983009808
          %v3468 = vunpack.c.0.s8 %v3467
          %v3469 = vperm.slane %v3463, %v3468
          %v3471 = vunpack.c.l.s4 1983009808
          %v3472 = vunpack.c.0.s8 %v3471
          %v3473 = vperm.slane %v3465, %v3472
          %v3474 = vrot.slane %v2783, 4
          %v3475 = vsel %vm2890, %v3474, %v2653
          %v3476 = vrot.slane %v2653, 4
          %v3477 = vsel %vm2890, %v2783, %v3476
          %v3479 = vunpack.c.l.s4 1983009808
          %v3480 = vunpack.c.0.s8 %v3479
          %v3481 = vperm.slane %v3475, %v3480
          %v3483 = vunpack.c.l.s4 1983009808
          %v3484 = vunpack.c.0.s8 %v3483
          %v3485 = vperm.slane %v3477, %v3484
          %v3486 = vrot.slane %v2848, 4
          %v3487 = vsel %vm2890, %v3486, %v2718
          %v3488 = vrot.slane %v2718, 4
          %v3489 = vsel %vm2890, %v2848, %v3488
          %v3491 = vunpack.c.l.s4 1983009808
          %v3492 = vunpack.c.0.s8 %v3491
          %v3493 = vperm.slane %v3487, %v3492
          %v3495 = vunpack.c.l.s4 1983009808
          %v3496 = vunpack.c.0.s8 %v3495
          %v3497 = vperm.slane %v3489, %v3496
          %v3498 = vrot.slane %v3469, 4
          %v3499 = vsel %vm2890, %v3498, %v3457
          %v3500 = vrot.slane %v3457, 4
          %v3501 = vsel %vm2890, %v3469, %v3500
          %v3503 = vunpack.c.l.s4 1934713408
          %v3504 = vunpack.c.0.s8 %v3503
          %v3505 = vperm.slane %v3499, %v3504
          %v3507 = vunpack.c.l.s4 1934713408
          %v3508 = vunpack.c.0.s8 %v3507
          %v3509 = vperm.slane %v3501, %v3508
          %v3510 = vrot.slane %v3473, 4
          %v3511 = vsel %vm2890, %v3510, %v3461
          %v3512 = vrot.slane %v3461, 4
          %v3513 = vsel %vm2890, %v3473, %v3512
          %v3515 = vunpack.c.l.s4 1934713408
          %v3516 = vunpack.c.0.s8 %v3515
          %v3517 = vperm.slane %v3511, %v3516
          %v3519 = vunpack.c.l.s4 1934713408
          %v3520 = vunpack.c.0.s8 %v3519
          %v3521 = vperm.slane %v3513, %v3520
          %v3522 = vrot.slane %v3493, 4
          %v3523 = vsel %vm2890, %v3522, %v3481
          %v3524 = vrot.slane %v3481, 4
          %v3525 = vsel %vm2890, %v3493, %v3524
          %v3527 = vunpack.c.l.s4 1934713408
          %v3528 = vunpack.c.0.s8 %v3527
          %v3529 = vperm.slane %v3523, %v3528
          %v3531 = vunpack.c.l.s4 1934713408
          %v3532 = vunpack.c.0.s8 %v3531
          %v3533 = vperm.slane %v3525, %v3532
          %v3534 = vrot.slane %v3497, 4
          %v3535 = vsel %vm2890, %v3534, %v3485
          %v3536 = vrot.slane %v3485, 4
          %v3537 = vsel %vm2890, %v3497, %v3536
          %v3539 = vunpack.c.l.s4 1934713408
          %v3540 = vunpack.c.0.s8 %v3539
          %v3541 = vperm.slane %v3535, %v3540
          %v3543 = vunpack.c.l.s4 1934713408
          %v3544 = vunpack.c.0.s8 %v3543
          %v3545 = vperm.slane %v3537, %v3544
          %v3546 = vrot.slane %v3529, 4
          %v3547 = vsel %vm2890, %v3546, %v3505
          %v3548 = vrot.slane %v3505, 4
          %v3549 = vsel %vm2890, %v3529, %v3548
          %v3550 = vrot.slane %v3533, 4
          %v3551 = vsel %vm2890, %v3550, %v3509
          %v3552 = vrot.slane %v3509, 4
          %v3553 = vsel %vm2890, %v3533, %v3552
          %v3554 = vrot.slane %v3541, 4
          %v3555 = vsel %vm2890, %v3554, %v3517
          %v3556 = vrot.slane %v3517, 4
          %v3557 = vsel %vm2890, %v3541, %v3556
          %v3558 = vrot.slane %v3545, 4
          %v3559 = vsel %vm2890, %v3558, %v3521
          %v3560 = vrot.slane %v3521, 4
          %v3561 = vsel %vm2890, %v3545, %v3560
          %v3562 = vrot.slane %v2006, 4
          %v3563 = vsel %vm2890, %v3562, %v1876
          %v3564 = vrot.slane %v1876, 4
          %v3565 = vsel %vm2890, %v2006, %v3564
          %v3567 = vunpack.c.l.s4 1983009808
          %v3568 = vunpack.c.0.s8 %v3567
          %v3569 = vperm.slane %v3563, %v3568
          %v3571 = vunpack.c.l.s4 1983009808
          %v3572 = vunpack.c.0.s8 %v3571
          %v3573 = vperm.slane %v3565, %v3572
          %v3574 = vrot.slane %v2071, 4
          %v3575 = vsel %vm2890, %v3574, %v1941
          %v3576 = vrot.slane %v1941, 4
          %v3577 = vsel %vm2890, %v2071, %v3576
          %v3579 = vunpack.c.l.s4 1983009808
          %v3580 = vunpack.c.0.s8 %v3579
          %v3581 = vperm.slane %v3575, %v3580
          %v3583 = vunpack.c.l.s4 1983009808
          %v3584 = vunpack.c.0.s8 %v3583
          %v3585 = vperm.slane %v3577, %v3584
          %v3586 = vrot.slane %v2266, 4
          %v3587 = vsel %vm2890, %v3586, %v2136
          %v3588 = vrot.slane %v2136, 4
          %v3589 = vsel %vm2890, %v2266, %v3588
          %v3591 = vunpack.c.l.s4 1983009808
          %v3592 = vunpack.c.0.s8 %v3591
          %v3593 = vperm.slane %v3587, %v3592
          %v3595 = vunpack.c.l.s4 1983009808
          %v3596 = vunpack.c.0.s8 %v3595
          %v3597 = vperm.slane %v3589, %v3596
          %v3598 = vrot.slane %v2331, 4
          %v3599 = vsel %vm2890, %v3598, %v2201
          %v3600 = vrot.slane %v2201, 4
          %v3601 = vsel %vm2890, %v2331, %v3600
          %v3603 = vunpack.c.l.s4 1983009808
          %v3604 = vunpack.c.0.s8 %v3603
          %v3605 = vperm.slane %v3599, %v3604
          %v3607 = vunpack.c.l.s4 1983009808
          %v3608 = vunpack.c.0.s8 %v3607
          %v3609 = vperm.slane %v3601, %v3608
          %v3610 = vrot.slane %v3581, 4
          %v3611 = vsel %vm2890, %v3610, %v3569
          %v3612 = vrot.slane %v3569, 4
          %v3613 = vsel %vm2890, %v3581, %v3612
          %v3615 = vunpack.c.l.s4 1934713408
          %v3616 = vunpack.c.0.s8 %v3615
          %v3617 = vperm.slane %v3611, %v3616
          %v3619 = vunpack.c.l.s4 1934713408
          %v3620 = vunpack.c.0.s8 %v3619
          %v3621 = vperm.slane %v3613, %v3620
          %v3622 = vrot.slane %v3585, 4
          %v3623 = vsel %vm2890, %v3622, %v3573
          %v3624 = vrot.slane %v3573, 4
          %v3625 = vsel %vm2890, %v3585, %v3624
          %v3627 = vunpack.c.l.s4 1934713408
          %v3628 = vunpack.c.0.s8 %v3627
          %v3629 = vperm.slane %v3623, %v3628
          %v3631 = vunpack.c.l.s4 1934713408
          %v3632 = vunpack.c.0.s8 %v3631
          %v3633 = vperm.slane %v3625, %v3632
          %v3634 = vrot.slane %v3605, 4
          %v3635 = vsel %vm2890, %v3634, %v3593
          %v3636 = vrot.slane %v3593, 4
          %v3637 = vsel %vm2890, %v3605, %v3636
          %v3639 = vunpack.c.l.s4 1934713408
          %v3640 = vunpack.c.0.s8 %v3639
          %v3641 = vperm.slane %v3635, %v3640
          %v3643 = vunpack.c.l.s4 1934713408
          %v3644 = vunpack.c.0.s8 %v3643
          %v3645 = vperm.slane %v3637, %v3644
          %v3646 = vrot.slane %v3609, 4
          %v3647 = vsel %vm2890, %v3646, %v3597
          %v3648 = vrot.slane %v3597, 4
          %v3649 = vsel %vm2890, %v3609, %v3648
          %v3651 = vunpack.c.l.s4 1934713408
          %v3652 = vunpack.c.0.s8 %v3651
          %v3653 = vperm.slane %v3647, %v3652
          %v3655 = vunpack.c.l.s4 1934713408
          %v3656 = vunpack.c.0.s8 %v3655
          %v3657 = vperm.slane %v3649, %v3656
          %v3658 = vrot.slane %v3641, 4
          %v3659 = vsel %vm2890, %v3658, %v3617
          %v3660 = vrot.slane %v3617, 4
          %v3661 = vsel %vm2890, %v3641, %v3660
          %v3662 = vrot.slane %v3645, 4
          %v3663 = vsel %vm2890, %v3662, %v3621
          %v3664 = vrot.slane %v3621, 4
          %v3665 = vsel %vm2890, %v3645, %v3664
          %v3666 = vrot.slane %v3653, 4
          %v3667 = vsel %vm2890, %v3666, %v3629
          %v3668 = vrot.slane %v3629, 4
          %v3669 = vsel %vm2890, %v3653, %v3668
          %v3670 = vrot.slane %v3657, 4
          %v3671 = vsel %vm2890, %v3670, %v3633
          %v3672 = vrot.slane %v3633, 4
          %v3673 = vsel %vm2890, %v3657, %v3672
          %v3674 = vrot.slane %v2526, 4
          %v3675 = vsel %vm2890, %v3674, %v2396
          %v3676 = vrot.slane %v2396, 4
          %v3677 = vsel %vm2890, %v2526, %v3676
          %v3679 = vunpack.c.l.s4 1983009808
          %v3680 = vunpack.c.0.s8 %v3679
          %v3681 = vperm.slane %v3675, %v3680
          %v3683 = vunpack.c.l.s4 1983009808
          %v3684 = vunpack.c.0.s8 %v3683
          %v3685 = vperm.slane %v3677, %v3684
          %v3686 = vrot.slane %v2591, 4
          %v3687 = vsel %vm2890, %v3686, %v2461
          %v3688 = vrot.slane %v2461, 4
          %v3689 = vsel %vm2890, %v2591, %v3688
          %v3691 = vunpack.c.l.s4 1983009808
          %v3692 = vunpack.c.0.s8 %v3691
          %v3693 = vperm.slane %v3687, %v3692
          %v3695 = vunpack.c.l.s4 1983009808
          %v3696 = vunpack.c.0.s8 %v3695
          %v3697 = vperm.slane %v3689, %v3696
          %v3698 = vrot.slane %v2786, 4
          %v3699 = vsel %vm2890, %v3698, %v2656
          %v3700 = vrot.slane %v2656, 4
          %v3701 = vsel %vm2890, %v2786, %v3700
          %v3703 = vunpack.c.l.s4 1983009808
          %v3704 = vunpack.c.0.s8 %v3703
          %v3705 = vperm.slane %v3699, %v3704
          %v3707 = vunpack.c.l.s4 1983009808
          %v3708 = vunpack.c.0.s8 %v3707
          %v3709 = vperm.slane %v3701, %v3708
          %v3710 = vrot.slane %v2851, 4
          %v3711 = vsel %vm2890, %v3710, %v2721
          %v3712 = vrot.slane %v2721, 4
          %v3713 = vsel %vm2890, %v2851, %v3712
          %v3715 = vunpack.c.l.s4 1983009808
          %v3716 = vunpack.c.0.s8 %v3715
          %v3717 = vperm.slane %v3711, %v3716
          %v3719 = vunpack.c.l.s4 1983009808
          %v3720 = vunpack.c.0.s8 %v3719
          %v3721 = vperm.slane %v3713, %v3720
          %v3722 = vrot.slane %v3693, 4
          %v3723 = vsel %vm2890, %v3722, %v3681
          %v3724 = vrot.slane %v3681, 4
          %v3725 = vsel %vm2890, %v3693, %v3724
          %v3727 = vunpack.c.l.s4 1934713408
          %v3728 = vunpack.c.0.s8 %v3727
          %v3729 = vperm.slane %v3723, %v3728
          %v3731 = vunpack.c.l.s4 1934713408
          %v3732 = vunpack.c.0.s8 %v3731
          %v3733 = vperm.slane %v3725, %v3732
          %v3734 = vrot.slane %v3697, 4
          %v3735 = vsel %vm2890, %v3734, %v3685
          %v3736 = vrot.slane %v3685, 4
          %v3737 = vsel %vm2890, %v3697, %v3736
          %v3739 = vunpack.c.l.s4 1934713408
          %v3740 = vunpack.c.0.s8 %v3739
          %v3741 = vperm.slane %v3735, %v3740
          %v3743 = vunpack.c.l.s4 1934713408
          %v3744 = vunpack.c.0.s8 %v3743
          %v3745 = vperm.slane %v3737, %v3744
          %v3746 = vrot.slane %v3717, 4
          %v3747 = vsel %vm2890, %v3746, %v3705
          %v3748 = vrot.slane %v3705, 4
          %v3749 = vsel %vm2890, %v3717, %v3748
          %v3751 = vunpack.c.l.s4 1934713408
          %v3752 = vunpack.c.0.s8 %v3751
          %v3753 = vperm.slane %v3747, %v3752
          %v3755 = vunpack.c.l.s4 1934713408
          %v3756 = vunpack.c.0.s8 %v3755
          %v3757 = vperm.slane %v3749, %v3756
          %v3758 = vrot.slane %v3721, 4
          %v3759 = vsel %vm2890, %v3758, %v3709
          %v3760 = vrot.slane %v3709, 4
          %v3761 = vsel %vm2890, %v3721, %v3760
          %v3763 = vunpack.c.l.s4 1934713408
          %v3764 = vunpack.c.0.s8 %v3763
          %v3765 = vperm.slane %v3759, %v3764
          %v3767 = vunpack.c.l.s4 1934713408
          %v3768 = vunpack.c.0.s8 %v3767
          %v3769 = vperm.slane %v3761, %v3768
          %v3770 = vrot.slane %v3753, 4
          %v3771 = vsel %vm2890, %v3770, %v3729
          %v3772 = vrot.slane %v3729, 4
          %v3773 = vsel %vm2890, %v3753, %v3772
          %v3774 = vrot.slane %v3757, 4
          %v3775 = vsel %vm2890, %v3774, %v3733
          %v3776 = vrot.slane %v3733, 4
          %v3777 = vsel %vm2890, %v3757, %v3776
          %v3778 = vrot.slane %v3765, 4
          %v3779 = vsel %vm2890, %v3778, %v3741
          %v3780 = vrot.slane %v3741, 4
          %v3781 = vsel %vm2890, %v3765, %v3780
          %v3782 = vrot.slane %v3769, 4
          %v3783 = vsel %vm2890, %v3782, %v3745
          %v3784 = vrot.slane %v3745, 4
          %v3785 = vsel %vm2890, %v3769, %v3784
          %v3786 = vrot.slane %v2009, 4
          %v3787 = vsel %vm2890, %v3786, %v1879
          %v3788 = vrot.slane %v1879, 4
          %v3789 = vsel %vm2890, %v2009, %v3788
          %v3791 = vunpack.c.l.s4 1983009808
          %v3792 = vunpack.c.0.s8 %v3791
          %v3793 = vperm.slane %v3787, %v3792
          %v3795 = vunpack.c.l.s4 1983009808
          %v3796 = vunpack.c.0.s8 %v3795
          %v3797 = vperm.slane %v3789, %v3796
          %v3798 = vrot.slane %v2074, 4
          %v3799 = vsel %vm2890, %v3798, %v1944
          %v3800 = vrot.slane %v1944, 4
          %v3801 = vsel %vm2890, %v2074, %v3800
          %v3803 = vunpack.c.l.s4 1983009808
          %v3804 = vunpack.c.0.s8 %v3803
          %v3805 = vperm.slane %v3799, %v3804
          %v3807 = vunpack.c.l.s4 1983009808
          %v3808 = vunpack.c.0.s8 %v3807
          %v3809 = vperm.slane %v3801, %v3808
          %v3810 = vrot.slane %v2269, 4
          %v3811 = vsel %vm2890, %v3810, %v2139
          %v3812 = vrot.slane %v2139, 4
          %v3813 = vsel %vm2890, %v2269, %v3812
          %v3815 = vunpack.c.l.s4 1983009808
          %v3816 = vunpack.c.0.s8 %v3815
          %v3817 = vperm.slane %v3811, %v3816
          %v3819 = vunpack.c.l.s4 1983009808
          %v3820 = vunpack.c.0.s8 %v3819
          %v3821 = vperm.slane %v3813, %v3820
          %v3822 = vrot.slane %v2334, 4
          %v3823 = vsel %vm2890, %v3822, %v2204
          %v3824 = vrot.slane %v2204, 4
          %v3825 = vsel %vm2890, %v2334, %v3824
          %v3827 = vunpack.c.l.s4 1983009808
          %v3828 = vunpack.c.0.s8 %v3827
          %v3829 = vperm.slane %v3823, %v3828
          %v3831 = vunpack.c.l.s4 1983009808
          %v3832 = vunpack.c.0.s8 %v3831
          %v3833 = vperm.slane %v3825, %v3832
          %v3834 = vrot.slane %v3805, 4
          %v3835 = vsel %vm2890, %v3834, %v3793
          %v3836 = vrot.slane %v3793, 4
          %v3837 = vsel %vm2890, %v3805, %v3836
          %v3839 = vunpack.c.l.s4 1934713408
          %v3840 = vunpack.c.0.s8 %v3839
          %v3841 = vperm.slane %v3835, %v3840
          %v3843 = vunpack.c.l.s4 1934713408
          %v3844 = vunpack.c.0.s8 %v3843
          %v3845 = vperm.slane %v3837, %v3844
          %v3846 = vrot.slane %v3809, 4
          %v3847 = vsel %vm2890, %v3846, %v3797
          %v3848 = vrot.slane %v3797, 4
          %v3849 = vsel %vm2890, %v3809, %v3848
          %v3851 = vunpack.c.l.s4 1934713408
          %v3852 = vunpack.c.0.s8 %v3851
          %v3853 = vperm.slane %v3847, %v3852
          %v3855 = vunpack.c.l.s4 1934713408
          %v3856 = vunpack.c.0.s8 %v3855
          %v3857 = vperm.slane %v3849, %v3856
          %v3858 = vrot.slane %v3829, 4
          %v3859 = vsel %vm2890, %v3858, %v3817
          %v3860 = vrot.slane %v3817, 4
          %v3861 = vsel %vm2890, %v3829, %v3860
          %v3863 = vunpack.c.l.s4 1934713408
          %v3864 = vunpack.c.0.s8 %v3863
          %v3865 = vperm.slane %v3859, %v3864
          %v3867 = vunpack.c.l.s4 1934713408
          %v3868 = vunpack.c.0.s8 %v3867
          %v3869 = vperm.slane %v3861, %v3868
          %v3870 = vrot.slane %v3833, 4
          %v3871 = vsel %vm2890, %v3870, %v3821
          %v3872 = vrot.slane %v3821, 4
          %v3873 = vsel %vm2890, %v3833, %v3872
          %v3875 = vunpack.c.l.s4 1934713408
          %v3876 = vunpack.c.0.s8 %v3875
          %v3877 = vperm.slane %v3871, %v3876
          %v3879 = vunpack.c.l.s4 1934713408
          %v3880 = vunpack.c.0.s8 %v3879
          %v3881 = vperm.slane %v3873, %v3880
          %v3882 = vrot.slane %v3865, 4
          %v3883 = vsel %vm2890, %v3882, %v3841
          %v3884 = vrot.slane %v3841, 4
          %v3885 = vsel %vm2890, %v3865, %v3884
          %v3886 = vrot.slane %v3869, 4
          %v3887 = vsel %vm2890, %v3886, %v3845
          %v3888 = vrot.slane %v3845, 4
          %v3889 = vsel %vm2890, %v3869, %v3888
          %v3890 = vrot.slane %v3877, 4
          %v3891 = vsel %vm2890, %v3890, %v3853
          %v3892 = vrot.slane %v3853, 4
          %v3893 = vsel %vm2890, %v3877, %v3892
          %v3894 = vrot.slane %v3881, 4
          %v3895 = vsel %vm2890, %v3894, %v3857
          %v3896 = vrot.slane %v3857, 4
          %v3897 = vsel %vm2890, %v3881, %v3896
          %v3898 = vrot.slane %v2529, 4
          %v3899 = vsel %vm2890, %v3898, %v2399
          %v3900 = vrot.slane %v2399, 4
          %v3901 = vsel %vm2890, %v2529, %v3900
          %v3903 = vunpack.c.l.s4 1983009808
          %v3904 = vunpack.c.0.s8 %v3903
          %v3905 = vperm.slane %v3899, %v3904
          %v3907 = vunpack.c.l.s4 1983009808
          %v3908 = vunpack.c.0.s8 %v3907
          %v3909 = vperm.slane %v3901, %v3908
          %v3910 = vrot.slane %v2594, 4
          %v3911 = vsel %vm2890, %v3910, %v2464
          %v3912 = vrot.slane %v2464, 4
          %v3913 = vsel %vm2890, %v2594, %v3912
          %v3915 = vunpack.c.l.s4 1983009808
          %v3916 = vunpack.c.0.s8 %v3915
          %v3917 = vperm.slane %v3911, %v3916
          %v3919 = vunpack.c.l.s4 1983009808
          %v3920 = vunpack.c.0.s8 %v3919
          %v3921 = vperm.slane %v3913, %v3920
          %v3922 = vrot.slane %v2789, 4
          %v3923 = vsel %vm2890, %v3922, %v2659
          %v3924 = vrot.slane %v2659, 4
          %v3925 = vsel %vm2890, %v2789, %v3924
          %v3927 = vunpack.c.l.s4 1983009808
          %v3928 = vunpack.c.0.s8 %v3927
          %v3929 = vperm.slane %v3923, %v3928
          %v3931 = vunpack.c.l.s4 1983009808
          %v3932 = vunpack.c.0.s8 %v3931
          %v3933 = vperm.slane %v3925, %v3932
          %v3934 = vrot.slane %v2854, 4
          %v3935 = vsel %vm2890, %v3934, %v2724
          %v3936 = vrot.slane %v2724, 4
          %v3937 = vsel %vm2890, %v2854, %v3936
          %v3939 = vunpack.c.l.s4 1983009808
          %v3940 = vunpack.c.0.s8 %v3939
          %v3941 = vperm.slane %v3935, %v3940
          %v3943 = vunpack.c.l.s4 1983009808
          %v3944 = vunpack.c.0.s8 %v3943
          %v3945 = vperm.slane %v3937, %v3944
          %v3946 = vrot.slane %v3917, 4
          %v3947 = vsel %vm2890, %v3946, %v3905
          %v3948 = vrot.slane %v3905, 4
          %v3949 = vsel %vm2890, %v3917, %v3948
          %v3951 = vunpack.c.l.s4 1934713408
          %v3952 = vunpack.c.0.s8 %v3951
          %v3953 = vperm.slane %v3947, %v3952
          %v3955 = vunpack.c.l.s4 1934713408
          %v3956 = vunpack.c.0.s8 %v3955
          %v3957 = vperm.slane %v3949, %v3956
          %v3958 = vrot.slane %v3921, 4
          %v3959 = vsel %vm2890, %v3958, %v3909
          %v3960 = vrot.slane %v3909, 4
          %v3961 = vsel %vm2890, %v3921, %v3960
          %v3963 = vunpack.c.l.s4 1934713408
          %v3964 = vunpack.c.0.s8 %v3963
          %v3965 = vperm.slane %v3959, %v3964
          %v3967 = vunpack.c.l.s4 1934713408
          %v3968 = vunpack.c.0.s8 %v3967
          %v3969 = vperm.slane %v3961, %v3968
          %v3970 = vrot.slane %v3941, 4
          %v3971 = vsel %vm2890, %v3970, %v3929
          %v3972 = vrot.slane %v3929, 4
          %v3973 = vsel %vm2890, %v3941, %v3972
          %v3975 = vunpack.c.l.s4 1934713408
          %v3976 = vunpack.c.0.s8 %v3975
          %v3977 = vperm.slane %v3971, %v3976
          %v3979 = vunpack.c.l.s4 1934713408
          %v3980 = vunpack.c.0.s8 %v3979
          %v3981 = vperm.slane %v3973, %v3980
          %v3982 = vrot.slane %v3945, 4
          %v3983 = vsel %vm2890, %v3982, %v3933
          %v3984 = vrot.slane %v3933, 4
          %v3985 = vsel %vm2890, %v3945, %v3984
          %v3987 = vunpack.c.l.s4 1934713408
          %v3988 = vunpack.c.0.s8 %v3987
          %v3989 = vperm.slane %v3983, %v3988
          %v3991 = vunpack.c.l.s4 1934713408
          %v3992 = vunpack.c.0.s8 %v3991
          %v3993 = vperm.slane %v3985, %v3992
          %v3994 = vrot.slane %v3977, 4
          %v3995 = vsel %vm2890, %v3994, %v3953
          %v3996 = vrot.slane %v3953, 4
          %v3997 = vsel %vm2890, %v3977, %v3996
          %v3998 = vrot.slane %v3981, 4
          %v3999 = vsel %vm2890, %v3998, %v3957
          %v4000 = vrot.slane %v3957, 4
          %v4001 = vsel %vm2890, %v3981, %v4000
          %v4002 = vrot.slane %v3989, 4
          %v4003 = vsel %vm2890, %v4002, %v3965
          %v4004 = vrot.slane %v3965, 4
          %v4005 = vsel %vm2890, %v3989, %v4004
          %v4006 = vrot.slane %v3993, 4
          %v4007 = vsel %vm2890, %v4006, %v3969
          %v4008 = vrot.slane %v3969, 4
          %v4009 = vsel %vm2890, %v3993, %v4008
          %v4010 = vrot.slane %v2012, 4
          %v4011 = vsel %vm2890, %v4010, %v1882
          %v4012 = vrot.slane %v1882, 4
          %v4013 = vsel %vm2890, %v2012, %v4012
          %v4015 = vunpack.c.l.s4 1983009808
          %v4016 = vunpack.c.0.s8 %v4015
          %v4017 = vperm.slane %v4011, %v4016
          %v4019 = vunpack.c.l.s4 1983009808
          %v4020 = vunpack.c.0.s8 %v4019
          %v4021 = vperm.slane %v4013, %v4020
          %v4022 = vrot.slane %v2077, 4
          %v4023 = vsel %vm2890, %v4022, %v1947
          %v4024 = vrot.slane %v1947, 4
          %v4025 = vsel %vm2890, %v2077, %v4024
          %v4027 = vunpack.c.l.s4 1983009808
          %v4028 = vunpack.c.0.s8 %v4027
          %v4029 = vperm.slane %v4023, %v4028
          %v4031 = vunpack.c.l.s4 1983009808
          %v4032 = vunpack.c.0.s8 %v4031
          %v4033 = vperm.slane %v4025, %v4032
          %v4034 = vrot.slane %v2272, 4
          %v4035 = vsel %vm2890, %v4034, %v2142
          %v4036 = vrot.slane %v2142, 4
          %v4037 = vsel %vm2890, %v2272, %v4036
          %v4039 = vunpack.c.l.s4 1983009808
          %v4040 = vunpack.c.0.s8 %v4039
          %v4041 = vperm.slane %v4035, %v4040
          %v4043 = vunpack.c.l.s4 1983009808
          %v4044 = vunpack.c.0.s8 %v4043
          %v4045 = vperm.slane %v4037, %v4044
          %v4046 = vrot.slane %v2337, 4
          %v4047 = vsel %vm2890, %v4046, %v2207
          %v4048 = vrot.slane %v2207, 4
          %v4049 = vsel %vm2890, %v2337, %v4048
          %v4051 = vunpack.c.l.s4 1983009808
          %v4052 = vunpack.c.0.s8 %v4051
          %v4053 = vperm.slane %v4047, %v4052
          %v4055 = vunpack.c.l.s4 1983009808
          %v4056 = vunpack.c.0.s8 %v4055
          %v4057 = vperm.slane %v4049, %v4056
          %v4058 = vrot.slane %v4029, 4
          %v4059 = vsel %vm2890, %v4058, %v4017
          %v4060 = vrot.slane %v4017, 4
          %v4061 = vsel %vm2890, %v4029, %v4060
          %v4063 = vunpack.c.l.s4 1934713408
          %v4064 = vunpack.c.0.s8 %v4063
          %v4065 = vperm.slane %v4059, %v4064
          %v4067 = vunpack.c.l.s4 1934713408
          %v4068 = vunpack.c.0.s8 %v4067
          %v4069 = vperm.slane %v4061, %v4068
          %v4070 = vrot.slane %v4033, 4
          %v4071 = vsel %vm2890, %v4070, %v4021
          %v4072 = vrot.slane %v4021, 4
          %v4073 = vsel %vm2890, %v4033, %v4072
          %v4075 = vunpack.c.l.s4 1934713408
          %v4076 = vunpack.c.0.s8 %v4075
          %v4077 = vperm.slane %v4071, %v4076
          %v4079 = vunpack.c.l.s4 1934713408
          %v4080 = vunpack.c.0.s8 %v4079
          %v4081 = vperm.slane %v4073, %v4080
          %v4082 = vrot.slane %v4053, 4
          %v4083 = vsel %vm2890, %v4082, %v4041
          %v4084 = vrot.slane %v4041, 4
          %v4085 = vsel %vm2890, %v4053, %v4084
          %v4087 = vunpack.c.l.s4 1934713408
          %v4088 = vunpack.c.0.s8 %v4087
          %v4089 = vperm.slane %v4083, %v4088
          %v4091 = vunpack.c.l.s4 1934713408
          %v4092 = vunpack.c.0.s8 %v4091
          %v4093 = vperm.slane %v4085, %v4092
          %v4094 = vrot.slane %v4057, 4
          %v4095 = vsel %vm2890, %v4094, %v4045
          %v4096 = vrot.slane %v4045, 4
          %v4097 = vsel %vm2890, %v4057, %v4096
          %v4099 = vunpack.c.l.s4 1934713408
          %v4100 = vunpack.c.0.s8 %v4099
          %v4101 = vperm.slane %v4095, %v4100
          %v4103 = vunpack.c.l.s4 1934713408
          %v4104 = vunpack.c.0.s8 %v4103
          %v4105 = vperm.slane %v4097, %v4104
          %v4106 = vrot.slane %v4089, 4
          %v4107 = vsel %vm2890, %v4106, %v4065
          %v4108 = vrot.slane %v4065, 4
          %v4109 = vsel %vm2890, %v4089, %v4108
          %v4110 = vrot.slane %v4093, 4
          %v4111 = vsel %vm2890, %v4110, %v4069
          %v4112 = vrot.slane %v4069, 4
          %v4113 = vsel %vm2890, %v4093, %v4112
          %v4114 = vrot.slane %v4101, 4
          %v4115 = vsel %vm2890, %v4114, %v4077
          %v4116 = vrot.slane %v4077, 4
          %v4117 = vsel %vm2890, %v4101, %v4116
          %v4118 = vrot.slane %v4105, 4
          %v4119 = vsel %vm2890, %v4118, %v4081
          %v4120 = vrot.slane %v4081, 4
          %v4121 = vsel %vm2890, %v4105, %v4120
          %v4122 = vrot.slane %v2532, 4
          %v4123 = vsel %vm2890, %v4122, %v2402
          %v4124 = vrot.slane %v2402, 4
          %v4125 = vsel %vm2890, %v2532, %v4124
          %v4127 = vunpack.c.l.s4 1983009808
          %v4128 = vunpack.c.0.s8 %v4127
          %v4129 = vperm.slane %v4123, %v4128
          %v4131 = vunpack.c.l.s4 1983009808
          %v4132 = vunpack.c.0.s8 %v4131
          %v4133 = vperm.slane %v4125, %v4132
          %v4134 = vrot.slane %v2597, 4
          %v4135 = vsel %vm2890, %v4134, %v2467
          %v4136 = vrot.slane %v2467, 4
          %v4137 = vsel %vm2890, %v2597, %v4136
          %v4139 = vunpack.c.l.s4 1983009808
          %v4140 = vunpack.c.0.s8 %v4139
          %v4141 = vperm.slane %v4135, %v4140
          %v4143 = vunpack.c.l.s4 1983009808
          %v4144 = vunpack.c.0.s8 %v4143
          %v4145 = vperm.slane %v4137, %v4144
          %v4146 = vrot.slane %v2792, 4
          %v4147 = vsel %vm2890, %v4146, %v2662
          %v4148 = vrot.slane %v2662, 4
          %v4149 = vsel %vm2890, %v2792, %v4148
          %v4151 = vunpack.c.l.s4 1983009808
          %v4152 = vunpack.c.0.s8 %v4151
          %v4153 = vperm.slane %v4147, %v4152
          %v4155 = vunpack.c.l.s4 1983009808
          %v4156 = vunpack.c.0.s8 %v4155
          %v4157 = vperm.slane %v4149, %v4156
          %v4158 = vrot.slane %v2857, 4
          %v4159 = vsel %vm2890, %v4158, %v2727
          %v4160 = vrot.slane %v2727, 4
          %v4161 = vsel %vm2890, %v2857, %v4160
          %v4163 = vunpack.c.l.s4 1983009808
          %v4164 = vunpack.c.0.s8 %v4163
          %v4165 = vperm.slane %v4159, %v4164
          %v4167 = vunpack.c.l.s4 1983009808
          %v4168 = vunpack.c.0.s8 %v4167
          %v4169 = vperm.slane %v4161, %v4168
          %v4170 = vrot.slane %v4141, 4
          %v4171 = vsel %vm2890, %v4170, %v4129
          %v4172 = vrot.slane %v4129, 4
          %v4173 = vsel %vm2890, %v4141, %v4172
          %v4175 = vunpack.c.l.s4 1934713408
          %v4176 = vunpack.c.0.s8 %v4175
          %v4177 = vperm.slane %v4171, %v4176
          %v4179 = vunpack.c.l.s4 1934713408
          %v4180 = vunpack.c.0.s8 %v4179
          %v4181 = vperm.slane %v4173, %v4180
          %v4182 = vrot.slane %v4145, 4
          %v4183 = vsel %vm2890, %v4182, %v4133
          %v4184 = vrot.slane %v4133, 4
          %v4185 = vsel %vm2890, %v4145, %v4184
          %v4187 = vunpack.c.l.s4 1934713408
          %v4188 = vunpack.c.0.s8 %v4187
          %v4189 = vperm.slane %v4183, %v4188
          %v4191 = vunpack.c.l.s4 1934713408
          %v4192 = vunpack.c.0.s8 %v4191
          %v4193 = vperm.slane %v4185, %v4192
          %v4194 = vrot.slane %v4165, 4
          %v4195 = vsel %vm2890, %v4194, %v4153
          %v4196 = vrot.slane %v4153, 4
          %v4197 = vsel %vm2890, %v4165, %v4196
          %v4199 = vunpack.c.l.s4 1934713408
          %v4200 = vunpack.c.0.s8 %v4199
          %v4201 = vperm.slane %v4195, %v4200
          %v4203 = vunpack.c.l.s4 1934713408
          %v4204 = vunpack.c.0.s8 %v4203
          %v4205 = vperm.slane %v4197, %v4204
          %v4206 = vrot.slane %v4169, 4
          %v4207 = vsel %vm2890, %v4206, %v4157
          %v4208 = vrot.slane %v4157, 4
          %v4209 = vsel %vm2890, %v4169, %v4208
          %v4211 = vunpack.c.l.s4 1934713408
          %v4212 = vunpack.c.0.s8 %v4211
          %v4213 = vperm.slane %v4207, %v4212
          %v4215 = vunpack.c.l.s4 1934713408
          %v4216 = vunpack.c.0.s8 %v4215
          %v4217 = vperm.slane %v4209, %v4216
          %v4218 = vrot.slane %v4201, 4
          %v4219 = vsel %vm2890, %v4218, %v4177
          %v4220 = vrot.slane %v4177, 4
          %v4221 = vsel %vm2890, %v4201, %v4220
          %v4222 = vrot.slane %v4205, 4
          %v4223 = vsel %vm2890, %v4222, %v4181
          %v4224 = vrot.slane %v4181, 4
          %v4225 = vsel %vm2890, %v4205, %v4224
          %v4226 = vrot.slane %v4213, 4
          %v4227 = vsel %vm2890, %v4226, %v4189
          %v4228 = vrot.slane %v4189, 4
          %v4229 = vsel %vm2890, %v4213, %v4228
          %v4230 = vrot.slane %v4217, 4
          %v4231 = vsel %vm2890, %v4230, %v4193
          %v4232 = vrot.slane %v4193, 4
          %v4233 = vsel %vm2890, %v4217, %v4232
          %v4234 = vrot.slane %v2015, 4
          %v4235 = vsel %vm2890, %v4234, %v1885
          %v4236 = vrot.slane %v1885, 4
          %v4237 = vsel %vm2890, %v2015, %v4236
          %v4239 = vunpack.c.l.s4 1983009808
          %v4240 = vunpack.c.0.s8 %v4239
          %v4241 = vperm.slane %v4235, %v4240
          %v4243 = vunpack.c.l.s4 1983009808
          %v4244 = vunpack.c.0.s8 %v4243
          %v4245 = vperm.slane %v4237, %v4244
          %v4246 = vrot.slane %v2080, 4
          %v4247 = vsel %vm2890, %v4246, %v1950
          %v4248 = vrot.slane %v1950, 4
          %v4249 = vsel %vm2890, %v2080, %v4248
          %v4251 = vunpack.c.l.s4 1983009808
          %v4252 = vunpack.c.0.s8 %v4251
          %v4253 = vperm.slane %v4247, %v4252
          %v4255 = vunpack.c.l.s4 1983009808
          %v4256 = vunpack.c.0.s8 %v4255
          %v4257 = vperm.slane %v4249, %v4256
          %v4258 = vrot.slane %v2275, 4
          %v4259 = vsel %vm2890, %v4258, %v2145
          %v4260 = vrot.slane %v2145, 4
          %v4261 = vsel %vm2890, %v2275, %v4260
          %v4263 = vunpack.c.l.s4 1983009808
          %v4264 = vunpack.c.0.s8 %v4263
          %v4265 = vperm.slane %v4259, %v4264
          %v4267 = vunpack.c.l.s4 1983009808
          %v4268 = vunpack.c.0.s8 %v4267
          %v4269 = vperm.slane %v4261, %v4268
          %v4270 = vrot.slane %v2340, 4
          %v4271 = vsel %vm2890, %v4270, %v2210
          %v4272 = vrot.slane %v2210, 4
          %v4273 = vsel %vm2890, %v2340, %v4272
          %v4275 = vunpack.c.l.s4 1983009808
          %v4276 = vunpack.c.0.s8 %v4275
          %v4277 = vperm.slane %v4271, %v4276
          %v4279 = vunpack.c.l.s4 1983009808
          %v4280 = vunpack.c.0.s8 %v4279
          %v4281 = vperm.slane %v4273, %v4280
          %v4282 = vrot.slane %v4253, 4
          %v4283 = vsel %vm2890, %v4282, %v4241
          %v4284 = vrot.slane %v4241, 4
          %v4285 = vsel %vm2890, %v4253, %v4284
          %v4287 = vunpack.c.l.s4 1934713408
          %v4288 = vunpack.c.0.s8 %v4287
          %v4289 = vperm.slane %v4283, %v4288
          %v4291 = vunpack.c.l.s4 1934713408
          %v4292 = vunpack.c.0.s8 %v4291
          %v4293 = vperm.slane %v4285, %v4292
          %v4294 = vrot.slane %v4257, 4
          %v4295 = vsel %vm2890, %v4294, %v4245
          %v4296 = vrot.slane %v4245, 4
          %v4297 = vsel %vm2890, %v4257, %v4296
          %v4299 = vunpack.c.l.s4 1934713408
          %v4300 = vunpack.c.0.s8 %v4299
          %v4301 = vperm.slane %v4295, %v4300
          %v4303 = vunpack.c.l.s4 1934713408
          %v4304 = vunpack.c.0.s8 %v4303
          %v4305 = vperm.slane %v4297, %v4304
          %v4306 = vrot.slane %v4277, 4
          %v4307 = vsel %vm2890, %v4306, %v4265
          %v4308 = vrot.slane %v4265, 4
          %v4309 = vsel %vm2890, %v4277, %v4308
          %v4311 = vunpack.c.l.s4 1934713408
          %v4312 = vunpack.c.0.s8 %v4311
          %v4313 = vperm.slane %v4307, %v4312
          %v4315 = vunpack.c.l.s4 1934713408
          %v4316 = vunpack.c.0.s8 %v4315
          %v4317 = vperm.slane %v4309, %v4316
          %v4318 = vrot.slane %v4281, 4
          %v4319 = vsel %vm2890, %v4318, %v4269
          %v4320 = vrot.slane %v4269, 4
          %v4321 = vsel %vm2890, %v4281, %v4320
          %v4323 = vunpack.c.l.s4 1934713408
          %v4324 = vunpack.c.0.s8 %v4323
          %v4325 = vperm.slane %v4319, %v4324
          %v4327 = vunpack.c.l.s4 1934713408
          %v4328 = vunpack.c.0.s8 %v4327
          %v4329 = vperm.slane %v4321, %v4328
          %v4330 = vrot.slane %v4313, 4
          %v4331 = vsel %vm2890, %v4330, %v4289
          %v4332 = vrot.slane %v4289, 4
          %v4333 = vsel %vm2890, %v4313, %v4332
          %v4334 = vrot.slane %v4317, 4
          %v4335 = vsel %vm2890, %v4334, %v4293
          %v4336 = vrot.slane %v4293, 4
          %v4337 = vsel %vm2890, %v4317, %v4336
          %v4338 = vrot.slane %v4325, 4
          %v4339 = vsel %vm2890, %v4338, %v4301
          %v4340 = vrot.slane %v4301, 4
          %v4341 = vsel %vm2890, %v4325, %v4340
          %v4342 = vrot.slane %v4329, 4
          %v4343 = vsel %vm2890, %v4342, %v4305
          %v4344 = vrot.slane %v4305, 4
          %v4345 = vsel %vm2890, %v4329, %v4344
          %v4346 = vrot.slane %v2535, 4
          %v4347 = vsel %vm2890, %v4346, %v2405
          %v4348 = vrot.slane %v2405, 4
          %v4349 = vsel %vm2890, %v2535, %v4348
          %v4351 = vunpack.c.l.s4 1983009808
          %v4352 = vunpack.c.0.s8 %v4351
          %v4353 = vperm.slane %v4347, %v4352
          %v4355 = vunpack.c.l.s4 1983009808
          %v4356 = vunpack.c.0.s8 %v4355
          %v4357 = vperm.slane %v4349, %v4356
          %v4358 = vrot.slane %v2600, 4
          %v4359 = vsel %vm2890, %v4358, %v2470
          %v4360 = vrot.slane %v2470, 4
          %v4361 = vsel %vm2890, %v2600, %v4360
          %v4363 = vunpack.c.l.s4 1983009808
          %v4364 = vunpack.c.0.s8 %v4363
          %v4365 = vperm.slane %v4359, %v4364
          %v4367 = vunpack.c.l.s4 1983009808
          %v4368 = vunpack.c.0.s8 %v4367
          %v4369 = vperm.slane %v4361, %v4368
          %v4370 = vrot.slane %v2795, 4
          %v4371 = vsel %vm2890, %v4370, %v2665
          %v4372 = vrot.slane %v2665, 4
          %v4373 = vsel %vm2890, %v2795, %v4372
          %v4375 = vunpack.c.l.s4 1983009808
          %v4376 = vunpack.c.0.s8 %v4375
          %v4377 = vperm.slane %v4371, %v4376
          %v4379 = vunpack.c.l.s4 1983009808
          %v4380 = vunpack.c.0.s8 %v4379
          %v4381 = vperm.slane %v4373, %v4380
          %v4382 = vrot.slane %v2860, 4
          %v4383 = vsel %vm2890, %v4382, %v2730
          %v4384 = vrot.slane %v2730, 4
          %v4385 = vsel %vm2890, %v2860, %v4384
          %v4387 = vunpack.c.l.s4 1983009808
          %v4388 = vunpack.c.0.s8 %v4387
          %v4389 = vperm.slane %v4383, %v4388
          %v4391 = vunpack.c.l.s4 1983009808
          %v4392 = vunpack.c.0.s8 %v4391
          %v4393 = vperm.slane %v4385, %v4392
          %v4394 = vrot.slane %v4365, 4
          %v4395 = vsel %vm2890, %v4394, %v4353
          %v4396 = vrot.slane %v4353, 4
          %v4397 = vsel %vm2890, %v4365, %v4396
          %v4399 = vunpack.c.l.s4 1934713408
          %v4400 = vunpack.c.0.s8 %v4399
          %v4401 = vperm.slane %v4395, %v4400
          %v4403 = vunpack.c.l.s4 1934713408
          %v4404 = vunpack.c.0.s8 %v4403
          %v4405 = vperm.slane %v4397, %v4404
          %v4406 = vrot.slane %v4369, 4
          %v4407 = vsel %vm2890, %v4406, %v4357
          %v4408 = vrot.slane %v4357, 4
          %v4409 = vsel %vm2890, %v4369, %v4408
          %v4411 = vunpack.c.l.s4 1934713408
          %v4412 = vunpack.c.0.s8 %v4411
          %v4413 = vperm.slane %v4407, %v4412
          %v4415 = vunpack.c.l.s4 1934713408
          %v4416 = vunpack.c.0.s8 %v4415
          %v4417 = vperm.slane %v4409, %v4416
          %v4418 = vrot.slane %v4389, 4
          %v4419 = vsel %vm2890, %v4418, %v4377
          %v4420 = vrot.slane %v4377, 4
          %v4421 = vsel %vm2890, %v4389, %v4420
          %v4423 = vunpack.c.l.s4 1934713408
          %v4424 = vunpack.c.0.s8 %v4423
          %v4425 = vperm.slane %v4419, %v4424
          %v4427 = vunpack.c.l.s4 1934713408
          %v4428 = vunpack.c.0.s8 %v4427
          %v4429 = vperm.slane %v4421, %v4428
          %v4430 = vrot.slane %v4393, 4
          %v4431 = vsel %vm2890, %v4430, %v4381
          %v4432 = vrot.slane %v4381, 4
          %v4433 = vsel %vm2890, %v4393, %v4432
          %v4435 = vunpack.c.l.s4 1934713408
          %v4436 = vunpack.c.0.s8 %v4435
          %v4437 = vperm.slane %v4431, %v4436
          %v4439 = vunpack.c.l.s4 1934713408
          %v4440 = vunpack.c.0.s8 %v4439
          %v4441 = vperm.slane %v4433, %v4440
          %v4442 = vrot.slane %v4425, 4
          %v4443 = vsel %vm2890, %v4442, %v4401
          %v4444 = vrot.slane %v4401, 4
          %v4445 = vsel %vm2890, %v4425, %v4444
          %v4446 = vrot.slane %v4429, 4
          %v4447 = vsel %vm2890, %v4446, %v4405
          %v4448 = vrot.slane %v4405, 4
          %v4449 = vsel %vm2890, %v4429, %v4448
          %v4450 = vrot.slane %v4437, 4
          %v4451 = vsel %vm2890, %v4450, %v4413
          %v4452 = vrot.slane %v4413, 4
          %v4453 = vsel %vm2890, %v4437, %v4452
          %v4454 = vrot.slane %v4441, 4
          %v4455 = vsel %vm2890, %v4454, %v4417
          %v4456 = vrot.slane %v4417, 4
          %v4457 = vsel %vm2890, %v4441, %v4456
          %v4458 = vrot.slane %v2018, 4
          %v4459 = vsel %vm2890, %v4458, %v1888
          %v4460 = vrot.slane %v1888, 4
          %v4461 = vsel %vm2890, %v2018, %v4460
          %v4463 = vunpack.c.l.s4 1983009808
          %v4464 = vunpack.c.0.s8 %v4463
          %v4465 = vperm.slane %v4459, %v4464
          %v4467 = vunpack.c.l.s4 1983009808
          %v4468 = vunpack.c.0.s8 %v4467
          %v4469 = vperm.slane %v4461, %v4468
          %v4470 = vrot.slane %v2083, 4
          %v4471 = vsel %vm2890, %v4470, %v1953
          %v4472 = vrot.slane %v1953, 4
          %v4473 = vsel %vm2890, %v2083, %v4472
          %v4475 = vunpack.c.l.s4 1983009808
          %v4476 = vunpack.c.0.s8 %v4475
          %v4477 = vperm.slane %v4471, %v4476
          %v4479 = vunpack.c.l.s4 1983009808
          %v4480 = vunpack.c.0.s8 %v4479
          %v4481 = vperm.slane %v4473, %v4480
          %v4482 = vrot.slane %v2278, 4
          %v4483 = vsel %vm2890, %v4482, %v2148
          %v4484 = vrot.slane %v2148, 4
          %v4485 = vsel %vm2890, %v2278, %v4484
          %v4487 = vunpack.c.l.s4 1983009808
          %v4488 = vunpack.c.0.s8 %v4487
          %v4489 = vperm.slane %v4483, %v4488
          %v4491 = vunpack.c.l.s4 1983009808
          %v4492 = vunpack.c.0.s8 %v4491
          %v4493 = vperm.slane %v4485, %v4492
          %v4494 = vrot.slane %v2343, 4
          %v4495 = vsel %vm2890, %v4494, %v2213
          %v4496 = vrot.slane %v2213, 4
          %v4497 = vsel %vm2890, %v2343, %v4496
          %v4499 = vunpack.c.l.s4 1983009808
          %v4500 = vunpack.c.0.s8 %v4499
          %v4501 = vperm.slane %v4495, %v4500
          %v4503 = vunpack.c.l.s4 1983009808
          %v4504 = vunpack.c.0.s8 %v4503
          %v4505 = vperm.slane %v4497, %v4504
          %v4506 = vrot.slane %v4477, 4
          %v4507 = vsel %vm2890, %v4506, %v4465
          %v4508 = vrot.slane %v4465, 4
          %v4509 = vsel %vm2890, %v4477, %v4508
          %v4511 = vunpack.c.l.s4 1934713408
          %v4512 = vunpack.c.0.s8 %v4511
          %v4513 = vperm.slane %v4507, %v4512
          %v4515 = vunpack.c.l.s4 1934713408
          %v4516 = vunpack.c.0.s8 %v4515
          %v4517 = vperm.slane %v4509, %v4516
          %v4518 = vrot.slane %v4481, 4
          %v4519 = vsel %vm2890, %v4518, %v4469
          %v4520 = vrot.slane %v4469, 4
          %v4521 = vsel %vm2890, %v4481, %v4520
          %v4523 = vunpack.c.l.s4 1934713408
          %v4524 = vunpack.c.0.s8 %v4523
          %v4525 = vperm.slane %v4519, %v4524
          %v4527 = vunpack.c.l.s4 1934713408
          %v4528 = vunpack.c.0.s8 %v4527
          %v4529 = vperm.slane %v4521, %v4528
          %v4530 = vrot.slane %v4501, 4
          %v4531 = vsel %vm2890, %v4530, %v4489
          %v4532 = vrot.slane %v4489, 4
          %v4533 = vsel %vm2890, %v4501, %v4532
          %v4535 = vunpack.c.l.s4 1934713408
          %v4536 = vunpack.c.0.s8 %v4535
          %v4537 = vperm.slane %v4531, %v4536
          %v4539 = vunpack.c.l.s4 1934713408
          %v4540 = vunpack.c.0.s8 %v4539
          %v4541 = vperm.slane %v4533, %v4540
          %v4542 = vrot.slane %v4505, 4
          %v4543 = vsel %vm2890, %v4542, %v4493
          %v4544 = vrot.slane %v4493, 4
          %v4545 = vsel %vm2890, %v4505, %v4544
          %v4547 = vunpack.c.l.s4 1934713408
          %v4548 = vunpack.c.0.s8 %v4547
          %v4549 = vperm.slane %v4543, %v4548
          %v4551 = vunpack.c.l.s4 1934713408
          %v4552 = vunpack.c.0.s8 %v4551
          %v4553 = vperm.slane %v4545, %v4552
          %v4554 = vrot.slane %v4537, 4
          %v4555 = vsel %vm2890, %v4554, %v4513
          %v4556 = vrot.slane %v4513, 4
          %v4557 = vsel %vm2890, %v4537, %v4556
          %v4558 = vrot.slane %v4541, 4
          %v4559 = vsel %vm2890, %v4558, %v4517
          %v4560 = vrot.slane %v4517, 4
          %v4561 = vsel %vm2890, %v4541, %v4560
          %v4562 = vrot.slane %v4549, 4
          %v4563 = vsel %vm2890, %v4562, %v4525
          %v4564 = vrot.slane %v4525, 4
          %v4565 = vsel %vm2890, %v4549, %v4564
          %v4566 = vrot.slane %v4553, 4
          %v4567 = vsel %vm2890, %v4566, %v4529
          %v4568 = vrot.slane %v4529, 4
          %v4569 = vsel %vm2890, %v4553, %v4568
          %v4570 = vrot.slane %v2538, 4
          %v4571 = vsel %vm2890, %v4570, %v2408
          %v4572 = vrot.slane %v2408, 4
          %v4573 = vsel %vm2890, %v2538, %v4572
          %v4575 = vunpack.c.l.s4 1983009808
          %v4576 = vunpack.c.0.s8 %v4575
          %v4577 = vperm.slane %v4571, %v4576
          %v4579 = vunpack.c.l.s4 1983009808
          %v4580 = vunpack.c.0.s8 %v4579
          %v4581 = vperm.slane %v4573, %v4580
          %v4582 = vrot.slane %v2603, 4
          %v4583 = vsel %vm2890, %v4582, %v2473
          %v4584 = vrot.slane %v2473, 4
          %v4585 = vsel %vm2890, %v2603, %v4584
          %v4587 = vunpack.c.l.s4 1983009808
          %v4588 = vunpack.c.0.s8 %v4587
          %v4589 = vperm.slane %v4583, %v4588
          %v4591 = vunpack.c.l.s4 1983009808
          %v4592 = vunpack.c.0.s8 %v4591
          %v4593 = vperm.slane %v4585, %v4592
          %v4594 = vrot.slane %v2798, 4
          %v4595 = vsel %vm2890, %v4594, %v2668
          %v4596 = vrot.slane %v2668, 4
          %v4597 = vsel %vm2890, %v2798, %v4596
          %v4599 = vunpack.c.l.s4 1983009808
          %v4600 = vunpack.c.0.s8 %v4599
          %v4601 = vperm.slane %v4595, %v4600
          %v4603 = vunpack.c.l.s4 1983009808
          %v4604 = vunpack.c.0.s8 %v4603
          %v4605 = vperm.slane %v4597, %v4604
          %v4606 = vrot.slane %v2863, 4
          %v4607 = vsel %vm2890, %v4606, %v2733
          %v4608 = vrot.slane %v2733, 4
          %v4609 = vsel %vm2890, %v2863, %v4608
          %v4611 = vunpack.c.l.s4 1983009808
          %v4612 = vunpack.c.0.s8 %v4611
          %v4613 = vperm.slane %v4607, %v4612
          %v4615 = vunpack.c.l.s4 1983009808
          %v4616 = vunpack.c.0.s8 %v4615
          %v4617 = vperm.slane %v4609, %v4616
          %v4618 = vrot.slane %v4589, 4
          %v4619 = vsel %vm2890, %v4618, %v4577
          %v4620 = vrot.slane %v4577, 4
          %v4621 = vsel %vm2890, %v4589, %v4620
          %v4623 = vunpack.c.l.s4 1934713408
          %v4624 = vunpack.c.0.s8 %v4623
          %v4625 = vperm.slane %v4619, %v4624
          %v4627 = vunpack.c.l.s4 1934713408
          %v4628 = vunpack.c.0.s8 %v4627
          %v4629 = vperm.slane %v4621, %v4628
          %v4630 = vrot.slane %v4593, 4
          %v4631 = vsel %vm2890, %v4630, %v4581
          %v4632 = vrot.slane %v4581, 4
          %v4633 = vsel %vm2890, %v4593, %v4632
          %v4635 = vunpack.c.l.s4 1934713408
          %v4636 = vunpack.c.0.s8 %v4635
          %v4637 = vperm.slane %v4631, %v4636
          %v4639 = vunpack.c.l.s4 1934713408
          %v4640 = vunpack.c.0.s8 %v4639
          %v4641 = vperm.slane %v4633, %v4640
          %v4642 = vrot.slane %v4613, 4
          %v4643 = vsel %vm2890, %v4642, %v4601
          %v4644 = vrot.slane %v4601, 4
          %v4645 = vsel %vm2890, %v4613, %v4644
          %v4647 = vunpack.c.l.s4 1934713408
          %v4648 = vunpack.c.0.s8 %v4647
          %v4649 = vperm.slane %v4643, %v4648
          %v4651 = vunpack.c.l.s4 1934713408
          %v4652 = vunpack.c.0.s8 %v4651
          %v4653 = vperm.slane %v4645, %v4652
          %v4654 = vrot.slane %v4617, 4
          %v4655 = vsel %vm2890, %v4654, %v4605
          %v4656 = vrot.slane %v4605, 4
          %v4657 = vsel %vm2890, %v4617, %v4656
          %v4659 = vunpack.c.l.s4 1934713408
          %v4660 = vunpack.c.0.s8 %v4659
          %v4661 = vperm.slane %v4655, %v4660
          %v4663 = vunpack.c.l.s4 1934713408
          %v4664 = vunpack.c.0.s8 %v4663
          %v4665 = vperm.slane %v4657, %v4664
          %v4666 = vrot.slane %v4649, 4
          %v4667 = vsel %vm2890, %v4666, %v4625
          %v4668 = vrot.slane %v4625, 4
          %v4669 = vsel %vm2890, %v4649, %v4668
          %v4670 = vrot.slane %v4653, 4
          %v4671 = vsel %vm2890, %v4670, %v4629
          %v4672 = vrot.slane %v4629, 4
          %v4673 = vsel %vm2890, %v4653, %v4672
          %v4674 = vrot.slane %v4661, 4
          %v4675 = vsel %vm2890, %v4674, %v4637
          %v4676 = vrot.slane %v4637, 4
          %v4677 = vsel %vm2890, %v4661, %v4676
          %v4678 = vrot.slane %v4665, 4
          %v4679 = vsel %vm2890, %v4678, %v4641
          %v4680 = vrot.slane %v4641, 4
          %v4681 = vsel %vm2890, %v4665, %v4680
          %v4682 = vrot.slane %v2021, 4
          %v4683 = vsel %vm2890, %v4682, %v1891
          %v4684 = vrot.slane %v1891, 4
          %v4685 = vsel %vm2890, %v2021, %v4684
          %v4687 = vunpack.c.l.s4 1983009808
          %v4688 = vunpack.c.0.s8 %v4687
          %v4689 = vperm.slane %v4683, %v4688
          %v4691 = vunpack.c.l.s4 1983009808
          %v4692 = vunpack.c.0.s8 %v4691
          %v4693 = vperm.slane %v4685, %v4692
          %v4694 = vrot.slane %v2086, 4
          %v4695 = vsel %vm2890, %v4694, %v1956
          %v4696 = vrot.slane %v1956, 4
          %v4697 = vsel %vm2890, %v2086, %v4696
          %v4699 = vunpack.c.l.s4 1983009808
          %v4700 = vunpack.c.0.s8 %v4699
          %v4701 = vperm.slane %v4695, %v4700
          %v4703 = vunpack.c.l.s4 1983009808
          %v4704 = vunpack.c.0.s8 %v4703
          %v4705 = vperm.slane %v4697, %v4704
          %v4706 = vrot.slane %v2281, 4
          %v4707 = vsel %vm2890, %v4706, %v2151
          %v4708 = vrot.slane %v2151, 4
          %v4709 = vsel %vm2890, %v2281, %v4708
          %v4711 = vunpack.c.l.s4 1983009808
          %v4712 = vunpack.c.0.s8 %v4711
          %v4713 = vperm.slane %v4707, %v4712
          %v4715 = vunpack.c.l.s4 1983009808
          %v4716 = vunpack.c.0.s8 %v4715
          %v4717 = vperm.slane %v4709, %v4716
          %v4718 = vrot.slane %v2346, 4
          %v4719 = vsel %vm2890, %v4718, %v2216
          %v4720 = vrot.slane %v2216, 4
          %v4721 = vsel %vm2890, %v2346, %v4720
          %v4723 = vunpack.c.l.s4 1983009808
          %v4724 = vunpack.c.0.s8 %v4723
          %v4725 = vperm.slane %v4719, %v4724
          %v4727 = vunpack.c.l.s4 1983009808
          %v4728 = vunpack.c.0.s8 %v4727
          %v4729 = vperm.slane %v4721, %v4728
          %v4730 = vrot.slane %v4701, 4
          %v4731 = vsel %vm2890, %v4730, %v4689
          %v4732 = vrot.slane %v4689, 4
          %v4733 = vsel %vm2890, %v4701, %v4732
          %v4735 = vunpack.c.l.s4 1934713408
          %v4736 = vunpack.c.0.s8 %v4735
          %v4737 = vperm.slane %v4731, %v4736
          %v4739 = vunpack.c.l.s4 1934713408
          %v4740 = vunpack.c.0.s8 %v4739
          %v4741 = vperm.slane %v4733, %v4740
          %v4742 = vrot.slane %v4705, 4
          %v4743 = vsel %vm2890, %v4742, %v4693
          %v4744 = vrot.slane %v4693, 4
          %v4745 = vsel %vm2890, %v4705, %v4744
          %v4747 = vunpack.c.l.s4 1934713408
          %v4748 = vunpack.c.0.s8 %v4747
          %v4749 = vperm.slane %v4743, %v4748
          %v4751 = vunpack.c.l.s4 1934713408
          %v4752 = vunpack.c.0.s8 %v4751
          %v4753 = vperm.slane %v4745, %v4752
          %v4754 = vrot.slane %v4725, 4
          %v4755 = vsel %vm2890, %v4754, %v4713
          %v4756 = vrot.slane %v4713, 4
          %v4757 = vsel %vm2890, %v4725, %v4756
          %v4759 = vunpack.c.l.s4 1934713408
          %v4760 = vunpack.c.0.s8 %v4759
          %v4761 = vperm.slane %v4755, %v4760
          %v4763 = vunpack.c.l.s4 1934713408
          %v4764 = vunpack.c.0.s8 %v4763
          %v4765 = vperm.slane %v4757, %v4764
          %v4766 = vrot.slane %v4729, 4
          %v4767 = vsel %vm2890, %v4766, %v4717
          %v4768 = vrot.slane %v4717, 4
          %v4769 = vsel %vm2890, %v4729, %v4768
          %v4771 = vunpack.c.l.s4 1934713408
          %v4772 = vunpack.c.0.s8 %v4771
          %v4773 = vperm.slane %v4767, %v4772
          %v4775 = vunpack.c.l.s4 1934713408
          %v4776 = vunpack.c.0.s8 %v4775
          %v4777 = vperm.slane %v4769, %v4776
          %v4778 = vrot.slane %v4761, 4
          %v4779 = vsel %vm2890, %v4778, %v4737
          %v4780 = vrot.slane %v4737, 4
          %v4781 = vsel %vm2890, %v4761, %v4780
          %v4782 = vrot.slane %v4765, 4
          %v4783 = vsel %vm2890, %v4782, %v4741
          %v4784 = vrot.slane %v4741, 4
          %v4785 = vsel %vm2890, %v4765, %v4784
          %v4786 = vrot.slane %v4773, 4
          %v4787 = vsel %vm2890, %v4786, %v4749
          %v4788 = vrot.slane %v4749, 4
          %v4789 = vsel %vm2890, %v4773, %v4788
          %v4790 = vrot.slane %v4777, 4
          %v4791 = vsel %vm2890, %v4790, %v4753
          %v4792 = vrot.slane %v4753, 4
          %v4793 = vsel %vm2890, %v4777, %v4792
          %v4794 = vrot.slane %v2541, 4
          %v4795 = vsel %vm2890, %v4794, %v2411
          %v4796 = vrot.slane %v2411, 4
          %v4797 = vsel %vm2890, %v2541, %v4796
          %v4799 = vunpack.c.l.s4 1983009808
          %v4800 = vunpack.c.0.s8 %v4799
          %v4801 = vperm.slane %v4795, %v4800
          %v4803 = vunpack.c.l.s4 1983009808
          %v4804 = vunpack.c.0.s8 %v4803
          %v4805 = vperm.slane %v4797, %v4804
          %v4806 = vrot.slane %v2606, 4
          %v4807 = vsel %vm2890, %v4806, %v2476
          %v4808 = vrot.slane %v2476, 4
          %v4809 = vsel %vm2890, %v2606, %v4808
          %v4811 = vunpack.c.l.s4 1983009808
          %v4812 = vunpack.c.0.s8 %v4811
          %v4813 = vperm.slane %v4807, %v4812
          %v4815 = vunpack.c.l.s4 1983009808
          %v4816 = vunpack.c.0.s8 %v4815
          %v4817 = vperm.slane %v4809, %v4816
          %v4818 = vrot.slane %v2801, 4
          %v4819 = vsel %vm2890, %v4818, %v2671
          %v4820 = vrot.slane %v2671, 4
          %v4821 = vsel %vm2890, %v2801, %v4820
          %v4823 = vunpack.c.l.s4 1983009808
          %v4824 = vunpack.c.0.s8 %v4823
          %v4825 = vperm.slane %v4819, %v4824
          %v4827 = vunpack.c.l.s4 1983009808
          %v4828 = vunpack.c.0.s8 %v4827
          %v4829 = vperm.slane %v4821, %v4828
          %v4830 = vrot.slane %v2866, 4
          %v4831 = vsel %vm2890, %v4830, %v2736
          %v4832 = vrot.slane %v2736, 4
          %v4833 = vsel %vm2890, %v2866, %v4832
          %v4835 = vunpack.c.l.s4 1983009808
          %v4836 = vunpack.c.0.s8 %v4835
          %v4837 = vperm.slane %v4831, %v4836
          %v4839 = vunpack.c.l.s4 1983009808
          %v4840 = vunpack.c.0.s8 %v4839
          %v4841 = vperm.slane %v4833, %v4840
          %v4842 = vrot.slane %v4813, 4
          %v4843 = vsel %vm2890, %v4842, %v4801
          %v4844 = vrot.slane %v4801, 4
          %v4845 = vsel %vm2890, %v4813, %v4844
          %v4847 = vunpack.c.l.s4 1934713408
          %v4848 = vunpack.c.0.s8 %v4847
          %v4849 = vperm.slane %v4843, %v4848
          %v4851 = vunpack.c.l.s4 1934713408
          %v4852 = vunpack.c.0.s8 %v4851
          %v4853 = vperm.slane %v4845, %v4852
          %v4854 = vrot.slane %v4817, 4
          %v4855 = vsel %vm2890, %v4854, %v4805
          %v4856 = vrot.slane %v4805, 4
          %v4857 = vsel %vm2890, %v4817, %v4856
          %v4859 = vunpack.c.l.s4 1934713408
          %v4860 = vunpack.c.0.s8 %v4859
          %v4861 = vperm.slane %v4855, %v4860
          %v4863 = vunpack.c.l.s4 1934713408
          %v4864 = vunpack.c.0.s8 %v4863
          %v4865 = vperm.slane %v4857, %v4864
          %v4866 = vrot.slane %v4837, 4
          %v4867 = vsel %vm2890, %v4866, %v4825
          %v4868 = vrot.slane %v4825, 4
          %v4869 = vsel %vm2890, %v4837, %v4868
          %v4871 = vunpack.c.l.s4 1934713408
          %v4872 = vunpack.c.0.s8 %v4871
          %v4873 = vperm.slane %v4867, %v4872
          %v4875 = vunpack.c.l.s4 1934713408
          %v4876 = vunpack.c.0.s8 %v4875
          %v4877 = vperm.slane %v4869, %v4876
          %v4878 = vrot.slane %v4841, 4
          %v4879 = vsel %vm2890, %v4878, %v4829
          %v4880 = vrot.slane %v4829, 4
          %v4881 = vsel %vm2890, %v4841, %v4880
          %v4883 = vunpack.c.l.s4 1934713408
          %v4884 = vunpack.c.0.s8 %v4883
          %v4885 = vperm.slane %v4879, %v4884
          %v4887 = vunpack.c.l.s4 1934713408
          %v4888 = vunpack.c.0.s8 %v4887
          %v4889 = vperm.slane %v4881, %v4888
          %v4890 = vrot.slane %v4873, 4
          %v4891 = vsel %vm2890, %v4890, %v4849
          %v4892 = vrot.slane %v4849, 4
          %v4893 = vsel %vm2890, %v4873, %v4892
          %v4894 = vrot.slane %v4877, 4
          %v4895 = vsel %vm2890, %v4894, %v4853
          %v4896 = vrot.slane %v4853, 4
          %v4897 = vsel %vm2890, %v4877, %v4896
          %v4898 = vrot.slane %v4885, 4
          %v4899 = vsel %vm2890, %v4898, %v4861
          %v4900 = vrot.slane %v4861, 4
          %v4901 = vsel %vm2890, %v4885, %v4900
          %v4902 = vrot.slane %v4889, 4
          %v4903 = vsel %vm2890, %v4902, %v4865
          %v4904 = vrot.slane %v4865, 4
          %v4905 = vsel %vm2890, %v4889, %v4904
          %v4906 = vrot.slane %v2024, 4
          %v4907 = vsel %vm2890, %v4906, %v1894
          %v4908 = vrot.slane %v1894, 4
          %v4909 = vsel %vm2890, %v2024, %v4908
          %v4911 = vunpack.c.l.s4 1983009808
          %v4912 = vunpack.c.0.s8 %v4911
          %v4913 = vperm.slane %v4907, %v4912
          %v4915 = vunpack.c.l.s4 1983009808
          %v4916 = vunpack.c.0.s8 %v4915
          %v4917 = vperm.slane %v4909, %v4916
          %v4918 = vrot.slane %v2089, 4
          %v4919 = vsel %vm2890, %v4918, %v1959
          %v4920 = vrot.slane %v1959, 4
          %v4921 = vsel %vm2890, %v2089, %v4920
          %v4923 = vunpack.c.l.s4 1983009808
          %v4924 = vunpack.c.0.s8 %v4923
          %v4925 = vperm.slane %v4919, %v4924
          %v4927 = vunpack.c.l.s4 1983009808
          %v4928 = vunpack.c.0.s8 %v4927
          %v4929 = vperm.slane %v4921, %v4928
          %v4930 = vrot.slane %v2284, 4
          %v4931 = vsel %vm2890, %v4930, %v2154
          %v4932 = vrot.slane %v2154, 4
          %v4933 = vsel %vm2890, %v2284, %v4932
          %v4935 = vunpack.c.l.s4 1983009808
          %v4936 = vunpack.c.0.s8 %v4935
          %v4937 = vperm.slane %v4931, %v4936
          %v4939 = vunpack.c.l.s4 1983009808
          %v4940 = vunpack.c.0.s8 %v4939
          %v4941 = vperm.slane %v4933, %v4940
          %v4942 = vrot.slane %v2349, 4
          %v4943 = vsel %vm2890, %v4942, %v2219
          %v4944 = vrot.slane %v2219, 4
          %v4945 = vsel %vm2890, %v2349, %v4944
          %v4947 = vunpack.c.l.s4 1983009808
          %v4948 = vunpack.c.0.s8 %v4947
          %v4949 = vperm.slane %v4943, %v4948
          %v4951 = vunpack.c.l.s4 1983009808
          %v4952 = vunpack.c.0.s8 %v4951
          %v4953 = vperm.slane %v4945, %v4952
          %v4954 = vrot.slane %v4925, 4
          %v4955 = vsel %vm2890, %v4954, %v4913
          %v4956 = vrot.slane %v4913, 4
          %v4957 = vsel %vm2890, %v4925, %v4956
          %v4959 = vunpack.c.l.s4 1934713408
          %v4960 = vunpack.c.0.s8 %v4959
          %v4961 = vperm.slane %v4955, %v4960
          %v4963 = vunpack.c.l.s4 1934713408
          %v4964 = vunpack.c.0.s8 %v4963
          %v4965 = vperm.slane %v4957, %v4964
          %v4966 = vrot.slane %v4929, 4
          %v4967 = vsel %vm2890, %v4966, %v4917
          %v4968 = vrot.slane %v4917, 4
          %v4969 = vsel %vm2890, %v4929, %v4968
          %v4971 = vunpack.c.l.s4 1934713408
          %v4972 = vunpack.c.0.s8 %v4971
          %v4973 = vperm.slane %v4967, %v4972
          %v4975 = vunpack.c.l.s4 1934713408
          %v4976 = vunpack.c.0.s8 %v4975
          %v4977 = vperm.slane %v4969, %v4976
          %v4978 = vrot.slane %v4949, 4
          %v4979 = vsel %vm2890, %v4978, %v4937
          %v4980 = vrot.slane %v4937, 4
          %v4981 = vsel %vm2890, %v4949, %v4980
          %v4983 = vunpack.c.l.s4 1934713408
          %v4984 = vunpack.c.0.s8 %v4983
          %v4985 = vperm.slane %v4979, %v4984
          %v4987 = vunpack.c.l.s4 1934713408
          %v4988 = vunpack.c.0.s8 %v4987
          %v4989 = vperm.slane %v4981, %v4988
          %v4990 = vrot.slane %v4953, 4
          %v4991 = vsel %vm2890, %v4990, %v4941
          %v4992 = vrot.slane %v4941, 4
          %v4993 = vsel %vm2890, %v4953, %v4992
          %v4995 = vunpack.c.l.s4 1934713408
          %v4996 = vunpack.c.0.s8 %v4995
          %v4997 = vperm.slane %v4991, %v4996
          %v4999 = vunpack.c.l.s4 1934713408
          %v5000 = vunpack.c.0.s8 %v4999
          %v5001 = vperm.slane %v4993, %v5000
          %v5002 = vrot.slane %v4985, 4
          %v5003 = vsel %vm2890, %v5002, %v4961
          %v5004 = vrot.slane %v4961, 4
          %v5005 = vsel %vm2890, %v4985, %v5004
          %v5006 = vrot.slane %v4989, 4
          %v5007 = vsel %vm2890, %v5006, %v4965
          %v5008 = vrot.slane %v4965, 4
          %v5009 = vsel %vm2890, %v4989, %v5008
          %v5010 = vrot.slane %v4997, 4
          %v5011 = vsel %vm2890, %v5010, %v4973
          %v5012 = vrot.slane %v4973, 4
          %v5013 = vsel %vm2890, %v4997, %v5012
          %v5014 = vrot.slane %v5001, 4
          %v5015 = vsel %vm2890, %v5014, %v4977
          %v5016 = vrot.slane %v4977, 4
          %v5017 = vsel %vm2890, %v5001, %v5016
          %v5018 = vrot.slane %v2544, 4
          %v5019 = vsel %vm2890, %v5018, %v2414
          %v5020 = vrot.slane %v2414, 4
          %v5021 = vsel %vm2890, %v2544, %v5020
          %v5023 = vunpack.c.l.s4 1983009808
          %v5024 = vunpack.c.0.s8 %v5023
          %v5025 = vperm.slane %v5019, %v5024
          %v5027 = vunpack.c.l.s4 1983009808
          %v5028 = vunpack.c.0.s8 %v5027
          %v5029 = vperm.slane %v5021, %v5028
          %v5030 = vrot.slane %v2609, 4
          %v5031 = vsel %vm2890, %v5030, %v2479
          %v5032 = vrot.slane %v2479, 4
          %v5033 = vsel %vm2890, %v2609, %v5032
          %v5035 = vunpack.c.l.s4 1983009808
          %v5036 = vunpack.c.0.s8 %v5035
          %v5037 = vperm.slane %v5031, %v5036
          %v5039 = vunpack.c.l.s4 1983009808
          %v5040 = vunpack.c.0.s8 %v5039
          %v5041 = vperm.slane %v5033, %v5040
          %v5042 = vrot.slane %v2804, 4
          %v5043 = vsel %vm2890, %v5042, %v2674
          %v5044 = vrot.slane %v2674, 4
          %v5045 = vsel %vm2890, %v2804, %v5044
          %v5047 = vunpack.c.l.s4 1983009808
          %v5048 = vunpack.c.0.s8 %v5047
          %v5049 = vperm.slane %v5043, %v5048
          %v5051 = vunpack.c.l.s4 1983009808
          %v5052 = vunpack.c.0.s8 %v5051
          %v5053 = vperm.slane %v5045, %v5052
          %v5054 = vrot.slane %v2869, 4
          %v5055 = vsel %vm2890, %v5054, %v2739
          %v5056 = vrot.slane %v2739, 4
          %v5057 = vsel %vm2890, %v2869, %v5056
          %v5059 = vunpack.c.l.s4 1983009808
          %v5060 = vunpack.c.0.s8 %v5059
          %v5061 = vperm.slane %v5055, %v5060
          %v5063 = vunpack.c.l.s4 1983009808
          %v5064 = vunpack.c.0.s8 %v5063
          %v5065 = vperm.slane %v5057, %v5064
          %v5066 = vrot.slane %v5037, 4
          %v5067 = vsel %vm2890, %v5066, %v5025
          %v5068 = vrot.slane %v5025, 4
          %v5069 = vsel %vm2890, %v5037, %v5068
          %v5071 = vunpack.c.l.s4 1934713408
          %v5072 = vunpack.c.0.s8 %v5071
          %v5073 = vperm.slane %v5067, %v5072
          %v5075 = vunpack.c.l.s4 1934713408
          %v5076 = vunpack.c.0.s8 %v5075
          %v5077 = vperm.slane %v5069, %v5076
          %v5078 = vrot.slane %v5041, 4
          %v5079 = vsel %vm2890, %v5078, %v5029
          %v5080 = vrot.slane %v5029, 4
          %v5081 = vsel %vm2890, %v5041, %v5080
          %v5083 = vunpack.c.l.s4 1934713408
          %v5084 = vunpack.c.0.s8 %v5083
          %v5085 = vperm.slane %v5079, %v5084
          %v5087 = vunpack.c.l.s4 1934713408
          %v5088 = vunpack.c.0.s8 %v5087
          %v5089 = vperm.slane %v5081, %v5088
          %v5090 = vrot.slane %v5061, 4
          %v5091 = vsel %vm2890, %v5090, %v5049
          %v5092 = vrot.slane %v5049, 4
          %v5093 = vsel %vm2890, %v5061, %v5092
          %v5095 = vunpack.c.l.s4 1934713408
          %v5096 = vunpack.c.0.s8 %v5095
          %v5097 = vperm.slane %v5091, %v5096
          %v5099 = vunpack.c.l.s4 1934713408
          %v5100 = vunpack.c.0.s8 %v5099
          %v5101 = vperm.slane %v5093, %v5100
          %v5102 = vrot.slane %v5065, 4
          %v5103 = vsel %vm2890, %v5102, %v5053
          %v5104 = vrot.slane %v5053, 4
          %v5105 = vsel %vm2890, %v5065, %v5104
          %v5107 = vunpack.c.l.s4 1934713408
          %v5108 = vunpack.c.0.s8 %v5107
          %v5109 = vperm.slane %v5103, %v5108
          %v5111 = vunpack.c.l.s4 1934713408
          %v5112 = vunpack.c.0.s8 %v5111
          %v5113 = vperm.slane %v5105, %v5112
          %v5114 = vrot.slane %v5097, 4
          %v5115 = vsel %vm2890, %v5114, %v5073
          %v5116 = vrot.slane %v5073, 4
          %v5117 = vsel %vm2890, %v5097, %v5116
          %v5118 = vrot.slane %v5101, 4
          %v5119 = vsel %vm2890, %v5118, %v5077
          %v5120 = vrot.slane %v5077, 4
          %v5121 = vsel %vm2890, %v5101, %v5120
          %v5122 = vrot.slane %v5109, 4
          %v5123 = vsel %vm2890, %v5122, %v5085
          %v5124 = vrot.slane %v5085, 4
          %v5125 = vsel %vm2890, %v5109, %v5124
          %v5126 = vrot.slane %v5113, 4
          %v5127 = vsel %vm2890, %v5126, %v5089
          %v5128 = vrot.slane %v5089, 4
          %v5129 = vsel %vm2890, %v5113, %v5128
          %v5130 = vrot.slane %v2027, 4
          %v5131 = vsel %vm2890, %v5130, %v1897
          %v5132 = vrot.slane %v1897, 4
          %v5133 = vsel %vm2890, %v2027, %v5132
          %v5135 = vunpack.c.l.s4 1983009808
          %v5136 = vunpack.c.0.s8 %v5135
          %v5137 = vperm.slane %v5131, %v5136
          %v5139 = vunpack.c.l.s4 1983009808
          %v5140 = vunpack.c.0.s8 %v5139
          %v5141 = vperm.slane %v5133, %v5140
          %v5142 = vrot.slane %v2092, 4
          %v5143 = vsel %vm2890, %v5142, %v1962
          %v5144 = vrot.slane %v1962, 4
          %v5145 = vsel %vm2890, %v2092, %v5144
          %v5147 = vunpack.c.l.s4 1983009808
          %v5148 = vunpack.c.0.s8 %v5147
          %v5149 = vperm.slane %v5143, %v5148
          %v5151 = vunpack.c.l.s4 1983009808
          %v5152 = vunpack.c.0.s8 %v5151
          %v5153 = vperm.slane %v5145, %v5152
          %v5154 = vrot.slane %v2287, 4
          %v5155 = vsel %vm2890, %v5154, %v2157
          %v5156 = vrot.slane %v2157, 4
          %v5157 = vsel %vm2890, %v2287, %v5156
          %v5159 = vunpack.c.l.s4 1983009808
          %v5160 = vunpack.c.0.s8 %v5159
          %v5161 = vperm.slane %v5155, %v5160
          %v5163 = vunpack.c.l.s4 1983009808
          %v5164 = vunpack.c.0.s8 %v5163
          %v5165 = vperm.slane %v5157, %v5164
          %v5166 = vrot.slane %v2352, 4
          %v5167 = vsel %vm2890, %v5166, %v2222
          %v5168 = vrot.slane %v2222, 4
          %v5169 = vsel %vm2890, %v2352, %v5168
          %v5171 = vunpack.c.l.s4 1983009808
          %v5172 = vunpack.c.0.s8 %v5171
          %v5173 = vperm.slane %v5167, %v5172
          %v5175 = vunpack.c.l.s4 1983009808
          %v5176 = vunpack.c.0.s8 %v5175
          %v5177 = vperm.slane %v5169, %v5176
          %v5178 = vrot.slane %v5149, 4
          %v5179 = vsel %vm2890, %v5178, %v5137
          %v5180 = vrot.slane %v5137, 4
          %v5181 = vsel %vm2890, %v5149, %v5180
          %v5183 = vunpack.c.l.s4 1934713408
          %v5184 = vunpack.c.0.s8 %v5183
          %v5185 = vperm.slane %v5179, %v5184
          %v5187 = vunpack.c.l.s4 1934713408
          %v5188 = vunpack.c.0.s8 %v5187
          %v5189 = vperm.slane %v5181, %v5188
          %v5190 = vrot.slane %v5153, 4
          %v5191 = vsel %vm2890, %v5190, %v5141
          %v5192 = vrot.slane %v5141, 4
          %v5193 = vsel %vm2890, %v5153, %v5192
          %v5195 = vunpack.c.l.s4 1934713408
          %v5196 = vunpack.c.0.s8 %v5195
          %v5197 = vperm.slane %v5191, %v5196
          %v5199 = vunpack.c.l.s4 1934713408
          %v5200 = vunpack.c.0.s8 %v5199
          %v5201 = vperm.slane %v5193, %v5200
          %v5202 = vrot.slane %v5173, 4
          %v5203 = vsel %vm2890, %v5202, %v5161
          %v5204 = vrot.slane %v5161, 4
          %v5205 = vsel %vm2890, %v5173, %v5204
          %v5207 = vunpack.c.l.s4 1934713408
          %v5208 = vunpack.c.0.s8 %v5207
          %v5209 = vperm.slane %v5203, %v5208
          %v5211 = vunpack.c.l.s4 1934713408
          %v5212 = vunpack.c.0.s8 %v5211
          %v5213 = vperm.slane %v5205, %v5212
          %v5214 = vrot.slane %v5177, 4
          %v5215 = vsel %vm2890, %v5214, %v5165
          %v5216 = vrot.slane %v5165, 4
          %v5217 = vsel %vm2890, %v5177, %v5216
          %v5219 = vunpack.c.l.s4 1934713408
          %v5220 = vunpack.c.0.s8 %v5219
          %v5221 = vperm.slane %v5215, %v5220
          %v5223 = vunpack.c.l.s4 1934713408
          %v5224 = vunpack.c.0.s8 %v5223
          %v5225 = vperm.slane %v5217, %v5224
          %v5226 = vrot.slane %v5209, 4
          %v5227 = vsel %vm2890, %v5226, %v5185
          %v5228 = vrot.slane %v5185, 4
          %v5229 = vsel %vm2890, %v5209, %v5228
          %v5230 = vrot.slane %v5213, 4
          %v5231 = vsel %vm2890, %v5230, %v5189
          %v5232 = vrot.slane %v5189, 4
          %v5233 = vsel %vm2890, %v5213, %v5232
          %v5234 = vrot.slane %v5221, 4
          %v5235 = vsel %vm2890, %v5234, %v5197
          %v5236 = vrot.slane %v5197, 4
          %v5237 = vsel %vm2890, %v5221, %v5236
          %v5238 = vrot.slane %v5225, 4
          %v5239 = vsel %vm2890, %v5238, %v5201
          %v5240 = vrot.slane %v5201, 4
          %v5241 = vsel %vm2890, %v5225, %v5240
          %v5242 = vrot.slane %v2547, 4
          %v5243 = vsel %vm2890, %v5242, %v2417
          %v5244 = vrot.slane %v2417, 4
          %v5245 = vsel %vm2890, %v2547, %v5244
          %v5247 = vunpack.c.l.s4 1983009808
          %v5248 = vunpack.c.0.s8 %v5247
          %v5249 = vperm.slane %v5243, %v5248
          %v5251 = vunpack.c.l.s4 1983009808
          %v5252 = vunpack.c.0.s8 %v5251
          %v5253 = vperm.slane %v5245, %v5252
          %v5254 = vrot.slane %v2612, 4
          %v5255 = vsel %vm2890, %v5254, %v2482
          %v5256 = vrot.slane %v2482, 4
          %v5257 = vsel %vm2890, %v2612, %v5256
          %v5259 = vunpack.c.l.s4 1983009808
          %v5260 = vunpack.c.0.s8 %v5259
          %v5261 = vperm.slane %v5255, %v5260
          %v5263 = vunpack.c.l.s4 1983009808
          %v5264 = vunpack.c.0.s8 %v5263
          %v5265 = vperm.slane %v5257, %v5264
          %v5266 = vrot.slane %v2807, 4
          %v5267 = vsel %vm2890, %v5266, %v2677
          %v5268 = vrot.slane %v2677, 4
          %v5269 = vsel %vm2890, %v2807, %v5268
          %v5271 = vunpack.c.l.s4 1983009808
          %v5272 = vunpack.c.0.s8 %v5271
          %v5273 = vperm.slane %v5267, %v5272
          %v5275 = vunpack.c.l.s4 1983009808
          %v5276 = vunpack.c.0.s8 %v5275
          %v5277 = vperm.slane %v5269, %v5276
          %v5278 = vrot.slane %v2872, 4
          %v5279 = vsel %vm2890, %v5278, %v2742
          %v5280 = vrot.slane %v2742, 4
          %v5281 = vsel %vm2890, %v2872, %v5280
          %v5283 = vunpack.c.l.s4 1983009808
          %v5284 = vunpack.c.0.s8 %v5283
          %v5285 = vperm.slane %v5279, %v5284
          %v5287 = vunpack.c.l.s4 1983009808
          %v5288 = vunpack.c.0.s8 %v5287
          %v5289 = vperm.slane %v5281, %v5288
          %v5290 = vrot.slane %v5261, 4
          %v5291 = vsel %vm2890, %v5290, %v5249
          %v5292 = vrot.slane %v5249, 4
          %v5293 = vsel %vm2890, %v5261, %v5292
          %v5295 = vunpack.c.l.s4 1934713408
          %v5296 = vunpack.c.0.s8 %v5295
          %v5297 = vperm.slane %v5291, %v5296
          %v5299 = vunpack.c.l.s4 1934713408
          %v5300 = vunpack.c.0.s8 %v5299
          %v5301 = vperm.slane %v5293, %v5300
          %v5302 = vrot.slane %v5265, 4
          %v5303 = vsel %vm2890, %v5302, %v5253
          %v5304 = vrot.slane %v5253, 4
          %v5305 = vsel %vm2890, %v5265, %v5304
          %v5307 = vunpack.c.l.s4 1934713408
          %v5308 = vunpack.c.0.s8 %v5307
          %v5309 = vperm.slane %v5303, %v5308
          %v5311 = vunpack.c.l.s4 1934713408
          %v5312 = vunpack.c.0.s8 %v5311
          %v5313 = vperm.slane %v5305, %v5312
          %v5314 = vrot.slane %v5285, 4
          %v5315 = vsel %vm2890, %v5314, %v5273
          %v5316 = vrot.slane %v5273, 4
          %v5317 = vsel %vm2890, %v5285, %v5316
          %v5319 = vunpack.c.l.s4 1934713408
          %v5320 = vunpack.c.0.s8 %v5319
          %v5321 = vperm.slane %v5315, %v5320
          %v5323 = vunpack.c.l.s4 1934713408
          %v5324 = vunpack.c.0.s8 %v5323
          %v5325 = vperm.slane %v5317, %v5324
          %v5326 = vrot.slane %v5289, 4
          %v5327 = vsel %vm2890, %v5326, %v5277
          %v5328 = vrot.slane %v5277, 4
          %v5329 = vsel %vm2890, %v5289, %v5328
          %v5331 = vunpack.c.l.s4 1934713408
          %v5332 = vunpack.c.0.s8 %v5331
          %v5333 = vperm.slane %v5327, %v5332
          %v5335 = vunpack.c.l.s4 1934713408
          %v5336 = vunpack.c.0.s8 %v5335
          %v5337 = vperm.slane %v5329, %v5336
          %v5338 = vrot.slane %v5321, 4
          %v5339 = vsel %vm2890, %v5338, %v5297
          %v5340 = vrot.slane %v5297, 4
          %v5341 = vsel %vm2890, %v5321, %v5340
          %v5342 = vrot.slane %v5325, 4
          %v5343 = vsel %vm2890, %v5342, %v5301
          %v5344 = vrot.slane %v5301, 4
          %v5345 = vsel %vm2890, %v5325, %v5344
          %v5346 = vrot.slane %v5333, 4
          %v5347 = vsel %vm2890, %v5346, %v5309
          %v5348 = vrot.slane %v5309, 4
          %v5349 = vsel %vm2890, %v5333, %v5348
          %v5350 = vrot.slane %v5337, 4
          %v5351 = vsel %vm2890, %v5350, %v5313
          %v5352 = vrot.slane %v5313, 4
          %v5353 = vsel %vm2890, %v5337, %v5352
          %v5354 = vrot.slane %v2030, 4
          %v5355 = vsel %vm2890, %v5354, %v1900
          %v5356 = vrot.slane %v1900, 4
          %v5357 = vsel %vm2890, %v2030, %v5356
          %v5359 = vunpack.c.l.s4 1983009808
          %v5360 = vunpack.c.0.s8 %v5359
          %v5361 = vperm.slane %v5355, %v5360
          %v5363 = vunpack.c.l.s4 1983009808
          %v5364 = vunpack.c.0.s8 %v5363
          %v5365 = vperm.slane %v5357, %v5364
          %v5366 = vrot.slane %v2095, 4
          %v5367 = vsel %vm2890, %v5366, %v1965
          %v5368 = vrot.slane %v1965, 4
          %v5369 = vsel %vm2890, %v2095, %v5368
          %v5371 = vunpack.c.l.s4 1983009808
          %v5372 = vunpack.c.0.s8 %v5371
          %v5373 = vperm.slane %v5367, %v5372
          %v5375 = vunpack.c.l.s4 1983009808
          %v5376 = vunpack.c.0.s8 %v5375
          %v5377 = vperm.slane %v5369, %v5376
          %v5378 = vrot.slane %v2290, 4
          %v5379 = vsel %vm2890, %v5378, %v2160
          %v5380 = vrot.slane %v2160, 4
          %v5381 = vsel %vm2890, %v2290, %v5380
          %v5383 = vunpack.c.l.s4 1983009808
          %v5384 = vunpack.c.0.s8 %v5383
          %v5385 = vperm.slane %v5379, %v5384
          %v5387 = vunpack.c.l.s4 1983009808
          %v5388 = vunpack.c.0.s8 %v5387
          %v5389 = vperm.slane %v5381, %v5388
          %v5390 = vrot.slane %v2355, 4
          %v5391 = vsel %vm2890, %v5390, %v2225
          %v5392 = vrot.slane %v2225, 4
          %v5393 = vsel %vm2890, %v2355, %v5392
          %v5395 = vunpack.c.l.s4 1983009808
          %v5396 = vunpack.c.0.s8 %v5395
          %v5397 = vperm.slane %v5391, %v5396
          %v5399 = vunpack.c.l.s4 1983009808
          %v5400 = vunpack.c.0.s8 %v5399
          %v5401 = vperm.slane %v5393, %v5400
          %v5402 = vrot.slane %v5373, 4
          %v5403 = vsel %vm2890, %v5402, %v5361
          %v5404 = vrot.slane %v5361, 4
          %v5405 = vsel %vm2890, %v5373, %v5404
          %v5407 = vunpack.c.l.s4 1934713408
          %v5408 = vunpack.c.0.s8 %v5407
          %v5409 = vperm.slane %v5403, %v5408
          %v5411 = vunpack.c.l.s4 1934713408
          %v5412 = vunpack.c.0.s8 %v5411
          %v5413 = vperm.slane %v5405, %v5412
          %v5414 = vrot.slane %v5377, 4
          %v5415 = vsel %vm2890, %v5414, %v5365
          %v5416 = vrot.slane %v5365, 4
          %v5417 = vsel %vm2890, %v5377, %v5416
          %v5419 = vunpack.c.l.s4 1934713408
          %v5420 = vunpack.c.0.s8 %v5419
          %v5421 = vperm.slane %v5415, %v5420
          %v5423 = vunpack.c.l.s4 1934713408
          %v5424 = vunpack.c.0.s8 %v5423
          %v5425 = vperm.slane %v5417, %v5424
          %v5426 = vrot.slane %v5397, 4
          %v5427 = vsel %vm2890, %v5426, %v5385
          %v5428 = vrot.slane %v5385, 4
          %v5429 = vsel %vm2890, %v5397, %v5428
          %v5431 = vunpack.c.l.s4 1934713408
          %v5432 = vunpack.c.0.s8 %v5431
          %v5433 = vperm.slane %v5427, %v5432
          %v5435 = vunpack.c.l.s4 1934713408
          %v5436 = vunpack.c.0.s8 %v5435
          %v5437 = vperm.slane %v5429, %v5436
          %v5438 = vrot.slane %v5401, 4
          %v5439 = vsel %vm2890, %v5438, %v5389
          %v5440 = vrot.slane %v5389, 4
          %v5441 = vsel %vm2890, %v5401, %v5440
          %v5443 = vunpack.c.l.s4 1934713408
          %v5444 = vunpack.c.0.s8 %v5443
          %v5445 = vperm.slane %v5439, %v5444
          %v5447 = vunpack.c.l.s4 1934713408
          %v5448 = vunpack.c.0.s8 %v5447
          %v5449 = vperm.slane %v5441, %v5448
          %v5450 = vrot.slane %v5433, 4
          %v5451 = vsel %vm2890, %v5450, %v5409
          %v5452 = vrot.slane %v5409, 4
          %v5453 = vsel %vm2890, %v5433, %v5452
          %v5454 = vrot.slane %v5437, 4
          %v5455 = vsel %vm2890, %v5454, %v5413
          %v5456 = vrot.slane %v5413, 4
          %v5457 = vsel %vm2890, %v5437, %v5456
          %v5458 = vrot.slane %v5445, 4
          %v5459 = vsel %vm2890, %v5458, %v5421
          %v5460 = vrot.slane %v5421, 4
          %v5461 = vsel %vm2890, %v5445, %v5460
          %v5462 = vrot.slane %v5449, 4
          %v5463 = vsel %vm2890, %v5462, %v5425
          %v5464 = vrot.slane %v5425, 4
          %v5465 = vsel %vm2890, %v5449, %v5464
          %v5466 = vrot.slane %v2550, 4
          %v5467 = vsel %vm2890, %v5466, %v2420
          %v5468 = vrot.slane %v2420, 4
          %v5469 = vsel %vm2890, %v2550, %v5468
          %v5471 = vunpack.c.l.s4 1983009808
          %v5472 = vunpack.c.0.s8 %v5471
          %v5473 = vperm.slane %v5467, %v5472
          %v5475 = vunpack.c.l.s4 1983009808
          %v5476 = vunpack.c.0.s8 %v5475
          %v5477 = vperm.slane %v5469, %v5476
          %v5478 = vrot.slane %v2615, 4
          %v5479 = vsel %vm2890, %v5478, %v2485
          %v5480 = vrot.slane %v2485, 4
          %v5481 = vsel %vm2890, %v2615, %v5480
          %v5483 = vunpack.c.l.s4 1983009808
          %v5484 = vunpack.c.0.s8 %v5483
          %v5485 = vperm.slane %v5479, %v5484
          %v5487 = vunpack.c.l.s4 1983009808
          %v5488 = vunpack.c.0.s8 %v5487
          %v5489 = vperm.slane %v5481, %v5488
          %v5490 = vrot.slane %v2810, 4
          %v5491 = vsel %vm2890, %v5490, %v2680
          %v5492 = vrot.slane %v2680, 4
          %v5493 = vsel %vm2890, %v2810, %v5492
          %v5495 = vunpack.c.l.s4 1983009808
          %v5496 = vunpack.c.0.s8 %v5495
          %v5497 = vperm.slane %v5491, %v5496
          %v5499 = vunpack.c.l.s4 1983009808
          %v5500 = vunpack.c.0.s8 %v5499
          %v5501 = vperm.slane %v5493, %v5500
          %v5502 = vrot.slane %v2875, 4
          %v5503 = vsel %vm2890, %v5502, %v2745
          %v5504 = vrot.slane %v2745, 4
          %v5505 = vsel %vm2890, %v2875, %v5504
          %v5507 = vunpack.c.l.s4 1983009808
          %v5508 = vunpack.c.0.s8 %v5507
          %v5509 = vperm.slane %v5503, %v5508
          %v5511 = vunpack.c.l.s4 1983009808
          %v5512 = vunpack.c.0.s8 %v5511
          %v5513 = vperm.slane %v5505, %v5512
          %v5514 = vrot.slane %v5485, 4
          %v5515 = vsel %vm2890, %v5514, %v5473
          %v5516 = vrot.slane %v5473, 4
          %v5517 = vsel %vm2890, %v5485, %v5516
          %v5519 = vunpack.c.l.s4 1934713408
          %v5520 = vunpack.c.0.s8 %v5519
          %v5521 = vperm.slane %v5515, %v5520
          %v5523 = vunpack.c.l.s4 1934713408
          %v5524 = vunpack.c.0.s8 %v5523
          %v5525 = vperm.slane %v5517, %v5524
          %v5526 = vrot.slane %v5489, 4
          %v5527 = vsel %vm2890, %v5526, %v5477
          %v5528 = vrot.slane %v5477, 4
          %v5529 = vsel %vm2890, %v5489, %v5528
          %v5531 = vunpack.c.l.s4 1934713408
          %v5532 = vunpack.c.0.s8 %v5531
          %v5533 = vperm.slane %v5527, %v5532
          %v5535 = vunpack.c.l.s4 1934713408
          %v5536 = vunpack.c.0.s8 %v5535
          %v5537 = vperm.slane %v5529, %v5536
          %v5538 = vrot.slane %v5509, 4
          %v5539 = vsel %vm2890, %v5538, %v5497
          %v5540 = vrot.slane %v5497, 4
          %v5541 = vsel %vm2890, %v5509, %v5540
          %v5543 = vunpack.c.l.s4 1934713408
          %v5544 = vunpack.c.0.s8 %v5543
          %v5545 = vperm.slane %v5539, %v5544
          %v5547 = vunpack.c.l.s4 1934713408
          %v5548 = vunpack.c.0.s8 %v5547
          %v5549 = vperm.slane %v5541, %v5548
          %v5550 = vrot.slane %v5513, 4
          %v5551 = vsel %vm2890, %v5550, %v5501
          %v5552 = vrot.slane %v5501, 4
          %v5553 = vsel %vm2890, %v5513, %v5552
          %v5555 = vunpack.c.l.s4 1934713408
          %v5556 = vunpack.c.0.s8 %v5555
          %v5557 = vperm.slane %v5551, %v5556
          %v5559 = vunpack.c.l.s4 1934713408
          %v5560 = vunpack.c.0.s8 %v5559
          %v5561 = vperm.slane %v5553, %v5560
          %v5562 = vrot.slane %v5545, 4
          %v5563 = vsel %vm2890, %v5562, %v5521
          %v5564 = vrot.slane %v5521, 4
          %v5565 = vsel %vm2890, %v5545, %v5564
          %v5566 = vrot.slane %v5549, 4
          %v5567 = vsel %vm2890, %v5566, %v5525
          %v5568 = vrot.slane %v5525, 4
          %v5569 = vsel %vm2890, %v5549, %v5568
          %v5570 = vrot.slane %v5557, 4
          %v5571 = vsel %vm2890, %v5570, %v5533
          %v5572 = vrot.slane %v5533, 4
          %v5573 = vsel %vm2890, %v5557, %v5572
          %v5574 = vrot.slane %v5561, 4
          %v5575 = vsel %vm2890, %v5574, %v5537
          %v5576 = vrot.slane %v5537, 4
          %v5577 = vsel %vm2890, %v5561, %v5576
          %v5578 = vrot.slane %v2033, 4
          %v5579 = vsel %vm2890, %v5578, %v1903
          %v5580 = vrot.slane %v1903, 4
          %v5581 = vsel %vm2890, %v2033, %v5580
          %v5583 = vunpack.c.l.s4 1983009808
          %v5584 = vunpack.c.0.s8 %v5583
          %v5585 = vperm.slane %v5579, %v5584
          %v5587 = vunpack.c.l.s4 1983009808
          %v5588 = vunpack.c.0.s8 %v5587
          %v5589 = vperm.slane %v5581, %v5588
          %v5590 = vrot.slane %v2098, 4
          %v5591 = vsel %vm2890, %v5590, %v1968
          %v5592 = vrot.slane %v1968, 4
          %v5593 = vsel %vm2890, %v2098, %v5592
          %v5595 = vunpack.c.l.s4 1983009808
          %v5596 = vunpack.c.0.s8 %v5595
          %v5597 = vperm.slane %v5591, %v5596
          %v5599 = vunpack.c.l.s4 1983009808
          %v5600 = vunpack.c.0.s8 %v5599
          %v5601 = vperm.slane %v5593, %v5600
          %v5602 = vrot.slane %v2293, 4
          %v5603 = vsel %vm2890, %v5602, %v2163
          %v5604 = vrot.slane %v2163, 4
          %v5605 = vsel %vm2890, %v2293, %v5604
          %v5607 = vunpack.c.l.s4 1983009808
          %v5608 = vunpack.c.0.s8 %v5607
          %v5609 = vperm.slane %v5603, %v5608
          %v5611 = vunpack.c.l.s4 1983009808
          %v5612 = vunpack.c.0.s8 %v5611
          %v5613 = vperm.slane %v5605, %v5612
          %v5614 = vrot.slane %v2358, 4
          %v5615 = vsel %vm2890, %v5614, %v2228
          %v5616 = vrot.slane %v2228, 4
          %v5617 = vsel %vm2890, %v2358, %v5616
          %v5619 = vunpack.c.l.s4 1983009808
          %v5620 = vunpack.c.0.s8 %v5619
          %v5621 = vperm.slane %v5615, %v5620
          %v5623 = vunpack.c.l.s4 1983009808
          %v5624 = vunpack.c.0.s8 %v5623
          %v5625 = vperm.slane %v5617, %v5624
          %v5626 = vrot.slane %v5597, 4
          %v5627 = vsel %vm2890, %v5626, %v5585
          %v5628 = vrot.slane %v5585, 4
          %v5629 = vsel %vm2890, %v5597, %v5628
          %v5631 = vunpack.c.l.s4 1934713408
          %v5632 = vunpack.c.0.s8 %v5631
          %v5633 = vperm.slane %v5627, %v5632
          %v5635 = vunpack.c.l.s4 1934713408
          %v5636 = vunpack.c.0.s8 %v5635
          %v5637 = vperm.slane %v5629, %v5636
          %v5638 = vrot.slane %v5601, 4
          %v5639 = vsel %vm2890, %v5638, %v5589
          %v5640 = vrot.slane %v5589, 4
          %v5641 = vsel %vm2890, %v5601, %v5640
          %v5643 = vunpack.c.l.s4 1934713408
          %v5644 = vunpack.c.0.s8 %v5643
          %v5645 = vperm.slane %v5639, %v5644
          %v5647 = vunpack.c.l.s4 1934713408
          %v5648 = vunpack.c.0.s8 %v5647
          %v5649 = vperm.slane %v5641, %v5648
          %v5650 = vrot.slane %v5621, 4
          %v5651 = vsel %vm2890, %v5650, %v5609
          %v5652 = vrot.slane %v5609, 4
          %v5653 = vsel %vm2890, %v5621, %v5652
          %v5655 = vunpack.c.l.s4 1934713408
          %v5656 = vunpack.c.0.s8 %v5655
          %v5657 = vperm.slane %v5651, %v5656
          %v5659 = vunpack.c.l.s4 1934713408
          %v5660 = vunpack.c.0.s8 %v5659
          %v5661 = vperm.slane %v5653, %v5660
          %v5662 = vrot.slane %v5625, 4
          %v5663 = vsel %vm2890, %v5662, %v5613
          %v5664 = vrot.slane %v5613, 4
          %v5665 = vsel %vm2890, %v5625, %v5664
          %v5667 = vunpack.c.l.s4 1934713408
          %v5668 = vunpack.c.0.s8 %v5667
          %v5669 = vperm.slane %v5663, %v5668
          %v5671 = vunpack.c.l.s4 1934713408
          %v5672 = vunpack.c.0.s8 %v5671
          %v5673 = vperm.slane %v5665, %v5672
          %v5674 = vrot.slane %v5657, 4
          %v5675 = vsel %vm2890, %v5674, %v5633
          %v5676 = vrot.slane %v5633, 4
          %v5677 = vsel %vm2890, %v5657, %v5676
          %v5678 = vrot.slane %v5661, 4
          %v5679 = vsel %vm2890, %v5678, %v5637
          %v5680 = vrot.slane %v5637, 4
          %v5681 = vsel %vm2890, %v5661, %v5680
          %v5682 = vrot.slane %v5669, 4
          %v5683 = vsel %vm2890, %v5682, %v5645
          %v5684 = vrot.slane %v5645, 4
          %v5685 = vsel %vm2890, %v5669, %v5684
          %v5686 = vrot.slane %v5673, 4
          %v5687 = vsel %vm2890, %v5686, %v5649
          %v5688 = vrot.slane %v5649, 4
          %v5689 = vsel %vm2890, %v5673, %v5688
          %v5690 = vrot.slane %v2553, 4
          %v5691 = vsel %vm2890, %v5690, %v2423
          %v5692 = vrot.slane %v2423, 4
          %v5693 = vsel %vm2890, %v2553, %v5692
          %v5695 = vunpack.c.l.s4 1983009808
          %v5696 = vunpack.c.0.s8 %v5695
          %v5697 = vperm.slane %v5691, %v5696
          %v5699 = vunpack.c.l.s4 1983009808
          %v5700 = vunpack.c.0.s8 %v5699
          %v5701 = vperm.slane %v5693, %v5700
          %v5702 = vrot.slane %v2618, 4
          %v5703 = vsel %vm2890, %v5702, %v2488
          %v5704 = vrot.slane %v2488, 4
          %v5705 = vsel %vm2890, %v2618, %v5704
          %v5707 = vunpack.c.l.s4 1983009808
          %v5708 = vunpack.c.0.s8 %v5707
          %v5709 = vperm.slane %v5703, %v5708
          %v5711 = vunpack.c.l.s4 1983009808
          %v5712 = vunpack.c.0.s8 %v5711
          %v5713 = vperm.slane %v5705, %v5712
          %v5714 = vrot.slane %v2813, 4
          %v5715 = vsel %vm2890, %v5714, %v2683
          %v5716 = vrot.slane %v2683, 4
          %v5717 = vsel %vm2890, %v2813, %v5716
          %v5719 = vunpack.c.l.s4 1983009808
          %v5720 = vunpack.c.0.s8 %v5719
          %v5721 = vperm.slane %v5715, %v5720
          %v5723 = vunpack.c.l.s4 1983009808
          %v5724 = vunpack.c.0.s8 %v5723
          %v5725 = vperm.slane %v5717, %v5724
          %v5726 = vrot.slane %v2878, 4
          %v5727 = vsel %vm2890, %v5726, %v2748
          %v5728 = vrot.slane %v2748, 4
          %v5729 = vsel %vm2890, %v2878, %v5728
          %v5731 = vunpack.c.l.s4 1983009808
          %v5732 = vunpack.c.0.s8 %v5731
          %v5733 = vperm.slane %v5727, %v5732
          %v5735 = vunpack.c.l.s4 1983009808
          %v5736 = vunpack.c.0.s8 %v5735
          %v5737 = vperm.slane %v5729, %v5736
          %v5738 = vrot.slane %v5709, 4
          %v5739 = vsel %vm2890, %v5738, %v5697
          %v5740 = vrot.slane %v5697, 4
          %v5741 = vsel %vm2890, %v5709, %v5740
          %v5743 = vunpack.c.l.s4 1934713408
          %v5744 = vunpack.c.0.s8 %v5743
          %v5745 = vperm.slane %v5739, %v5744
          %v5747 = vunpack.c.l.s4 1934713408
          %v5748 = vunpack.c.0.s8 %v5747
          %v5749 = vperm.slane %v5741, %v5748
          %v5750 = vrot.slane %v5713, 4
          %v5751 = vsel %vm2890, %v5750, %v5701
          %v5752 = vrot.slane %v5701, 4
          %v5753 = vsel %vm2890, %v5713, %v5752
          %v5755 = vunpack.c.l.s4 1934713408
          %v5756 = vunpack.c.0.s8 %v5755
          %v5757 = vperm.slane %v5751, %v5756
          %v5759 = vunpack.c.l.s4 1934713408
          %v5760 = vunpack.c.0.s8 %v5759
          %v5761 = vperm.slane %v5753, %v5760
          %v5762 = vrot.slane %v5733, 4
          %v5763 = vsel %vm2890, %v5762, %v5721
          %v5764 = vrot.slane %v5721, 4
          %v5765 = vsel %vm2890, %v5733, %v5764
          %v5767 = vunpack.c.l.s4 1934713408
          %v5768 = vunpack.c.0.s8 %v5767
          %v5769 = vperm.slane %v5763, %v5768
          %v5771 = vunpack.c.l.s4 1934713408
          %v5772 = vunpack.c.0.s8 %v5771
          %v5773 = vperm.slane %v5765, %v5772
          %v5774 = vrot.slane %v5737, 4
          %v5775 = vsel %vm2890, %v5774, %v5725
          %v5776 = vrot.slane %v5725, 4
          %v5777 = vsel %vm2890, %v5737, %v5776
          %v5779 = vunpack.c.l.s4 1934713408
          %v5780 = vunpack.c.0.s8 %v5779
          %v5781 = vperm.slane %v5775, %v5780
          %v5783 = vunpack.c.l.s4 1934713408
          %v5784 = vunpack.c.0.s8 %v5783
          %v5785 = vperm.slane %v5777, %v5784
          %v5786 = vrot.slane %v5769, 4
          %v5787 = vsel %vm2890, %v5786, %v5745
          %v5788 = vrot.slane %v5745, 4
          %v5789 = vsel %vm2890, %v5769, %v5788
          %v5790 = vrot.slane %v5773, 4
          %v5791 = vsel %vm2890, %v5790, %v5749
          %v5792 = vrot.slane %v5749, 4
          %v5793 = vsel %vm2890, %v5773, %v5792
          %v5794 = vrot.slane %v5781, 4
          %v5795 = vsel %vm2890, %v5794, %v5757
          %v5796 = vrot.slane %v5757, 4
          %v5797 = vsel %vm2890, %v5781, %v5796
          %v5798 = vrot.slane %v5785, 4
          %v5799 = vsel %vm2890, %v5798, %v5761
          %v5800 = vrot.slane %v5761, 4
          %v5801 = vsel %vm2890, %v5785, %v5800
          %v5802 = vrot.slane %v2036, 4
          %v5803 = vsel %vm2890, %v5802, %v1906
          %v5804 = vrot.slane %v1906, 4
          %v5805 = vsel %vm2890, %v2036, %v5804
          %v5807 = vunpack.c.l.s4 1983009808
          %v5808 = vunpack.c.0.s8 %v5807
          %v5809 = vperm.slane %v5803, %v5808
          %v5811 = vunpack.c.l.s4 1983009808
          %v5812 = vunpack.c.0.s8 %v5811
          %v5813 = vperm.slane %v5805, %v5812
          %v5814 = vrot.slane %v2101, 4
          %v5815 = vsel %vm2890, %v5814, %v1971
          %v5816 = vrot.slane %v1971, 4
          %v5817 = vsel %vm2890, %v2101, %v5816
          %v5819 = vunpack.c.l.s4 1983009808
          %v5820 = vunpack.c.0.s8 %v5819
          %v5821 = vperm.slane %v5815, %v5820
          %v5823 = vunpack.c.l.s4 1983009808
          %v5824 = vunpack.c.0.s8 %v5823
          %v5825 = vperm.slane %v5817, %v5824
          %v5826 = vrot.slane %v2296, 4
          %v5827 = vsel %vm2890, %v5826, %v2166
          %v5828 = vrot.slane %v2166, 4
          %v5829 = vsel %vm2890, %v2296, %v5828
          %v5831 = vunpack.c.l.s4 1983009808
          %v5832 = vunpack.c.0.s8 %v5831
          %v5833 = vperm.slane %v5827, %v5832
          %v5835 = vunpack.c.l.s4 1983009808
          %v5836 = vunpack.c.0.s8 %v5835
          %v5837 = vperm.slane %v5829, %v5836
          %v5838 = vrot.slane %v2361, 4
          %v5839 = vsel %vm2890, %v5838, %v2231
          %v5840 = vrot.slane %v2231, 4
          %v5841 = vsel %vm2890, %v2361, %v5840
          %v5843 = vunpack.c.l.s4 1983009808
          %v5844 = vunpack.c.0.s8 %v5843
          %v5845 = vperm.slane %v5839, %v5844
          %v5847 = vunpack.c.l.s4 1983009808
          %v5848 = vunpack.c.0.s8 %v5847
          %v5849 = vperm.slane %v5841, %v5848
          %v5850 = vrot.slane %v5821, 4
          %v5851 = vsel %vm2890, %v5850, %v5809
          %v5852 = vrot.slane %v5809, 4
          %v5853 = vsel %vm2890, %v5821, %v5852
          %v5855 = vunpack.c.l.s4 1934713408
          %v5856 = vunpack.c.0.s8 %v5855
          %v5857 = vperm.slane %v5851, %v5856
          %v5859 = vunpack.c.l.s4 1934713408
          %v5860 = vunpack.c.0.s8 %v5859
          %v5861 = vperm.slane %v5853, %v5860
          %v5862 = vrot.slane %v5825, 4
          %v5863 = vsel %vm2890, %v5862, %v5813
          %v5864 = vrot.slane %v5813, 4
          %v5865 = vsel %vm2890, %v5825, %v5864
          %v5867 = vunpack.c.l.s4 1934713408
          %v5868 = vunpack.c.0.s8 %v5867
          %v5869 = vperm.slane %v5863, %v5868
          %v5871 = vunpack.c.l.s4 1934713408
          %v5872 = vunpack.c.0.s8 %v5871
          %v5873 = vperm.slane %v5865, %v5872
          %v5874 = vrot.slane %v5845, 4
          %v5875 = vsel %vm2890, %v5874, %v5833
          %v5876 = vrot.slane %v5833, 4
          %v5877 = vsel %vm2890, %v5845, %v5876
          %v5879 = vunpack.c.l.s4 1934713408
          %v5880 = vunpack.c.0.s8 %v5879
          %v5881 = vperm.slane %v5875, %v5880
          %v5883 = vunpack.c.l.s4 1934713408
          %v5884 = vunpack.c.0.s8 %v5883
          %v5885 = vperm.slane %v5877, %v5884
          %v5886 = vrot.slane %v5849, 4
          %v5887 = vsel %vm2890, %v5886, %v5837
          %v5888 = vrot.slane %v5837, 4
          %v5889 = vsel %vm2890, %v5849, %v5888
          %v5891 = vunpack.c.l.s4 1934713408
          %v5892 = vunpack.c.0.s8 %v5891
          %v5893 = vperm.slane %v5887, %v5892
          %v5895 = vunpack.c.l.s4 1934713408
          %v5896 = vunpack.c.0.s8 %v5895
          %v5897 = vperm.slane %v5889, %v5896
          %v5898 = vrot.slane %v5881, 4
          %v5899 = vsel %vm2890, %v5898, %v5857
          %v5900 = vrot.slane %v5857, 4
          %v5901 = vsel %vm2890, %v5881, %v5900
          %v5902 = vrot.slane %v5885, 4
          %v5903 = vsel %vm2890, %v5902, %v5861
          %v5904 = vrot.slane %v5861, 4
          %v5905 = vsel %vm2890, %v5885, %v5904
          %v5906 = vrot.slane %v5893, 4
          %v5907 = vsel %vm2890, %v5906, %v5869
          %v5908 = vrot.slane %v5869, 4
          %v5909 = vsel %vm2890, %v5893, %v5908
          %v5910 = vrot.slane %v5897, 4
          %v5911 = vsel %vm2890, %v5910, %v5873
          %v5912 = vrot.slane %v5873, 4
          %v5913 = vsel %vm2890, %v5897, %v5912
          %v5914 = vrot.slane %v2556, 4
          %v5915 = vsel %vm2890, %v5914, %v2426
          %v5916 = vrot.slane %v2426, 4
          %v5917 = vsel %vm2890, %v2556, %v5916
          %v5919 = vunpack.c.l.s4 1983009808
          %v5920 = vunpack.c.0.s8 %v5919
          %v5921 = vperm.slane %v5915, %v5920
          %v5923 = vunpack.c.l.s4 1983009808
          %v5924 = vunpack.c.0.s8 %v5923
          %v5925 = vperm.slane %v5917, %v5924
          %v5926 = vrot.slane %v2621, 4
          %v5927 = vsel %vm2890, %v5926, %v2491
          %v5928 = vrot.slane %v2491, 4
          %v5929 = vsel %vm2890, %v2621, %v5928
          %v5931 = vunpack.c.l.s4 1983009808
          %v5932 = vunpack.c.0.s8 %v5931
          %v5933 = vperm.slane %v5927, %v5932
          %v5935 = vunpack.c.l.s4 1983009808
          %v5936 = vunpack.c.0.s8 %v5935
          %v5937 = vperm.slane %v5929, %v5936
          %v5938 = vrot.slane %v2816, 4
          %v5939 = vsel %vm2890, %v5938, %v2686
          %v5940 = vrot.slane %v2686, 4
          %v5941 = vsel %vm2890, %v2816, %v5940
          %v5943 = vunpack.c.l.s4 1983009808
          %v5944 = vunpack.c.0.s8 %v5943
          %v5945 = vperm.slane %v5939, %v5944
          %v5947 = vunpack.c.l.s4 1983009808
          %v5948 = vunpack.c.0.s8 %v5947
          %v5949 = vperm.slane %v5941, %v5948
          %v5950 = vrot.slane %v2881, 4
          %v5951 = vsel %vm2890, %v5950, %v2751
          %v5952 = vrot.slane %v2751, 4
          %v5953 = vsel %vm2890, %v2881, %v5952
          %v5955 = vunpack.c.l.s4 1983009808
          %v5956 = vunpack.c.0.s8 %v5955
          %v5957 = vperm.slane %v5951, %v5956
          %v5959 = vunpack.c.l.s4 1983009808
          %v5960 = vunpack.c.0.s8 %v5959
          %v5961 = vperm.slane %v5953, %v5960
          %v5962 = vrot.slane %v5933, 4
          %v5963 = vsel %vm2890, %v5962, %v5921
          %v5964 = vrot.slane %v5921, 4
          %v5965 = vsel %vm2890, %v5933, %v5964
          %v5967 = vunpack.c.l.s4 1934713408
          %v5968 = vunpack.c.0.s8 %v5967
          %v5969 = vperm.slane %v5963, %v5968
          %v5971 = vunpack.c.l.s4 1934713408
          %v5972 = vunpack.c.0.s8 %v5971
          %v5973 = vperm.slane %v5965, %v5972
          %v5974 = vrot.slane %v5937, 4
          %v5975 = vsel %vm2890, %v5974, %v5925
          %v5976 = vrot.slane %v5925, 4
          %v5977 = vsel %vm2890, %v5937, %v5976
          %v5979 = vunpack.c.l.s4 1934713408
          %v5980 = vunpack.c.0.s8 %v5979
          %v5981 = vperm.slane %v5975, %v5980
          %v5983 = vunpack.c.l.s4 1934713408
          %v5984 = vunpack.c.0.s8 %v5983
          %v5985 = vperm.slane %v5977, %v5984
          %v5986 = vrot.slane %v5957, 4
          %v5987 = vsel %vm2890, %v5986, %v5945
          %v5988 = vrot.slane %v5945, 4
          %v5989 = vsel %vm2890, %v5957, %v5988
          %v5991 = vunpack.c.l.s4 1934713408
          %v5992 = vunpack.c.0.s8 %v5991
          %v5993 = vperm.slane %v5987, %v5992
          %v5995 = vunpack.c.l.s4 1934713408
          %v5996 = vunpack.c.0.s8 %v5995
          %v5997 = vperm.slane %v5989, %v5996
          %v5998 = vrot.slane %v5961, 4
          %v5999 = vsel %vm2890, %v5998, %v5949
          %v6000 = vrot.slane %v5949, 4
          %v6001 = vsel %vm2890, %v5961, %v6000
          %v6003 = vunpack.c.l.s4 1934713408
          %v6004 = vunpack.c.0.s8 %v6003
          %v6005 = vperm.slane %v5999, %v6004
          %v6007 = vunpack.c.l.s4 1934713408
          %v6008 = vunpack.c.0.s8 %v6007
          %v6009 = vperm.slane %v6001, %v6008
          %v6010 = vrot.slane %v5993, 4
          %v6011 = vsel %vm2890, %v6010, %v5969
          %v6012 = vrot.slane %v5969, 4
          %v6013 = vsel %vm2890, %v5993, %v6012
          %v6014 = vrot.slane %v5997, 4
          %v6015 = vsel %vm2890, %v6014, %v5973
          %v6016 = vrot.slane %v5973, 4
          %v6017 = vsel %vm2890, %v5997, %v6016
          %v6018 = vrot.slane %v6005, 4
          %v6019 = vsel %vm2890, %v6018, %v5981
          %v6020 = vrot.slane %v5981, 4
          %v6021 = vsel %vm2890, %v6005, %v6020
          %v6022 = vrot.slane %v6009, 4
          %v6023 = vsel %vm2890, %v6022, %v5985
          %v6024 = vrot.slane %v5985, 4
          %v6025 = vsel %vm2890, %v6009, %v6024
          %v6026 = vrot.slane %v2039, 4
          %v6027 = vsel %vm2890, %v6026, %v1909
          %v6028 = vrot.slane %v1909, 4
          %v6029 = vsel %vm2890, %v2039, %v6028
          %v6031 = vunpack.c.l.s4 1983009808
          %v6032 = vunpack.c.0.s8 %v6031
          %v6033 = vperm.slane %v6027, %v6032
          %v6035 = vunpack.c.l.s4 1983009808
          %v6036 = vunpack.c.0.s8 %v6035
          %v6037 = vperm.slane %v6029, %v6036
          %v6038 = vrot.slane %v2104, 4
          %v6039 = vsel %vm2890, %v6038, %v1974
          %v6040 = vrot.slane %v1974, 4
          %v6041 = vsel %vm2890, %v2104, %v6040
          %v6043 = vunpack.c.l.s4 1983009808
          %v6044 = vunpack.c.0.s8 %v6043
          %v6045 = vperm.slane %v6039, %v6044
          %v6047 = vunpack.c.l.s4 1983009808
          %v6048 = vunpack.c.0.s8 %v6047
          %v6049 = vperm.slane %v6041, %v6048
          %v6050 = vrot.slane %v2299, 4
          %v6051 = vsel %vm2890, %v6050, %v2169
          %v6052 = vrot.slane %v2169, 4
          %v6053 = vsel %vm2890, %v2299, %v6052
          %v6055 = vunpack.c.l.s4 1983009808
          %v6056 = vunpack.c.0.s8 %v6055
          %v6057 = vperm.slane %v6051, %v6056
          %v6059 = vunpack.c.l.s4 1983009808
          %v6060 = vunpack.c.0.s8 %v6059
          %v6061 = vperm.slane %v6053, %v6060
          %v6062 = vrot.slane %v2364, 4
          %v6063 = vsel %vm2890, %v6062, %v2234
          %v6064 = vrot.slane %v2234, 4
          %v6065 = vsel %vm2890, %v2364, %v6064
          %v6067 = vunpack.c.l.s4 1983009808
          %v6068 = vunpack.c.0.s8 %v6067
          %v6069 = vperm.slane %v6063, %v6068
          %v6071 = vunpack.c.l.s4 1983009808
          %v6072 = vunpack.c.0.s8 %v6071
          %v6073 = vperm.slane %v6065, %v6072
          %v6074 = vrot.slane %v6045, 4
          %v6075 = vsel %vm2890, %v6074, %v6033
          %v6076 = vrot.slane %v6033, 4
          %v6077 = vsel %vm2890, %v6045, %v6076
          %v6079 = vunpack.c.l.s4 1934713408
          %v6080 = vunpack.c.0.s8 %v6079
          %v6081 = vperm.slane %v6075, %v6080
          %v6083 = vunpack.c.l.s4 1934713408
          %v6084 = vunpack.c.0.s8 %v6083
          %v6085 = vperm.slane %v6077, %v6084
          %v6086 = vrot.slane %v6049, 4
          %v6087 = vsel %vm2890, %v6086, %v6037
          %v6088 = vrot.slane %v6037, 4
          %v6089 = vsel %vm2890, %v6049, %v6088
          %v6091 = vunpack.c.l.s4 1934713408
          %v6092 = vunpack.c.0.s8 %v6091
          %v6093 = vperm.slane %v6087, %v6092
          %v6095 = vunpack.c.l.s4 1934713408
          %v6096 = vunpack.c.0.s8 %v6095
          %v6097 = vperm.slane %v6089, %v6096
          %v6098 = vrot.slane %v6069, 4
          %v6099 = vsel %vm2890, %v6098, %v6057
          %v6100 = vrot.slane %v6057, 4
          %v6101 = vsel %vm2890, %v6069, %v6100
          %v6103 = vunpack.c.l.s4 1934713408
          %v6104 = vunpack.c.0.s8 %v6103
          %v6105 = vperm.slane %v6099, %v6104
          %v6107 = vunpack.c.l.s4 1934713408
          %v6108 = vunpack.c.0.s8 %v6107
          %v6109 = vperm.slane %v6101, %v6108
          %v6110 = vrot.slane %v6073, 4
          %v6111 = vsel %vm2890, %v6110, %v6061
          %v6112 = vrot.slane %v6061, 4
          %v6113 = vsel %vm2890, %v6073, %v6112
          %v6115 = vunpack.c.l.s4 1934713408
          %v6116 = vunpack.c.0.s8 %v6115
          %v6117 = vperm.slane %v6111, %v6116
          %v6119 = vunpack.c.l.s4 1934713408
          %v6120 = vunpack.c.0.s8 %v6119
          %v6121 = vperm.slane %v6113, %v6120
          %v6122 = vrot.slane %v6105, 4
          %v6123 = vsel %vm2890, %v6122, %v6081
          %v6124 = vrot.slane %v6081, 4
          %v6125 = vsel %vm2890, %v6105, %v6124
          %v6126 = vrot.slane %v6109, 4
          %v6127 = vsel %vm2890, %v6126, %v6085
          %v6128 = vrot.slane %v6085, 4
          %v6129 = vsel %vm2890, %v6109, %v6128
          %v6130 = vrot.slane %v6117, 4
          %v6131 = vsel %vm2890, %v6130, %v6093
          %v6132 = vrot.slane %v6093, 4
          %v6133 = vsel %vm2890, %v6117, %v6132
          %v6134 = vrot.slane %v6121, 4
          %v6135 = vsel %vm2890, %v6134, %v6097
          %v6136 = vrot.slane %v6097, 4
          %v6137 = vsel %vm2890, %v6121, %v6136
          %v6138 = vrot.slane %v2559, 4
          %v6139 = vsel %vm2890, %v6138, %v2429
          %v6140 = vrot.slane %v2429, 4
          %v6141 = vsel %vm2890, %v2559, %v6140
          %v6143 = vunpack.c.l.s4 1983009808
          %v6144 = vunpack.c.0.s8 %v6143
          %v6145 = vperm.slane %v6139, %v6144
          %v6147 = vunpack.c.l.s4 1983009808
          %v6148 = vunpack.c.0.s8 %v6147
          %v6149 = vperm.slane %v6141, %v6148
          %v6150 = vrot.slane %v2624, 4
          %v6151 = vsel %vm2890, %v6150, %v2494
          %v6152 = vrot.slane %v2494, 4
          %v6153 = vsel %vm2890, %v2624, %v6152
          %v6155 = vunpack.c.l.s4 1983009808
          %v6156 = vunpack.c.0.s8 %v6155
          %v6157 = vperm.slane %v6151, %v6156
          %v6159 = vunpack.c.l.s4 1983009808
          %v6160 = vunpack.c.0.s8 %v6159
          %v6161 = vperm.slane %v6153, %v6160
          %v6162 = vrot.slane %v2819, 4
          %v6163 = vsel %vm2890, %v6162, %v2689
          %v6164 = vrot.slane %v2689, 4
          %v6165 = vsel %vm2890, %v2819, %v6164
          %v6167 = vunpack.c.l.s4 1983009808
          %v6168 = vunpack.c.0.s8 %v6167
          %v6169 = vperm.slane %v6163, %v6168
          %v6171 = vunpack.c.l.s4 1983009808
          %v6172 = vunpack.c.0.s8 %v6171
          %v6173 = vperm.slane %v6165, %v6172
          %v6174 = vrot.slane %v2884, 4
          %v6175 = vsel %vm2890, %v6174, %v2754
          %v6176 = vrot.slane %v2754, 4
          %v6177 = vsel %vm2890, %v2884, %v6176
          %v6179 = vunpack.c.l.s4 1983009808
          %v6180 = vunpack.c.0.s8 %v6179
          %v6181 = vperm.slane %v6175, %v6180
          %v6183 = vunpack.c.l.s4 1983009808
          %v6184 = vunpack.c.0.s8 %v6183
          %v6185 = vperm.slane %v6177, %v6184
          %v6186 = vrot.slane %v6157, 4
          %v6187 = vsel %vm2890, %v6186, %v6145
          %v6188 = vrot.slane %v6145, 4
          %v6189 = vsel %vm2890, %v6157, %v6188
          %v6191 = vunpack.c.l.s4 1934713408
          %v6192 = vunpack.c.0.s8 %v6191
          %v6193 = vperm.slane %v6187, %v6192
          %v6195 = vunpack.c.l.s4 1934713408
          %v6196 = vunpack.c.0.s8 %v6195
          %v6197 = vperm.slane %v6189, %v6196
          %v6198 = vrot.slane %v6161, 4
          %v6199 = vsel %vm2890, %v6198, %v6149
          %v6200 = vrot.slane %v6149, 4
          %v6201 = vsel %vm2890, %v6161, %v6200
          %v6203 = vunpack.c.l.s4 1934713408
          %v6204 = vunpack.c.0.s8 %v6203
          %v6205 = vperm.slane %v6199, %v6204
          %v6207 = vunpack.c.l.s4 1934713408
          %v6208 = vunpack.c.0.s8 %v6207
          %v6209 = vperm.slane %v6201, %v6208
          %v6210 = vrot.slane %v6181, 4
          %v6211 = vsel %vm2890, %v6210, %v6169
          %v6212 = vrot.slane %v6169, 4
          %v6213 = vsel %vm2890, %v6181, %v6212
          %v6215 = vunpack.c.l.s4 1934713408
          %v6216 = vunpack.c.0.s8 %v6215
          %v6217 = vperm.slane %v6211, %v6216
          %v6219 = vunpack.c.l.s4 1934713408
          %v6220 = vunpack.c.0.s8 %v6219
          %v6221 = vperm.slane %v6213, %v6220
          %v6222 = vrot.slane %v6185, 4
          %v6223 = vsel %vm2890, %v6222, %v6173
          %v6224 = vrot.slane %v6173, 4
          %v6225 = vsel %vm2890, %v6185, %v6224
          %v6227 = vunpack.c.l.s4 1934713408
          %v6228 = vunpack.c.0.s8 %v6227
          %v6229 = vperm.slane %v6223, %v6228
          %v6231 = vunpack.c.l.s4 1934713408
          %v6232 = vunpack.c.0.s8 %v6231
          %v6233 = vperm.slane %v6225, %v6232
          %v6234 = vrot.slane %v6217, 4
          %v6235 = vsel %vm2890, %v6234, %v6193
          %v6236 = vrot.slane %v6193, 4
          %v6237 = vsel %vm2890, %v6217, %v6236
          %v6238 = vrot.slane %v6221, 4
          %v6239 = vsel %vm2890, %v6238, %v6197
          %v6240 = vrot.slane %v6197, 4
          %v6241 = vsel %vm2890, %v6221, %v6240
          %v6242 = vrot.slane %v6229, 4
          %v6243 = vsel %vm2890, %v6242, %v6205
          %v6244 = vrot.slane %v6205, 4
          %v6245 = vsel %vm2890, %v6229, %v6244
          %v6246 = vrot.slane %v6233, 4
          %v6247 = vsel %vm2890, %v6246, %v6209
          %v6248 = vrot.slane %v6209, 4
          %v6249 = vsel %vm2890, %v6233, %v6248
          %v6250 = vrot.slane %v2042, 4
          %v6251 = vsel %vm2890, %v6250, %v1912
          %v6252 = vrot.slane %v1912, 4
          %v6253 = vsel %vm2890, %v2042, %v6252
          %v6255 = vunpack.c.l.s4 1983009808
          %v6256 = vunpack.c.0.s8 %v6255
          %v6257 = vperm.slane %v6251, %v6256
          %v6259 = vunpack.c.l.s4 1983009808
          %v6260 = vunpack.c.0.s8 %v6259
          %v6261 = vperm.slane %v6253, %v6260
          %v6262 = vrot.slane %v2107, 4
          %v6263 = vsel %vm2890, %v6262, %v1977
          %v6264 = vrot.slane %v1977, 4
          %v6265 = vsel %vm2890, %v2107, %v6264
          %v6267 = vunpack.c.l.s4 1983009808
          %v6268 = vunpack.c.0.s8 %v6267
          %v6269 = vperm.slane %v6263, %v6268
          %v6271 = vunpack.c.l.s4 1983009808
          %v6272 = vunpack.c.0.s8 %v6271
          %v6273 = vperm.slane %v6265, %v6272
          %v6274 = vrot.slane %v2302, 4
          %v6275 = vsel %vm2890, %v6274, %v2172
          %v6276 = vrot.slane %v2172, 4
          %v6277 = vsel %vm2890, %v2302, %v6276
          %v6279 = vunpack.c.l.s4 1983009808
          %v6280 = vunpack.c.0.s8 %v6279
          %v6281 = vperm.slane %v6275, %v6280
          %v6283 = vunpack.c.l.s4 1983009808
          %v6284 = vunpack.c.0.s8 %v6283
          %v6285 = vperm.slane %v6277, %v6284
          %v6286 = vrot.slane %v2367, 4
          %v6287 = vsel %vm2890, %v6286, %v2237
          %v6288 = vrot.slane %v2237, 4
          %v6289 = vsel %vm2890, %v2367, %v6288
          %v6291 = vunpack.c.l.s4 1983009808
          %v6292 = vunpack.c.0.s8 %v6291
          %v6293 = vperm.slane %v6287, %v6292
          %v6295 = vunpack.c.l.s4 1983009808
          %v6296 = vunpack.c.0.s8 %v6295
          %v6297 = vperm.slane %v6289, %v6296
          %v6298 = vrot.slane %v6269, 4
          %v6299 = vsel %vm2890, %v6298, %v6257
          %v6300 = vrot.slane %v6257, 4
          %v6301 = vsel %vm2890, %v6269, %v6300
          %v6303 = vunpack.c.l.s4 1934713408
          %v6304 = vunpack.c.0.s8 %v6303
          %v6305 = vperm.slane %v6299, %v6304
          %v6307 = vunpack.c.l.s4 1934713408
          %v6308 = vunpack.c.0.s8 %v6307
          %v6309 = vperm.slane %v6301, %v6308
          %v6310 = vrot.slane %v6273, 4
          %v6311 = vsel %vm2890, %v6310, %v6261
          %v6312 = vrot.slane %v6261, 4
          %v6313 = vsel %vm2890, %v6273, %v6312
          %v6315 = vunpack.c.l.s4 1934713408
          %v6316 = vunpack.c.0.s8 %v6315
          %v6317 = vperm.slane %v6311, %v6316
          %v6319 = vunpack.c.l.s4 1934713408
          %v6320 = vunpack.c.0.s8 %v6319
          %v6321 = vperm.slane %v6313, %v6320
          %v6322 = vrot.slane %v6293, 4
          %v6323 = vsel %vm2890, %v6322, %v6281
          %v6324 = vrot.slane %v6281, 4
          %v6325 = vsel %vm2890, %v6293, %v6324
          %v6327 = vunpack.c.l.s4 1934713408
          %v6328 = vunpack.c.0.s8 %v6327
          %v6329 = vperm.slane %v6323, %v6328
          %v6331 = vunpack.c.l.s4 1934713408
          %v6332 = vunpack.c.0.s8 %v6331
          %v6333 = vperm.slane %v6325, %v6332
          %v6334 = vrot.slane %v6297, 4
          %v6335 = vsel %vm2890, %v6334, %v6285
          %v6336 = vrot.slane %v6285, 4
          %v6337 = vsel %vm2890, %v6297, %v6336
          %v6339 = vunpack.c.l.s4 1934713408
          %v6340 = vunpack.c.0.s8 %v6339
          %v6341 = vperm.slane %v6335, %v6340
          %v6343 = vunpack.c.l.s4 1934713408
          %v6344 = vunpack.c.0.s8 %v6343
          %v6345 = vperm.slane %v6337, %v6344
          %v6346 = vrot.slane %v6329, 4
          %v6347 = vsel %vm2890, %v6346, %v6305
          %v6348 = vrot.slane %v6305, 4
          %v6349 = vsel %vm2890, %v6329, %v6348
          %v6350 = vrot.slane %v6333, 4
          %v6351 = vsel %vm2890, %v6350, %v6309
          %v6352 = vrot.slane %v6309, 4
          %v6353 = vsel %vm2890, %v6333, %v6352
          %v6354 = vrot.slane %v6341, 4
          %v6355 = vsel %vm2890, %v6354, %v6317
          %v6356 = vrot.slane %v6317, 4
          %v6357 = vsel %vm2890, %v6341, %v6356
          %v6358 = vrot.slane %v6345, 4
          %v6359 = vsel %vm2890, %v6358, %v6321
          %v6360 = vrot.slane %v6321, 4
          %v6361 = vsel %vm2890, %v6345, %v6360
          %v6362 = vrot.slane %v2562, 4
          %v6363 = vsel %vm2890, %v6362, %v2432
          %v6364 = vrot.slane %v2432, 4
          %v6365 = vsel %vm2890, %v2562, %v6364
          %v6367 = vunpack.c.l.s4 1983009808
          %v6368 = vunpack.c.0.s8 %v6367
          %v6369 = vperm.slane %v6363, %v6368
          %v6371 = vunpack.c.l.s4 1983009808
          %v6372 = vunpack.c.0.s8 %v6371
          %v6373 = vperm.slane %v6365, %v6372
          %v6374 = vrot.slane %v2627, 4
          %v6375 = vsel %vm2890, %v6374, %v2497
          %v6376 = vrot.slane %v2497, 4
          %v6377 = vsel %vm2890, %v2627, %v6376
          %v6379 = vunpack.c.l.s4 1983009808
          %v6380 = vunpack.c.0.s8 %v6379
          %v6381 = vperm.slane %v6375, %v6380
          %v6383 = vunpack.c.l.s4 1983009808
          %v6384 = vunpack.c.0.s8 %v6383
          %v6385 = vperm.slane %v6377, %v6384
          %v6386 = vrot.slane %v2822, 4
          %v6387 = vsel %vm2890, %v6386, %v2692
          %v6388 = vrot.slane %v2692, 4
          %v6389 = vsel %vm2890, %v2822, %v6388
          %v6391 = vunpack.c.l.s4 1983009808
          %v6392 = vunpack.c.0.s8 %v6391
          %v6393 = vperm.slane %v6387, %v6392
          %v6395 = vunpack.c.l.s4 1983009808
          %v6396 = vunpack.c.0.s8 %v6395
          %v6397 = vperm.slane %v6389, %v6396
          %v6398 = vrot.slane %v2887, 4
          %v6399 = vsel %vm2890, %v6398, %v2757
          %v6400 = vrot.slane %v2757, 4
          %v6401 = vsel %vm2890, %v2887, %v6400
          %v6403 = vunpack.c.l.s4 1983009808
          %v6404 = vunpack.c.0.s8 %v6403
          %v6405 = vperm.slane %v6399, %v6404
          %v6407 = vunpack.c.l.s4 1983009808
          %v6408 = vunpack.c.0.s8 %v6407
          %v6409 = vperm.slane %v6401, %v6408
          %v6410 = vrot.slane %v6381, 4
          %v6411 = vsel %vm2890, %v6410, %v6369
          %v6412 = vrot.slane %v6369, 4
          %v6413 = vsel %vm2890, %v6381, %v6412
          %v6415 = vunpack.c.l.s4 1934713408
          %v6416 = vunpack.c.0.s8 %v6415
          %v6417 = vperm.slane %v6411, %v6416
          %v6419 = vunpack.c.l.s4 1934713408
          %v6420 = vunpack.c.0.s8 %v6419
          %v6421 = vperm.slane %v6413, %v6420
          %v6422 = vrot.slane %v6385, 4
          %v6423 = vsel %vm2890, %v6422, %v6373
          %v6424 = vrot.slane %v6373, 4
          %v6425 = vsel %vm2890, %v6385, %v6424
          %v6427 = vunpack.c.l.s4 1934713408
          %v6428 = vunpack.c.0.s8 %v6427
          %v6429 = vperm.slane %v6423, %v6428
          %v6431 = vunpack.c.l.s4 1934713408
          %v6432 = vunpack.c.0.s8 %v6431
          %v6433 = vperm.slane %v6425, %v6432
          %v6434 = vrot.slane %v6405, 4
          %v6435 = vsel %vm2890, %v6434, %v6393
          %v6436 = vrot.slane %v6393, 4
          %v6437 = vsel %vm2890, %v6405, %v6436
          %v6439 = vunpack.c.l.s4 1934713408
          %v6440 = vunpack.c.0.s8 %v6439
          %v6441 = vperm.slane %v6435, %v6440
          %v6443 = vunpack.c.l.s4 1934713408
          %v6444 = vunpack.c.0.s8 %v6443
          %v6445 = vperm.slane %v6437, %v6444
          %v6446 = vrot.slane %v6409, 4
          %v6447 = vsel %vm2890, %v6446, %v6397
          %v6448 = vrot.slane %v6397, 4
          %v6449 = vsel %vm2890, %v6409, %v6448
          %v6451 = vunpack.c.l.s4 1934713408
          %v6452 = vunpack.c.0.s8 %v6451
          %v6453 = vperm.slane %v6447, %v6452
          %v6455 = vunpack.c.l.s4 1934713408
          %v6456 = vunpack.c.0.s8 %v6455
          %v6457 = vperm.slane %v6449, %v6456
          %v6458 = vrot.slane %v6441, 4
          %v6459 = vsel %vm2890, %v6458, %v6417
          %v6460 = vrot.slane %v6417, 4
          %v6461 = vsel %vm2890, %v6441, %v6460
          %v6462 = vrot.slane %v6445, 4
          %v6463 = vsel %vm2890, %v6462, %v6421
          %v6464 = vrot.slane %v6421, 4
          %v6465 = vsel %vm2890, %v6445, %v6464
          %v6466 = vrot.slane %v6453, 4
          %v6467 = vsel %vm2890, %v6466, %v6429
          %v6468 = vrot.slane %v6429, 4
          %v6469 = vsel %vm2890, %v6453, %v6468
          %v6470 = vrot.slane %v6457, 4
          %v6471 = vsel %vm2890, %v6470, %v6433
          %v6472 = vrot.slane %v6433, 4
          %v6473 = vsel %vm2890, %v6457, %v6472
          %v6490 = vrot.slane %v1736, 4
          %v6491 = vrot.slane %v1737, 4
          %v6492 = vrot.slane %v1738, 4
          %v6493 = vrot.slane %v1739, 4
          %v6494 = vrot.slane %v1740, 4
          %v6495 = vrot.slane %v1741, 4
          %v6496 = vrot.slane %v1742, 4
          %v6497 = vrot.slane %v1743, 4
          %v6498 = vrot.slane %v1744, 4
          %v6499 = vrot.slane %v1745, 4
          %v6500 = vrot.slane %v1746, 4
          %v6501 = vrot.slane %v1747, 4
          %v6502 = vrot.slane %v1748, 4
          %v6503 = vrot.slane %v1749, 4
          %v6504 = vrot.slane %v1750, 4
          %v6505 = vrot.slane %v1751, 4
          %vm6506 = vcmask 130048
          %v6507 = vsel %vm6506, %v1736, 0
          %6509 = vmatpush.msra.mxu0 0.0
          %6510 = vmatpush.msra.mxu0 0.0
          %6511 = vmatpush.msra.mxu0 0.0
          %6512 = vmatpush.msra.mxu0 0.0
          %6513 = vmatpush.msra.mxu0 0.0
          %6514 = vmatpush.msra.mxu0 0.0
          %6515 = vmatpush.msra.mxu0 0.0
          %6516 = vmatpush.msra.mxu0 0.0
          %6517 = vmatpush.msra.mxu0 0.0
          %6518 = vmatpush.msra.mxu0 0.0
          %6519 = vmatpush.msra.mxu0 0.0
          %6520 = vmatpush.msra.mxu0 0.0
          %6521 = vmatpush.msra.mxu0 0.0
          %6522 = vmatpush.msra.mxu0 0.0
          %6523 = vmatpush.msra.mxu0 %v3099
          %6524 = vmatpush.msra.mxu0 %v2987
          %6525 = vmatmul.f32.gmra.mxu0 %v6507
          %v6526 = vpop.f32.mrf.mxu0
          %v6527 = vadd.f32 0.0, %v6526
          %6528 = vdwg.mxu0
          %6529 = vmatpush.msra.mxu0 0.0
          %6530 = vmatpush.msra.mxu0 0.0
          %6531 = vmatpush.msra.mxu0 0.0
          %6532 = vmatpush.msra.mxu0 0.0
          %6533 = vmatpush.msra.mxu0 0.0
          %6534 = vmatpush.msra.mxu0 0.0
          %6535 = vmatpush.msra.mxu0 0.0
          %6536 = vmatpush.msra.mxu0 0.0
          %6537 = vmatpush.msra.mxu0 0.0
          %6538 = vmatpush.msra.mxu0 0.0
          %6539 = vmatpush.msra.mxu0 0.0
          %6540 = vmatpush.msra.mxu0 0.0
          %6541 = vmatpush.msra.mxu0 0.0
          %6542 = vmatpush.msra.mxu0 0.0
          %6543 = vmatpush.msra.mxu0 %v3101
          %6544 = vmatpush.msra.mxu0 %v2989
          %6545 = vmatmul.f32.gmra.mxu0 %v6507
          %v6546 = vpop.f32.mrf.mxu0
          %v6547 = vadd.f32 0.0, %v6546
          %6548 = vdwg.mxu0
          %6549 = vmatpush.msra.mxu0 0.0
          %6550 = vmatpush.msra.mxu0 0.0
          %6551 = vmatpush.msra.mxu0 0.0
          %6552 = vmatpush.msra.mxu0 0.0
          %6553 = vmatpush.msra.mxu0 0.0
          %6554 = vmatpush.msra.mxu0 0.0
          %6555 = vmatpush.msra.mxu0 0.0
          %6556 = vmatpush.msra.mxu0 0.0
          %6557 = vmatpush.msra.mxu0 0.0
          %6558 = vmatpush.msra.mxu0 0.0
          %6559 = vmatpush.msra.mxu0 0.0
          %6560 = vmatpush.msra.mxu0 0.0
          %6561 = vmatpush.msra.mxu0 0.0
          %6562 = vmatpush.msra.mxu0 0.0
          %6563 = vmatpush.msra.mxu0 %v3103
          %6564 = vmatpush.msra.mxu0 %v2991
          %6565 = vmatmul.f32.gmra.mxu0 %v6507
          %v6566 = vpop.f32.mrf.mxu0
          %v6567 = vadd.f32 0.0, %v6566
          %6568 = vdwg.mxu0
          %6569 = vmatpush.msra.mxu0 0.0
          %6570 = vmatpush.msra.mxu0 0.0
          %6571 = vmatpush.msra.mxu0 0.0
          %6572 = vmatpush.msra.mxu0 0.0
          %6573 = vmatpush.msra.mxu0 0.0
          %6574 = vmatpush.msra.mxu0 0.0
          %6575 = vmatpush.msra.mxu0 0.0
          %6576 = vmatpush.msra.mxu0 0.0
          %6577 = vmatpush.msra.mxu0 0.0
          %6578 = vmatpush.msra.mxu0 0.0
          %6579 = vmatpush.msra.mxu0 0.0
          %6580 = vmatpush.msra.mxu0 0.0
          %6581 = vmatpush.msra.mxu0 0.0
          %6582 = vmatpush.msra.mxu0 0.0
          %6583 = vmatpush.msra.mxu0 %v3105
          %6584 = vmatpush.msra.mxu0 %v2993
          %6585 = vmatmul.f32.gmra.mxu0 %v6507
          %v6586 = vpop.f32.mrf.mxu0
          %v6587 = vadd.f32 0.0, %v6586
          %6588 = vdwg.mxu0
          %v6589 = vsel %vm6506, %v6490, 0
          %6591 = vmatpush.msra.mxu0 0.0
          %6592 = vmatpush.msra.mxu0 0.0
          %6593 = vmatpush.msra.mxu0 0.0
          %6594 = vmatpush.msra.mxu0 0.0
          %6595 = vmatpush.msra.mxu0 0.0
          %6596 = vmatpush.msra.mxu0 0.0
          %6597 = vmatpush.msra.mxu0 0.0
          %6598 = vmatpush.msra.mxu0 0.0
          %6599 = vmatpush.msra.mxu0 0.0
          %6600 = vmatpush.msra.mxu0 0.0
          %6601 = vmatpush.msra.mxu0 0.0
          %6602 = vmatpush.msra.mxu0 0.0
          %6603 = vmatpush.msra.mxu0 0.0
          %6604 = vmatpush.msra.mxu0 0.0
          %6605 = vmatpush.msra.mxu0 %v3107
          %6606 = vmatpush.msra.mxu0 %v2995
          %6607 = vmatmul.f32.gmra.mxu0 %v6589
          %v6608 = vpop.f32.mrf.mxu0
          %v6609 = vadd.f32 0.0, %v6608
          %6610 = vdwg.mxu0
          %6611 = vmatpush.msra.mxu0 0.0
          %6612 = vmatpush.msra.mxu0 0.0
          %6613 = vmatpush.msra.mxu0 0.0
          %6614 = vmatpush.msra.mxu0 0.0
          %6615 = vmatpush.msra.mxu0 0.0
          %6616 = vmatpush.msra.mxu0 0.0
          %6617 = vmatpush.msra.mxu0 0.0
          %6618 = vmatpush.msra.mxu0 0.0
          %6619 = vmatpush.msra.mxu0 0.0
          %6620 = vmatpush.msra.mxu0 0.0
          %6621 = vmatpush.msra.mxu0 0.0
          %6622 = vmatpush.msra.mxu0 0.0
          %6623 = vmatpush.msra.mxu0 0.0
          %6624 = vmatpush.msra.mxu0 0.0
          %6625 = vmatpush.msra.mxu0 %v3109
          %6626 = vmatpush.msra.mxu0 %v2997
          %6627 = vmatmul.f32.gmra.mxu0 %v6589
          %v6628 = vpop.f32.mrf.mxu0
          %v6629 = vadd.f32 0.0, %v6628
          %6630 = vdwg.mxu0
          %6631 = vmatpush.msra.mxu0 0.0
          %6632 = vmatpush.msra.mxu0 0.0
          %6633 = vmatpush.msra.mxu0 0.0
          %6634 = vmatpush.msra.mxu0 0.0
          %6635 = vmatpush.msra.mxu0 0.0
          %6636 = vmatpush.msra.mxu0 0.0
          %6637 = vmatpush.msra.mxu0 0.0
          %6638 = vmatpush.msra.mxu0 0.0
          %6639 = vmatpush.msra.mxu0 0.0
          %6640 = vmatpush.msra.mxu0 0.0
          %6641 = vmatpush.msra.mxu0 0.0
          %6642 = vmatpush.msra.mxu0 0.0
          %6643 = vmatpush.msra.mxu0 0.0
          %6644 = vmatpush.msra.mxu0 0.0
          %6645 = vmatpush.msra.mxu0 %v3111
          %6646 = vmatpush.msra.mxu0 %v2999
          %6647 = vmatmul.f32.gmra.mxu0 %v6589
          %v6648 = vpop.f32.mrf.mxu0
          %v6649 = vadd.f32 0.0, %v6648
          %6650 = vdwg.mxu0
          %6651 = vmatpush.msra.mxu0 0.0
          %6652 = vmatpush.msra.mxu0 0.0
          %6653 = vmatpush.msra.mxu0 0.0
          %6654 = vmatpush.msra.mxu0 0.0
          %6655 = vmatpush.msra.mxu0 0.0
          %6656 = vmatpush.msra.mxu0 0.0
          %6657 = vmatpush.msra.mxu0 0.0
          %6658 = vmatpush.msra.mxu0 0.0
          %6659 = vmatpush.msra.mxu0 0.0
          %6660 = vmatpush.msra.mxu0 0.0
          %6661 = vmatpush.msra.mxu0 0.0
          %6662 = vmatpush.msra.mxu0 0.0
          %6663 = vmatpush.msra.mxu0 0.0
          %6664 = vmatpush.msra.mxu0 0.0
          %6665 = vmatpush.msra.mxu0 %v3113
          %6666 = vmatpush.msra.mxu0 %v3001
          %6667 = vmatmul.f32.gmra.mxu0 %v6589
          %v6668 = vpop.f32.mrf.mxu0
          %v6669 = vadd.f32 0.0, %v6668
          %6670 = vdwg.mxu0
          %v6671 = vsel %vm6506, %v1737, 0
          %6673 = vmatpush.msra.mxu0 0.0
          %6674 = vmatpush.msra.mxu0 0.0
          %6675 = vmatpush.msra.mxu0 0.0
          %6676 = vmatpush.msra.mxu0 0.0
          %6677 = vmatpush.msra.mxu0 0.0
          %6678 = vmatpush.msra.mxu0 0.0
          %6679 = vmatpush.msra.mxu0 0.0
          %6680 = vmatpush.msra.mxu0 0.0
          %6681 = vmatpush.msra.mxu0 0.0
          %6682 = vmatpush.msra.mxu0 0.0
          %6683 = vmatpush.msra.mxu0 0.0
          %6684 = vmatpush.msra.mxu0 0.0
          %6685 = vmatpush.msra.mxu0 0.0
          %6686 = vmatpush.msra.mxu0 0.0
          %6687 = vmatpush.msra.mxu0 %v3323
          %6688 = vmatpush.msra.mxu0 %v3211
          %6689 = vmatmul.f32.gmra.mxu0 %v6671
          %v6690 = vpop.f32.mrf.mxu0
          %v6691 = vadd.f32 0.0, %v6690
          %6692 = vdwg.mxu0
          %6693 = vmatpush.msra.mxu0 0.0
          %6694 = vmatpush.msra.mxu0 0.0
          %6695 = vmatpush.msra.mxu0 0.0
          %6696 = vmatpush.msra.mxu0 0.0
          %6697 = vmatpush.msra.mxu0 0.0
          %6698 = vmatpush.msra.mxu0 0.0
          %6699 = vmatpush.msra.mxu0 0.0
          %6700 = vmatpush.msra.mxu0 0.0
          %6701 = vmatpush.msra.mxu0 0.0
          %6702 = vmatpush.msra.mxu0 0.0
          %6703 = vmatpush.msra.mxu0 0.0
          %6704 = vmatpush.msra.mxu0 0.0
          %6705 = vmatpush.msra.mxu0 0.0
          %6706 = vmatpush.msra.mxu0 0.0
          %6707 = vmatpush.msra.mxu0 %v3325
          %6708 = vmatpush.msra.mxu0 %v3213
          %6709 = vmatmul.f32.gmra.mxu0 %v6671
          %v6710 = vpop.f32.mrf.mxu0
          %v6711 = vadd.f32 0.0, %v6710
          %6712 = vdwg.mxu0
          %6713 = vmatpush.msra.mxu0 0.0
          %6714 = vmatpush.msra.mxu0 0.0
          %6715 = vmatpush.msra.mxu0 0.0
          %6716 = vmatpush.msra.mxu0 0.0
          %6717 = vmatpush.msra.mxu0 0.0
          %6718 = vmatpush.msra.mxu0 0.0
          %6719 = vmatpush.msra.mxu0 0.0
          %6720 = vmatpush.msra.mxu0 0.0
          %6721 = vmatpush.msra.mxu0 0.0
          %6722 = vmatpush.msra.mxu0 0.0
          %6723 = vmatpush.msra.mxu0 0.0
          %6724 = vmatpush.msra.mxu0 0.0
          %6725 = vmatpush.msra.mxu0 0.0
          %6726 = vmatpush.msra.mxu0 0.0
          %6727 = vmatpush.msra.mxu0 %v3327
          %6728 = vmatpush.msra.mxu0 %v3215
          %6729 = vmatmul.f32.gmra.mxu0 %v6671
          %v6730 = vpop.f32.mrf.mxu0
          %v6731 = vadd.f32 0.0, %v6730
          %6732 = vdwg.mxu0
          %6733 = vmatpush.msra.mxu0 0.0
          %6734 = vmatpush.msra.mxu0 0.0
          %6735 = vmatpush.msra.mxu0 0.0
          %6736 = vmatpush.msra.mxu0 0.0
          %6737 = vmatpush.msra.mxu0 0.0
          %6738 = vmatpush.msra.mxu0 0.0
          %6739 = vmatpush.msra.mxu0 0.0
          %6740 = vmatpush.msra.mxu0 0.0
          %6741 = vmatpush.msra.mxu0 0.0
          %6742 = vmatpush.msra.mxu0 0.0
          %6743 = vmatpush.msra.mxu0 0.0
          %6744 = vmatpush.msra.mxu0 0.0
          %6745 = vmatpush.msra.mxu0 0.0
          %6746 = vmatpush.msra.mxu0 0.0
          %6747 = vmatpush.msra.mxu0 %v3329
          %6748 = vmatpush.msra.mxu0 %v3217
          %6749 = vmatmul.f32.gmra.mxu0 %v6671
          %v6750 = vpop.f32.mrf.mxu0
          %v6751 = vadd.f32 0.0, %v6750
          %6752 = vdwg.mxu0
          %v6753 = vsel %vm6506, %v6491, 0
          %6755 = vmatpush.msra.mxu0 0.0
          %6756 = vmatpush.msra.mxu0 0.0
          %6757 = vmatpush.msra.mxu0 0.0
          %6758 = vmatpush.msra.mxu0 0.0
          %6759 = vmatpush.msra.mxu0 0.0
          %6760 = vmatpush.msra.mxu0 0.0
          %6761 = vmatpush.msra.mxu0 0.0
          %6762 = vmatpush.msra.mxu0 0.0
          %6763 = vmatpush.msra.mxu0 0.0
          %6764 = vmatpush.msra.mxu0 0.0
          %6765 = vmatpush.msra.mxu0 0.0
          %6766 = vmatpush.msra.mxu0 0.0
          %6767 = vmatpush.msra.mxu0 0.0
          %6768 = vmatpush.msra.mxu0 0.0
          %6769 = vmatpush.msra.mxu0 %v3331
          %6770 = vmatpush.msra.mxu0 %v3219
          %6771 = vmatmul.f32.gmra.mxu0 %v6753
          %v6772 = vpop.f32.mrf.mxu0
          %v6773 = vadd.f32 0.0, %v6772
          %6774 = vdwg.mxu0
          %6775 = vmatpush.msra.mxu0 0.0
          %6776 = vmatpush.msra.mxu0 0.0
          %6777 = vmatpush.msra.mxu0 0.0
          %6778 = vmatpush.msra.mxu0 0.0
          %6779 = vmatpush.msra.mxu0 0.0
          %6780 = vmatpush.msra.mxu0 0.0
          %6781 = vmatpush.msra.mxu0 0.0
          %6782 = vmatpush.msra.mxu0 0.0
          %6783 = vmatpush.msra.mxu0 0.0
          %6784 = vmatpush.msra.mxu0 0.0
          %6785 = vmatpush.msra.mxu0 0.0
          %6786 = vmatpush.msra.mxu0 0.0
          %6787 = vmatpush.msra.mxu0 0.0
          %6788 = vmatpush.msra.mxu0 0.0
          %6789 = vmatpush.msra.mxu0 %v3333
          %6790 = vmatpush.msra.mxu0 %v3221
          %6791 = vmatmul.f32.gmra.mxu0 %v6753
          %v6792 = vpop.f32.mrf.mxu0
          %v6793 = vadd.f32 0.0, %v6792
          %6794 = vdwg.mxu0
          %6795 = vmatpush.msra.mxu0 0.0
          %6796 = vmatpush.msra.mxu0 0.0
          %6797 = vmatpush.msra.mxu0 0.0
          %6798 = vmatpush.msra.mxu0 0.0
          %6799 = vmatpush.msra.mxu0 0.0
          %6800 = vmatpush.msra.mxu0 0.0
          %6801 = vmatpush.msra.mxu0 0.0
          %6802 = vmatpush.msra.mxu0 0.0
          %6803 = vmatpush.msra.mxu0 0.0
          %6804 = vmatpush.msra.mxu0 0.0
          %6805 = vmatpush.msra.mxu0 0.0
          %6806 = vmatpush.msra.mxu0 0.0
          %6807 = vmatpush.msra.mxu0 0.0
          %6808 = vmatpush.msra.mxu0 0.0
          %6809 = vmatpush.msra.mxu0 %v3335
          %6810 = vmatpush.msra.mxu0 %v3223
          %6811 = vmatmul.f32.gmra.mxu0 %v6753
          %v6812 = vpop.f32.mrf.mxu0
          %v6813 = vadd.f32 0.0, %v6812
          %6814 = vdwg.mxu0
          %6815 = vmatpush.msra.mxu0 0.0
          %6816 = vmatpush.msra.mxu0 0.0
          %6817 = vmatpush.msra.mxu0 0.0
          %6818 = vmatpush.msra.mxu0 0.0
          %6819 = vmatpush.msra.mxu0 0.0
          %6820 = vmatpush.msra.mxu0 0.0
          %6821 = vmatpush.msra.mxu0 0.0
          %6822 = vmatpush.msra.mxu0 0.0
          %6823 = vmatpush.msra.mxu0 0.0
          %6824 = vmatpush.msra.mxu0 0.0
          %6825 = vmatpush.msra.mxu0 0.0
          %6826 = vmatpush.msra.mxu0 0.0
          %6827 = vmatpush.msra.mxu0 0.0
          %6828 = vmatpush.msra.mxu0 0.0
          %6829 = vmatpush.msra.mxu0 %v3337
          %6830 = vmatpush.msra.mxu0 %v3225
          %6831 = vmatmul.f32.gmra.mxu0 %v6753
          %v6832 = vpop.f32.mrf.mxu0
          %v6833 = vadd.f32 0.0, %v6832
          %6834 = vdwg.mxu0
          %v6835 = vsel %vm6506, %v1738, 0
          %6837 = vmatpush.msra.mxu0 0.0
          %6838 = vmatpush.msra.mxu0 0.0
          %6839 = vmatpush.msra.mxu0 0.0
          %6840 = vmatpush.msra.mxu0 0.0
          %6841 = vmatpush.msra.mxu0 0.0
          %6842 = vmatpush.msra.mxu0 0.0
          %6843 = vmatpush.msra.mxu0 0.0
          %6844 = vmatpush.msra.mxu0 0.0
          %6845 = vmatpush.msra.mxu0 0.0
          %6846 = vmatpush.msra.mxu0 0.0
          %6847 = vmatpush.msra.mxu0 0.0
          %6848 = vmatpush.msra.mxu0 0.0
          %6849 = vmatpush.msra.mxu0 0.0
          %6850 = vmatpush.msra.mxu0 0.0
          %6851 = vmatpush.msra.mxu0 %v3547
          %6852 = vmatpush.msra.mxu0 %v3435
          %6853 = vmatmul.f32.gmra.mxu0 %v6835
          %v6854 = vpop.f32.mrf.mxu0
          %v6855 = vadd.f32 0.0, %v6854
          %6856 = vdwg.mxu0
          %6857 = vmatpush.msra.mxu0 0.0
          %6858 = vmatpush.msra.mxu0 0.0
          %6859 = vmatpush.msra.mxu0 0.0
          %6860 = vmatpush.msra.mxu0 0.0
          %6861 = vmatpush.msra.mxu0 0.0
          %6862 = vmatpush.msra.mxu0 0.0
          %6863 = vmatpush.msra.mxu0 0.0
          %6864 = vmatpush.msra.mxu0 0.0
          %6865 = vmatpush.msra.mxu0 0.0
          %6866 = vmatpush.msra.mxu0 0.0
          %6867 = vmatpush.msra.mxu0 0.0
          %6868 = vmatpush.msra.mxu0 0.0
          %6869 = vmatpush.msra.mxu0 0.0
          %6870 = vmatpush.msra.mxu0 0.0
          %6871 = vmatpush.msra.mxu0 %v3549
          %6872 = vmatpush.msra.mxu0 %v3437
          %6873 = vmatmul.f32.gmra.mxu0 %v6835
          %v6874 = vpop.f32.mrf.mxu0
          %v6875 = vadd.f32 0.0, %v6874
          %6876 = vdwg.mxu0
          %6877 = vmatpush.msra.mxu0 0.0
          %6878 = vmatpush.msra.mxu0 0.0
          %6879 = vmatpush.msra.mxu0 0.0
          %6880 = vmatpush.msra.mxu0 0.0
          %6881 = vmatpush.msra.mxu0 0.0
          %6882 = vmatpush.msra.mxu0 0.0
          %6883 = vmatpush.msra.mxu0 0.0
          %6884 = vmatpush.msra.mxu0 0.0
          %6885 = vmatpush.msra.mxu0 0.0
          %6886 = vmatpush.msra.mxu0 0.0
          %6887 = vmatpush.msra.mxu0 0.0
          %6888 = vmatpush.msra.mxu0 0.0
          %6889 = vmatpush.msra.mxu0 0.0
          %6890 = vmatpush.msra.mxu0 0.0
          %6891 = vmatpush.msra.mxu0 %v3551
          %6892 = vmatpush.msra.mxu0 %v3439
          %6893 = vmatmul.f32.gmra.mxu0 %v6835
          %v6894 = vpop.f32.mrf.mxu0
          %v6895 = vadd.f32 0.0, %v6894
          %6896 = vdwg.mxu0
          %6897 = vmatpush.msra.mxu0 0.0
          %6898 = vmatpush.msra.mxu0 0.0
          %6899 = vmatpush.msra.mxu0 0.0
          %6900 = vmatpush.msra.mxu0 0.0
          %6901 = vmatpush.msra.mxu0 0.0
          %6902 = vmatpush.msra.mxu0 0.0
          %6903 = vmatpush.msra.mxu0 0.0
          %6904 = vmatpush.msra.mxu0 0.0
          %6905 = vmatpush.msra.mxu0 0.0
          %6906 = vmatpush.msra.mxu0 0.0
          %6907 = vmatpush.msra.mxu0 0.0
          %6908 = vmatpush.msra.mxu0 0.0
          %6909 = vmatpush.msra.mxu0 0.0
          %6910 = vmatpush.msra.mxu0 0.0
          %6911 = vmatpush.msra.mxu0 %v3553
          %6912 = vmatpush.msra.mxu0 %v3441
          %6913 = vmatmul.f32.gmra.mxu0 %v6835
          %v6914 = vpop.f32.mrf.mxu0
          %v6915 = vadd.f32 0.0, %v6914
          %6916 = vdwg.mxu0
          %v6917 = vsel %vm6506, %v6492, 0
          %6919 = vmatpush.msra.mxu0 0.0
          %6920 = vmatpush.msra.mxu0 0.0
          %6921 = vmatpush.msra.mxu0 0.0
          %6922 = vmatpush.msra.mxu0 0.0
          %6923 = vmatpush.msra.mxu0 0.0
          %6924 = vmatpush.msra.mxu0 0.0
          %6925 = vmatpush.msra.mxu0 0.0
          %6926 = vmatpush.msra.mxu0 0.0
          %6927 = vmatpush.msra.mxu0 0.0
          %6928 = vmatpush.msra.mxu0 0.0
          %6929 = vmatpush.msra.mxu0 0.0
          %6930 = vmatpush.msra.mxu0 0.0
          %6931 = vmatpush.msra.mxu0 0.0
          %6932 = vmatpush.msra.mxu0 0.0
          %6933 = vmatpush.msra.mxu0 %v3555
          %6934 = vmatpush.msra.mxu0 %v3443
          %6935 = vmatmul.f32.gmra.mxu0 %v6917
          %v6936 = vpop.f32.mrf.mxu0
          %v6937 = vadd.f32 0.0, %v6936
          %6938 = vdwg.mxu0
          %6939 = vmatpush.msra.mxu0 0.0
          %6940 = vmatpush.msra.mxu0 0.0
          %6941 = vmatpush.msra.mxu0 0.0
          %6942 = vmatpush.msra.mxu0 0.0
          %6943 = vmatpush.msra.mxu0 0.0
          %6944 = vmatpush.msra.mxu0 0.0
          %6945 = vmatpush.msra.mxu0 0.0
          %6946 = vmatpush.msra.mxu0 0.0
          %6947 = vmatpush.msra.mxu0 0.0
          %6948 = vmatpush.msra.mxu0 0.0
          %6949 = vmatpush.msra.mxu0 0.0
          %6950 = vmatpush.msra.mxu0 0.0
          %6951 = vmatpush.msra.mxu0 0.0
          %6952 = vmatpush.msra.mxu0 0.0
          %6953 = vmatpush.msra.mxu0 %v3557
          %6954 = vmatpush.msra.mxu0 %v3445
          %6955 = vmatmul.f32.gmra.mxu0 %v6917
          %v6956 = vpop.f32.mrf.mxu0
          %v6957 = vadd.f32 0.0, %v6956
          %6958 = vdwg.mxu0
          %6959 = vmatpush.msra.mxu0 0.0
          %6960 = vmatpush.msra.mxu0 0.0
          %6961 = vmatpush.msra.mxu0 0.0
          %6962 = vmatpush.msra.mxu0 0.0
          %6963 = vmatpush.msra.mxu0 0.0
          %6964 = vmatpush.msra.mxu0 0.0
          %6965 = vmatpush.msra.mxu0 0.0
          %6966 = vmatpush.msra.mxu0 0.0
          %6967 = vmatpush.msra.mxu0 0.0
          %6968 = vmatpush.msra.mxu0 0.0
          %6969 = vmatpush.msra.mxu0 0.0
          %6970 = vmatpush.msra.mxu0 0.0
          %6971 = vmatpush.msra.mxu0 0.0
          %6972 = vmatpush.msra.mxu0 0.0
          %6973 = vmatpush.msra.mxu0 %v3559
          %6974 = vmatpush.msra.mxu0 %v3447
          %6975 = vmatmul.f32.gmra.mxu0 %v6917
          %v6976 = vpop.f32.mrf.mxu0
          %v6977 = vadd.f32 0.0, %v6976
          %6978 = vdwg.mxu0
          %6979 = vmatpush.msra.mxu0 0.0
          %6980 = vmatpush.msra.mxu0 0.0
          %6981 = vmatpush.msra.mxu0 0.0
          %6982 = vmatpush.msra.mxu0 0.0
          %6983 = vmatpush.msra.mxu0 0.0
          %6984 = vmatpush.msra.mxu0 0.0
          %6985 = vmatpush.msra.mxu0 0.0
          %6986 = vmatpush.msra.mxu0 0.0
          %6987 = vmatpush.msra.mxu0 0.0
          %6988 = vmatpush.msra.mxu0 0.0
          %6989 = vmatpush.msra.mxu0 0.0
          %6990 = vmatpush.msra.mxu0 0.0
          %6991 = vmatpush.msra.mxu0 0.0
          %6992 = vmatpush.msra.mxu0 0.0
          %6993 = vmatpush.msra.mxu0 %v3561
          %6994 = vmatpush.msra.mxu0 %v3449
          %6995 = vmatmul.f32.gmra.mxu0 %v6917
          %v6996 = vpop.f32.mrf.mxu0
          %v6997 = vadd.f32 0.0, %v6996
          %6998 = vdwg.mxu0
          %v6999 = vsel %vm6506, %v1739, 0
          %7001 = vmatpush.msra.mxu0 0.0
          %7002 = vmatpush.msra.mxu0 0.0
          %7003 = vmatpush.msra.mxu0 0.0
          %7004 = vmatpush.msra.mxu0 0.0
          %7005 = vmatpush.msra.mxu0 0.0
          %7006 = vmatpush.msra.mxu0 0.0
          %7007 = vmatpush.msra.mxu0 0.0
          %7008 = vmatpush.msra.mxu0 0.0
          %7009 = vmatpush.msra.mxu0 0.0
          %7010 = vmatpush.msra.mxu0 0.0
          %7011 = vmatpush.msra.mxu0 0.0
          %7012 = vmatpush.msra.mxu0 0.0
          %7013 = vmatpush.msra.mxu0 0.0
          %7014 = vmatpush.msra.mxu0 0.0
          %7015 = vmatpush.msra.mxu0 %v3771
          %7016 = vmatpush.msra.mxu0 %v3659
          %7017 = vmatmul.f32.gmra.mxu0 %v6999
          %v7018 = vpop.f32.mrf.mxu0
          %v7019 = vadd.f32 0.0, %v7018
          %7020 = vdwg.mxu0
          %7021 = vmatpush.msra.mxu0 0.0
          %7022 = vmatpush.msra.mxu0 0.0
          %7023 = vmatpush.msra.mxu0 0.0
          %7024 = vmatpush.msra.mxu0 0.0
          %7025 = vmatpush.msra.mxu0 0.0
          %7026 = vmatpush.msra.mxu0 0.0
          %7027 = vmatpush.msra.mxu0 0.0
          %7028 = vmatpush.msra.mxu0 0.0
          %7029 = vmatpush.msra.mxu0 0.0
          %7030 = vmatpush.msra.mxu0 0.0
          %7031 = vmatpush.msra.mxu0 0.0
          %7032 = vmatpush.msra.mxu0 0.0
          %7033 = vmatpush.msra.mxu0 0.0
          %7034 = vmatpush.msra.mxu0 0.0
          %7035 = vmatpush.msra.mxu0 %v3773
          %7036 = vmatpush.msra.mxu0 %v3661
          %7037 = vmatmul.f32.gmra.mxu0 %v6999
          %v7038 = vpop.f32.mrf.mxu0
          %v7039 = vadd.f32 0.0, %v7038
          %7040 = vdwg.mxu0
          %7041 = vmatpush.msra.mxu0 0.0
          %7042 = vmatpush.msra.mxu0 0.0
          %7043 = vmatpush.msra.mxu0 0.0
          %7044 = vmatpush.msra.mxu0 0.0
          %7045 = vmatpush.msra.mxu0 0.0
          %7046 = vmatpush.msra.mxu0 0.0
          %7047 = vmatpush.msra.mxu0 0.0
          %7048 = vmatpush.msra.mxu0 0.0
          %7049 = vmatpush.msra.mxu0 0.0
          %7050 = vmatpush.msra.mxu0 0.0
          %7051 = vmatpush.msra.mxu0 0.0
          %7052 = vmatpush.msra.mxu0 0.0
          %7053 = vmatpush.msra.mxu0 0.0
          %7054 = vmatpush.msra.mxu0 0.0
          %7055 = vmatpush.msra.mxu0 %v3775
          %7056 = vmatpush.msra.mxu0 %v3663
          %7057 = vmatmul.f32.gmra.mxu0 %v6999
          %v7058 = vpop.f32.mrf.mxu0
          %v7059 = vadd.f32 0.0, %v7058
          %7060 = vdwg.mxu0
          %7061 = vmatpush.msra.mxu0 0.0
          %7062 = vmatpush.msra.mxu0 0.0
          %7063 = vmatpush.msra.mxu0 0.0
          %7064 = vmatpush.msra.mxu0 0.0
          %7065 = vmatpush.msra.mxu0 0.0
          %7066 = vmatpush.msra.mxu0 0.0
          %7067 = vmatpush.msra.mxu0 0.0
          %7068 = vmatpush.msra.mxu0 0.0
          %7069 = vmatpush.msra.mxu0 0.0
          %7070 = vmatpush.msra.mxu0 0.0
          %7071 = vmatpush.msra.mxu0 0.0
          %7072 = vmatpush.msra.mxu0 0.0
          %7073 = vmatpush.msra.mxu0 0.0
          %7074 = vmatpush.msra.mxu0 0.0
          %7075 = vmatpush.msra.mxu0 %v3777
          %7076 = vmatpush.msra.mxu0 %v3665
          %7077 = vmatmul.f32.gmra.mxu0 %v6999
          %v7078 = vpop.f32.mrf.mxu0
          %v7079 = vadd.f32 0.0, %v7078
          %7080 = vdwg.mxu0
          %v7081 = vsel %vm6506, %v6493, 0
          %7083 = vmatpush.msra.mxu0 0.0
          %7084 = vmatpush.msra.mxu0 0.0
          %7085 = vmatpush.msra.mxu0 0.0
          %7086 = vmatpush.msra.mxu0 0.0
          %7087 = vmatpush.msra.mxu0 0.0
          %7088 = vmatpush.msra.mxu0 0.0
          %7089 = vmatpush.msra.mxu0 0.0
          %7090 = vmatpush.msra.mxu0 0.0
          %7091 = vmatpush.msra.mxu0 0.0
          %7092 = vmatpush.msra.mxu0 0.0
          %7093 = vmatpush.msra.mxu0 0.0
          %7094 = vmatpush.msra.mxu0 0.0
          %7095 = vmatpush.msra.mxu0 0.0
          %7096 = vmatpush.msra.mxu0 0.0
          %7097 = vmatpush.msra.mxu0 %v3779
          %7098 = vmatpush.msra.mxu0 %v3667
          %7099 = vmatmul.f32.gmra.mxu0 %v7081
          %v7100 = vpop.f32.mrf.mxu0
          %v7101 = vadd.f32 0.0, %v7100
          %7102 = vdwg.mxu0
          %7103 = vmatpush.msra.mxu0 0.0
          %7104 = vmatpush.msra.mxu0 0.0
          %7105 = vmatpush.msra.mxu0 0.0
          %7106 = vmatpush.msra.mxu0 0.0
          %7107 = vmatpush.msra.mxu0 0.0
          %7108 = vmatpush.msra.mxu0 0.0
          %7109 = vmatpush.msra.mxu0 0.0
          %7110 = vmatpush.msra.mxu0 0.0
          %7111 = vmatpush.msra.mxu0 0.0
          %7112 = vmatpush.msra.mxu0 0.0
          %7113 = vmatpush.msra.mxu0 0.0
          %7114 = vmatpush.msra.mxu0 0.0
          %7115 = vmatpush.msra.mxu0 0.0
          %7116 = vmatpush.msra.mxu0 0.0
          %7117 = vmatpush.msra.mxu0 %v3781
          %7118 = vmatpush.msra.mxu0 %v3669
          %7119 = vmatmul.f32.gmra.mxu0 %v7081
          %v7120 = vpop.f32.mrf.mxu0
          %v7121 = vadd.f32 0.0, %v7120
          %7122 = vdwg.mxu0
          %7123 = vmatpush.msra.mxu0 0.0
          %7124 = vmatpush.msra.mxu0 0.0
          %7125 = vmatpush.msra.mxu0 0.0
          %7126 = vmatpush.msra.mxu0 0.0
          %7127 = vmatpush.msra.mxu0 0.0
          %7128 = vmatpush.msra.mxu0 0.0
          %7129 = vmatpush.msra.mxu0 0.0
          %7130 = vmatpush.msra.mxu0 0.0
          %7131 = vmatpush.msra.mxu0 0.0
          %7132 = vmatpush.msra.mxu0 0.0
          %7133 = vmatpush.msra.mxu0 0.0
          %7134 = vmatpush.msra.mxu0 0.0
          %7135 = vmatpush.msra.mxu0 0.0
          %7136 = vmatpush.msra.mxu0 0.0
          %7137 = vmatpush.msra.mxu0 %v3783
          %7138 = vmatpush.msra.mxu0 %v3671
          %7139 = vmatmul.f32.gmra.mxu0 %v7081
          %v7140 = vpop.f32.mrf.mxu0
          %v7141 = vadd.f32 0.0, %v7140
          %7142 = vdwg.mxu0
          %7143 = vmatpush.msra.mxu0 0.0
          %7144 = vmatpush.msra.mxu0 0.0
          %7145 = vmatpush.msra.mxu0 0.0
          %7146 = vmatpush.msra.mxu0 0.0
          %7147 = vmatpush.msra.mxu0 0.0
          %7148 = vmatpush.msra.mxu0 0.0
          %7149 = vmatpush.msra.mxu0 0.0
          %7150 = vmatpush.msra.mxu0 0.0
          %7151 = vmatpush.msra.mxu0 0.0
          %7152 = vmatpush.msra.mxu0 0.0
          %7153 = vmatpush.msra.mxu0 0.0
          %7154 = vmatpush.msra.mxu0 0.0
          %7155 = vmatpush.msra.mxu0 0.0
          %7156 = vmatpush.msra.mxu0 0.0
          %7157 = vmatpush.msra.mxu0 %v3785
          %7158 = vmatpush.msra.mxu0 %v3673
          %7159 = vmatmul.f32.gmra.mxu0 %v7081
          %v7160 = vpop.f32.mrf.mxu0
          %v7161 = vadd.f32 0.0, %v7160
          %7162 = vdwg.mxu0
          %v7163 = vsel %vm6506, %v1740, 0
          %7165 = vmatpush.msra.mxu0 0.0
          %7166 = vmatpush.msra.mxu0 0.0
          %7167 = vmatpush.msra.mxu0 0.0
          %7168 = vmatpush.msra.mxu0 0.0
          %7169 = vmatpush.msra.mxu0 0.0
          %7170 = vmatpush.msra.mxu0 0.0
          %7171 = vmatpush.msra.mxu0 0.0
          %7172 = vmatpush.msra.mxu0 0.0
          %7173 = vmatpush.msra.mxu0 0.0
          %7174 = vmatpush.msra.mxu0 0.0
          %7175 = vmatpush.msra.mxu0 0.0
          %7176 = vmatpush.msra.mxu0 0.0
          %7177 = vmatpush.msra.mxu0 0.0
          %7178 = vmatpush.msra.mxu0 0.0
          %7179 = vmatpush.msra.mxu0 %v3995
          %7180 = vmatpush.msra.mxu0 %v3883
          %7181 = vmatmul.f32.gmra.mxu0 %v7163
          %v7182 = vpop.f32.mrf.mxu0
          %v7183 = vadd.f32 0.0, %v7182
          %7184 = vdwg.mxu0
          %7185 = vmatpush.msra.mxu0 0.0
          %7186 = vmatpush.msra.mxu0 0.0
          %7187 = vmatpush.msra.mxu0 0.0
          %7188 = vmatpush.msra.mxu0 0.0
          %7189 = vmatpush.msra.mxu0 0.0
          %7190 = vmatpush.msra.mxu0 0.0
          %7191 = vmatpush.msra.mxu0 0.0
          %7192 = vmatpush.msra.mxu0 0.0
          %7193 = vmatpush.msra.mxu0 0.0
          %7194 = vmatpush.msra.mxu0 0.0
          %7195 = vmatpush.msra.mxu0 0.0
          %7196 = vmatpush.msra.mxu0 0.0
          %7197 = vmatpush.msra.mxu0 0.0
          %7198 = vmatpush.msra.mxu0 0.0
          %7199 = vmatpush.msra.mxu0 %v3997
          %7200 = vmatpush.msra.mxu0 %v3885
          %7201 = vmatmul.f32.gmra.mxu0 %v7163
          %v7202 = vpop.f32.mrf.mxu0
          %v7203 = vadd.f32 0.0, %v7202
          %7204 = vdwg.mxu0
          %7205 = vmatpush.msra.mxu0 0.0
          %7206 = vmatpush.msra.mxu0 0.0
          %7207 = vmatpush.msra.mxu0 0.0
          %7208 = vmatpush.msra.mxu0 0.0
          %7209 = vmatpush.msra.mxu0 0.0
          %7210 = vmatpush.msra.mxu0 0.0
          %7211 = vmatpush.msra.mxu0 0.0
          %7212 = vmatpush.msra.mxu0 0.0
          %7213 = vmatpush.msra.mxu0 0.0
          %7214 = vmatpush.msra.mxu0 0.0
          %7215 = vmatpush.msra.mxu0 0.0
          %7216 = vmatpush.msra.mxu0 0.0
          %7217 = vmatpush.msra.mxu0 0.0
          %7218 = vmatpush.msra.mxu0 0.0
          %7219 = vmatpush.msra.mxu0 %v3999
          %7220 = vmatpush.msra.mxu0 %v3887
          %7221 = vmatmul.f32.gmra.mxu0 %v7163
          %v7222 = vpop.f32.mrf.mxu0
          %v7223 = vadd.f32 0.0, %v7222
          %7224 = vdwg.mxu0
          %7225 = vmatpush.msra.mxu0 0.0
          %7226 = vmatpush.msra.mxu0 0.0
          %7227 = vmatpush.msra.mxu0 0.0
          %7228 = vmatpush.msra.mxu0 0.0
          %7229 = vmatpush.msra.mxu0 0.0
          %7230 = vmatpush.msra.mxu0 0.0
          %7231 = vmatpush.msra.mxu0 0.0
          %7232 = vmatpush.msra.mxu0 0.0
          %7233 = vmatpush.msra.mxu0 0.0
          %7234 = vmatpush.msra.mxu0 0.0
          %7235 = vmatpush.msra.mxu0 0.0
          %7236 = vmatpush.msra.mxu0 0.0
          %7237 = vmatpush.msra.mxu0 0.0
          %7238 = vmatpush.msra.mxu0 0.0
          %7239 = vmatpush.msra.mxu0 %v4001
          %7240 = vmatpush.msra.mxu0 %v3889
          %7241 = vmatmul.f32.gmra.mxu0 %v7163
          %v7242 = vpop.f32.mrf.mxu0
          %v7243 = vadd.f32 0.0, %v7242
          %7244 = vdwg.mxu0
          %v7245 = vsel %vm6506, %v6494, 0
          %7247 = vmatpush.msra.mxu0 0.0
          %7248 = vmatpush.msra.mxu0 0.0
          %7249 = vmatpush.msra.mxu0 0.0
          %7250 = vmatpush.msra.mxu0 0.0
          %7251 = vmatpush.msra.mxu0 0.0
          %7252 = vmatpush.msra.mxu0 0.0
          %7253 = vmatpush.msra.mxu0 0.0
          %7254 = vmatpush.msra.mxu0 0.0
          %7255 = vmatpush.msra.mxu0 0.0
          %7256 = vmatpush.msra.mxu0 0.0
          %7257 = vmatpush.msra.mxu0 0.0
          %7258 = vmatpush.msra.mxu0 0.0
          %7259 = vmatpush.msra.mxu0 0.0
          %7260 = vmatpush.msra.mxu0 0.0
          %7261 = vmatpush.msra.mxu0 %v4003
          %7262 = vmatpush.msra.mxu0 %v3891
          %7263 = vmatmul.f32.gmra.mxu0 %v7245
          %v7264 = vpop.f32.mrf.mxu0
          %v7265 = vadd.f32 0.0, %v7264
          %7266 = vdwg.mxu0
          %7267 = vmatpush.msra.mxu0 0.0
          %7268 = vmatpush.msra.mxu0 0.0
          %7269 = vmatpush.msra.mxu0 0.0
          %7270 = vmatpush.msra.mxu0 0.0
          %7271 = vmatpush.msra.mxu0 0.0
          %7272 = vmatpush.msra.mxu0 0.0
          %7273 = vmatpush.msra.mxu0 0.0
          %7274 = vmatpush.msra.mxu0 0.0
          %7275 = vmatpush.msra.mxu0 0.0
          %7276 = vmatpush.msra.mxu0 0.0
          %7277 = vmatpush.msra.mxu0 0.0
          %7278 = vmatpush.msra.mxu0 0.0
          %7279 = vmatpush.msra.mxu0 0.0
          %7280 = vmatpush.msra.mxu0 0.0
          %7281 = vmatpush.msra.mxu0 %v4005
          %7282 = vmatpush.msra.mxu0 %v3893
          %7283 = vmatmul.f32.gmra.mxu0 %v7245
          %v7284 = vpop.f32.mrf.mxu0
          %v7285 = vadd.f32 0.0, %v7284
          %7286 = vdwg.mxu0
          %7287 = vmatpush.msra.mxu0 0.0
          %7288 = vmatpush.msra.mxu0 0.0
          %7289 = vmatpush.msra.mxu0 0.0
          %7290 = vmatpush.msra.mxu0 0.0
          %7291 = vmatpush.msra.mxu0 0.0
          %7292 = vmatpush.msra.mxu0 0.0
          %7293 = vmatpush.msra.mxu0 0.0
          %7294 = vmatpush.msra.mxu0 0.0
          %7295 = vmatpush.msra.mxu0 0.0
          %7296 = vmatpush.msra.mxu0 0.0
          %7297 = vmatpush.msra.mxu0 0.0
          %7298 = vmatpush.msra.mxu0 0.0
          %7299 = vmatpush.msra.mxu0 0.0
          %7300 = vmatpush.msra.mxu0 0.0
          %7301 = vmatpush.msra.mxu0 %v4007
          %7302 = vmatpush.msra.mxu0 %v3895
          %7303 = vmatmul.f32.gmra.mxu0 %v7245
          %v7304 = vpop.f32.mrf.mxu0
          %v7305 = vadd.f32 0.0, %v7304
          %7306 = vdwg.mxu0
          %7307 = vmatpush.msra.mxu0 0.0
          %7308 = vmatpush.msra.mxu0 0.0
          %7309 = vmatpush.msra.mxu0 0.0
          %7310 = vmatpush.msra.mxu0 0.0
          %7311 = vmatpush.msra.mxu0 0.0
          %7312 = vmatpush.msra.mxu0 0.0
          %7313 = vmatpush.msra.mxu0 0.0
          %7314 = vmatpush.msra.mxu0 0.0
          %7315 = vmatpush.msra.mxu0 0.0
          %7316 = vmatpush.msra.mxu0 0.0
          %7317 = vmatpush.msra.mxu0 0.0
          %7318 = vmatpush.msra.mxu0 0.0
          %7319 = vmatpush.msra.mxu0 0.0
          %7320 = vmatpush.msra.mxu0 0.0
          %7321 = vmatpush.msra.mxu0 %v4009
          %7322 = vmatpush.msra.mxu0 %v3897
          %7323 = vmatmul.f32.gmra.mxu0 %v7245
          %v7324 = vpop.f32.mrf.mxu0
          %v7325 = vadd.f32 0.0, %v7324
          %7326 = vdwg.mxu0
          %v7327 = vsel %vm6506, %v1741, 0
          %7329 = vmatpush.msra.mxu0 0.0
          %7330 = vmatpush.msra.mxu0 0.0
          %7331 = vmatpush.msra.mxu0 0.0
          %7332 = vmatpush.msra.mxu0 0.0
          %7333 = vmatpush.msra.mxu0 0.0
          %7334 = vmatpush.msra.mxu0 0.0
          %7335 = vmatpush.msra.mxu0 0.0
          %7336 = vmatpush.msra.mxu0 0.0
          %7337 = vmatpush.msra.mxu0 0.0
          %7338 = vmatpush.msra.mxu0 0.0
          %7339 = vmatpush.msra.mxu0 0.0
          %7340 = vmatpush.msra.mxu0 0.0
          %7341 = vmatpush.msra.mxu0 0.0
          %7342 = vmatpush.msra.mxu0 0.0
          %7343 = vmatpush.msra.mxu0 %v4219
          %7344 = vmatpush.msra.mxu0 %v4107
          %7345 = vmatmul.f32.gmra.mxu0 %v7327
          %v7346 = vpop.f32.mrf.mxu0
          %v7347 = vadd.f32 0.0, %v7346
          %7348 = vdwg.mxu0
          %7349 = vmatpush.msra.mxu0 0.0
          %7350 = vmatpush.msra.mxu0 0.0
          %7351 = vmatpush.msra.mxu0 0.0
          %7352 = vmatpush.msra.mxu0 0.0
          %7353 = vmatpush.msra.mxu0 0.0
          %7354 = vmatpush.msra.mxu0 0.0
          %7355 = vmatpush.msra.mxu0 0.0
          %7356 = vmatpush.msra.mxu0 0.0
          %7357 = vmatpush.msra.mxu0 0.0
          %7358 = vmatpush.msra.mxu0 0.0
          %7359 = vmatpush.msra.mxu0 0.0
          %7360 = vmatpush.msra.mxu0 0.0
          %7361 = vmatpush.msra.mxu0 0.0
          %7362 = vmatpush.msra.mxu0 0.0
          %7363 = vmatpush.msra.mxu0 %v4221
          %7364 = vmatpush.msra.mxu0 %v4109
          %7365 = vmatmul.f32.gmra.mxu0 %v7327
          %v7366 = vpop.f32.mrf.mxu0
          %v7367 = vadd.f32 0.0, %v7366
          %7368 = vdwg.mxu0
          %7369 = vmatpush.msra.mxu0 0.0
          %7370 = vmatpush.msra.mxu0 0.0
          %7371 = vmatpush.msra.mxu0 0.0
          %7372 = vmatpush.msra.mxu0 0.0
          %7373 = vmatpush.msra.mxu0 0.0
          %7374 = vmatpush.msra.mxu0 0.0
          %7375 = vmatpush.msra.mxu0 0.0
          %7376 = vmatpush.msra.mxu0 0.0
          %7377 = vmatpush.msra.mxu0 0.0
          %7378 = vmatpush.msra.mxu0 0.0
          %7379 = vmatpush.msra.mxu0 0.0
          %7380 = vmatpush.msra.mxu0 0.0
          %7381 = vmatpush.msra.mxu0 0.0
          %7382 = vmatpush.msra.mxu0 0.0
          %7383 = vmatpush.msra.mxu0 %v4223
          %7384 = vmatpush.msra.mxu0 %v4111
          %7385 = vmatmul.f32.gmra.mxu0 %v7327
          %v7386 = vpop.f32.mrf.mxu0
          %v7387 = vadd.f32 0.0, %v7386
          %7388 = vdwg.mxu0
          %7389 = vmatpush.msra.mxu0 0.0
          %7390 = vmatpush.msra.mxu0 0.0
          %7391 = vmatpush.msra.mxu0 0.0
          %7392 = vmatpush.msra.mxu0 0.0
          %7393 = vmatpush.msra.mxu0 0.0
          %7394 = vmatpush.msra.mxu0 0.0
          %7395 = vmatpush.msra.mxu0 0.0
          %7396 = vmatpush.msra.mxu0 0.0
          %7397 = vmatpush.msra.mxu0 0.0
          %7398 = vmatpush.msra.mxu0 0.0
          %7399 = vmatpush.msra.mxu0 0.0
          %7400 = vmatpush.msra.mxu0 0.0
          %7401 = vmatpush.msra.mxu0 0.0
          %7402 = vmatpush.msra.mxu0 0.0
          %7403 = vmatpush.msra.mxu0 %v4225
          %7404 = vmatpush.msra.mxu0 %v4113
          %7405 = vmatmul.f32.gmra.mxu0 %v7327
          %v7406 = vpop.f32.mrf.mxu0
          %v7407 = vadd.f32 0.0, %v7406
          %7408 = vdwg.mxu0
          %v7409 = vsel %vm6506, %v6495, 0
          %7411 = vmatpush.msra.mxu0 0.0
          %7412 = vmatpush.msra.mxu0 0.0
          %7413 = vmatpush.msra.mxu0 0.0
          %7414 = vmatpush.msra.mxu0 0.0
          %7415 = vmatpush.msra.mxu0 0.0
          %7416 = vmatpush.msra.mxu0 0.0
          %7417 = vmatpush.msra.mxu0 0.0
          %7418 = vmatpush.msra.mxu0 0.0
          %7419 = vmatpush.msra.mxu0 0.0
          %7420 = vmatpush.msra.mxu0 0.0
          %7421 = vmatpush.msra.mxu0 0.0
          %7422 = vmatpush.msra.mxu0 0.0
          %7423 = vmatpush.msra.mxu0 0.0
          %7424 = vmatpush.msra.mxu0 0.0
          %7425 = vmatpush.msra.mxu0 %v4227
          %7426 = vmatpush.msra.mxu0 %v4115
          %7427 = vmatmul.f32.gmra.mxu0 %v7409
          %v7428 = vpop.f32.mrf.mxu0
          %v7429 = vadd.f32 0.0, %v7428
          %7430 = vdwg.mxu0
          %7431 = vmatpush.msra.mxu0 0.0
          %7432 = vmatpush.msra.mxu0 0.0
          %7433 = vmatpush.msra.mxu0 0.0
          %7434 = vmatpush.msra.mxu0 0.0
          %7435 = vmatpush.msra.mxu0 0.0
          %7436 = vmatpush.msra.mxu0 0.0
          %7437 = vmatpush.msra.mxu0 0.0
          %7438 = vmatpush.msra.mxu0 0.0
          %7439 = vmatpush.msra.mxu0 0.0
          %7440 = vmatpush.msra.mxu0 0.0
          %7441 = vmatpush.msra.mxu0 0.0
          %7442 = vmatpush.msra.mxu0 0.0
          %7443 = vmatpush.msra.mxu0 0.0
          %7444 = vmatpush.msra.mxu0 0.0
          %7445 = vmatpush.msra.mxu0 %v4229
          %7446 = vmatpush.msra.mxu0 %v4117
          %7447 = vmatmul.f32.gmra.mxu0 %v7409
          %v7448 = vpop.f32.mrf.mxu0
          %v7449 = vadd.f32 0.0, %v7448
          %7450 = vdwg.mxu0
          %7451 = vmatpush.msra.mxu0 0.0
          %7452 = vmatpush.msra.mxu0 0.0
          %7453 = vmatpush.msra.mxu0 0.0
          %7454 = vmatpush.msra.mxu0 0.0
          %7455 = vmatpush.msra.mxu0 0.0
          %7456 = vmatpush.msra.mxu0 0.0
          %7457 = vmatpush.msra.mxu0 0.0
          %7458 = vmatpush.msra.mxu0 0.0
          %7459 = vmatpush.msra.mxu0 0.0
          %7460 = vmatpush.msra.mxu0 0.0
          %7461 = vmatpush.msra.mxu0 0.0
          %7462 = vmatpush.msra.mxu0 0.0
          %7463 = vmatpush.msra.mxu0 0.0
          %7464 = vmatpush.msra.mxu0 0.0
          %7465 = vmatpush.msra.mxu0 %v4231
          %7466 = vmatpush.msra.mxu0 %v4119
          %7467 = vmatmul.f32.gmra.mxu0 %v7409
          %v7468 = vpop.f32.mrf.mxu0
          %v7469 = vadd.f32 0.0, %v7468
          %7470 = vdwg.mxu0
          %7471 = vmatpush.msra.mxu0 0.0
          %7472 = vmatpush.msra.mxu0 0.0
          %7473 = vmatpush.msra.mxu0 0.0
          %7474 = vmatpush.msra.mxu0 0.0
          %7475 = vmatpush.msra.mxu0 0.0
          %7476 = vmatpush.msra.mxu0 0.0
          %7477 = vmatpush.msra.mxu0 0.0
          %7478 = vmatpush.msra.mxu0 0.0
          %7479 = vmatpush.msra.mxu0 0.0
          %7480 = vmatpush.msra.mxu0 0.0
          %7481 = vmatpush.msra.mxu0 0.0
          %7482 = vmatpush.msra.mxu0 0.0
          %7483 = vmatpush.msra.mxu0 0.0
          %7484 = vmatpush.msra.mxu0 0.0
          %7485 = vmatpush.msra.mxu0 %v4233
          %7486 = vmatpush.msra.mxu0 %v4121
          %7487 = vmatmul.f32.gmra.mxu0 %v7409
          %v7488 = vpop.f32.mrf.mxu0
          %v7489 = vadd.f32 0.0, %v7488
          %7490 = vdwg.mxu0
          %v7491 = vsel %vm6506, %v1742, 0
          %7493 = vmatpush.msra.mxu0 0.0
          %7494 = vmatpush.msra.mxu0 0.0
          %7495 = vmatpush.msra.mxu0 0.0
          %7496 = vmatpush.msra.mxu0 0.0
          %7497 = vmatpush.msra.mxu0 0.0
          %7498 = vmatpush.msra.mxu0 0.0
          %7499 = vmatpush.msra.mxu0 0.0
          %7500 = vmatpush.msra.mxu0 0.0
          %7501 = vmatpush.msra.mxu0 0.0
          %7502 = vmatpush.msra.mxu0 0.0
          %7503 = vmatpush.msra.mxu0 0.0
          %7504 = vmatpush.msra.mxu0 0.0
          %7505 = vmatpush.msra.mxu0 0.0
          %7506 = vmatpush.msra.mxu0 0.0
          %7507 = vmatpush.msra.mxu0 %v4443
          %7508 = vmatpush.msra.mxu0 %v4331
          %7509 = vmatmul.f32.gmra.mxu0 %v7491
          %v7510 = vpop.f32.mrf.mxu0
          %v7511 = vadd.f32 0.0, %v7510
          %7512 = vdwg.mxu0
          %7513 = vmatpush.msra.mxu0 0.0
          %7514 = vmatpush.msra.mxu0 0.0
          %7515 = vmatpush.msra.mxu0 0.0
          %7516 = vmatpush.msra.mxu0 0.0
          %7517 = vmatpush.msra.mxu0 0.0
          %7518 = vmatpush.msra.mxu0 0.0
          %7519 = vmatpush.msra.mxu0 0.0
          %7520 = vmatpush.msra.mxu0 0.0
          %7521 = vmatpush.msra.mxu0 0.0
          %7522 = vmatpush.msra.mxu0 0.0
          %7523 = vmatpush.msra.mxu0 0.0
          %7524 = vmatpush.msra.mxu0 0.0
          %7525 = vmatpush.msra.mxu0 0.0
          %7526 = vmatpush.msra.mxu0 0.0
          %7527 = vmatpush.msra.mxu0 %v4445
          %7528 = vmatpush.msra.mxu0 %v4333
          %7529 = vmatmul.f32.gmra.mxu0 %v7491
          %v7530 = vpop.f32.mrf.mxu0
          %v7531 = vadd.f32 0.0, %v7530
          %7532 = vdwg.mxu0
          %7533 = vmatpush.msra.mxu0 0.0
          %7534 = vmatpush.msra.mxu0 0.0
          %7535 = vmatpush.msra.mxu0 0.0
          %7536 = vmatpush.msra.mxu0 0.0
          %7537 = vmatpush.msra.mxu0 0.0
          %7538 = vmatpush.msra.mxu0 0.0
          %7539 = vmatpush.msra.mxu0 0.0
          %7540 = vmatpush.msra.mxu0 0.0
          %7541 = vmatpush.msra.mxu0 0.0
          %7542 = vmatpush.msra.mxu0 0.0
          %7543 = vmatpush.msra.mxu0 0.0
          %7544 = vmatpush.msra.mxu0 0.0
          %7545 = vmatpush.msra.mxu0 0.0
          %7546 = vmatpush.msra.mxu0 0.0
          %7547 = vmatpush.msra.mxu0 %v4447
          %7548 = vmatpush.msra.mxu0 %v4335
          %7549 = vmatmul.f32.gmra.mxu0 %v7491
          %v7550 = vpop.f32.mrf.mxu0
          %v7551 = vadd.f32 0.0, %v7550
          %7552 = vdwg.mxu0
          %7553 = vmatpush.msra.mxu0 0.0
          %7554 = vmatpush.msra.mxu0 0.0
          %7555 = vmatpush.msra.mxu0 0.0
          %7556 = vmatpush.msra.mxu0 0.0
          %7557 = vmatpush.msra.mxu0 0.0
          %7558 = vmatpush.msra.mxu0 0.0
          %7559 = vmatpush.msra.mxu0 0.0
          %7560 = vmatpush.msra.mxu0 0.0
          %7561 = vmatpush.msra.mxu0 0.0
          %7562 = vmatpush.msra.mxu0 0.0
          %7563 = vmatpush.msra.mxu0 0.0
          %7564 = vmatpush.msra.mxu0 0.0
          %7565 = vmatpush.msra.mxu0 0.0
          %7566 = vmatpush.msra.mxu0 0.0
          %7567 = vmatpush.msra.mxu0 %v4449
          %7568 = vmatpush.msra.mxu0 %v4337
          %7569 = vmatmul.f32.gmra.mxu0 %v7491
          %v7570 = vpop.f32.mrf.mxu0
          %v7571 = vadd.f32 0.0, %v7570
          %7572 = vdwg.mxu0
          %v7573 = vsel %vm6506, %v6496, 0
          %7575 = vmatpush.msra.mxu0 0.0
          %7576 = vmatpush.msra.mxu0 0.0
          %7577 = vmatpush.msra.mxu0 0.0
          %7578 = vmatpush.msra.mxu0 0.0
          %7579 = vmatpush.msra.mxu0 0.0
          %7580 = vmatpush.msra.mxu0 0.0
          %7581 = vmatpush.msra.mxu0 0.0
          %7582 = vmatpush.msra.mxu0 0.0
          %7583 = vmatpush.msra.mxu0 0.0
          %7584 = vmatpush.msra.mxu0 0.0
          %7585 = vmatpush.msra.mxu0 0.0
          %7586 = vmatpush.msra.mxu0 0.0
          %7587 = vmatpush.msra.mxu0 0.0
          %7588 = vmatpush.msra.mxu0 0.0
          %7589 = vmatpush.msra.mxu0 %v4451
          %7590 = vmatpush.msra.mxu0 %v4339
          %7591 = vmatmul.f32.gmra.mxu0 %v7573
          %v7592 = vpop.f32.mrf.mxu0
          %v7593 = vadd.f32 0.0, %v7592
          %7594 = vdwg.mxu0
          %7595 = vmatpush.msra.mxu0 0.0
          %7596 = vmatpush.msra.mxu0 0.0
          %7597 = vmatpush.msra.mxu0 0.0
          %7598 = vmatpush.msra.mxu0 0.0
          %7599 = vmatpush.msra.mxu0 0.0
          %7600 = vmatpush.msra.mxu0 0.0
          %7601 = vmatpush.msra.mxu0 0.0
          %7602 = vmatpush.msra.mxu0 0.0
          %7603 = vmatpush.msra.mxu0 0.0
          %7604 = vmatpush.msra.mxu0 0.0
          %7605 = vmatpush.msra.mxu0 0.0
          %7606 = vmatpush.msra.mxu0 0.0
          %7607 = vmatpush.msra.mxu0 0.0
          %7608 = vmatpush.msra.mxu0 0.0
          %7609 = vmatpush.msra.mxu0 %v4453
          %7610 = vmatpush.msra.mxu0 %v4341
          %7611 = vmatmul.f32.gmra.mxu0 %v7573
          %v7612 = vpop.f32.mrf.mxu0
          %v7613 = vadd.f32 0.0, %v7612
          %7614 = vdwg.mxu0
          %7615 = vmatpush.msra.mxu0 0.0
          %7616 = vmatpush.msra.mxu0 0.0
          %7617 = vmatpush.msra.mxu0 0.0
          %7618 = vmatpush.msra.mxu0 0.0
          %7619 = vmatpush.msra.mxu0 0.0
          %7620 = vmatpush.msra.mxu0 0.0
          %7621 = vmatpush.msra.mxu0 0.0
          %7622 = vmatpush.msra.mxu0 0.0
          %7623 = vmatpush.msra.mxu0 0.0
          %7624 = vmatpush.msra.mxu0 0.0
          %7625 = vmatpush.msra.mxu0 0.0
          %7626 = vmatpush.msra.mxu0 0.0
          %7627 = vmatpush.msra.mxu0 0.0
          %7628 = vmatpush.msra.mxu0 0.0
          %7629 = vmatpush.msra.mxu0 %v4455
          %7630 = vmatpush.msra.mxu0 %v4343
          %7631 = vmatmul.f32.gmra.mxu0 %v7573
          %v7632 = vpop.f32.mrf.mxu0
          %v7633 = vadd.f32 0.0, %v7632
          %7634 = vdwg.mxu0
          %7635 = vmatpush.msra.mxu0 0.0
          %7636 = vmatpush.msra.mxu0 0.0
          %7637 = vmatpush.msra.mxu0 0.0
          %7638 = vmatpush.msra.mxu0 0.0
          %7639 = vmatpush.msra.mxu0 0.0
          %7640 = vmatpush.msra.mxu0 0.0
          %7641 = vmatpush.msra.mxu0 0.0
          %7642 = vmatpush.msra.mxu0 0.0
          %7643 = vmatpush.msra.mxu0 0.0
          %7644 = vmatpush.msra.mxu0 0.0
          %7645 = vmatpush.msra.mxu0 0.0
          %7646 = vmatpush.msra.mxu0 0.0
          %7647 = vmatpush.msra.mxu0 0.0
          %7648 = vmatpush.msra.mxu0 0.0
          %7649 = vmatpush.msra.mxu0 %v4457
          %7650 = vmatpush.msra.mxu0 %v4345
          %7651 = vmatmul.f32.gmra.mxu0 %v7573
          %v7652 = vpop.f32.mrf.mxu0
          %v7653 = vadd.f32 0.0, %v7652
          %7654 = vdwg.mxu0
          %v7655 = vsel %vm6506, %v1743, 0
          %7657 = vmatpush.msra.mxu0 0.0
          %7658 = vmatpush.msra.mxu0 0.0
          %7659 = vmatpush.msra.mxu0 0.0
          %7660 = vmatpush.msra.mxu0 0.0
          %7661 = vmatpush.msra.mxu0 0.0
          %7662 = vmatpush.msra.mxu0 0.0
          %7663 = vmatpush.msra.mxu0 0.0
          %7664 = vmatpush.msra.mxu0 0.0
          %7665 = vmatpush.msra.mxu0 0.0
          %7666 = vmatpush.msra.mxu0 0.0
          %7667 = vmatpush.msra.mxu0 0.0
          %7668 = vmatpush.msra.mxu0 0.0
          %7669 = vmatpush.msra.mxu0 0.0
          %7670 = vmatpush.msra.mxu0 0.0
          %7671 = vmatpush.msra.mxu0 %v4667
          %7672 = vmatpush.msra.mxu0 %v4555
          %7673 = vmatmul.f32.gmra.mxu0 %v7655
          %v7674 = vpop.f32.mrf.mxu0
          %v7675 = vadd.f32 0.0, %v7674
          %7676 = vdwg.mxu0
          %7677 = vmatpush.msra.mxu0 0.0
          %7678 = vmatpush.msra.mxu0 0.0
          %7679 = vmatpush.msra.mxu0 0.0
          %7680 = vmatpush.msra.mxu0 0.0
          %7681 = vmatpush.msra.mxu0 0.0
          %7682 = vmatpush.msra.mxu0 0.0
          %7683 = vmatpush.msra.mxu0 0.0
          %7684 = vmatpush.msra.mxu0 0.0
          %7685 = vmatpush.msra.mxu0 0.0
          %7686 = vmatpush.msra.mxu0 0.0
          %7687 = vmatpush.msra.mxu0 0.0
          %7688 = vmatpush.msra.mxu0 0.0
          %7689 = vmatpush.msra.mxu0 0.0
          %7690 = vmatpush.msra.mxu0 0.0
          %7691 = vmatpush.msra.mxu0 %v4669
          %7692 = vmatpush.msra.mxu0 %v4557
          %7693 = vmatmul.f32.gmra.mxu0 %v7655
          %v7694 = vpop.f32.mrf.mxu0
          %v7695 = vadd.f32 0.0, %v7694
          %7696 = vdwg.mxu0
          %7697 = vmatpush.msra.mxu0 0.0
          %7698 = vmatpush.msra.mxu0 0.0
          %7699 = vmatpush.msra.mxu0 0.0
          %7700 = vmatpush.msra.mxu0 0.0
          %7701 = vmatpush.msra.mxu0 0.0
          %7702 = vmatpush.msra.mxu0 0.0
          %7703 = vmatpush.msra.mxu0 0.0
          %7704 = vmatpush.msra.mxu0 0.0
          %7705 = vmatpush.msra.mxu0 0.0
          %7706 = vmatpush.msra.mxu0 0.0
          %7707 = vmatpush.msra.mxu0 0.0
          %7708 = vmatpush.msra.mxu0 0.0
          %7709 = vmatpush.msra.mxu0 0.0
          %7710 = vmatpush.msra.mxu0 0.0
          %7711 = vmatpush.msra.mxu0 %v4671
          %7712 = vmatpush.msra.mxu0 %v4559
          %7713 = vmatmul.f32.gmra.mxu0 %v7655
          %v7714 = vpop.f32.mrf.mxu0
          %v7715 = vadd.f32 0.0, %v7714
          %7716 = vdwg.mxu0
          %7717 = vmatpush.msra.mxu0 0.0
          %7718 = vmatpush.msra.mxu0 0.0
          %7719 = vmatpush.msra.mxu0 0.0
          %7720 = vmatpush.msra.mxu0 0.0
          %7721 = vmatpush.msra.mxu0 0.0
          %7722 = vmatpush.msra.mxu0 0.0
          %7723 = vmatpush.msra.mxu0 0.0
          %7724 = vmatpush.msra.mxu0 0.0
          %7725 = vmatpush.msra.mxu0 0.0
          %7726 = vmatpush.msra.mxu0 0.0
          %7727 = vmatpush.msra.mxu0 0.0
          %7728 = vmatpush.msra.mxu0 0.0
          %7729 = vmatpush.msra.mxu0 0.0
          %7730 = vmatpush.msra.mxu0 0.0
          %7731 = vmatpush.msra.mxu0 %v4673
          %7732 = vmatpush.msra.mxu0 %v4561
          %7733 = vmatmul.f32.gmra.mxu0 %v7655
          %v7734 = vpop.f32.mrf.mxu0
          %v7735 = vadd.f32 0.0, %v7734
          %7736 = vdwg.mxu0
          %v7737 = vsel %vm6506, %v6497, 0
          %7739 = vmatpush.msra.mxu0 0.0
          %7740 = vmatpush.msra.mxu0 0.0
          %7741 = vmatpush.msra.mxu0 0.0
          %7742 = vmatpush.msra.mxu0 0.0
          %7743 = vmatpush.msra.mxu0 0.0
          %7744 = vmatpush.msra.mxu0 0.0
          %7745 = vmatpush.msra.mxu0 0.0
          %7746 = vmatpush.msra.mxu0 0.0
          %7747 = vmatpush.msra.mxu0 0.0
          %7748 = vmatpush.msra.mxu0 0.0
          %7749 = vmatpush.msra.mxu0 0.0
          %7750 = vmatpush.msra.mxu0 0.0
          %7751 = vmatpush.msra.mxu0 0.0
          %7752 = vmatpush.msra.mxu0 0.0
          %7753 = vmatpush.msra.mxu0 %v4675
          %7754 = vmatpush.msra.mxu0 %v4563
          %7755 = vmatmul.f32.gmra.mxu0 %v7737
          %v7756 = vpop.f32.mrf.mxu0
          %v7757 = vadd.f32 0.0, %v7756
          %7758 = vdwg.mxu0
          %7759 = vmatpush.msra.mxu0 0.0
          %7760 = vmatpush.msra.mxu0 0.0
          %7761 = vmatpush.msra.mxu0 0.0
          %7762 = vmatpush.msra.mxu0 0.0
          %7763 = vmatpush.msra.mxu0 0.0
          %7764 = vmatpush.msra.mxu0 0.0
          %7765 = vmatpush.msra.mxu0 0.0
          %7766 = vmatpush.msra.mxu0 0.0
          %7767 = vmatpush.msra.mxu0 0.0
          %7768 = vmatpush.msra.mxu0 0.0
          %7769 = vmatpush.msra.mxu0 0.0
          %7770 = vmatpush.msra.mxu0 0.0
          %7771 = vmatpush.msra.mxu0 0.0
          %7772 = vmatpush.msra.mxu0 0.0
          %7773 = vmatpush.msra.mxu0 %v4677
          %7774 = vmatpush.msra.mxu0 %v4565
          %7775 = vmatmul.f32.gmra.mxu0 %v7737
          %v7776 = vpop.f32.mrf.mxu0
          %v7777 = vadd.f32 0.0, %v7776
          %7778 = vdwg.mxu0
          %7779 = vmatpush.msra.mxu0 0.0
          %7780 = vmatpush.msra.mxu0 0.0
          %7781 = vmatpush.msra.mxu0 0.0
          %7782 = vmatpush.msra.mxu0 0.0
          %7783 = vmatpush.msra.mxu0 0.0
          %7784 = vmatpush.msra.mxu0 0.0
          %7785 = vmatpush.msra.mxu0 0.0
          %7786 = vmatpush.msra.mxu0 0.0
          %7787 = vmatpush.msra.mxu0 0.0
          %7788 = vmatpush.msra.mxu0 0.0
          %7789 = vmatpush.msra.mxu0 0.0
          %7790 = vmatpush.msra.mxu0 0.0
          %7791 = vmatpush.msra.mxu0 0.0
          %7792 = vmatpush.msra.mxu0 0.0
          %7793 = vmatpush.msra.mxu0 %v4679
          %7794 = vmatpush.msra.mxu0 %v4567
          %7795 = vmatmul.f32.gmra.mxu0 %v7737
          %v7796 = vpop.f32.mrf.mxu0
          %v7797 = vadd.f32 0.0, %v7796
          %7798 = vdwg.mxu0
          %7799 = vmatpush.msra.mxu0 0.0
          %7800 = vmatpush.msra.mxu0 0.0
          %7801 = vmatpush.msra.mxu0 0.0
          %7802 = vmatpush.msra.mxu0 0.0
          %7803 = vmatpush.msra.mxu0 0.0
          %7804 = vmatpush.msra.mxu0 0.0
          %7805 = vmatpush.msra.mxu0 0.0
          %7806 = vmatpush.msra.mxu0 0.0
          %7807 = vmatpush.msra.mxu0 0.0
          %7808 = vmatpush.msra.mxu0 0.0
          %7809 = vmatpush.msra.mxu0 0.0
          %7810 = vmatpush.msra.mxu0 0.0
          %7811 = vmatpush.msra.mxu0 0.0
          %7812 = vmatpush.msra.mxu0 0.0
          %7813 = vmatpush.msra.mxu0 %v4681
          %7814 = vmatpush.msra.mxu0 %v4569
          %7815 = vmatmul.f32.gmra.mxu0 %v7737
          %v7816 = vpop.f32.mrf.mxu0
          %v7817 = vadd.f32 0.0, %v7816
          %7818 = vdwg.mxu0
          %v7819 = vsel %vm6506, %v1744, 0
          %7821 = vmatpush.msra.mxu0 0.0
          %7822 = vmatpush.msra.mxu0 0.0
          %7823 = vmatpush.msra.mxu0 0.0
          %7824 = vmatpush.msra.mxu0 0.0
          %7825 = vmatpush.msra.mxu0 0.0
          %7826 = vmatpush.msra.mxu0 0.0
          %7827 = vmatpush.msra.mxu0 0.0
          %7828 = vmatpush.msra.mxu0 0.0
          %7829 = vmatpush.msra.mxu0 0.0
          %7830 = vmatpush.msra.mxu0 0.0
          %7831 = vmatpush.msra.mxu0 0.0
          %7832 = vmatpush.msra.mxu0 0.0
          %7833 = vmatpush.msra.mxu0 0.0
          %7834 = vmatpush.msra.mxu0 0.0
          %7835 = vmatpush.msra.mxu0 %v4891
          %7836 = vmatpush.msra.mxu0 %v4779
          %7837 = vmatmul.f32.gmra.mxu0 %v7819
          %v7838 = vpop.f32.mrf.mxu0
          %v7839 = vadd.f32 0.0, %v7838
          %7840 = vdwg.mxu0
          %7841 = vmatpush.msra.mxu0 0.0
          %7842 = vmatpush.msra.mxu0 0.0
          %7843 = vmatpush.msra.mxu0 0.0
          %7844 = vmatpush.msra.mxu0 0.0
          %7845 = vmatpush.msra.mxu0 0.0
          %7846 = vmatpush.msra.mxu0 0.0
          %7847 = vmatpush.msra.mxu0 0.0
          %7848 = vmatpush.msra.mxu0 0.0
          %7849 = vmatpush.msra.mxu0 0.0
          %7850 = vmatpush.msra.mxu0 0.0
          %7851 = vmatpush.msra.mxu0 0.0
          %7852 = vmatpush.msra.mxu0 0.0
          %7853 = vmatpush.msra.mxu0 0.0
          %7854 = vmatpush.msra.mxu0 0.0
          %7855 = vmatpush.msra.mxu0 %v4893
          %7856 = vmatpush.msra.mxu0 %v4781
          %7857 = vmatmul.f32.gmra.mxu0 %v7819
          %v7858 = vpop.f32.mrf.mxu0
          %v7859 = vadd.f32 0.0, %v7858
          %7860 = vdwg.mxu0
          %7861 = vmatpush.msra.mxu0 0.0
          %7862 = vmatpush.msra.mxu0 0.0
          %7863 = vmatpush.msra.mxu0 0.0
          %7864 = vmatpush.msra.mxu0 0.0
          %7865 = vmatpush.msra.mxu0 0.0
          %7866 = vmatpush.msra.mxu0 0.0
          %7867 = vmatpush.msra.mxu0 0.0
          %7868 = vmatpush.msra.mxu0 0.0
          %7869 = vmatpush.msra.mxu0 0.0
          %7870 = vmatpush.msra.mxu0 0.0
          %7871 = vmatpush.msra.mxu0 0.0
          %7872 = vmatpush.msra.mxu0 0.0
          %7873 = vmatpush.msra.mxu0 0.0
          %7874 = vmatpush.msra.mxu0 0.0
          %7875 = vmatpush.msra.mxu0 %v4895
          %7876 = vmatpush.msra.mxu0 %v4783
          %7877 = vmatmul.f32.gmra.mxu0 %v7819
          %v7878 = vpop.f32.mrf.mxu0
          %v7879 = vadd.f32 0.0, %v7878
          %7880 = vdwg.mxu0
          %7881 = vmatpush.msra.mxu0 0.0
          %7882 = vmatpush.msra.mxu0 0.0
          %7883 = vmatpush.msra.mxu0 0.0
          %7884 = vmatpush.msra.mxu0 0.0
          %7885 = vmatpush.msra.mxu0 0.0
          %7886 = vmatpush.msra.mxu0 0.0
          %7887 = vmatpush.msra.mxu0 0.0
          %7888 = vmatpush.msra.mxu0 0.0
          %7889 = vmatpush.msra.mxu0 0.0
          %7890 = vmatpush.msra.mxu0 0.0
          %7891 = vmatpush.msra.mxu0 0.0
          %7892 = vmatpush.msra.mxu0 0.0
          %7893 = vmatpush.msra.mxu0 0.0
          %7894 = vmatpush.msra.mxu0 0.0
          %7895 = vmatpush.msra.mxu0 %v4897
          %7896 = vmatpush.msra.mxu0 %v4785
          %7897 = vmatmul.f32.gmra.mxu0 %v7819
          %v7898 = vpop.f32.mrf.mxu0
          %v7899 = vadd.f32 0.0, %v7898
          %7900 = vdwg.mxu0
          %v7901 = vsel %vm6506, %v6498, 0
          %7903 = vmatpush.msra.mxu0 0.0
          %7904 = vmatpush.msra.mxu0 0.0
          %7905 = vmatpush.msra.mxu0 0.0
          %7906 = vmatpush.msra.mxu0 0.0
          %7907 = vmatpush.msra.mxu0 0.0
          %7908 = vmatpush.msra.mxu0 0.0
          %7909 = vmatpush.msra.mxu0 0.0
          %7910 = vmatpush.msra.mxu0 0.0
          %7911 = vmatpush.msra.mxu0 0.0
          %7912 = vmatpush.msra.mxu0 0.0
          %7913 = vmatpush.msra.mxu0 0.0
          %7914 = vmatpush.msra.mxu0 0.0
          %7915 = vmatpush.msra.mxu0 0.0
          %7916 = vmatpush.msra.mxu0 0.0
          %7917 = vmatpush.msra.mxu0 %v4899
          %7918 = vmatpush.msra.mxu0 %v4787
          %7919 = vmatmul.f32.gmra.mxu0 %v7901
          %v7920 = vpop.f32.mrf.mxu0
          %v7921 = vadd.f32 0.0, %v7920
          %7922 = vdwg.mxu0
          %7923 = vmatpush.msra.mxu0 0.0
          %7924 = vmatpush.msra.mxu0 0.0
          %7925 = vmatpush.msra.mxu0 0.0
          %7926 = vmatpush.msra.mxu0 0.0
          %7927 = vmatpush.msra.mxu0 0.0
          %7928 = vmatpush.msra.mxu0 0.0
          %7929 = vmatpush.msra.mxu0 0.0
          %7930 = vmatpush.msra.mxu0 0.0
          %7931 = vmatpush.msra.mxu0 0.0
          %7932 = vmatpush.msra.mxu0 0.0
          %7933 = vmatpush.msra.mxu0 0.0
          %7934 = vmatpush.msra.mxu0 0.0
          %7935 = vmatpush.msra.mxu0 0.0
          %7936 = vmatpush.msra.mxu0 0.0
          %7937 = vmatpush.msra.mxu0 %v4901
          %7938 = vmatpush.msra.mxu0 %v4789
          %7939 = vmatmul.f32.gmra.mxu0 %v7901
          %v7940 = vpop.f32.mrf.mxu0
          %v7941 = vadd.f32 0.0, %v7940
          %7942 = vdwg.mxu0
          %7943 = vmatpush.msra.mxu0 0.0
          %7944 = vmatpush.msra.mxu0 0.0
          %7945 = vmatpush.msra.mxu0 0.0
          %7946 = vmatpush.msra.mxu0 0.0
          %7947 = vmatpush.msra.mxu0 0.0
          %7948 = vmatpush.msra.mxu0 0.0
          %7949 = vmatpush.msra.mxu0 0.0
          %7950 = vmatpush.msra.mxu0 0.0
          %7951 = vmatpush.msra.mxu0 0.0
          %7952 = vmatpush.msra.mxu0 0.0
          %7953 = vmatpush.msra.mxu0 0.0
          %7954 = vmatpush.msra.mxu0 0.0
          %7955 = vmatpush.msra.mxu0 0.0
          %7956 = vmatpush.msra.mxu0 0.0
          %7957 = vmatpush.msra.mxu0 %v4903
          %7958 = vmatpush.msra.mxu0 %v4791
          %7959 = vmatmul.f32.gmra.mxu0 %v7901
          %v7960 = vpop.f32.mrf.mxu0
          %v7961 = vadd.f32 0.0, %v7960
          %7962 = vdwg.mxu0
          %7963 = vmatpush.msra.mxu0 0.0
          %7964 = vmatpush.msra.mxu0 0.0
          %7965 = vmatpush.msra.mxu0 0.0
          %7966 = vmatpush.msra.mxu0 0.0
          %7967 = vmatpush.msra.mxu0 0.0
          %7968 = vmatpush.msra.mxu0 0.0
          %7969 = vmatpush.msra.mxu0 0.0
          %7970 = vmatpush.msra.mxu0 0.0
          %7971 = vmatpush.msra.mxu0 0.0
          %7972 = vmatpush.msra.mxu0 0.0
          %7973 = vmatpush.msra.mxu0 0.0
          %7974 = vmatpush.msra.mxu0 0.0
          %7975 = vmatpush.msra.mxu0 0.0
          %7976 = vmatpush.msra.mxu0 0.0
          %7977 = vmatpush.msra.mxu0 %v4905
          %7978 = vmatpush.msra.mxu0 %v4793
          %7979 = vmatmul.f32.gmra.mxu0 %v7901
          %v7980 = vpop.f32.mrf.mxu0
          %v7981 = vadd.f32 0.0, %v7980
          %7982 = vdwg.mxu0
          %v7983 = vsel %vm6506, %v1745, 0
          %7985 = vmatpush.msra.mxu0 0.0
          %7986 = vmatpush.msra.mxu0 0.0
          %7987 = vmatpush.msra.mxu0 0.0
          %7988 = vmatpush.msra.mxu0 0.0
          %7989 = vmatpush.msra.mxu0 0.0
          %7990 = vmatpush.msra.mxu0 0.0
          %7991 = vmatpush.msra.mxu0 0.0
          %7992 = vmatpush.msra.mxu0 0.0
          %7993 = vmatpush.msra.mxu0 0.0
          %7994 = vmatpush.msra.mxu0 0.0
          %7995 = vmatpush.msra.mxu0 0.0
          %7996 = vmatpush.msra.mxu0 0.0
          %7997 = vmatpush.msra.mxu0 0.0
          %7998 = vmatpush.msra.mxu0 0.0
          %7999 = vmatpush.msra.mxu0 %v5115
          %8000 = vmatpush.msra.mxu0 %v5003
          %8001 = vmatmul.f32.gmra.mxu0 %v7983
          %v8002 = vpop.f32.mrf.mxu0
          %v8003 = vadd.f32 0.0, %v8002
          %8004 = vdwg.mxu0
          %8005 = vmatpush.msra.mxu0 0.0
          %8006 = vmatpush.msra.mxu0 0.0
          %8007 = vmatpush.msra.mxu0 0.0
          %8008 = vmatpush.msra.mxu0 0.0
          %8009 = vmatpush.msra.mxu0 0.0
          %8010 = vmatpush.msra.mxu0 0.0
          %8011 = vmatpush.msra.mxu0 0.0
          %8012 = vmatpush.msra.mxu0 0.0
          %8013 = vmatpush.msra.mxu0 0.0
          %8014 = vmatpush.msra.mxu0 0.0
          %8015 = vmatpush.msra.mxu0 0.0
          %8016 = vmatpush.msra.mxu0 0.0
          %8017 = vmatpush.msra.mxu0 0.0
          %8018 = vmatpush.msra.mxu0 0.0
          %8019 = vmatpush.msra.mxu0 %v5117
          %8020 = vmatpush.msra.mxu0 %v5005
          %8021 = vmatmul.f32.gmra.mxu0 %v7983
          %v8022 = vpop.f32.mrf.mxu0
          %v8023 = vadd.f32 0.0, %v8022
          %8024 = vdwg.mxu0
          %8025 = vmatpush.msra.mxu0 0.0
          %8026 = vmatpush.msra.mxu0 0.0
          %8027 = vmatpush.msra.mxu0 0.0
          %8028 = vmatpush.msra.mxu0 0.0
          %8029 = vmatpush.msra.mxu0 0.0
          %8030 = vmatpush.msra.mxu0 0.0
          %8031 = vmatpush.msra.mxu0 0.0
          %8032 = vmatpush.msra.mxu0 0.0
          %8033 = vmatpush.msra.mxu0 0.0
          %8034 = vmatpush.msra.mxu0 0.0
          %8035 = vmatpush.msra.mxu0 0.0
          %8036 = vmatpush.msra.mxu0 0.0
          %8037 = vmatpush.msra.mxu0 0.0
          %8038 = vmatpush.msra.mxu0 0.0
          %8039 = vmatpush.msra.mxu0 %v5119
          %8040 = vmatpush.msra.mxu0 %v5007
          %8041 = vmatmul.f32.gmra.mxu0 %v7983
          %v8042 = vpop.f32.mrf.mxu0
          %v8043 = vadd.f32 0.0, %v8042
          %8044 = vdwg.mxu0
          %8045 = vmatpush.msra.mxu0 0.0
          %8046 = vmatpush.msra.mxu0 0.0
          %8047 = vmatpush.msra.mxu0 0.0
          %8048 = vmatpush.msra.mxu0 0.0
          %8049 = vmatpush.msra.mxu0 0.0
          %8050 = vmatpush.msra.mxu0 0.0
          %8051 = vmatpush.msra.mxu0 0.0
          %8052 = vmatpush.msra.mxu0 0.0
          %8053 = vmatpush.msra.mxu0 0.0
          %8054 = vmatpush.msra.mxu0 0.0
          %8055 = vmatpush.msra.mxu0 0.0
          %8056 = vmatpush.msra.mxu0 0.0
          %8057 = vmatpush.msra.mxu0 0.0
          %8058 = vmatpush.msra.mxu0 0.0
          %8059 = vmatpush.msra.mxu0 %v5121
          %8060 = vmatpush.msra.mxu0 %v5009
          %8061 = vmatmul.f32.gmra.mxu0 %v7983
          %v8062 = vpop.f32.mrf.mxu0
          %v8063 = vadd.f32 0.0, %v8062
          %8064 = vdwg.mxu0
          %v8065 = vsel %vm6506, %v6499, 0
          %8067 = vmatpush.msra.mxu0 0.0
          %8068 = vmatpush.msra.mxu0 0.0
          %8069 = vmatpush.msra.mxu0 0.0
          %8070 = vmatpush.msra.mxu0 0.0
          %8071 = vmatpush.msra.mxu0 0.0
          %8072 = vmatpush.msra.mxu0 0.0
          %8073 = vmatpush.msra.mxu0 0.0
          %8074 = vmatpush.msra.mxu0 0.0
          %8075 = vmatpush.msra.mxu0 0.0
          %8076 = vmatpush.msra.mxu0 0.0
          %8077 = vmatpush.msra.mxu0 0.0
          %8078 = vmatpush.msra.mxu0 0.0
          %8079 = vmatpush.msra.mxu0 0.0
          %8080 = vmatpush.msra.mxu0 0.0
          %8081 = vmatpush.msra.mxu0 %v5123
          %8082 = vmatpush.msra.mxu0 %v5011
          %8083 = vmatmul.f32.gmra.mxu0 %v8065
          %v8084 = vpop.f32.mrf.mxu0
          %v8085 = vadd.f32 0.0, %v8084
          %8086 = vdwg.mxu0
          %8087 = vmatpush.msra.mxu0 0.0
          %8088 = vmatpush.msra.mxu0 0.0
          %8089 = vmatpush.msra.mxu0 0.0
          %8090 = vmatpush.msra.mxu0 0.0
          %8091 = vmatpush.msra.mxu0 0.0
          %8092 = vmatpush.msra.mxu0 0.0
          %8093 = vmatpush.msra.mxu0 0.0
          %8094 = vmatpush.msra.mxu0 0.0
          %8095 = vmatpush.msra.mxu0 0.0
          %8096 = vmatpush.msra.mxu0 0.0
          %8097 = vmatpush.msra.mxu0 0.0
          %8098 = vmatpush.msra.mxu0 0.0
          %8099 = vmatpush.msra.mxu0 0.0
          %8100 = vmatpush.msra.mxu0 0.0
          %8101 = vmatpush.msra.mxu0 %v5125
          %8102 = vmatpush.msra.mxu0 %v5013
          %8103 = vmatmul.f32.gmra.mxu0 %v8065
          %v8104 = vpop.f32.mrf.mxu0
          %v8105 = vadd.f32 0.0, %v8104
          %8106 = vdwg.mxu0
          %8107 = vmatpush.msra.mxu0 0.0
          %8108 = vmatpush.msra.mxu0 0.0
          %8109 = vmatpush.msra.mxu0 0.0
          %8110 = vmatpush.msra.mxu0 0.0
          %8111 = vmatpush.msra.mxu0 0.0
          %8112 = vmatpush.msra.mxu0 0.0
          %8113 = vmatpush.msra.mxu0 0.0
          %8114 = vmatpush.msra.mxu0 0.0
          %8115 = vmatpush.msra.mxu0 0.0
          %8116 = vmatpush.msra.mxu0 0.0
          %8117 = vmatpush.msra.mxu0 0.0
          %8118 = vmatpush.msra.mxu0 0.0
          %8119 = vmatpush.msra.mxu0 0.0
          %8120 = vmatpush.msra.mxu0 0.0
          %8121 = vmatpush.msra.mxu0 %v5127
          %8122 = vmatpush.msra.mxu0 %v5015
          %8123 = vmatmul.f32.gmra.mxu0 %v8065
          %v8124 = vpop.f32.mrf.mxu0
          %v8125 = vadd.f32 0.0, %v8124
          %8126 = vdwg.mxu0
          %8127 = vmatpush.msra.mxu0 0.0
          %8128 = vmatpush.msra.mxu0 0.0
          %8129 = vmatpush.msra.mxu0 0.0
          %8130 = vmatpush.msra.mxu0 0.0
          %8131 = vmatpush.msra.mxu0 0.0
          %8132 = vmatpush.msra.mxu0 0.0
          %8133 = vmatpush.msra.mxu0 0.0
          %8134 = vmatpush.msra.mxu0 0.0
          %8135 = vmatpush.msra.mxu0 0.0
          %8136 = vmatpush.msra.mxu0 0.0
          %8137 = vmatpush.msra.mxu0 0.0
          %8138 = vmatpush.msra.mxu0 0.0
          %8139 = vmatpush.msra.mxu0 0.0
          %8140 = vmatpush.msra.mxu0 0.0
          %8141 = vmatpush.msra.mxu0 %v5129
          %8142 = vmatpush.msra.mxu0 %v5017
          %8143 = vmatmul.f32.gmra.mxu0 %v8065
          %v8144 = vpop.f32.mrf.mxu0
          %v8145 = vadd.f32 0.0, %v8144
          %8146 = vdwg.mxu0
          %v8147 = vsel %vm6506, %v1746, 0
          %8149 = vmatpush.msra.mxu0 0.0
          %8150 = vmatpush.msra.mxu0 0.0
          %8151 = vmatpush.msra.mxu0 0.0
          %8152 = vmatpush.msra.mxu0 0.0
          %8153 = vmatpush.msra.mxu0 0.0
          %8154 = vmatpush.msra.mxu0 0.0
          %8155 = vmatpush.msra.mxu0 0.0
          %8156 = vmatpush.msra.mxu0 0.0
          %8157 = vmatpush.msra.mxu0 0.0
          %8158 = vmatpush.msra.mxu0 0.0
          %8159 = vmatpush.msra.mxu0 0.0
          %8160 = vmatpush.msra.mxu0 0.0
          %8161 = vmatpush.msra.mxu0 0.0
          %8162 = vmatpush.msra.mxu0 0.0
          %8163 = vmatpush.msra.mxu0 %v5339
          %8164 = vmatpush.msra.mxu0 %v5227
          %8165 = vmatmul.f32.gmra.mxu0 %v8147
          %v8166 = vpop.f32.mrf.mxu0
          %v8167 = vadd.f32 0.0, %v8166
          %8168 = vdwg.mxu0
          %8169 = vmatpush.msra.mxu0 0.0
          %8170 = vmatpush.msra.mxu0 0.0
          %8171 = vmatpush.msra.mxu0 0.0
          %8172 = vmatpush.msra.mxu0 0.0
          %8173 = vmatpush.msra.mxu0 0.0
          %8174 = vmatpush.msra.mxu0 0.0
          %8175 = vmatpush.msra.mxu0 0.0
          %8176 = vmatpush.msra.mxu0 0.0
          %8177 = vmatpush.msra.mxu0 0.0
          %8178 = vmatpush.msra.mxu0 0.0
          %8179 = vmatpush.msra.mxu0 0.0
          %8180 = vmatpush.msra.mxu0 0.0
          %8181 = vmatpush.msra.mxu0 0.0
          %8182 = vmatpush.msra.mxu0 0.0
          %8183 = vmatpush.msra.mxu0 %v5341
          %8184 = vmatpush.msra.mxu0 %v5229
          %8185 = vmatmul.f32.gmra.mxu0 %v8147
          %v8186 = vpop.f32.mrf.mxu0
          %v8187 = vadd.f32 0.0, %v8186
          %8188 = vdwg.mxu0
          %8189 = vmatpush.msra.mxu0 0.0
          %8190 = vmatpush.msra.mxu0 0.0
          %8191 = vmatpush.msra.mxu0 0.0
          %8192 = vmatpush.msra.mxu0 0.0
          %8193 = vmatpush.msra.mxu0 0.0
          %8194 = vmatpush.msra.mxu0 0.0
          %8195 = vmatpush.msra.mxu0 0.0
          %8196 = vmatpush.msra.mxu0 0.0
          %8197 = vmatpush.msra.mxu0 0.0
          %8198 = vmatpush.msra.mxu0 0.0
          %8199 = vmatpush.msra.mxu0 0.0
          %8200 = vmatpush.msra.mxu0 0.0
          %8201 = vmatpush.msra.mxu0 0.0
          %8202 = vmatpush.msra.mxu0 0.0
          %8203 = vmatpush.msra.mxu0 %v5343
          %8204 = vmatpush.msra.mxu0 %v5231
          %8205 = vmatmul.f32.gmra.mxu0 %v8147
          %v8206 = vpop.f32.mrf.mxu0
          %v8207 = vadd.f32 0.0, %v8206
          %8208 = vdwg.mxu0
          %8209 = vmatpush.msra.mxu0 0.0
          %8210 = vmatpush.msra.mxu0 0.0
          %8211 = vmatpush.msra.mxu0 0.0
          %8212 = vmatpush.msra.mxu0 0.0
          %8213 = vmatpush.msra.mxu0 0.0
          %8214 = vmatpush.msra.mxu0 0.0
          %8215 = vmatpush.msra.mxu0 0.0
          %8216 = vmatpush.msra.mxu0 0.0
          %8217 = vmatpush.msra.mxu0 0.0
          %8218 = vmatpush.msra.mxu0 0.0
          %8219 = vmatpush.msra.mxu0 0.0
          %8220 = vmatpush.msra.mxu0 0.0
          %8221 = vmatpush.msra.mxu0 0.0
          %8222 = vmatpush.msra.mxu0 0.0
          %8223 = vmatpush.msra.mxu0 %v5345
          %8224 = vmatpush.msra.mxu0 %v5233
          %8225 = vmatmul.f32.gmra.mxu0 %v8147
          %v8226 = vpop.f32.mrf.mxu0
          %v8227 = vadd.f32 0.0, %v8226
          %8228 = vdwg.mxu0
          %v8229 = vsel %vm6506, %v6500, 0
          %8231 = vmatpush.msra.mxu0 0.0
          %8232 = vmatpush.msra.mxu0 0.0
          %8233 = vmatpush.msra.mxu0 0.0
          %8234 = vmatpush.msra.mxu0 0.0
          %8235 = vmatpush.msra.mxu0 0.0
          %8236 = vmatpush.msra.mxu0 0.0
          %8237 = vmatpush.msra.mxu0 0.0
          %8238 = vmatpush.msra.mxu0 0.0
          %8239 = vmatpush.msra.mxu0 0.0
          %8240 = vmatpush.msra.mxu0 0.0
          %8241 = vmatpush.msra.mxu0 0.0
          %8242 = vmatpush.msra.mxu0 0.0
          %8243 = vmatpush.msra.mxu0 0.0
          %8244 = vmatpush.msra.mxu0 0.0
          %8245 = vmatpush.msra.mxu0 %v5347
          %8246 = vmatpush.msra.mxu0 %v5235
          %8247 = vmatmul.f32.gmra.mxu0 %v8229
          %v8248 = vpop.f32.mrf.mxu0
          %v8249 = vadd.f32 0.0, %v8248
          %8250 = vdwg.mxu0
          %8251 = vmatpush.msra.mxu0 0.0
          %8252 = vmatpush.msra.mxu0 0.0
          %8253 = vmatpush.msra.mxu0 0.0
          %8254 = vmatpush.msra.mxu0 0.0
          %8255 = vmatpush.msra.mxu0 0.0
          %8256 = vmatpush.msra.mxu0 0.0
          %8257 = vmatpush.msra.mxu0 0.0
          %8258 = vmatpush.msra.mxu0 0.0
          %8259 = vmatpush.msra.mxu0 0.0
          %8260 = vmatpush.msra.mxu0 0.0
          %8261 = vmatpush.msra.mxu0 0.0
          %8262 = vmatpush.msra.mxu0 0.0
          %8263 = vmatpush.msra.mxu0 0.0
          %8264 = vmatpush.msra.mxu0 0.0
          %8265 = vmatpush.msra.mxu0 %v5349
          %8266 = vmatpush.msra.mxu0 %v5237
          %8267 = vmatmul.f32.gmra.mxu0 %v8229
          %v8268 = vpop.f32.mrf.mxu0
          %v8269 = vadd.f32 0.0, %v8268
          %8270 = vdwg.mxu0
          %8271 = vmatpush.msra.mxu0 0.0
          %8272 = vmatpush.msra.mxu0 0.0
          %8273 = vmatpush.msra.mxu0 0.0
          %8274 = vmatpush.msra.mxu0 0.0
          %8275 = vmatpush.msra.mxu0 0.0
          %8276 = vmatpush.msra.mxu0 0.0
          %8277 = vmatpush.msra.mxu0 0.0
          %8278 = vmatpush.msra.mxu0 0.0
          %8279 = vmatpush.msra.mxu0 0.0
          %8280 = vmatpush.msra.mxu0 0.0
          %8281 = vmatpush.msra.mxu0 0.0
          %8282 = vmatpush.msra.mxu0 0.0
          %8283 = vmatpush.msra.mxu0 0.0
          %8284 = vmatpush.msra.mxu0 0.0
          %8285 = vmatpush.msra.mxu0 %v5351
          %8286 = vmatpush.msra.mxu0 %v5239
          %8287 = vmatmul.f32.gmra.mxu0 %v8229
          %v8288 = vpop.f32.mrf.mxu0
          %v8289 = vadd.f32 0.0, %v8288
          %8290 = vdwg.mxu0
          %8291 = vmatpush.msra.mxu0 0.0
          %8292 = vmatpush.msra.mxu0 0.0
          %8293 = vmatpush.msra.mxu0 0.0
          %8294 = vmatpush.msra.mxu0 0.0
          %8295 = vmatpush.msra.mxu0 0.0
          %8296 = vmatpush.msra.mxu0 0.0
          %8297 = vmatpush.msra.mxu0 0.0
          %8298 = vmatpush.msra.mxu0 0.0
          %8299 = vmatpush.msra.mxu0 0.0
          %8300 = vmatpush.msra.mxu0 0.0
          %8301 = vmatpush.msra.mxu0 0.0
          %8302 = vmatpush.msra.mxu0 0.0
          %8303 = vmatpush.msra.mxu0 0.0
          %8304 = vmatpush.msra.mxu0 0.0
          %8305 = vmatpush.msra.mxu0 %v5353
          %8306 = vmatpush.msra.mxu0 %v5241
          %8307 = vmatmul.f32.gmra.mxu0 %v8229
          %v8308 = vpop.f32.mrf.mxu0
          %v8309 = vadd.f32 0.0, %v8308
          %8310 = vdwg.mxu0
          %v8311 = vsel %vm6506, %v1747, 0
          %8313 = vmatpush.msra.mxu0 0.0
          %8314 = vmatpush.msra.mxu0 0.0
          %8315 = vmatpush.msra.mxu0 0.0
          %8316 = vmatpush.msra.mxu0 0.0
          %8317 = vmatpush.msra.mxu0 0.0
          %8318 = vmatpush.msra.mxu0 0.0
          %8319 = vmatpush.msra.mxu0 0.0
          %8320 = vmatpush.msra.mxu0 0.0
          %8321 = vmatpush.msra.mxu0 0.0
          %8322 = vmatpush.msra.mxu0 0.0
          %8323 = vmatpush.msra.mxu0 0.0
          %8324 = vmatpush.msra.mxu0 0.0
          %8325 = vmatpush.msra.mxu0 0.0
          %8326 = vmatpush.msra.mxu0 0.0
          %8327 = vmatpush.msra.mxu0 %v5563
          %8328 = vmatpush.msra.mxu0 %v5451
          %8329 = vmatmul.f32.gmra.mxu0 %v8311
          %v8330 = vpop.f32.mrf.mxu0
          %v8331 = vadd.f32 0.0, %v8330
          %8332 = vdwg.mxu0
          %8333 = vmatpush.msra.mxu0 0.0
          %8334 = vmatpush.msra.mxu0 0.0
          %8335 = vmatpush.msra.mxu0 0.0
          %8336 = vmatpush.msra.mxu0 0.0
          %8337 = vmatpush.msra.mxu0 0.0
          %8338 = vmatpush.msra.mxu0 0.0
          %8339 = vmatpush.msra.mxu0 0.0
          %8340 = vmatpush.msra.mxu0 0.0
          %8341 = vmatpush.msra.mxu0 0.0
          %8342 = vmatpush.msra.mxu0 0.0
          %8343 = vmatpush.msra.mxu0 0.0
          %8344 = vmatpush.msra.mxu0 0.0
          %8345 = vmatpush.msra.mxu0 0.0
          %8346 = vmatpush.msra.mxu0 0.0
          %8347 = vmatpush.msra.mxu0 %v5565
          %8348 = vmatpush.msra.mxu0 %v5453
          %8349 = vmatmul.f32.gmra.mxu0 %v8311
          %v8350 = vpop.f32.mrf.mxu0
          %v8351 = vadd.f32 0.0, %v8350
          %8352 = vdwg.mxu0
          %8353 = vmatpush.msra.mxu0 0.0
          %8354 = vmatpush.msra.mxu0 0.0
          %8355 = vmatpush.msra.mxu0 0.0
          %8356 = vmatpush.msra.mxu0 0.0
          %8357 = vmatpush.msra.mxu0 0.0
          %8358 = vmatpush.msra.mxu0 0.0
          %8359 = vmatpush.msra.mxu0 0.0
          %8360 = vmatpush.msra.mxu0 0.0
          %8361 = vmatpush.msra.mxu0 0.0
          %8362 = vmatpush.msra.mxu0 0.0
          %8363 = vmatpush.msra.mxu0 0.0
          %8364 = vmatpush.msra.mxu0 0.0
          %8365 = vmatpush.msra.mxu0 0.0
          %8366 = vmatpush.msra.mxu0 0.0
          %8367 = vmatpush.msra.mxu0 %v5567
          %8368 = vmatpush.msra.mxu0 %v5455
          %8369 = vmatmul.f32.gmra.mxu0 %v8311
          %v8370 = vpop.f32.mrf.mxu0
          %v8371 = vadd.f32 0.0, %v8370
          %8372 = vdwg.mxu0
          %8373 = vmatpush.msra.mxu0 0.0
          %8374 = vmatpush.msra.mxu0 0.0
          %8375 = vmatpush.msra.mxu0 0.0
          %8376 = vmatpush.msra.mxu0 0.0
          %8377 = vmatpush.msra.mxu0 0.0
          %8378 = vmatpush.msra.mxu0 0.0
          %8379 = vmatpush.msra.mxu0 0.0
          %8380 = vmatpush.msra.mxu0 0.0
          %8381 = vmatpush.msra.mxu0 0.0
          %8382 = vmatpush.msra.mxu0 0.0
          %8383 = vmatpush.msra.mxu0 0.0
          %8384 = vmatpush.msra.mxu0 0.0
          %8385 = vmatpush.msra.mxu0 0.0
          %8386 = vmatpush.msra.mxu0 0.0
          %8387 = vmatpush.msra.mxu0 %v5569
          %8388 = vmatpush.msra.mxu0 %v5457
          %8389 = vmatmul.f32.gmra.mxu0 %v8311
          %v8390 = vpop.f32.mrf.mxu0
          %v8391 = vadd.f32 0.0, %v8390
          %8392 = vdwg.mxu0
          %v8393 = vsel %vm6506, %v6501, 0
          %8395 = vmatpush.msra.mxu0 0.0
          %8396 = vmatpush.msra.mxu0 0.0
          %8397 = vmatpush.msra.mxu0 0.0
          %8398 = vmatpush.msra.mxu0 0.0
          %8399 = vmatpush.msra.mxu0 0.0
          %8400 = vmatpush.msra.mxu0 0.0
          %8401 = vmatpush.msra.mxu0 0.0
          %8402 = vmatpush.msra.mxu0 0.0
          %8403 = vmatpush.msra.mxu0 0.0
          %8404 = vmatpush.msra.mxu0 0.0
          %8405 = vmatpush.msra.mxu0 0.0
          %8406 = vmatpush.msra.mxu0 0.0
          %8407 = vmatpush.msra.mxu0 0.0
          %8408 = vmatpush.msra.mxu0 0.0
          %8409 = vmatpush.msra.mxu0 %v5571
          %8410 = vmatpush.msra.mxu0 %v5459
          %8411 = vmatmul.f32.gmra.mxu0 %v8393
          %v8412 = vpop.f32.mrf.mxu0
          %v8413 = vadd.f32 0.0, %v8412
          %8414 = vdwg.mxu0
          %8415 = vmatpush.msra.mxu0 0.0
          %8416 = vmatpush.msra.mxu0 0.0
          %8417 = vmatpush.msra.mxu0 0.0
          %8418 = vmatpush.msra.mxu0 0.0
          %8419 = vmatpush.msra.mxu0 0.0
          %8420 = vmatpush.msra.mxu0 0.0
          %8421 = vmatpush.msra.mxu0 0.0
          %8422 = vmatpush.msra.mxu0 0.0
          %8423 = vmatpush.msra.mxu0 0.0
          %8424 = vmatpush.msra.mxu0 0.0
          %8425 = vmatpush.msra.mxu0 0.0
          %8426 = vmatpush.msra.mxu0 0.0
          %8427 = vmatpush.msra.mxu0 0.0
          %8428 = vmatpush.msra.mxu0 0.0
          %8429 = vmatpush.msra.mxu0 %v5573
          %8430 = vmatpush.msra.mxu0 %v5461
          %8431 = vmatmul.f32.gmra.mxu0 %v8393
          %v8432 = vpop.f32.mrf.mxu0
          %v8433 = vadd.f32 0.0, %v8432
          %8434 = vdwg.mxu0
          %8435 = vmatpush.msra.mxu0 0.0
          %8436 = vmatpush.msra.mxu0 0.0
          %8437 = vmatpush.msra.mxu0 0.0
          %8438 = vmatpush.msra.mxu0 0.0
          %8439 = vmatpush.msra.mxu0 0.0
          %8440 = vmatpush.msra.mxu0 0.0
          %8441 = vmatpush.msra.mxu0 0.0
          %8442 = vmatpush.msra.mxu0 0.0
          %8443 = vmatpush.msra.mxu0 0.0
          %8444 = vmatpush.msra.mxu0 0.0
          %8445 = vmatpush.msra.mxu0 0.0
          %8446 = vmatpush.msra.mxu0 0.0
          %8447 = vmatpush.msra.mxu0 0.0
          %8448 = vmatpush.msra.mxu0 0.0
          %8449 = vmatpush.msra.mxu0 %v5575
          %8450 = vmatpush.msra.mxu0 %v5463
          %8451 = vmatmul.f32.gmra.mxu0 %v8393
          %v8452 = vpop.f32.mrf.mxu0
          %v8453 = vadd.f32 0.0, %v8452
          %8454 = vdwg.mxu0
          %8455 = vmatpush.msra.mxu0 0.0
          %8456 = vmatpush.msra.mxu0 0.0
          %8457 = vmatpush.msra.mxu0 0.0
          %8458 = vmatpush.msra.mxu0 0.0
          %8459 = vmatpush.msra.mxu0 0.0
          %8460 = vmatpush.msra.mxu0 0.0
          %8461 = vmatpush.msra.mxu0 0.0
          %8462 = vmatpush.msra.mxu0 0.0
          %8463 = vmatpush.msra.mxu0 0.0
          %8464 = vmatpush.msra.mxu0 0.0
          %8465 = vmatpush.msra.mxu0 0.0
          %8466 = vmatpush.msra.mxu0 0.0
          %8467 = vmatpush.msra.mxu0 0.0
          %8468 = vmatpush.msra.mxu0 0.0
          %8469 = vmatpush.msra.mxu0 %v5577
          %8470 = vmatpush.msra.mxu0 %v5465
          %8471 = vmatmul.f32.gmra.mxu0 %v8393
          %v8472 = vpop.f32.mrf.mxu0
          %v8473 = vadd.f32 0.0, %v8472
          %8474 = vdwg.mxu0
          %v8475 = vsel %vm6506, %v1748, 0
          %8477 = vmatpush.msra.mxu0 0.0
          %8478 = vmatpush.msra.mxu0 0.0
          %8479 = vmatpush.msra.mxu0 0.0
          %8480 = vmatpush.msra.mxu0 0.0
          %8481 = vmatpush.msra.mxu0 0.0
          %8482 = vmatpush.msra.mxu0 0.0
          %8483 = vmatpush.msra.mxu0 0.0
          %8484 = vmatpush.msra.mxu0 0.0
          %8485 = vmatpush.msra.mxu0 0.0
          %8486 = vmatpush.msra.mxu0 0.0
          %8487 = vmatpush.msra.mxu0 0.0
          %8488 = vmatpush.msra.mxu0 0.0
          %8489 = vmatpush.msra.mxu0 0.0
          %8490 = vmatpush.msra.mxu0 0.0
          %8491 = vmatpush.msra.mxu0 %v5787
          %8492 = vmatpush.msra.mxu0 %v5675
          %8493 = vmatmul.f32.gmra.mxu0 %v8475
          %v8494 = vpop.f32.mrf.mxu0
          %v8495 = vadd.f32 0.0, %v8494
          %8496 = vdwg.mxu0
          %8497 = vmatpush.msra.mxu0 0.0
          %8498 = vmatpush.msra.mxu0 0.0
          %8499 = vmatpush.msra.mxu0 0.0
          %8500 = vmatpush.msra.mxu0 0.0
          %8501 = vmatpush.msra.mxu0 0.0
          %8502 = vmatpush.msra.mxu0 0.0
          %8503 = vmatpush.msra.mxu0 0.0
          %8504 = vmatpush.msra.mxu0 0.0
          %8505 = vmatpush.msra.mxu0 0.0
          %8506 = vmatpush.msra.mxu0 0.0
          %8507 = vmatpush.msra.mxu0 0.0
          %8508 = vmatpush.msra.mxu0 0.0
          %8509 = vmatpush.msra.mxu0 0.0
          %8510 = vmatpush.msra.mxu0 0.0
          %8511 = vmatpush.msra.mxu0 %v5789
          %8512 = vmatpush.msra.mxu0 %v5677
          %8513 = vmatmul.f32.gmra.mxu0 %v8475
          %v8514 = vpop.f32.mrf.mxu0
          %v8515 = vadd.f32 0.0, %v8514
          %8516 = vdwg.mxu0
          %8517 = vmatpush.msra.mxu0 0.0
          %8518 = vmatpush.msra.mxu0 0.0
          %8519 = vmatpush.msra.mxu0 0.0
          %8520 = vmatpush.msra.mxu0 0.0
          %8521 = vmatpush.msra.mxu0 0.0
          %8522 = vmatpush.msra.mxu0 0.0
          %8523 = vmatpush.msra.mxu0 0.0
          %8524 = vmatpush.msra.mxu0 0.0
          %8525 = vmatpush.msra.mxu0 0.0
          %8526 = vmatpush.msra.mxu0 0.0
          %8527 = vmatpush.msra.mxu0 0.0
          %8528 = vmatpush.msra.mxu0 0.0
          %8529 = vmatpush.msra.mxu0 0.0
          %8530 = vmatpush.msra.mxu0 0.0
          %8531 = vmatpush.msra.mxu0 %v5791
          %8532 = vmatpush.msra.mxu0 %v5679
          %8533 = vmatmul.f32.gmra.mxu0 %v8475
          %v8534 = vpop.f32.mrf.mxu0
          %v8535 = vadd.f32 0.0, %v8534
          %8536 = vdwg.mxu0
          %8537 = vmatpush.msra.mxu0 0.0
          %8538 = vmatpush.msra.mxu0 0.0
          %8539 = vmatpush.msra.mxu0 0.0
          %8540 = vmatpush.msra.mxu0 0.0
          %8541 = vmatpush.msra.mxu0 0.0
          %8542 = vmatpush.msra.mxu0 0.0
          %8543 = vmatpush.msra.mxu0 0.0
          %8544 = vmatpush.msra.mxu0 0.0
          %8545 = vmatpush.msra.mxu0 0.0
          %8546 = vmatpush.msra.mxu0 0.0
          %8547 = vmatpush.msra.mxu0 0.0
          %8548 = vmatpush.msra.mxu0 0.0
          %8549 = vmatpush.msra.mxu0 0.0
          %8550 = vmatpush.msra.mxu0 0.0
          %8551 = vmatpush.msra.mxu0 %v5793
          %8552 = vmatpush.msra.mxu0 %v5681
          %8553 = vmatmul.f32.gmra.mxu0 %v8475
          %v8554 = vpop.f32.mrf.mxu0
          %v8555 = vadd.f32 0.0, %v8554
          %8556 = vdwg.mxu0
          %v8557 = vsel %vm6506, %v6502, 0
          %8559 = vmatpush.msra.mxu0 0.0
          %8560 = vmatpush.msra.mxu0 0.0
          %8561 = vmatpush.msra.mxu0 0.0
          %8562 = vmatpush.msra.mxu0 0.0
          %8563 = vmatpush.msra.mxu0 0.0
          %8564 = vmatpush.msra.mxu0 0.0
          %8565 = vmatpush.msra.mxu0 0.0
          %8566 = vmatpush.msra.mxu0 0.0
          %8567 = vmatpush.msra.mxu0 0.0
          %8568 = vmatpush.msra.mxu0 0.0
          %8569 = vmatpush.msra.mxu0 0.0
          %8570 = vmatpush.msra.mxu0 0.0
          %8571 = vmatpush.msra.mxu0 0.0
          %8572 = vmatpush.msra.mxu0 0.0
          %8573 = vmatpush.msra.mxu0 %v5795
          %8574 = vmatpush.msra.mxu0 %v5683
          %8575 = vmatmul.f32.gmra.mxu0 %v8557
          %v8576 = vpop.f32.mrf.mxu0
          %v8577 = vadd.f32 0.0, %v8576
          %8578 = vdwg.mxu0
          %8579 = vmatpush.msra.mxu0 0.0
          %8580 = vmatpush.msra.mxu0 0.0
          %8581 = vmatpush.msra.mxu0 0.0
          %8582 = vmatpush.msra.mxu0 0.0
          %8583 = vmatpush.msra.mxu0 0.0
          %8584 = vmatpush.msra.mxu0 0.0
          %8585 = vmatpush.msra.mxu0 0.0
          %8586 = vmatpush.msra.mxu0 0.0
          %8587 = vmatpush.msra.mxu0 0.0
          %8588 = vmatpush.msra.mxu0 0.0
          %8589 = vmatpush.msra.mxu0 0.0
          %8590 = vmatpush.msra.mxu0 0.0
          %8591 = vmatpush.msra.mxu0 0.0
          %8592 = vmatpush.msra.mxu0 0.0
          %8593 = vmatpush.msra.mxu0 %v5797
          %8594 = vmatpush.msra.mxu0 %v5685
          %8595 = vmatmul.f32.gmra.mxu0 %v8557
          %v8596 = vpop.f32.mrf.mxu0
          %v8597 = vadd.f32 0.0, %v8596
          %8598 = vdwg.mxu0
          %8599 = vmatpush.msra.mxu0 0.0
          %8600 = vmatpush.msra.mxu0 0.0
          %8601 = vmatpush.msra.mxu0 0.0
          %8602 = vmatpush.msra.mxu0 0.0
          %8603 = vmatpush.msra.mxu0 0.0
          %8604 = vmatpush.msra.mxu0 0.0
          %8605 = vmatpush.msra.mxu0 0.0
          %8606 = vmatpush.msra.mxu0 0.0
          %8607 = vmatpush.msra.mxu0 0.0
          %8608 = vmatpush.msra.mxu0 0.0
          %8609 = vmatpush.msra.mxu0 0.0
          %8610 = vmatpush.msra.mxu0 0.0
          %8611 = vmatpush.msra.mxu0 0.0
          %8612 = vmatpush.msra.mxu0 0.0
          %8613 = vmatpush.msra.mxu0 %v5799
          %8614 = vmatpush.msra.mxu0 %v5687
          %8615 = vmatmul.f32.gmra.mxu0 %v8557
          %v8616 = vpop.f32.mrf.mxu0
          %v8617 = vadd.f32 0.0, %v8616
          %8618 = vdwg.mxu0
          %8619 = vmatpush.msra.mxu0 0.0
          %8620 = vmatpush.msra.mxu0 0.0
          %8621 = vmatpush.msra.mxu0 0.0
          %8622 = vmatpush.msra.mxu0 0.0
          %8623 = vmatpush.msra.mxu0 0.0
          %8624 = vmatpush.msra.mxu0 0.0
          %8625 = vmatpush.msra.mxu0 0.0
          %8626 = vmatpush.msra.mxu0 0.0
          %8627 = vmatpush.msra.mxu0 0.0
          %8628 = vmatpush.msra.mxu0 0.0
          %8629 = vmatpush.msra.mxu0 0.0
          %8630 = vmatpush.msra.mxu0 0.0
          %8631 = vmatpush.msra.mxu0 0.0
          %8632 = vmatpush.msra.mxu0 0.0
          %8633 = vmatpush.msra.mxu0 %v5801
          %8634 = vmatpush.msra.mxu0 %v5689
          %8635 = vmatmul.f32.gmra.mxu0 %v8557
          %v8636 = vpop.f32.mrf.mxu0
          %v8637 = vadd.f32 0.0, %v8636
          %8638 = vdwg.mxu0
          %v8639 = vsel %vm6506, %v1749, 0
          %8641 = vmatpush.msra.mxu0 0.0
          %8642 = vmatpush.msra.mxu0 0.0
          %8643 = vmatpush.msra.mxu0 0.0
          %8644 = vmatpush.msra.mxu0 0.0
          %8645 = vmatpush.msra.mxu0 0.0
          %8646 = vmatpush.msra.mxu0 0.0
          %8647 = vmatpush.msra.mxu0 0.0
          %8648 = vmatpush.msra.mxu0 0.0
          %8649 = vmatpush.msra.mxu0 0.0
          %8650 = vmatpush.msra.mxu0 0.0
          %8651 = vmatpush.msra.mxu0 0.0
          %8652 = vmatpush.msra.mxu0 0.0
          %8653 = vmatpush.msra.mxu0 0.0
          %8654 = vmatpush.msra.mxu0 0.0
          %8655 = vmatpush.msra.mxu0 %v6011
          %8656 = vmatpush.msra.mxu0 %v5899
          %8657 = vmatmul.f32.gmra.mxu0 %v8639
          %v8658 = vpop.f32.mrf.mxu0
          %v8659 = vadd.f32 0.0, %v8658
          %8660 = vdwg.mxu0
          %8661 = vmatpush.msra.mxu0 0.0
          %8662 = vmatpush.msra.mxu0 0.0
          %8663 = vmatpush.msra.mxu0 0.0
          %8664 = vmatpush.msra.mxu0 0.0
          %8665 = vmatpush.msra.mxu0 0.0
          %8666 = vmatpush.msra.mxu0 0.0
          %8667 = vmatpush.msra.mxu0 0.0
          %8668 = vmatpush.msra.mxu0 0.0
          %8669 = vmatpush.msra.mxu0 0.0
          %8670 = vmatpush.msra.mxu0 0.0
          %8671 = vmatpush.msra.mxu0 0.0
          %8672 = vmatpush.msra.mxu0 0.0
          %8673 = vmatpush.msra.mxu0 0.0
          %8674 = vmatpush.msra.mxu0 0.0
          %8675 = vmatpush.msra.mxu0 %v6013
          %8676 = vmatpush.msra.mxu0 %v5901
          %8677 = vmatmul.f32.gmra.mxu0 %v8639
          %v8678 = vpop.f32.mrf.mxu0
          %v8679 = vadd.f32 0.0, %v8678
          %8680 = vdwg.mxu0
          %8681 = vmatpush.msra.mxu0 0.0
          %8682 = vmatpush.msra.mxu0 0.0
          %8683 = vmatpush.msra.mxu0 0.0
          %8684 = vmatpush.msra.mxu0 0.0
          %8685 = vmatpush.msra.mxu0 0.0
          %8686 = vmatpush.msra.mxu0 0.0
          %8687 = vmatpush.msra.mxu0 0.0
          %8688 = vmatpush.msra.mxu0 0.0
          %8689 = vmatpush.msra.mxu0 0.0
          %8690 = vmatpush.msra.mxu0 0.0
          %8691 = vmatpush.msra.mxu0 0.0
          %8692 = vmatpush.msra.mxu0 0.0
          %8693 = vmatpush.msra.mxu0 0.0
          %8694 = vmatpush.msra.mxu0 0.0
          %8695 = vmatpush.msra.mxu0 %v6015
          %8696 = vmatpush.msra.mxu0 %v5903
          %8697 = vmatmul.f32.gmra.mxu0 %v8639
          %v8698 = vpop.f32.mrf.mxu0
          %v8699 = vadd.f32 0.0, %v8698
          %8700 = vdwg.mxu0
          %8701 = vmatpush.msra.mxu0 0.0
          %8702 = vmatpush.msra.mxu0 0.0
          %8703 = vmatpush.msra.mxu0 0.0
          %8704 = vmatpush.msra.mxu0 0.0
          %8705 = vmatpush.msra.mxu0 0.0
          %8706 = vmatpush.msra.mxu0 0.0
          %8707 = vmatpush.msra.mxu0 0.0
          %8708 = vmatpush.msra.mxu0 0.0
          %8709 = vmatpush.msra.mxu0 0.0
          %8710 = vmatpush.msra.mxu0 0.0
          %8711 = vmatpush.msra.mxu0 0.0
          %8712 = vmatpush.msra.mxu0 0.0
          %8713 = vmatpush.msra.mxu0 0.0
          %8714 = vmatpush.msra.mxu0 0.0
          %8715 = vmatpush.msra.mxu0 %v6017
          %8716 = vmatpush.msra.mxu0 %v5905
          %8717 = vmatmul.f32.gmra.mxu0 %v8639
          %v8718 = vpop.f32.mrf.mxu0
          %v8719 = vadd.f32 0.0, %v8718
          %8720 = vdwg.mxu0
          %v8721 = vsel %vm6506, %v6503, 0
          %8723 = vmatpush.msra.mxu0 0.0
          %8724 = vmatpush.msra.mxu0 0.0
          %8725 = vmatpush.msra.mxu0 0.0
          %8726 = vmatpush.msra.mxu0 0.0
          %8727 = vmatpush.msra.mxu0 0.0
          %8728 = vmatpush.msra.mxu0 0.0
          %8729 = vmatpush.msra.mxu0 0.0
          %8730 = vmatpush.msra.mxu0 0.0
          %8731 = vmatpush.msra.mxu0 0.0
          %8732 = vmatpush.msra.mxu0 0.0
          %8733 = vmatpush.msra.mxu0 0.0
          %8734 = vmatpush.msra.mxu0 0.0
          %8735 = vmatpush.msra.mxu0 0.0
          %8736 = vmatpush.msra.mxu0 0.0
          %8737 = vmatpush.msra.mxu0 %v6019
          %8738 = vmatpush.msra.mxu0 %v5907
          %8739 = vmatmul.f32.gmra.mxu0 %v8721
          %v8740 = vpop.f32.mrf.mxu0
          %v8741 = vadd.f32 0.0, %v8740
          %8742 = vdwg.mxu0
          %8743 = vmatpush.msra.mxu0 0.0
          %8744 = vmatpush.msra.mxu0 0.0
          %8745 = vmatpush.msra.mxu0 0.0
          %8746 = vmatpush.msra.mxu0 0.0
          %8747 = vmatpush.msra.mxu0 0.0
          %8748 = vmatpush.msra.mxu0 0.0
          %8749 = vmatpush.msra.mxu0 0.0
          %8750 = vmatpush.msra.mxu0 0.0
          %8751 = vmatpush.msra.mxu0 0.0
          %8752 = vmatpush.msra.mxu0 0.0
          %8753 = vmatpush.msra.mxu0 0.0
          %8754 = vmatpush.msra.mxu0 0.0
          %8755 = vmatpush.msra.mxu0 0.0
          %8756 = vmatpush.msra.mxu0 0.0
          %8757 = vmatpush.msra.mxu0 %v6021
          %8758 = vmatpush.msra.mxu0 %v5909
          %8759 = vmatmul.f32.gmra.mxu0 %v8721
          %v8760 = vpop.f32.mrf.mxu0
          %v8761 = vadd.f32 0.0, %v8760
          %8762 = vdwg.mxu0
          %8763 = vmatpush.msra.mxu0 0.0
          %8764 = vmatpush.msra.mxu0 0.0
          %8765 = vmatpush.msra.mxu0 0.0
          %8766 = vmatpush.msra.mxu0 0.0
          %8767 = vmatpush.msra.mxu0 0.0
          %8768 = vmatpush.msra.mxu0 0.0
          %8769 = vmatpush.msra.mxu0 0.0
          %8770 = vmatpush.msra.mxu0 0.0
          %8771 = vmatpush.msra.mxu0 0.0
          %8772 = vmatpush.msra.mxu0 0.0
          %8773 = vmatpush.msra.mxu0 0.0
          %8774 = vmatpush.msra.mxu0 0.0
          %8775 = vmatpush.msra.mxu0 0.0
          %8776 = vmatpush.msra.mxu0 0.0
          %8777 = vmatpush.msra.mxu0 %v6023
          %8778 = vmatpush.msra.mxu0 %v5911
          %8779 = vmatmul.f32.gmra.mxu0 %v8721
          %v8780 = vpop.f32.mrf.mxu0
          %v8781 = vadd.f32 0.0, %v8780
          %8782 = vdwg.mxu0
          %8783 = vmatpush.msra.mxu0 0.0
          %8784 = vmatpush.msra.mxu0 0.0
          %8785 = vmatpush.msra.mxu0 0.0
          %8786 = vmatpush.msra.mxu0 0.0
          %8787 = vmatpush.msra.mxu0 0.0
          %8788 = vmatpush.msra.mxu0 0.0
          %8789 = vmatpush.msra.mxu0 0.0
          %8790 = vmatpush.msra.mxu0 0.0
          %8791 = vmatpush.msra.mxu0 0.0
          %8792 = vmatpush.msra.mxu0 0.0
          %8793 = vmatpush.msra.mxu0 0.0
          %8794 = vmatpush.msra.mxu0 0.0
          %8795 = vmatpush.msra.mxu0 0.0
          %8796 = vmatpush.msra.mxu0 0.0
          %8797 = vmatpush.msra.mxu0 %v6025
          %8798 = vmatpush.msra.mxu0 %v5913
          %8799 = vmatmul.f32.gmra.mxu0 %v8721
          %v8800 = vpop.f32.mrf.mxu0
          %v8801 = vadd.f32 0.0, %v8800
          %8802 = vdwg.mxu0
          %v8803 = vsel %vm6506, %v1750, 0
          %8805 = vmatpush.msra.mxu0 0.0
          %8806 = vmatpush.msra.mxu0 0.0
          %8807 = vmatpush.msra.mxu0 0.0
          %8808 = vmatpush.msra.mxu0 0.0
          %8809 = vmatpush.msra.mxu0 0.0
          %8810 = vmatpush.msra.mxu0 0.0
          %8811 = vmatpush.msra.mxu0 0.0
          %8812 = vmatpush.msra.mxu0 0.0
          %8813 = vmatpush.msra.mxu0 0.0
          %8814 = vmatpush.msra.mxu0 0.0
          %8815 = vmatpush.msra.mxu0 0.0
          %8816 = vmatpush.msra.mxu0 0.0
          %8817 = vmatpush.msra.mxu0 0.0
          %8818 = vmatpush.msra.mxu0 0.0
          %8819 = vmatpush.msra.mxu0 %v6235
          %8820 = vmatpush.msra.mxu0 %v6123
          %8821 = vmatmul.f32.gmra.mxu0 %v8803
          %v8822 = vpop.f32.mrf.mxu0
          %v8823 = vadd.f32 0.0, %v8822
          %8824 = vdwg.mxu0
          %8825 = vmatpush.msra.mxu0 0.0
          %8826 = vmatpush.msra.mxu0 0.0
          %8827 = vmatpush.msra.mxu0 0.0
          %8828 = vmatpush.msra.mxu0 0.0
          %8829 = vmatpush.msra.mxu0 0.0
          %8830 = vmatpush.msra.mxu0 0.0
          %8831 = vmatpush.msra.mxu0 0.0
          %8832 = vmatpush.msra.mxu0 0.0
          %8833 = vmatpush.msra.mxu0 0.0
          %8834 = vmatpush.msra.mxu0 0.0
          %8835 = vmatpush.msra.mxu0 0.0
          %8836 = vmatpush.msra.mxu0 0.0
          %8837 = vmatpush.msra.mxu0 0.0
          %8838 = vmatpush.msra.mxu0 0.0
          %8839 = vmatpush.msra.mxu0 %v6237
          %8840 = vmatpush.msra.mxu0 %v6125
          %8841 = vmatmul.f32.gmra.mxu0 %v8803
          %v8842 = vpop.f32.mrf.mxu0
          %v8843 = vadd.f32 0.0, %v8842
          %8844 = vdwg.mxu0
          %8845 = vmatpush.msra.mxu0 0.0
          %8846 = vmatpush.msra.mxu0 0.0
          %8847 = vmatpush.msra.mxu0 0.0
          %8848 = vmatpush.msra.mxu0 0.0
          %8849 = vmatpush.msra.mxu0 0.0
          %8850 = vmatpush.msra.mxu0 0.0
          %8851 = vmatpush.msra.mxu0 0.0
          %8852 = vmatpush.msra.mxu0 0.0
          %8853 = vmatpush.msra.mxu0 0.0
          %8854 = vmatpush.msra.mxu0 0.0
          %8855 = vmatpush.msra.mxu0 0.0
          %8856 = vmatpush.msra.mxu0 0.0
          %8857 = vmatpush.msra.mxu0 0.0
          %8858 = vmatpush.msra.mxu0 0.0
          %8859 = vmatpush.msra.mxu0 %v6239
          %8860 = vmatpush.msra.mxu0 %v6127
          %8861 = vmatmul.f32.gmra.mxu0 %v8803
          %v8862 = vpop.f32.mrf.mxu0
          %v8863 = vadd.f32 0.0, %v8862
          %8864 = vdwg.mxu0
          %8865 = vmatpush.msra.mxu0 0.0
          %8866 = vmatpush.msra.mxu0 0.0
          %8867 = vmatpush.msra.mxu0 0.0
          %8868 = vmatpush.msra.mxu0 0.0
          %8869 = vmatpush.msra.mxu0 0.0
          %8870 = vmatpush.msra.mxu0 0.0
          %8871 = vmatpush.msra.mxu0 0.0
          %8872 = vmatpush.msra.mxu0 0.0
          %8873 = vmatpush.msra.mxu0 0.0
          %8874 = vmatpush.msra.mxu0 0.0
          %8875 = vmatpush.msra.mxu0 0.0
          %8876 = vmatpush.msra.mxu0 0.0
          %8877 = vmatpush.msra.mxu0 0.0
          %8878 = vmatpush.msra.mxu0 0.0
          %8879 = vmatpush.msra.mxu0 %v6241
          %8880 = vmatpush.msra.mxu0 %v6129
          %8881 = vmatmul.f32.gmra.mxu0 %v8803
          %v8882 = vpop.f32.mrf.mxu0
          %v8883 = vadd.f32 0.0, %v8882
          %8884 = vdwg.mxu0
          %v8885 = vsel %vm6506, %v6504, 0
          %8887 = vmatpush.msra.mxu0 0.0
          %8888 = vmatpush.msra.mxu0 0.0
          %8889 = vmatpush.msra.mxu0 0.0
          %8890 = vmatpush.msra.mxu0 0.0
          %8891 = vmatpush.msra.mxu0 0.0
          %8892 = vmatpush.msra.mxu0 0.0
          %8893 = vmatpush.msra.mxu0 0.0
          %8894 = vmatpush.msra.mxu0 0.0
          %8895 = vmatpush.msra.mxu0 0.0
          %8896 = vmatpush.msra.mxu0 0.0
          %8897 = vmatpush.msra.mxu0 0.0
          %8898 = vmatpush.msra.mxu0 0.0
          %8899 = vmatpush.msra.mxu0 0.0
          %8900 = vmatpush.msra.mxu0 0.0
          %8901 = vmatpush.msra.mxu0 %v6243
          %8902 = vmatpush.msra.mxu0 %v6131
          %8903 = vmatmul.f32.gmra.mxu0 %v8885
          %v8904 = vpop.f32.mrf.mxu0
          %v8905 = vadd.f32 0.0, %v8904
          %8906 = vdwg.mxu0
          %8907 = vmatpush.msra.mxu0 0.0
          %8908 = vmatpush.msra.mxu0 0.0
          %8909 = vmatpush.msra.mxu0 0.0
          %8910 = vmatpush.msra.mxu0 0.0
          %8911 = vmatpush.msra.mxu0 0.0
          %8912 = vmatpush.msra.mxu0 0.0
          %8913 = vmatpush.msra.mxu0 0.0
          %8914 = vmatpush.msra.mxu0 0.0
          %8915 = vmatpush.msra.mxu0 0.0
          %8916 = vmatpush.msra.mxu0 0.0
          %8917 = vmatpush.msra.mxu0 0.0
          %8918 = vmatpush.msra.mxu0 0.0
          %8919 = vmatpush.msra.mxu0 0.0
          %8920 = vmatpush.msra.mxu0 0.0
          %8921 = vmatpush.msra.mxu0 %v6245
          %8922 = vmatpush.msra.mxu0 %v6133
          %8923 = vmatmul.f32.gmra.mxu0 %v8885
          %v8924 = vpop.f32.mrf.mxu0
          %v8925 = vadd.f32 0.0, %v8924
          %8926 = vdwg.mxu0
          %8927 = vmatpush.msra.mxu0 0.0
          %8928 = vmatpush.msra.mxu0 0.0
          %8929 = vmatpush.msra.mxu0 0.0
          %8930 = vmatpush.msra.mxu0 0.0
          %8931 = vmatpush.msra.mxu0 0.0
          %8932 = vmatpush.msra.mxu0 0.0
          %8933 = vmatpush.msra.mxu0 0.0
          %8934 = vmatpush.msra.mxu0 0.0
          %8935 = vmatpush.msra.mxu0 0.0
          %8936 = vmatpush.msra.mxu0 0.0
          %8937 = vmatpush.msra.mxu0 0.0
          %8938 = vmatpush.msra.mxu0 0.0
          %8939 = vmatpush.msra.mxu0 0.0
          %8940 = vmatpush.msra.mxu0 0.0
          %8941 = vmatpush.msra.mxu0 %v6247
          %8942 = vmatpush.msra.mxu0 %v6135
          %8943 = vmatmul.f32.gmra.mxu0 %v8885
          %v8944 = vpop.f32.mrf.mxu0
          %v8945 = vadd.f32 0.0, %v8944
          %8946 = vdwg.mxu0
          %8947 = vmatpush.msra.mxu0 0.0
          %8948 = vmatpush.msra.mxu0 0.0
          %8949 = vmatpush.msra.mxu0 0.0
          %8950 = vmatpush.msra.mxu0 0.0
          %8951 = vmatpush.msra.mxu0 0.0
          %8952 = vmatpush.msra.mxu0 0.0
          %8953 = vmatpush.msra.mxu0 0.0
          %8954 = vmatpush.msra.mxu0 0.0
          %8955 = vmatpush.msra.mxu0 0.0
          %8956 = vmatpush.msra.mxu0 0.0
          %8957 = vmatpush.msra.mxu0 0.0
          %8958 = vmatpush.msra.mxu0 0.0
          %8959 = vmatpush.msra.mxu0 0.0
          %8960 = vmatpush.msra.mxu0 0.0
          %8961 = vmatpush.msra.mxu0 %v6249
          %8962 = vmatpush.msra.mxu0 %v6137
          %8963 = vmatmul.f32.gmra.mxu0 %v8885
          %v8964 = vpop.f32.mrf.mxu0
          %v8965 = vadd.f32 0.0, %v8964
          %8966 = vdwg.mxu0
          %v8967 = vsel %vm6506, %v1751, 0
          %8969 = vmatpush.msra.mxu0 0.0
          %8970 = vmatpush.msra.mxu0 0.0
          %8971 = vmatpush.msra.mxu0 0.0
          %8972 = vmatpush.msra.mxu0 0.0
          %8973 = vmatpush.msra.mxu0 0.0
          %8974 = vmatpush.msra.mxu0 0.0
          %8975 = vmatpush.msra.mxu0 0.0
          %8976 = vmatpush.msra.mxu0 0.0
          %8977 = vmatpush.msra.mxu0 0.0
          %8978 = vmatpush.msra.mxu0 0.0
          %8979 = vmatpush.msra.mxu0 0.0
          %8980 = vmatpush.msra.mxu0 0.0
          %8981 = vmatpush.msra.mxu0 0.0
          %8982 = vmatpush.msra.mxu0 0.0
          %8983 = vmatpush.msra.mxu0 %v6459
          %8984 = vmatpush.msra.mxu0 %v6347
          %8985 = vmatmul.f32.gmra.mxu0 %v8967
          %v8986 = vpop.f32.mrf.mxu0
          %v8987 = vadd.f32 0.0, %v8986
          %8988 = vdwg.mxu0
          %8989 = vmatpush.msra.mxu0 0.0
          %8990 = vmatpush.msra.mxu0 0.0
          %8991 = vmatpush.msra.mxu0 0.0
          %8992 = vmatpush.msra.mxu0 0.0
          %8993 = vmatpush.msra.mxu0 0.0
          %8994 = vmatpush.msra.mxu0 0.0
          %8995 = vmatpush.msra.mxu0 0.0
          %8996 = vmatpush.msra.mxu0 0.0
          %8997 = vmatpush.msra.mxu0 0.0
          %8998 = vmatpush.msra.mxu0 0.0
          %8999 = vmatpush.msra.mxu0 0.0
          %9000 = vmatpush.msra.mxu0 0.0
          %9001 = vmatpush.msra.mxu0 0.0
          %9002 = vmatpush.msra.mxu0 0.0
          %9003 = vmatpush.msra.mxu0 %v6461
          %9004 = vmatpush.msra.mxu0 %v6349
          %9005 = vmatmul.f32.gmra.mxu0 %v8967
          %v9006 = vpop.f32.mrf.mxu0
          %v9007 = vadd.f32 0.0, %v9006
          %9008 = vdwg.mxu0
          %9009 = vmatpush.msra.mxu0 0.0
          %9010 = vmatpush.msra.mxu0 0.0
          %9011 = vmatpush.msra.mxu0 0.0
          %9012 = vmatpush.msra.mxu0 0.0
          %9013 = vmatpush.msra.mxu0 0.0
          %9014 = vmatpush.msra.mxu0 0.0
          %9015 = vmatpush.msra.mxu0 0.0
          %9016 = vmatpush.msra.mxu0 0.0
          %9017 = vmatpush.msra.mxu0 0.0
          %9018 = vmatpush.msra.mxu0 0.0
          %9019 = vmatpush.msra.mxu0 0.0
          %9020 = vmatpush.msra.mxu0 0.0
          %9021 = vmatpush.msra.mxu0 0.0
          %9022 = vmatpush.msra.mxu0 0.0
          %9023 = vmatpush.msra.mxu0 %v6463
          %9024 = vmatpush.msra.mxu0 %v6351
          %9025 = vmatmul.f32.gmra.mxu0 %v8967
          %v9026 = vpop.f32.mrf.mxu0
          %v9027 = vadd.f32 0.0, %v9026
          %9028 = vdwg.mxu0
          %9029 = vmatpush.msra.mxu0 0.0
          %9030 = vmatpush.msra.mxu0 0.0
          %9031 = vmatpush.msra.mxu0 0.0
          %9032 = vmatpush.msra.mxu0 0.0
          %9033 = vmatpush.msra.mxu0 0.0
          %9034 = vmatpush.msra.mxu0 0.0
          %9035 = vmatpush.msra.mxu0 0.0
          %9036 = vmatpush.msra.mxu0 0.0
          %9037 = vmatpush.msra.mxu0 0.0
          %9038 = vmatpush.msra.mxu0 0.0
          %9039 = vmatpush.msra.mxu0 0.0
          %9040 = vmatpush.msra.mxu0 0.0
          %9041 = vmatpush.msra.mxu0 0.0
          %9042 = vmatpush.msra.mxu0 0.0
          %9043 = vmatpush.msra.mxu0 %v6465
          %9044 = vmatpush.msra.mxu0 %v6353
          %9045 = vmatmul.f32.gmra.mxu0 %v8967
          %v9046 = vpop.f32.mrf.mxu0
          %v9047 = vadd.f32 0.0, %v9046
          %9048 = vdwg.mxu0
          %v9049 = vsel %vm6506, %v6505, 0
          %9051 = vmatpush.msra.mxu0 0.0
          %9052 = vmatpush.msra.mxu0 0.0
          %9053 = vmatpush.msra.mxu0 0.0
          %9054 = vmatpush.msra.mxu0 0.0
          %9055 = vmatpush.msra.mxu0 0.0
          %9056 = vmatpush.msra.mxu0 0.0
          %9057 = vmatpush.msra.mxu0 0.0
          %9058 = vmatpush.msra.mxu0 0.0
          %9059 = vmatpush.msra.mxu0 0.0
          %9060 = vmatpush.msra.mxu0 0.0
          %9061 = vmatpush.msra.mxu0 0.0
          %9062 = vmatpush.msra.mxu0 0.0
          %9063 = vmatpush.msra.mxu0 0.0
          %9064 = vmatpush.msra.mxu0 0.0
          %9065 = vmatpush.msra.mxu0 %v6467
          %9066 = vmatpush.msra.mxu0 %v6355
          %9067 = vmatmul.f32.gmra.mxu0 %v9049
          %v9068 = vpop.f32.mrf.mxu0
          %v9069 = vadd.f32 0.0, %v9068
          %9070 = vdwg.mxu0
          %9071 = vmatpush.msra.mxu0 0.0
          %9072 = vmatpush.msra.mxu0 0.0
          %9073 = vmatpush.msra.mxu0 0.0
          %9074 = vmatpush.msra.mxu0 0.0
          %9075 = vmatpush.msra.mxu0 0.0
          %9076 = vmatpush.msra.mxu0 0.0
          %9077 = vmatpush.msra.mxu0 0.0
          %9078 = vmatpush.msra.mxu0 0.0
          %9079 = vmatpush.msra.mxu0 0.0
          %9080 = vmatpush.msra.mxu0 0.0
          %9081 = vmatpush.msra.mxu0 0.0
          %9082 = vmatpush.msra.mxu0 0.0
          %9083 = vmatpush.msra.mxu0 0.0
          %9084 = vmatpush.msra.mxu0 0.0
          %9085 = vmatpush.msra.mxu0 %v6469
          %9086 = vmatpush.msra.mxu0 %v6357
          %9087 = vmatmul.f32.gmra.mxu0 %v9049
          %v9088 = vpop.f32.mrf.mxu0
          %v9089 = vadd.f32 0.0, %v9088
          %9090 = vdwg.mxu0
          %9091 = vmatpush.msra.mxu0 0.0
          %9092 = vmatpush.msra.mxu0 0.0
          %9093 = vmatpush.msra.mxu0 0.0
          %9094 = vmatpush.msra.mxu0 0.0
          %9095 = vmatpush.msra.mxu0 0.0
          %9096 = vmatpush.msra.mxu0 0.0
          %9097 = vmatpush.msra.mxu0 0.0
          %9098 = vmatpush.msra.mxu0 0.0
          %9099 = vmatpush.msra.mxu0 0.0
          %9100 = vmatpush.msra.mxu0 0.0
          %9101 = vmatpush.msra.mxu0 0.0
          %9102 = vmatpush.msra.mxu0 0.0
          %9103 = vmatpush.msra.mxu0 0.0
          %9104 = vmatpush.msra.mxu0 0.0
          %9105 = vmatpush.msra.mxu0 %v6471
          %9106 = vmatpush.msra.mxu0 %v6359
          %9107 = vmatmul.f32.gmra.mxu0 %v9049
          %v9108 = vpop.f32.mrf.mxu0
          %v9109 = vadd.f32 0.0, %v9108
          %9110 = vdwg.mxu0
          %9111 = vmatpush.msra.mxu0 0.0
          %9112 = vmatpush.msra.mxu0 0.0
          %9113 = vmatpush.msra.mxu0 0.0
          %9114 = vmatpush.msra.mxu0 0.0
          %9115 = vmatpush.msra.mxu0 0.0
          %9116 = vmatpush.msra.mxu0 0.0
          %9117 = vmatpush.msra.mxu0 0.0
          %9118 = vmatpush.msra.mxu0 0.0
          %9119 = vmatpush.msra.mxu0 0.0
          %9120 = vmatpush.msra.mxu0 0.0
          %9121 = vmatpush.msra.mxu0 0.0
          %9122 = vmatpush.msra.mxu0 0.0
          %9123 = vmatpush.msra.mxu0 0.0
          %9124 = vmatpush.msra.mxu0 0.0
          %9125 = vmatpush.msra.mxu0 %v6473
          %9126 = vmatpush.msra.mxu0 %v6361
          %9127 = vmatmul.f32.gmra.mxu0 %v9049
          %v9128 = vpop.f32.mrf.mxu0
          %v9129 = vadd.f32 0.0, %v9128
          %9130 = vdwg.mxu0
          %9259 = vst [vmem:[#allocation1] ss:$2 sm:$0xff] %v6527
          %s9260 = scalar_lea.vmem [#allocation1], 1
          %9261 = vst [vmem:[%s9260] ss:$2 sm:$0xff] %v6547
          %s9262 = scalar_lea.vmem [#allocation1], 16
          %9263 = vst [vmem:[%s9262] ss:$2 sm:$0xff] %v6567
          %s9264 = scalar_lea.vmem [#allocation1], 17
          %9265 = vst [vmem:[%s9264] ss:$2 sm:$0xff] %v6587
          %s9266 = scalar_lea.vmem [#allocation1], 32
          %9267 = vst [vmem:[%s9266] ss:$2 sm:$0xff] %v6609
          %s9268 = scalar_lea.vmem [#allocation1], 33
          %9269 = vst [vmem:[%s9268] ss:$2 sm:$0xff] %v6629
          %s9270 = scalar_lea.vmem [#allocation1], 48
          %9271 = vst [vmem:[%s9270] ss:$2 sm:$0xff] %v6649
          %s9272 = scalar_lea.vmem [#allocation1], 49
          %9273 = vst [vmem:[%s9272] ss:$2 sm:$0xff] %v6669
          %v9274 = vld.sshfl [vmem:[#allocation1] sm:$0xff pattern:$0x75316420]
          %v9275 = vld.sshfl [vmem:[#allocation1 + $0x10] sm:$0xff pattern:$0x75316420]
          %v9276 = vld.sshfl [vmem:[#allocation1 + $0x20] sm:$0xff pattern:$0x75316420]
          %v9277 = vld.sshfl [vmem:[#allocation1 + $0x30] sm:$0xff pattern:$0x75316420]
          %9278 = vst [vmem:[#allocation1] ss:$2 sm:$0xff] %v6691
          %9279 = vst [vmem:[%s9260] ss:$2 sm:$0xff] %v6711
          %9280 = vst [vmem:[%s9262] ss:$2 sm:$0xff] %v6731
          %9281 = vst [vmem:[%s9264] ss:$2 sm:$0xff] %v6751
          %9282 = vst [vmem:[%s9266] ss:$2 sm:$0xff] %v6773
          %9283 = vst [vmem:[%s9268] ss:$2 sm:$0xff] %v6793
          %9284 = vst [vmem:[%s9270] ss:$2 sm:$0xff] %v6813
          %9285 = vst [vmem:[%s9272] ss:$2 sm:$0xff] %v6833
          %v9286 = vld.sshfl [vmem:[#allocation1] sm:$0xff pattern:$0x75316420]
          %v9287 = vld.sshfl [vmem:[#allocation1 + $0x10] sm:$0xff pattern:$0x75316420]
          %v9288 = vld.sshfl [vmem:[#allocation1 + $0x20] sm:$0xff pattern:$0x75316420]
          %v9289 = vld.sshfl [vmem:[#allocation1 + $0x30] sm:$0xff pattern:$0x75316420]
          %9290 = vst [vmem:[#allocation1] ss:$2 sm:$0xff] %v6855
          %9291 = vst [vmem:[%s9260] ss:$2 sm:$0xff] %v6875
          %9292 = vst [vmem:[%s9262] ss:$2 sm:$0xff] %v6895
          %9293 = vst [vmem:[%s9264] ss:$2 sm:$0xff] %v6915
          %9294 = vst [vmem:[%s9266] ss:$2 sm:$0xff] %v6937
          %9295 = vst [vmem:[%s9268] ss:$2 sm:$0xff] %v6957
          %9296 = vst [vmem:[%s9270] ss:$2 sm:$0xff] %v6977
          %9297 = vst [vmem:[%s9272] ss:$2 sm:$0xff] %v6997
          %v9298 = vld.sshfl [vmem:[#allocation1] sm:$0xff pattern:$0x75316420]
          %v9299 = vld.sshfl [vmem:[#allocation1 + $0x10] sm:$0xff pattern:$0x75316420]
          %v9300 = vld.sshfl [vmem:[#allocation1 + $0x20] sm:$0xff pattern:$0x75316420]
          %v9301 = vld.sshfl [vmem:[#allocation1 + $0x30] sm:$0xff pattern:$0x75316420]
          %9302 = vst [vmem:[#allocation1] ss:$2 sm:$0xff] %v7019
          %9303 = vst [vmem:[%s9260] ss:$2 sm:$0xff] %v7039
          %9304 = vst [vmem:[%s9262] ss:$2 sm:$0xff] %v7059
          %9305 = vst [vmem:[%s9264] ss:$2 sm:$0xff] %v7079
          %9306 = vst [vmem:[%s9266] ss:$2 sm:$0xff] %v7101
          %9307 = vst [vmem:[%s9268] ss:$2 sm:$0xff] %v7121
          %9308 = vst [vmem:[%s9270] ss:$2 sm:$0xff] %v7141
          %9309 = vst [vmem:[%s9272] ss:$2 sm:$0xff] %v7161
          %v9310 = vld.sshfl [vmem:[#allocation1] sm:$0xff pattern:$0x75316420]
          %v9311 = vld.sshfl [vmem:[#allocation1 + $0x10] sm:$0xff pattern:$0x75316420]
          %v9312 = vld.sshfl [vmem:[#allocation1 + $0x20] sm:$0xff pattern:$0x75316420]
          %v9313 = vld.sshfl [vmem:[#allocation1 + $0x30] sm:$0xff pattern:$0x75316420]
          %9314 = vst [vmem:[#allocation1] ss:$2 sm:$0xff] %v7183
          %9315 = vst [vmem:[%s9260] ss:$2 sm:$0xff] %v7203
          %9316 = vst [vmem:[%s9262] ss:$2 sm:$0xff] %v7223
          %9317 = vst [vmem:[%s9264] ss:$2 sm:$0xff] %v7243
          %9318 = vst [vmem:[%s9266] ss:$2 sm:$0xff] %v7265
          %9319 = vst [vmem:[%s9268] ss:$2 sm:$0xff] %v7285
          %9320 = vst [vmem:[%s9270] ss:$2 sm:$0xff] %v7305
          %9321 = vst [vmem:[%s9272] ss:$2 sm:$0xff] %v7325
          %v9322 = vld.sshfl [vmem:[#allocation1] sm:$0xff pattern:$0x75316420]
          %v9323 = vld.sshfl [vmem:[#allocation1 + $0x10] sm:$0xff pattern:$0x75316420]
          %v9324 = vld.sshfl [vmem:[#allocation1 + $0x20] sm:$0xff pattern:$0x75316420]
          %v9325 = vld.sshfl [vmem:[#allocation1 + $0x30] sm:$0xff pattern:$0x75316420]
          %9326 = vst [vmem:[#allocation1] ss:$2 sm:$0xff] %v7347
          %9327 = vst [vmem:[%s9260] ss:$2 sm:$0xff] %v7367
          %9328 = vst [vmem:[%s9262] ss:$2 sm:$0xff] %v7387
          %9329 = vst [vmem:[%s9264] ss:$2 sm:$0xff] %v7407
          %9330 = vst [vmem:[%s9266] ss:$2 sm:$0xff] %v7429
          %9331 = vst [vmem:[%s9268] ss:$2 sm:$0xff] %v7449
          %9332 = vst [vmem:[%s9270] ss:$2 sm:$0xff] %v7469
          %9333 = vst [vmem:[%s9272] ss:$2 sm:$0xff] %v7489
          %v9334 = vld.sshfl [vmem:[#allocation1] sm:$0xff pattern:$0x75316420]
          %v9335 = vld.sshfl [vmem:[#allocation1 + $0x10] sm:$0xff pattern:$0x75316420]
          %v9336 = vld.sshfl [vmem:[#allocation1 + $0x20] sm:$0xff pattern:$0x75316420]
          %v9337 = vld.sshfl [vmem:[#allocation1 + $0x30] sm:$0xff pattern:$0x75316420]
          %9338 = vst [vmem:[#allocation1] ss:$2 sm:$0xff] %v7511
          %9339 = vst [vmem:[%s9260] ss:$2 sm:$0xff] %v7531
          %9340 = vst [vmem:[%s9262] ss:$2 sm:$0xff] %v7551
          %9341 = vst [vmem:[%s9264] ss:$2 sm:$0xff] %v7571
          %9342 = vst [vmem:[%s9266] ss:$2 sm:$0xff] %v7593
          %9343 = vst [vmem:[%s9268] ss:$2 sm:$0xff] %v7613
          %9344 = vst [vmem:[%s9270] ss:$2 sm:$0xff] %v7633
          %9345 = vst [vmem:[%s9272] ss:$2 sm:$0xff] %v7653
          %v9346 = vld.sshfl [vmem:[#allocation1] sm:$0xff pattern:$0x75316420]
          %v9347 = vld.sshfl [vmem:[#allocation1 + $0x10] sm:$0xff pattern:$0x75316420]
          %v9348 = vld.sshfl [vmem:[#allocation1 + $0x20] sm:$0xff pattern:$0x75316420]
          %v9349 = vld.sshfl [vmem:[#allocation1 + $0x30] sm:$0xff pattern:$0x75316420]
          %9350 = vst [vmem:[#allocation1] ss:$2 sm:$0xff] %v7675
          %9351 = vst [vmem:[%s9260] ss:$2 sm:$0xff] %v7695
          %9352 = vst [vmem:[%s9262] ss:$2 sm:$0xff] %v7715
          %9353 = vst [vmem:[%s9264] ss:$2 sm:$0xff] %v7735
          %9354 = vst [vmem:[%s9266] ss:$2 sm:$0xff] %v7757
          %9355 = vst [vmem:[%s9268] ss:$2 sm:$0xff] %v7777
          %9356 = vst [vmem:[%s9270] ss:$2 sm:$0xff] %v7797
          %9357 = vst [vmem:[%s9272] ss:$2 sm:$0xff] %v7817
          %v9358 = vld.sshfl [vmem:[#allocation1] sm:$0xff pattern:$0x75316420]
          %v9359 = vld.sshfl [vmem:[#allocation1 + $0x10] sm:$0xff pattern:$0x75316420]
          %v9360 = vld.sshfl [vmem:[#allocation1 + $0x20] sm:$0xff pattern:$0x75316420]
          %v9361 = vld.sshfl [vmem:[#allocation1 + $0x30] sm:$0xff pattern:$0x75316420]
          %9362 = vst [vmem:[#allocation1] ss:$2 sm:$0xff] %v7839
          %9363 = vst [vmem:[%s9260] ss:$2 sm:$0xff] %v7859
          %9364 = vst [vmem:[%s9262] ss:$2 sm:$0xff] %v7879
          %9365 = vst [vmem:[%s9264] ss:$2 sm:$0xff] %v7899
          %9366 = vst [vmem:[%s9266] ss:$2 sm:$0xff] %v7921
          %9367 = vst [vmem:[%s9268] ss:$2 sm:$0xff] %v7941
          %9368 = vst [vmem:[%s9270] ss:$2 sm:$0xff] %v7961
          %9369 = vst [vmem:[%s9272] ss:$2 sm:$0xff] %v7981
          %v9370 = vld.sshfl [vmem:[#allocation1] sm:$0xff pattern:$0x75316420]
          %v9371 = vld.sshfl [vmem:[#allocation1 + $0x10] sm:$0xff pattern:$0x75316420]
          %v9372 = vld.sshfl [vmem:[#allocation1 + $0x20] sm:$0xff pattern:$0x75316420]
          %v9373 = vld.sshfl [vmem:[#allocation1 + $0x30] sm:$0xff pattern:$0x75316420]
          %9374 = vst [vmem:[#allocation1] ss:$2 sm:$0xff] %v8003
          %9375 = vst [vmem:[%s9260] ss:$2 sm:$0xff] %v8023
          %9376 = vst [vmem:[%s9262] ss:$2 sm:$0xff] %v8043
          %9377 = vst [vmem:[%s9264] ss:$2 sm:$0xff] %v8063
          %9378 = vst [vmem:[%s9266] ss:$2 sm:$0xff] %v8085
          %9379 = vst [vmem:[%s9268] ss:$2 sm:$0xff] %v8105
          %9380 = vst [vmem:[%s9270] ss:$2 sm:$0xff] %v8125
          %9381 = vst [vmem:[%s9272] ss:$2 sm:$0xff] %v8145
          %v9382 = vld.sshfl [vmem:[#allocation1] sm:$0xff pattern:$0x75316420]
          %v9383 = vld.sshfl [vmem:[#allocation1 + $0x10] sm:$0xff pattern:$0x75316420]
          %v9384 = vld.sshfl [vmem:[#allocation1 + $0x20] sm:$0xff pattern:$0x75316420]
          %v9385 = vld.sshfl [vmem:[#allocation1 + $0x30] sm:$0xff pattern:$0x75316420]
          %9386 = vst [vmem:[#allocation1] ss:$2 sm:$0xff] %v8167
          %9387 = vst [vmem:[%s9260] ss:$2 sm:$0xff] %v8187
          %9388 = vst [vmem:[%s9262] ss:$2 sm:$0xff] %v8207
          %9389 = vst [vmem:[%s9264] ss:$2 sm:$0xff] %v8227
          %9390 = vst [vmem:[%s9266] ss:$2 sm:$0xff] %v8249
          %9391 = vst [vmem:[%s9268] ss:$2 sm:$0xff] %v8269
          %9392 = vst [vmem:[%s9270] ss:$2 sm:$0xff] %v8289
          %9393 = vst [vmem:[%s9272] ss:$2 sm:$0xff] %v8309
          %v9394 = vld.sshfl [vmem:[#allocation1] sm:$0xff pattern:$0x75316420]
          %v9395 = vld.sshfl [vmem:[#allocation1 + $0x10] sm:$0xff pattern:$0x75316420]
          %v9396 = vld.sshfl [vmem:[#allocation1 + $0x20] sm:$0xff pattern:$0x75316420]
          %v9397 = vld.sshfl [vmem:[#allocation1 + $0x30] sm:$0xff pattern:$0x75316420]
          %9398 = vst [vmem:[#allocation1] ss:$2 sm:$0xff] %v8331
          %9399 = vst [vmem:[%s9260] ss:$2 sm:$0xff] %v8351
          %9400 = vst [vmem:[%s9262] ss:$2 sm:$0xff] %v8371
          %9401 = vst [vmem:[%s9264] ss:$2 sm:$0xff] %v8391
          %9402 = vst [vmem:[%s9266] ss:$2 sm:$0xff] %v8413
          %9403 = vst [vmem:[%s9268] ss:$2 sm:$0xff] %v8433
          %9404 = vst [vmem:[%s9270] ss:$2 sm:$0xff] %v8453
          %9405 = vst [vmem:[%s9272] ss:$2 sm:$0xff] %v8473
          %v9406 = vld.sshfl [vmem:[#allocation1] sm:$0xff pattern:$0x75316420]
          %v9407 = vld.sshfl [vmem:[#allocation1 + $0x10] sm:$0xff pattern:$0x75316420]
          %v9408 = vld.sshfl [vmem:[#allocation1 + $0x20] sm:$0xff pattern:$0x75316420]
          %v9409 = vld.sshfl [vmem:[#allocation1 + $0x30] sm:$0xff pattern:$0x75316420]
          %9410 = vst [vmem:[#allocation1] ss:$2 sm:$0xff] %v8495
          %9411 = vst [vmem:[%s9260] ss:$2 sm:$0xff] %v8515
          %9412 = vst [vmem:[%s9262] ss:$2 sm:$0xff] %v8535
          %9413 = vst [vmem:[%s9264] ss:$2 sm:$0xff] %v8555
          %9414 = vst [vmem:[%s9266] ss:$2 sm:$0xff] %v8577
          %9415 = vst [vmem:[%s9268] ss:$2 sm:$0xff] %v8597
          %9416 = vst [vmem:[%s9270] ss:$2 sm:$0xff] %v8617
          %9417 = vst [vmem:[%s9272] ss:$2 sm:$0xff] %v8637
          %v9418 = vld.sshfl [vmem:[#allocation1] sm:$0xff pattern:$0x75316420]
          %v9419 = vld.sshfl [vmem:[#allocation1 + $0x10] sm:$0xff pattern:$0x75316420]
          %v9420 = vld.sshfl [vmem:[#allocation1 + $0x20] sm:$0xff pattern:$0x75316420]
          %v9421 = vld.sshfl [vmem:[#allocation1 + $0x30] sm:$0xff pattern:$0x75316420]
          %9422 = vst [vmem:[#allocation1] ss:$2 sm:$0xff] %v8659
          %9423 = vst [vmem:[%s9260] ss:$2 sm:$0xff] %v8679
          %9424 = vst [vmem:[%s9262] ss:$2 sm:$0xff] %v8699
          %9425 = vst [vmem:[%s9264] ss:$2 sm:$0xff] %v8719
          %9426 = vst [vmem:[%s9266] ss:$2 sm:$0xff] %v8741
          %9427 = vst [vmem:[%s9268] ss:$2 sm:$0xff] %v8761
          %9428 = vst [vmem:[%s9270] ss:$2 sm:$0xff] %v8781
          %9429 = vst [vmem:[%s9272] ss:$2 sm:$0xff] %v8801
          %v9430 = vld.sshfl [vmem:[#allocation1] sm:$0xff pattern:$0x75316420]
          %v9431 = vld.sshfl [vmem:[#allocation1 + $0x10] sm:$0xff pattern:$0x75316420]
          %v9432 = vld.sshfl [vmem:[#allocation1 + $0x20] sm:$0xff pattern:$0x75316420]
          %v9433 = vld.sshfl [vmem:[#allocation1 + $0x30] sm:$0xff pattern:$0x75316420]
          %9434 = vst [vmem:[#allocation1] ss:$2 sm:$0xff] %v8823
          %9435 = vst [vmem:[%s9260] ss:$2 sm:$0xff] %v8843
          %9436 = vst [vmem:[%s9262] ss:$2 sm:$0xff] %v8863
          %9437 = vst [vmem:[%s9264] ss:$2 sm:$0xff] %v8883
          %9438 = vst [vmem:[%s9266] ss:$2 sm:$0xff] %v8905
          %9439 = vst [vmem:[%s9268] ss:$2 sm:$0xff] %v8925
          %9440 = vst [vmem:[%s9270] ss:$2 sm:$0xff] %v8945
          %9441 = vst [vmem:[%s9272] ss:$2 sm:$0xff] %v8965
          %v9442 = vld.sshfl [vmem:[#allocation1] sm:$0xff pattern:$0x75316420]
          %v9443 = vld.sshfl [vmem:[#allocation1 + $0x10] sm:$0xff pattern:$0x75316420]
          %v9444 = vld.sshfl [vmem:[#allocation1 + $0x20] sm:$0xff pattern:$0x75316420]
          %v9445 = vld.sshfl [vmem:[#allocation1 + $0x30] sm:$0xff pattern:$0x75316420]
          %9446 = vst [vmem:[#allocation1] ss:$2 sm:$0xff] %v8987
          %9447 = vst [vmem:[%s9260] ss:$2 sm:$0xff] %v9007
          %9448 = vst [vmem:[%s9262] ss:$2 sm:$0xff] %v9027
          %9449 = vst [vmem:[%s9264] ss:$2 sm:$0xff] %v9047
          %9450 = vst [vmem:[%s9266] ss:$2 sm:$0xff] %v9069
          %9451 = vst [vmem:[%s9268] ss:$2 sm:$0xff] %v9089
          %9452 = vst [vmem:[%s9270] ss:$2 sm:$0xff] %v9109
          %9453 = vst [vmem:[%s9272] ss:$2 sm:$0xff] %v9129
          %v9454 = vld.sshfl [vmem:[#allocation1] sm:$0xff pattern:$0x75316420]
          %v9455 = vld.sshfl [vmem:[#allocation1 + $0x10] sm:$0xff pattern:$0x75316420]
          %v9456 = vld.sshfl [vmem:[#allocation1 + $0x20] sm:$0xff pattern:$0x75316420]
          %v9457 = vld.sshfl [vmem:[#allocation1 + $0x30] sm:$0xff pattern:$0x75316420]
          %9522 = vst [vmem:[%s215] sm:$0xff] %v9274
          %9523 = vst [vmem:[%s215 + $0x8] sm:$0xff] %v9275
          %9524 = vst [vmem:[%s215 + $0x10] sm:$0xff] %v9276
          %9525 = vst [vmem:[%s215 + $0x18] sm:$0xff] %v9277
          %9526 = vst [vmem:[%s215 + $0x20] sm:$0xff] %v9286
          %9527 = vst [vmem:[%s215 + $0x28] sm:$0xff] %v9287
          %9528 = vst [vmem:[%s215 + $0x30] sm:$0xff] %v9288
          %9529 = vst [vmem:[%s215 + $0x38] sm:$0xff] %v9289
          %9530 = vst [vmem:[%s215 + $0x40] sm:$0xff] %v9298
          %9531 = vst [vmem:[%s215 + $0x48] sm:$0xff] %v9299
          %9532 = vst [vmem:[%s215 + $0x50] sm:$0xff] %v9300
          %9533 = vst [vmem:[%s215 + $0x58] sm:$0xff] %v9301
          %9534 = vst [vmem:[%s215 + $0x60] sm:$0xff] %v9310
          %9535 = vst [vmem:[%s215 + $0x68] sm:$0xff] %v9311
          %9536 = vst [vmem:[%s215 + $0x70] sm:$0xff] %v9312
          %9537 = vst [vmem:[%s215 + $0x78] sm:$0xff] %v9313
          %9538 = vst [vmem:[%s215 + $0x80] sm:$0xff] %v9322
          %9539 = vst [vmem:[%s215 + $0x88] sm:$0xff] %v9323
          %9540 = vst [vmem:[%s215 + $0x90] sm:$0xff] %v9324
          %9541 = vst [vmem:[%s215 + $0x98] sm:$0xff] %v9325
          %9542 = vst [vmem:[%s215 + $0xa0] sm:$0xff] %v9334
          %9543 = vst [vmem:[%s215 + $0xa8] sm:$0xff] %v9335
          %9544 = vst [vmem:[%s215 + $0xb0] sm:$0xff] %v9336
          %9545 = vst [vmem:[%s215 + $0xb8] sm:$0xff] %v9337
          %9546 = vst [vmem:[%s215 + $0xc0] sm:$0xff] %v9346
          %9547 = vst [vmem:[%s215 + $0xc8] sm:$0xff] %v9347
          %9548 = vst [vmem:[%s215 + $0xd0] sm:$0xff] %v9348
          %9549 = vst [vmem:[%s215 + $0xd8] sm:$0xff] %v9349
          %9550 = vst [vmem:[%s215 + $0xe0] sm:$0xff] %v9358
          %9551 = vst [vmem:[%s215 + $0xe8] sm:$0xff] %v9359
          %9552 = vst [vmem:[%s215 + $0xf0] sm:$0xff] %v9360
          %9553 = vst [vmem:[%s215 + $0xf8] sm:$0xff] %v9361
          %9554 = vst [vmem:[%s215 + $0x100] sm:$0xff] %v9370
          %9555 = vst [vmem:[%s215 + $0x108] sm:$0xff] %v9371
          %9556 = vst [vmem:[%s215 + $0x110] sm:$0xff] %v9372
          %9557 = vst [vmem:[%s215 + $0x118] sm:$0xff] %v9373
          %9558 = vst [vmem:[%s215 + $0x120] sm:$0xff] %v9382
          %9559 = vst [vmem:[%s215 + $0x128] sm:$0xff] %v9383
          %9560 = vst [vmem:[%s215 + $0x130] sm:$0xff] %v9384
          %9561 = vst [vmem:[%s215 + $0x138] sm:$0xff] %v9385
          %9562 = vst [vmem:[%s215 + $0x140] sm:$0xff] %v9394
          %9563 = vst [vmem:[%s215 + $0x148] sm:$0xff] %v9395
          %9564 = vst [vmem:[%s215 + $0x150] sm:$0xff] %v9396
          %9565 = vst [vmem:[%s215 + $0x158] sm:$0xff] %v9397
          %9566 = vst [vmem:[%s215 + $0x160] sm:$0xff] %v9406
          %9567 = vst [vmem:[%s215 + $0x168] sm:$0xff] %v9407
          %9568 = vst [vmem:[%s215 + $0x170] sm:$0xff] %v9408
          %9569 = vst [vmem:[%s215 + $0x178] sm:$0xff] %v9409
          %9570 = vst [vmem:[%s215 + $0x180] sm:$0xff] %v9418
          %9571 = vst [vmem:[%s215 + $0x188] sm:$0xff] %v9419
          %9572 = vst [vmem:[%s215 + $0x190] sm:$0xff] %v9420
          %9573 = vst [vmem:[%s215 + $0x198] sm:$0xff] %v9421
          %9574 = vst [vmem:[%s215 + $0x1a0] sm:$0xff] %v9430
          %9575 = vst [vmem:[%s215 + $0x1a8] sm:$0xff] %v9431
          %9576 = vst [vmem:[%s215 + $0x1b0] sm:$0xff] %v9432
          %9577 = vst [vmem:[%s215 + $0x1b8] sm:$0xff] %v9433
          %9578 = vst [vmem:[%s215 + $0x1c0] sm:$0xff] %v9442
          %9579 = vst [vmem:[%s215 + $0x1c8] sm:$0xff] %v9443
          %9580 = vst [vmem:[%s215 + $0x1d0] sm:$0xff] %v9444
          %9581 = vst [vmem:[%s215 + $0x1d8] sm:$0xff] %v9445
          %9582 = vst [vmem:[%s215 + $0x1e0] sm:$0xff] %v9454
          %9583 = vst [vmem:[%s215 + $0x1e8] sm:$0xff] %v9455
          %9584 = vst [vmem:[%s215 + $0x1f0] sm:$0xff] %v9456
          %9585 = vst [vmem:[%s215 + $0x1f8] sm:$0xff] %v9457
        $region36: #{tpu_custom_call.1} parent=27 // pred_fallthru
          _
        %s9586 = sand.u32 %s112, 1
        %s9587 = scalar_lea.sflag [#allocation7], %s9586
        %s9588 = sand.u32 %s112, 1
        %s9589 = smul.addr %s9588, 512
        %s9590 = scalar_lea.vmem [#allocation8], %s9589
        // Predicated region
        $region37: #{tpu_custom_call.1} parent=27 // pred_check
          %p9591 = pneg %p122
        $region38: #{tpu_custom_call.1} parent=27 // pred_check_branch
          %9593 = sbr.rel (%p9591) target = $region40
        $region39: #{tpu_custom_call.1} parent=27 // pred_region
          %s9594 = smul.u32 64, %s38
          %9596 = vsyncadd %s9587, 0
          %s9597 = sadd.s32 %s39, %s9594
          %s9598 = smul.addr %s9597, 8
          %s9599 = scalar_lea.hbm %s4, %s9598
          %s9600 = sshll.u32 %s9590, 4
          %s9601 = int_to_ptr.vmem [resolvable:$true] %s9600
          %s9602 = sshll.u32 %s9599, 4
          %s9603 = int_to_ptr.hbm [resolvable:$true] %s9602
          %9608 = dma.vmem_to_hbm [thread:$0]  %s9601, 8192, %s9603, %s9587, 128, 128, 8
        $region40: #{tpu_custom_call.1} parent=27 // pred_fallthru
          _
      $region28: #{tpu_custom_call.1} parent=5 // pred_fallthru
        _
      %p9609 = scmp.le.s32.totalorder 2, %s29
      // Predicated region
      $region41: #{tpu_custom_call.1} parent=5 // pred_check
        %p9610 = pneg %p9609
      $region42: #{tpu_custom_call.1} parent=5 // pred_check_branch
        %9612 = sbr.rel (%p9610) target = $region44
      $region43: #{tpu_custom_call.1} parent=5 // pred_region
        %s9613 = ssub.s32 %s29, 2
        // Predicated region
        $region45: #{tpu_custom_call.1} parent=43 // pred_check
          %p9614 = pneg %p128
        $region46: #{tpu_custom_call.1} parent=43 // pred_check_branch
          %9616 = sbr.rel (%p9614) target = $region48
        $region47: #{tpu_custom_call.1} parent=43 // pred_region
          %s9617 = sand.u32 %s113, 1
          %s9618 = scalar_lea.sflag [#allocation7], %s9617
          %s9619 = sand.u32 %s113, 1
          %s9620 = smul.addr %s9619, 512
          %s9621 = scalar_lea.vmem [#allocation8], %s9620
          %9623 = dma.done %s9618, 8192
        $region48: #{tpu_custom_call.1} parent=43 // pred_fallthru
          _
      $region44: #{tpu_custom_call.1} parent=5 // pred_fallthru
        _
    $region6: #{tpu_custom_call.1} parent=1 // loop_footer
      %s33 = sadd.s32 1, %s29
    $region7: #{tpu_custom_call.1} parent=1 // loop_footer_branch
      %28 = sbr.rel target = $region3
    $region8: #{tpu_custom_call.1} parent=1 // loop_exit
      _
    %9624 = vsyncpa [#allocation6], 1
    %s9625 = scalar_lea.sflag [#allocation6], 1
    %9626 = vsyncpa %s9625, 1
    %9627 = vsyncpa [#allocation7], 1
    %s9628 = scalar_lea.sflag [#allocation7], 1
    %9629 = vsyncpa %s9628, 1

</llo_original>
